<compile_context>
chip_gen: v7x
topology: tpu7x:2x2x1
jax: 0.10.0
libtpu: 0.0.40
codegen_flags: <defaults>
</compile_context>

<pallas_src>
import math
from functools import partial

import jax
import jax.numpy as jnp
from jax.experimental import pallas as pl
from jax.experimental.pallas import tpu as pltpu


# ----------------------------------------------------------------------------
# Static configuration
# ----------------------------------------------------------------------------
# (kh, kw, stride, pad, cout) for the 5 conv layers
_CONV_CFG = (
    (11, 11, 4, 2, 64),
    (5, 5, 1, 2, 192),
    (3, 3, 1, 1, 384),
    (3, 3, 1, 1, 256),
    (3, 3, 1, 1, 256),
)

_TM_CAP = 256        # M tile (rows of im2col matrix)        — multiple of 8
_TK_CAP = 1024       # K tile (reduction, KH*KW*Cin)         — multiple of 128
_TN_CAP = 512        # N tile (Cout)                         — multiple of 128
_VMEM_LIMIT = 32 * 1024 * 1024   # safe on v5e / v6e / v7x; tiles use ~5 MiB


def _round_up(x, m):
    return (x + m - 1) // m * m


def _split_dim(dim, cap, align):
    """Pick a tile size <= cap (aligned) and number of tiles; returns (tile, n, padded)."""
    padded = _round_up(dim, align)
    n = -(-padded // cap)
    tile = _round_up(-(-padded // n), align)
    return tile, n, tile * n


# ----------------------------------------------------------------------------
# Pallas kernels
# ----------------------------------------------------------------------------
def _matmul_bias_relu_kernel(x_ref, w_ref, b_ref, o_ref, acc_ref, *, apply_relu):
    # Tiled (tm,tk)@(tk,tn) on the MXU, bf16 inputs, f32 accumulator in VMEM scratch.
    @pl.when(pl.program_id(2) == 0)
    def _init():
        acc_ref[...] = jnp.zeros_like(acc_ref)

    acc_ref[...] += jnp.dot(x_ref[...], w_ref[...],
                            preferred_element_type=jnp.float32)

    @pl.when(pl.program_id(2) == pl.num_programs(2) - 1)
    def _finalize():
        acc = acc_ref[...] + b_ref[...].astype(jnp.float32)
        if apply_relu:
            acc = jnp.maximum(acc, 0.0)
        o_ref[...] = acc.astype(o_ref.dtype)


def _maxpool3_s2_kernel(ee_ref, eo_ref, oe_ref, oo_ref, o_ref):
    # Direct 3x3 / stride-2 max pool, separable decomposition.
    # Inputs are the even/odd row x even/odd column quadrants of the feature map:
    #   ee = x[2h, 2w], eo = x[2h, 2w+1], oe = x[2h+1, 2w], oo = x[2h+1, 2w+1]
    Ho = o_ref.shape[1]
    Wo = o_ref.shape[2]
    # column max over pool columns (2w, 2w+1, 2w+2), per row parity
    ce = jnp.maximum(jnp.maximum(ee_ref[:, :, 0:Wo, :], ee_ref[:, :, 1:Wo + 1, :]),
                     eo_ref[...])                       # (1, Ho+1, Wo, C)
    co = jnp.maximum(jnp.maximum(oe_ref[:, :, 0:Wo, :], oe_ref[:, :, 1:Wo + 1, :]),
                     oo_ref[...])                       # (1, Ho,   Wo, C)
    # row max over pool rows (2h, 2h+1, 2h+2)
    o_ref[...] = jnp.maximum(jnp.maximum(ce[:, 0:Ho, :, :], ce[:, 1:Ho + 1, :, :]), co)


def _adaptive_avgpool_kernel(x_ref, o_ref, *, out_h, out_w):
    # nn.AdaptiveAvgPool2d((out_h, out_w)) with the exact PyTorch window rule:
    # window_i = [floor(i*H/out), ceil((i+1)*H/out))
    _, Hin, Win, _ = x_ref.shape
    for oi in range(out_h):
        hs = (oi * Hin) // out_h
        he = -((-(oi + 1) * Hin) // out_h)
        for oj in range(out_w):
            ws = (oj * Win) // out_w
            we = -((-(oj + 1) * Win) // out_w)
            win = x_ref[:, hs:he, ws:we, :].astype(jnp.float32)
            m = jnp.mean(win, axis=(1, 2), keepdims=True)
            o_ref[:, oi:oi + 1, oj:oj + 1, :] = m.astype(o_ref.dtype)


# ----------------------------------------------------------------------------
# Wrappers around pallas_call
# ----------------------------------------------------------------------------
def _matmul_bias_relu(x, w, b2, m_t, n_t, k_t, apply_relu):
    tm, nm = m_t
    tn, nn = n_t
    tk, nk = k_t
    Mt, _ = x.shape
    _, Nt = w.shape
    return pl.pallas_call(
        partial(_matmul_bias_relu_kernel, apply_relu=apply_relu),
        out_shape=jax.ShapeDtypeStruct((Mt, Nt), jnp.float32),
        grid=(nm, nn, nk),
        in_specs=[
            pl.BlockSpec((tm, tk), lambda i, j, k: (i, k)),
            pl.BlockSpec((tk, tn), lambda i, j, k: (k, j)),
            pl.BlockSpec((1, tn), lambda i, j, k: (0, j)),
        ],
        out_specs=pl.BlockSpec((tm, tn), lambda i, j, k: (i, j)),
        scratch_shapes=[pltpu.VMEM((tm, tn), jnp.float32)],
        compiler_params=pltpu.CompilerParams(
            dimension_semantics=("parallel", "parallel", "arbitrary"),
            vmem_limit_bytes=_VMEM_LIMIT),
    )(x, w, b2)


def conv2d_relu(x_nhwc, w_mat, b_vec, kh, kw, stride, pad, cout, apply_relu=True):
    """Conv2d via bf16 im2col (XLA glue) + tiled Pallas fused matmul/bias/ReLU."""
    N, H, W, Cin = x_nhwc.shape
    K = kh * kw * Cin
    Ho = (H + 2 * pad - kh) // stride + 1
    Wo = (W + 2 * pad - kw) // stride + 1

    xp = jnp.pad(x_nhwc, ((0, 0), (pad, pad), (pad, pad), (0, 0)))
    xp = xp.astype(jnp.bfloat16)                         # bf16 MXU inputs, half the traffic
    cols = []
    for i in range(kh):
        for j in range(kw):
            cols.append(xp[:, i:i + stride * (Ho - 1) + 1:stride,
                           j:j + stride * (Wo - 1) + 1:stride, :])
    patches = jnp.stack(cols, axis=3)                    # (N, Ho, Wo, KH*KW, Cin)
    patches = patches.reshape(N * Ho * Wo, K)

    M = N * Ho * Wo
    tm, nm, Mt = _split_dim(M, _TM_CAP, 8)
    tk, nk, Kt = _split_dim(K, _TK_CAP, 128)
    tn, nn, Nt = _split_dim(cout, _TN_CAP, 128)
    assert (Kt, Nt) == w_mat.shape, (Kt, Nt, w_mat.shape)

    patches = jnp.pad(patches, ((0, Mt - M), (0, Kt - K)))
    out = _matmul_bias_relu(patches, w_mat, b_vec.reshape(1, Nt),
                            (tm, nm), (tn, nn), (tk, nk), apply_relu)
    return out[:M, :cout].reshape(N, Ho, Wo, cout)


def maxpool_3x3_s2(x):
    """nn.MaxPool2d(kernel_size=3, stride=2) on NHWC, direct stride-2 in-kernel."""
    N, H, W, C = x.shape
    Ho = (H - 3) // 2 + 1
    Wo = (W - 3) // 2 + 1
    # even/odd row & column split (XLA layout glue, reads input ~once total)
    ee = x[:, 0::2, 0::2, :][:, :Ho + 1, :Wo + 1, :]
    eo = x[:, 0::2, 1::2, :][:, :Ho + 1, :Wo, :]
    oe = x[:, 1::2, 0::2, :][:, :Ho, :Wo + 1, :]
    oo = x[:, 1::2, 1::2, :][:, :Ho, :Wo, :]
    return pl.pallas_call(
        _maxpool3_s2_kernel,
        out_shape=jax.ShapeDtypeStruct((N, Ho, Wo, C), x.dtype),
        grid=(N,),
        in_specs=[
            pl.BlockSpec((1, Ho + 1, Wo + 1, C), lambda n: (n, 0, 0, 0)),
            pl.BlockSpec((1, Ho + 1, Wo, C), lambda n: (n, 0, 0, 0)),
            pl.BlockSpec((1, Ho, Wo + 1, C), lambda n: (n, 0, 0, 0)),
            pl.BlockSpec((1, Ho, Wo, C), lambda n: (n, 0, 0, 0)),
        ],
        out_specs=pl.BlockSpec((1, Ho, Wo, C), lambda n: (n, 0, 0, 0)),
        compiler_params=pltpu.CompilerParams(
            dimension_semantics=("parallel",),
            vmem_limit_bytes=_VMEM_LIMIT),
    )(ee, eo, oe, oo)


def adaptive_avgpool_6x6(x):
    N, Hin, Win, C = x.shape
    if (Hin, Win) == (6, 6):
        return x   # identity for the canonical 224x224 input — skip the kernel launch
    return pl.pallas_call(
        partial(_adaptive_avgpool_kernel, out_h=6, out_w=6),
        out_shape=jax.ShapeDtypeStruct((N, 6, 6, C), x.dtype),
        grid=(N,),
        in_specs=[pl.BlockSpec((1, Hin, Win, C), lambda n: (n, 0, 0, 0))],
        out_specs=pl.BlockSpec((1, 6, 6, C), lambda n: (n, 0, 0, 0)),
        compiler_params=pltpu.CompilerParams(
            dimension_semantics=("parallel",),
            vmem_limit_bytes=_VMEM_LIMIT),
    )(x)


# ----------------------------------------------------------------------------
# AlexNet.forward
# ----------------------------------------------------------------------------
@jax.jit
def alexnet_forward(x_nchw, prep_params):
    x = jnp.transpose(x_nchw, (0, 2, 3, 1)).astype(jnp.float32)  # NCHW -> NHWC
    for idx, (kh, kw, stride, pad, cout) in enumerate(_CONV_CFG, start=1):
        x = conv2d_relu(x, prep_params[f"w{idx}"], prep_params[f"b{idx}"],
                        kh, kw, stride, pad, cout)
        if idx in (1, 2, 5):
            x = maxpool_3x3_s2(x)
    x = adaptive_avgpool_6x6(x)
    # flatten exactly like PyTorch's x.view(N, 256*6*6) on an NCHW tensor
    N = x.shape[0]
    x = jnp.transpose(x, (0, 3, 1, 2)).reshape(N, 256 * 6 * 6)
    return x
    # TODO(synk): self.classifier (Dropout/Linear stack) is defined in __init__ but never
    #             called in forward(); faithfully omitted here.


# ----------------------------------------------------------------------------
# Parameters: PyTorch-shaped init + one-time Pallas-friendly preparation
# ----------------------------------------------------------------------------
def init_params(key):
    specs = [
        ("w1", (64, 3, 11, 11)), ("b1", (64,)),
        ("w2", (192, 64, 5, 5)), ("b2", (192,)),
        ("w3", (384, 192, 3, 3)), ("b3", (384,)),
        ("w4", (256, 384, 3, 3)), ("b4", (256,)),
        ("w5", (256, 256, 3, 3)), ("b5", (256,)),
    ]
    params = {}
    for i, (name, shape) in enumerate(specs):
        k = jax.random.fold_in(key, i)
        if name.startswith("w"):
            fan_in = shape[1] * shape[2] * shape[3]
            params[name] = jax.random.normal(k, shape, jnp.float32) / math.sqrt(fan_in)
        else:
            params[name] = jax.random.normal(k, shape, jnp.float32) * 0.01
    return params


def prepare_params(params):
    """Pre-transpose OIHW weights to (KH*KW*Cin, Cout), pad to the matmul tiling and
    cast to bf16 ONCE (outside the jitted forward)."""
    prepared = {}
    for idx, (kh, kw, stride, pad, cout) in enumerate(_CONV_CFG, start=1):
        w = params[f"w{idx}"]                     # (Cout, Cin, KH, KW)
        b = params[f"b{idx}"]
        cin = w.shape[1]
        K = kh * kw * cin
        w_mat = jnp.transpose(w, (2, 3, 1, 0)).reshape(K, cout)   # (kh,kw,cin) x cout
        _, _, Kt = _split_dim(K, _TK_CAP, 128)
        _, _, Nt = _split_dim(cout, _TN_CAP, 128)
        prepared[f"w{idx}"] = jnp.pad(
            w_mat, ((0, Kt - K), (0, Nt - cout))).astype(jnp.bfloat16)
        prepared[f"b{idx}"] = jnp.pad(b, (0, Nt - cout)).astype(jnp.float32)
    return prepared


# ----------------------------------------------------------------------------
# Plain-JAX reference (same bf16-input / f32-accumulate numerics as the kernels)
# ----------------------------------------------------------------------------
def reference_forward(x_nchw, params):
    def conv(x, w, b, stride, pad):
        y = jax.lax.conv_general_dilated(
            x.astype(jnp.bfloat16), w.astype(jnp.bfloat16),
            window_strides=(stride, stride),
            padding=[(pad, pad), (pad, pad)],
            dimension_numbers=("NCHW", "OIHW", "NCHW"),
            preferred_element_type=jnp.float32)
        return y + b[None, :, None, None]

    def maxpool(x):
        return jax.lax.reduce_window(x, -jnp.inf, jax.lax.max,
                                     (1, 1, 3, 3), (1, 1, 2, 2), "VALID")

    x = jax.nn.relu(conv(x_nchw, params["w1"], params["b1"], 4, 2))
    x = maxpool(x)
    x = jax.nn.relu(conv(x, params["w2"], params["b2"], 1, 2))
    x = maxpool(x)
    x = jax.nn.relu(conv(x, params["w3"], params["b3"], 1, 1))
    x = jax.nn.relu(conv(x, params["w4"], params["b4"], 1, 1))
    x = jax.nn.relu(conv(x, params["w5"], params["b5"], 1, 1))
    x = maxpool(x)
    N, C, H, W = x.shape
    out = jnp.zeros((N, C, 6, 6), x.dtype)
    for oi in range(6):
        hs, he = (oi * H) // 6, -((-(oi + 1) * H) // 6)
        for oj in range(6):
            ws, we = (oj * W) // 6, -((-(oj + 1) * W) // 6)
            out = out.at[:, :, oi, oj].set(
                jnp.mean(x[:, :, hs:he, ws:we], axis=(2, 3)))
    return out.reshape(N, C * 36)


if __name__ == "__main__":
    key = jax.random.PRNGKey(0)
    params = init_params(jax.random.fold_in(key, 100))
    prep = prepare_params(params)

    # Small spatial size (67x67) keeps every intermediate valid for this conv stack:
    # 67 -> conv1 -> 16 -> pool -> 7 -> conv2 -> 7 -> pool -> 3 -> convs -> 3 -> pool -> 1
    # -> adaptive avgpool -> 6x6 -> flatten (N, 9216).
    x = jax.random.normal(jax.random.fold_in(key, 200), (2, 3, 67, 67), jnp.float32)

    out = jax.block_until_ready(alexnet_forward(x, prep))
    assert out.shape == (2, 256 * 6 * 6), out.shape

    ref = jax.block_until_ready(reference_forward(x, params))
    max_err = float(jnp.max(jnp.abs(out - ref)))
    assert max_err < 2e-3, f"mismatch vs reference: {max_err}"

    print("KERNEL_OK")
</pallas_src>

<mosaic_0001>
module attributes {stable_mosaic.version = 11 : i64} {
  func.func @_matmul_bias_relu_kernel(%arg0: i32, %arg1: i32, %arg2: i32, %arg3: memref<256x384xbf16, #tpu.memory_space<vmem>>, %arg4: memref<384x128xbf16, #tpu.memory_space<vmem>>, %arg5: memref<1x128xf32, #tpu.memory_space<vmem>>, %arg6: memref<256x128xf32, #tpu.memory_space<vmem>>, %arg7: memref<256x128xf32, #tpu.memory_space<vmem>>) attributes {dimension_semantics = [#tpu.dimension_semantics<parallel>, #tpu.dimension_semantics<parallel>, #tpu.dimension_semantics<arbitrary>], iteration_bounds = array<i64: 2, 1, 1>, scalar_prefetch = 0 : i64, scratch_operands = 1 : i64, tpu.core_type = #tpu.core_type<tc>, window_params = [{transform_indices = @transform_0, window_bounds = array<i64: 256, 384>}, {transform_indices = @transform_1, window_bounds = array<i64: 384, 128>}, {transform_indices = @transform_2, window_bounds = array<i64: 1, 128>}, {transform_indices = @transform_3, window_bounds = array<i64: 256, 128>}]} {
    %c0_i32 = arith.constant 0 : i32
    %0 = arith.cmpi eq, %arg2, %c0_i32 : i32
    %1 = arith.extui %0 : i1 to i32
    %c0_i32_0 = arith.constant 0 : i32
    %2 = arith.cmpi ne, %1, %c0_i32_0 : i32
    scf.if %2 {
      %cst_10 = arith.constant 0.000000e+00 : f32
      %12 = vector.broadcast %cst_10 : f32 to vector<256x128xf32>
      %c0_11 = arith.constant 0 : index
      %c0_12 = arith.constant 0 : index
      %13 = vector.load %arg7[%c0_11, %c0_12] : memref<256x128xf32, #tpu.memory_space<vmem>>, vector<256x128xf32>
      tpu.vector_store %arg7[%c0_11, %c0_12], %12 {strides = array<i32>} : memref<256x128xf32, #tpu.memory_space<vmem>>, vector<256x128xf32>,
    } else {
    }
    %c0 = arith.constant 0 : index
    %c0_1 = arith.constant 0 : index
    %3 = vector.load %arg7[%c0, %c0_1] : memref<256x128xf32, #tpu.memory_space<vmem>>, vector<256x128xf32>
    %c0_2 = arith.constant 0 : index
    %c0_3 = arith.constant 0 : index
    %4 = vector.load %arg3[%c0_2, %c0_3] : memref<256x384xbf16, #tpu.memory_space<vmem>>, vector<256x384xbf16>
    %c0_4 = arith.constant 0 : index
    %c0_5 = arith.constant 0 : index
    %5 = vector.load %arg4[%c0_4, %c0_5] : memref<384x128xbf16, #tpu.memory_space<vmem>>, vector<384x128xbf16>
    %cst = arith.constant dense<0.000000e+00> : vector<256x128xf32>
    %6 = tpu.matmul %4, %5, %cst {dimension_numbers = #tpu.dot_dimension_numbers<[1], [0], [0], [1], [0, 0, 1, 1], [], []>} : vector<256x384xbf16>, vector<384x128xbf16>, vector<256x128xf32> -> vector<256x128xf32>
    %7 = arith.addf %3, %6 : vector<256x128xf32>
    %c0_6 = arith.constant 0 : index
    %c0_7 = arith.constant 0 : index
    %8 = vector.load %arg7[%c0_6, %c0_7] : memref<256x128xf32, #tpu.memory_space<vmem>>, vector<256x128xf32>
    tpu.vector_store %arg7[%c0_6, %c0_7], %7 {strides = array<i32>} : memref<256x128xf32, #tpu.memory_space<vmem>>, vector<256x128xf32>,
    %c0_i32_8 = arith.constant 0 : i32
    %9 = arith.cmpi eq, %arg2, %c0_i32_8 : i32
    %10 = arith.extui %9 : i1 to i32
    %c0_i32_9 = arith.constant 0 : i32
    %11 = arith.cmpi ne, %10, %c0_i32_9 : i32
    scf.if %11 {
      %c0_10 = arith.constant 0 : index
      %c0_11 = arith.constant 0 : index
      %12 = vector.load %arg7[%c0_10, %c0_11] : memref<256x128xf32, #tpu.memory_space<vmem>>, vector<256x128xf32>
      %c0_12 = arith.constant 0 : index
      %c0_13 = arith.constant 0 : index
      %13 = vector.load %arg5[%c0_12, %c0_13] : memref<1x128xf32, #tpu.memory_space<vmem>>, vector<1x128xf32>
      %14 = vector.broadcast %13 : vector<1x128xf32> to vector<256x128xf32>
      %15 = arith.addf %12, %14 : vector<256x128xf32>
      %cst_14 = arith.constant 0.000000e+00 : f32
      %16 = vector.broadcast %cst_14 : f32 to vector<256x128xf32>
      %17 = arith.maximumf %15, %16 : vector<256x128xf32>
      %c0_15 = arith.constant 0 : index
      %c0_16 = arith.constant 0 : index
      %18 = vector.load %arg6[%c0_15, %c0_16] : memref<256x128xf32, #tpu.memory_space<vmem>>, vector<256x128xf32>
      tpu.vector_store %arg6[%c0_15, %c0_16], %17 {strides = array<i32>} : memref<256x128xf32, #tpu.memory_space<vmem>>, vector<256x128xf32>,
    } else {
    }
    return
  }
  func.func @transform_0(%arg0: i32, %arg1: i32, %arg2: i32) -> (i32, i32) {
    %c0_i32 = arith.constant 0 : i32
    return %arg0, %arg2 : i32, i32
  }
  func.func @transform_1(%arg0: i32, %arg1: i32, %arg2: i32) -> (i32, i32) {
    %c0_i32 = arith.constant 0 : i32
    return %arg2, %arg1 : i32, i32
  }
  func.func @transform_2(%arg0: i32, %arg1: i32, %arg2: i32) -> (i32, i32) {
    %c0_i32 = arith.constant 0 : i32
    %c0_i32_0 = arith.constant 0 : i32
    return %c0_i32, %arg1 : i32, i32
  }
  func.func @transform_3(%arg0: i32, %arg1: i32, %arg2: i32) -> (i32, i32) {
    %c0_i32 = arith.constant 0 : i32
    return %arg0, %arg1 : i32, i32
  }
}

module attributes {stable_mosaic.version = 11 : i64} {
  func.func @_maxpool3_s2_kernel(%arg0: i32, %arg1: memref<1x8x8x64xf32, #tpu.memory_space<vmem>>, %arg2: memref<1x8x7x64xf32, #tpu.memory_space<vmem>>, %arg3: memref<1x7x8x64xf32, #tpu.memory_space<vmem>>, %arg4: memref<1x7x7x64xf32, #tpu.memory_space<vmem>>, %arg5: memref<1x7x7x64xf32, #tpu.memory_space<vmem>>) attributes {dimension_semantics = [#tpu.dimension_semantics<parallel>], iteration_bounds = array<i64: 2>, scalar_prefetch = 0 : i64, scratch_operands = 0 : i64, tpu.core_type = #tpu.core_type<tc>, window_params = [{transform_indices = @transform_0, window_bounds = array<i64: 1, 8, 8, 64>}, {transform_indices = @transform_1, window_bounds = array<i64: 1, 8, 7, 64>}, {transform_indices = @transform_2, window_bounds = array<i64: 1, 7, 8, 64>}, {transform_indices = @transform_3, window_bounds = array<i64: 1, 7, 7, 64>}, {transform_indices = @transform_4, window_bounds = array<i64: 1, 7, 7, 64>}]} {
    %c0 = arith.constant 0 : index
    %c0_0 = arith.constant 0 : index
    %c0_1 = arith.constant 0 : index
    %c0_2 = arith.constant 0 : index
    %0 = vector.load %arg1[%c0, %c0_0, %c0_1, %c0_2] : memref<1x8x8x64xf32, #tpu.memory_space<vmem>>, vector<1x8x7x64xf32>
    %c0_3 = arith.constant 0 : index
    %c0_4 = arith.constant 0 : index
    %c1 = arith.constant 1 : index
    %c0_5 = arith.constant 0 : index
    %1 = vector.load %arg1[%c0_3, %c0_4, %c1, %c0_5] : memref<1x8x8x64xf32, #tpu.memory_space<vmem>>, vector<1x8x7x64xf32>
    %2 = arith.maximumf %0, %1 : vector<1x8x7x64xf32>
    %c0_6 = arith.constant 0 : index
    %c0_7 = arith.constant 0 : index
    %c0_8 = arith.constant 0 : index
    %c0_9 = arith.constant 0 : index
    %3 = vector.load %arg2[%c0_6, %c0_7, %c0_8, %c0_9] : memref<1x8x7x64xf32, #tpu.memory_space<vmem>>, vector<1x8x7x64xf32>
    %4 = arith.maximumf %2, %3 : vector<1x8x7x64xf32>
    %c0_10 = arith.constant 0 : index
    %c0_11 = arith.constant 0 : index
    %c0_12 = arith.constant 0 : index
    %c0_13 = arith.constant 0 : index
    %5 = vector.load %arg3[%c0_10, %c0_11, %c0_12, %c0_13] : memref<1x7x8x64xf32, #tpu.memory_space<vmem>>, vector<1x7x7x64xf32>
    %c0_14 = arith.constant 0 : index
    %c0_15 = arith.constant 0 : index
    %c1_16 = arith.constant 1 : index
    %c0_17 = arith.constant 0 : index
    %6 = vector.load %arg3[%c0_14, %c0_15, %c1_16, %c0_17] : memref<1x7x8x64xf32, #tpu.memory_space<vmem>>, vector<1x7x7x64xf32>
    %7 = arith.maximumf %5, %6 : vector<1x7x7x64xf32>
    %c0_18 = arith.constant 0 : index
    %c0_19 = arith.constant 0 : index
    %c0_20 = arith.constant 0 : index
    %c0_21 = arith.constant 0 : index
    %8 = vector.load %arg4[%c0_18, %c0_19, %c0_20, %c0_21] : memref<1x7x7x64xf32, #tpu.memory_space<vmem>>, vector<1x7x7x64xf32>
    %9 = arith.maximumf %7, %8 : vector<1x7x7x64xf32>
    %10 = vector.extract_strided_slice %4 {offsets = [0, 0, 0, 0], sizes = [1, 7, 7, 64], strides = [1, 1, 1, 1]} : vector<1x8x7x64xf32> to vector<1x7x7x64xf32>
    %11 = vector.extract_strided_slice %4 {offsets = [0, 1, 0, 0], sizes = [1, 7, 7, 64], strides = [1, 1, 1, 1]} : vector<1x8x7x64xf32> to vector<1x7x7x64xf32>
    %12 = arith.maximumf %10, %11 : vector<1x7x7x64xf32>
    %13 = arith.maximumf %12, %9 : vector<1x7x7x64xf32>
    %c0_22 = arith.constant 0 : index
    %c0_23 = arith.constant 0 : index
    %c0_24 = arith.constant 0 : index
    %c0_25 = arith.constant 0 : index
    %14 = vector.load %arg5[%c0_22, %c0_23, %c0_24, %c0_25] : memref<1x7x7x64xf32, #tpu.memory_space<vmem>>, vector<1x7x7x64xf32>
    tpu.vector_store %arg5[%c0_22, %c0_23, %c0_24, %c0_25], %13 {strides = array<i32>} : memref<1x7x7x64xf32, #tpu.memory_space<vmem>>, vector<1x7x7x64xf32>,
    return
  }
  func.func @transform_0(%arg0: i32) -> (i32, i32, i32, i32) {
    %c0_i32 = arith.constant 0 : i32
    %c0_i32_0 = arith.constant 0 : i32
    %c0_i32_1 = arith.constant 0 : i32
    %c0_i32_2 = arith.constant 0 : i32
    return %arg0, %c0_i32, %c0_i32_0, %c0_i32_1 : i32, i32, i32, i32
  }
  func.func @transform_1(%arg0: i32) -> (i32, i32, i32, i32) {
    %c0_i32 = arith.constant 0 : i32
    %c0_i32_0 = arith.constant 0 : i32
    %c0_i32_1 = arith.constant 0 : i32
    %c0_i32_2 = arith.constant 0 : i32
    return %arg0, %c0_i32, %c0_i32_0, %c0_i32_1 : i32, i32, i32, i32
  }
  func.func @transform_2(%arg0: i32) -> (i32, i32, i32, i32) {
    %c0_i32 = arith.constant 0 : i32
    %c0_i32_0 = arith.constant 0 : i32
    %c0_i32_1 = arith.constant 0 : i32
    %c0_i32_2 = arith.constant 0 : i32
    return %arg0, %c0_i32, %c0_i32_0, %c0_i32_1 : i32, i32, i32, i32
  }
  func.func @transform_3(%arg0: i32) -> (i32, i32, i32, i32) {
    %c0_i32 = arith.constant 0 : i32
    %c0_i32_0 = arith.constant 0 : i32
    %c0_i32_1 = arith.constant 0 : i32
    %c0_i32_2 = arith.constant 0 : i32
    return %arg0, %c0_i32, %c0_i32_0, %c0_i32_1 : i32, i32, i32, i32
  }
  func.func @transform_4(%arg0: i32) -> (i32, i32, i32, i32) {
    %c0_i32 = arith.constant 0 : i32
    %c0_i32_0 = arith.constant 0 : i32
    %c0_i32_1 = arith.constant 0 : i32
    %c0_i32_2 = arith.constant 0 : i32
    return %arg0, %c0_i32, %c0_i32_0, %c0_i32_1 : i32, i32, i32, i32
  }
}

module attributes {stable_mosaic.version = 11 : i64} {
  func.func @_matmul_bias_relu_kernel(%arg0: i32, %arg1: i32, %arg2: i32, %arg3: memref<104x896xbf16, #tpu.memory_space<vmem>>, %arg4: memref<896x256xbf16, #tpu.memory_space<vmem>>, %arg5: memref<1x256xf32, #tpu.memory_space<vmem>>, %arg6: memref<104x256xf32, #tpu.memory_space<vmem>>, %arg7: memref<104x256xf32, #tpu.memory_space<vmem>>) attributes {dimension_semantics = [#tpu.dimension_semantics<parallel>, #tpu.dimension_semantics<parallel>, #tpu.dimension_semantics<arbitrary>], iteration_bounds = array<i64: 1, 1, 2>, scalar_prefetch = 0 : i64, scratch_operands = 1 : i64, tpu.core_type = #tpu.core_type<tc>, window_params = [{transform_indices = @transform_0, window_bounds = array<i64: 104, 896>}, {transform_indices = @transform_1, window_bounds = array<i64: 896, 256>}, {transform_indices = @transform_2, window_bounds = array<i64: 1, 256>}, {transform_indices = @transform_3, window_bounds = array<i64: 104, 256>}]} {
    %c0_i32 = arith.constant 0 : i32
    %0 = arith.cmpi eq, %arg2, %c0_i32 : i32
    %1 = arith.extui %0 : i1 to i32
    %c0_i32_0 = arith.constant 0 : i32
    %2 = arith.cmpi ne, %1, %c0_i32_0 : i32
    scf.if %2 {
      %cst_9 = arith.constant 0.000000e+00 : f32
      %12 = vector.broadcast %cst_9 : f32 to vector<104x256xf32>
      %c0_10 = arith.constant 0 : index
      %c0_11 = arith.constant 0 : index
      %13 = vector.load %arg7[%c0_10, %c0_11] : memref<104x256xf32, #tpu.memory_space<vmem>>, vector<104x256xf32>
      tpu.vector_store %arg7[%c0_10, %c0_11], %12 {strides = array<i32>} : memref<104x256xf32, #tpu.memory_space<vmem>>, vector<104x256xf32>,
    } else {
    }
    %c0 = arith.constant 0 : index
    %c0_1 = arith.constant 0 : index
    %3 = vector.load %arg7[%c0, %c0_1] : memref<104x256xf32, #tpu.memory_space<vmem>>, vector<104x256xf32>
    %c0_2 = arith.constant 0 : index
    %c0_3 = arith.constant 0 : index
    %4 = vector.load %arg3[%c0_2, %c0_3] : memref<104x896xbf16, #tpu.memory_space<vmem>>, vector<104x896xbf16>
    %c0_4 = arith.constant 0 : index
    %c0_5 = arith.constant 0 : index
    %5 = vector.load %arg4[%c0_4, %c0_5] : memref<896x256xbf16, #tpu.memory_space<vmem>>, vector<896x256xbf16>
    %cst = arith.constant dense<0.000000e+00> : vector<104x256xf32>
    %6 = tpu.matmul %4, %5, %cst {dimension_numbers = #tpu.dot_dimension_numbers<[1], [0], [0], [1], [0, 0, 1, 1], [], []>} : vector<104x896xbf16>, vector<896x256xbf16>, vector<104x256xf32> -> vector<104x256xf32>
    %7 = arith.addf %3, %6 : vector<104x256xf32>
    %c0_6 = arith.constant 0 : index
    %c0_7 = arith.constant 0 : index
    %8 = vector.load %arg7[%c0_6, %c0_7] : memref<104x256xf32, #tpu.memory_space<vmem>>, vector<104x256xf32>
    tpu.vector_store %arg7[%c0_6, %c0_7], %7 {strides = array<i32>} : memref<104x256xf32, #tpu.memory_space<vmem>>, vector<104x256xf32>,
    %c1_i32 = arith.constant 1 : i32
    %9 = arith.cmpi eq, %arg2, %c1_i32 : i32
    %10 = arith.extui %9 : i1 to i32
    %c0_i32_8 = arith.constant 0 : i32
    %11 = arith.cmpi ne, %10, %c0_i32_8 : i32
    scf.if %11 {
      %c0_9 = arith.constant 0 : index
      %c0_10 = arith.constant 0 : index
      %12 = vector.load %arg7[%c0_9, %c0_10] : memref<104x256xf32, #tpu.memory_space<vmem>>, vector<104x256xf32>
      %c0_11 = arith.constant 0 : index
      %c0_12 = arith.constant 0 : index
      %13 = vector.load %arg5[%c0_11, %c0_12] : memref<1x256xf32, #tpu.memory_space<vmem>>, vector<1x256xf32>
      %14 = vector.broadcast %13 : vector<1x256xf32> to vector<104x256xf32>
      %15 = arith.addf %12, %14 : vector<104x256xf32>
      %cst_13 = arith.constant 0.000000e+00 : f32
      %16 = vector.broadcast %cst_13 : f32 to vector<104x256xf32>
      %17 = arith.maximumf %15, %16 : vector<104x256xf32>
      %c0_14 = arith.constant 0 : index
      %c0_15 = arith.constant 0 : index
      %18 = vector.load %arg6[%c0_14, %c0_15] : memref<104x256xf32, #tpu.memory_space<vmem>>, vector<104x256xf32>
      tpu.vector_store %arg6[%c0_14, %c0_15], %17 {strides = array<i32>} : memref<104x256xf32, #tpu.memory_space<vmem>>, vector<104x256xf32>,
    } else {
    }
    return
  }
  func.func @transform_0(%arg0: i32, %arg1: i32, %arg2: i32) -> (i32, i32) {
    %c0_i32 = arith.constant 0 : i32
    return %arg0, %arg2 : i32, i32
  }
  func.func @transform_1(%arg0: i32, %arg1: i32, %arg2: i32) -> (i32, i32) {
    %c0_i32 = arith.constant 0 : i32
    return %arg2, %arg1 : i32, i32
  }
  func.func @transform_2(%arg0: i32, %arg1: i32, %arg2: i32) -> (i32, i32) {
    %c0_i32 = arith.constant 0 : i32
    %c0_i32_0 = arith.constant 0 : i32
    return %c0_i32, %arg1 : i32, i32
  }
  func.func @transform_3(%arg0: i32, %arg1: i32, %arg2: i32) -> (i32, i32) {
    %c0_i32 = arith.constant 0 : i32
    return %arg0, %arg1 : i32, i32
  }
}

module attributes {stable_mosaic.version = 11 : i64} {
  func.func @_maxpool3_s2_kernel(%arg0: i32, %arg1: memref<1x4x4x192xf32, #tpu.memory_space<vmem>>, %arg2: memref<1x4x3x192xf32, #tpu.memory_space<vmem>>, %arg3: memref<1x3x4x192xf32, #tpu.memory_space<vmem>>, %arg4: memref<1x3x3x192xf32, #tpu.memory_space<vmem>>, %arg5: memref<1x3x3x192xf32, #tpu.memory_space<vmem>>) attributes {dimension_semantics = [#tpu.dimension_semantics<parallel>], iteration_bounds = array<i64: 2>, scalar_prefetch = 0 : i64, scratch_operands = 0 : i64, tpu.core_type = #tpu.core_type<tc>, window_params = [{transform_indices = @transform_0, window_bounds = array<i64: 1, 4, 4, 192>}, {transform_indices = @transform_1, window_bounds = array<i64: 1, 4, 3, 192>}, {transform_indices = @transform_2, window_bounds = array<i64: 1, 3, 4, 192>}, {transform_indices = @transform_3, window_bounds = array<i64: 1, 3, 3, 192>}, {transform_indices = @transform_4, window_bounds = array<i64: 1, 3, 3, 192>}]} {
    %c0 = arith.constant 0 : index
    %c0_0 = arith.constant 0 : index
    %c0_1 = arith.constant 0 : index
    %c0_2 = arith.constant 0 : index
    %0 = vector.load %arg1[%c0, %c0_0, %c0_1, %c0_2] : memref<1x4x4x192xf32, #tpu.memory_space<vmem>>, vector<1x4x3x192xf32>
    %c0_3 = arith.constant 0 : index
    %c0_4 = arith.constant 0 : index
    %c1 = arith.constant 1 : index
    %c0_5 = arith.constant 0 : index
    %1 = vector.load %arg1[%c0_3, %c0_4, %c1, %c0_5] : memref<1x4x4x192xf32, #tpu.memory_space<vmem>>, vector<1x4x3x192xf32>
    %2 = arith.maximumf %0, %1 : vector<1x4x3x192xf32>
    %c0_6 = arith.constant 0 : index
    %c0_7 = arith.constant 0 : index
    %c0_8 = arith.constant 0 : index
    %c0_9 = arith.constant 0 : index
    %3 = vector.load %arg2[%c0_6, %c0_7, %c0_8, %c0_9] : memref<1x4x3x192xf32, #tpu.memory_space<vmem>>, vector<1x4x3x192xf32>
    %4 = arith.maximumf %2, %3 : vector<1x4x3x192xf32>
    %c0_10 = arith.constant 0 : index
    %c0_11 = arith.constant 0 : index
    %c0_12 = arith.constant 0 : index
    %c0_13 = arith.constant 0 : index
    %5 = vector.load %arg3[%c0_10, %c0_11, %c0_12, %c0_13] : memref<1x3x4x192xf32, #tpu.memory_space<vmem>>, vector<1x3x3x192xf32>
    %c0_14 = arith.constant 0 : index
    %c0_15 = arith.constant 0 : index
    %c1_16 = arith.constant 1 : index
    %c0_17 = arith.constant 0 : index
    %6 = vector.load %arg3[%c0_14, %c0_15, %c1_16, %c0_17] : memref<1x3x4x192xf32, #tpu.memory_space<vmem>>, vector<1x3x3x192xf32>
    %7 = arith.maximumf %5, %6 : vector<1x3x3x192xf32>
    %c0_18 = arith.constant 0 : index
    %c0_19 = arith.constant 0 : index
    %c0_20 = arith.constant 0 : index
    %c0_21 = arith.constant 0 : index
    %8 = vector.load %arg4[%c0_18, %c0_19, %c0_20, %c0_21] : memref<1x3x3x192xf32, #tpu.memory_space<vmem>>, vector<1x3x3x192xf32>
    %9 = arith.maximumf %7, %8 : vector<1x3x3x192xf32>
    %10 = vector.extract_strided_slice %4 {offsets = [0, 0, 0, 0], sizes = [1, 3, 3, 192], strides = [1, 1, 1, 1]} : vector<1x4x3x192xf32> to vector<1x3x3x192xf32>
    %11 = vector.extract_strided_slice %4 {offsets = [0, 1, 0, 0], sizes = [1, 3, 3, 192], strides = [1, 1, 1, 1]} : vector<1x4x3x192xf32> to vector<1x3x3x192xf32>
    %12 = arith.maximumf %10, %11 : vector<1x3x3x192xf32>
    %13 = arith.maximumf %12, %9 : vector<1x3x3x192xf32>
    %c0_22 = arith.constant 0 : index
    %c0_23 = arith.constant 0 : index
    %c0_24 = arith.constant 0 : index
    %c0_25 = arith.constant 0 : index
    %14 = vector.load %arg5[%c0_22, %c0_23, %c0_24, %c0_25] : memref<1x3x3x192xf32, #tpu.memory_space<vmem>>, vector<1x3x3x192xf32>
    tpu.vector_store %arg5[%c0_22, %c0_23, %c0_24, %c0_25], %13 {strides = array<i32>} : memref<1x3x3x192xf32, #tpu.memory_space<vmem>>, vector<1x3x3x192xf32>,
    return
  }
  func.func @transform_0(%arg0: i32) -> (i32, i32, i32, i32) {
    %c0_i32 = arith.constant 0 : i32
    %c0_i32_0 = arith.constant 0 : i32
    %c0_i32_1 = arith.constant 0 : i32
    %c0_i32_2 = arith.constant 0 : i32
    return %arg0, %c0_i32, %c0_i32_0, %c0_i32_1 : i32, i32, i32, i32
  }
  func.func @transform_1(%arg0: i32) -> (i32, i32, i32, i32) {
    %c0_i32 = arith.constant 0 : i32
    %c0_i32_0 = arith.constant 0 : i32
    %c0_i32_1 = arith.constant 0 : i32
    %c0_i32_2 = arith.constant 0 : i32
    return %arg0, %c0_i32, %c0_i32_0, %c0_i32_1 : i32, i32, i32, i32
  }
  func.func @transform_2(%arg0: i32) -> (i32, i32, i32, i32) {
    %c0_i32 = arith.constant 0 : i32
    %c0_i32_0 = arith.constant 0 : i32
    %c0_i32_1 = arith.constant 0 : i32
    %c0_i32_2 = arith.constant 0 : i32
    return %arg0, %c0_i32, %c0_i32_0, %c0_i32_1 : i32, i32, i32, i32
  }
  func.func @transform_3(%arg0: i32) -> (i32, i32, i32, i32) {
    %c0_i32 = arith.constant 0 : i32
    %c0_i32_0 = arith.constant 0 : i32
    %c0_i32_1 = arith.constant 0 : i32
    %c0_i32_2 = arith.constant 0 : i32
    return %arg0, %c0_i32, %c0_i32_0, %c0_i32_1 : i32, i32, i32, i32
  }
  func.func @transform_4(%arg0: i32) -> (i32, i32, i32, i32) {
    %c0_i32 = arith.constant 0 : i32
    %c0_i32_0 = arith.constant 0 : i32
    %c0_i32_1 = arith.constant 0 : i32
    %c0_i32_2 = arith.constant 0 : i32
    return %arg0, %c0_i32, %c0_i32_0, %c0_i32_1 : i32, i32, i32, i32
  }
}

module attributes {stable_mosaic.version = 11 : i64} {
  func.func @_matmul_bias_relu_kernel(%arg0: i32, %arg1: i32, %arg2: i32, %arg3: memref<24x896xbf16, #tpu.memory_space<vmem>>, %arg4: memref<896x384xbf16, #tpu.memory_space<vmem>>, %arg5: memref<1x384xf32, #tpu.memory_space<vmem>>, %arg6: memref<24x384xf32, #tpu.memory_space<vmem>>, %arg7: memref<24x384xf32, #tpu.memory_space<vmem>>) attributes {dimension_semantics = [#tpu.dimension_semantics<parallel>, #tpu.dimension_semantics<parallel>, #tpu.dimension_semantics<arbitrary>], iteration_bounds = array<i64: 1, 1, 2>, scalar_prefetch = 0 : i64, scratch_operands = 1 : i64, tpu.core_type = #tpu.core_type<tc>, window_params = [{transform_indices = @transform_0, window_bounds = array<i64: 24, 896>}, {transform_indices = @transform_1, window_bounds = array<i64: 896, 384>}, {transform_indices = @transform_2, window_bounds = array<i64: 1, 384>}, {transform_indices = @transform_3, window_bounds = array<i64: 24, 384>}]} {
    %c0_i32 = arith.constant 0 : i32
    %0 = arith.cmpi eq, %arg2, %c0_i32 : i32
    %1 = arith.extui %0 : i1 to i32
    %c0_i32_0 = arith.constant 0 : i32
    %2 = arith.cmpi ne, %1, %c0_i32_0 : i32
    scf.if %2 {
      %cst_9 = arith.constant 0.000000e+00 : f32
      %12 = vector.broadcast %cst_9 : f32 to vector<24x384xf32>
      %c0_10 = arith.constant 0 : index
      %c0_11 = arith.constant 0 : index
      %13 = vector.load %arg7[%c0_10, %c0_11] : memref<24x384xf32, #tpu.memory_space<vmem>>, vector<24x384xf32>
      tpu.vector_store %arg7[%c0_10, %c0_11], %12 {strides = array<i32>} : memref<24x384xf32, #tpu.memory_space<vmem>>, vector<24x384xf32>,
    } else {
    }
    %c0 = arith.constant 0 : index
    %c0_1 = arith.constant 0 : index
    %3 = vector.load %arg7[%c0, %c0_1] : memref<24x384xf32, #tpu.memory_space<vmem>>, vector<24x384xf32>
    %c0_2 = arith.constant 0 : index
    %c0_3 = arith.constant 0 : index
    %4 = vector.load %arg3[%c0_2, %c0_3] : memref<24x896xbf16, #tpu.memory_space<vmem>>, vector<24x896xbf16>
    %c0_4 = arith.constant 0 : index
    %c0_5 = arith.constant 0 : index
    %5 = vector.load %arg4[%c0_4, %c0_5] : memref<896x384xbf16, #tpu.memory_space<vmem>>, vector<896x384xbf16>
    %cst = arith.constant dense<0.000000e+00> : vector<24x384xf32>
    %6 = tpu.matmul %4, %5, %cst {dimension_numbers = #tpu.dot_dimension_numbers<[1], [0], [0], [1], [0, 0, 1, 1], [], []>} : vector<24x896xbf16>, vector<896x384xbf16>, vector<24x384xf32> -> vector<24x384xf32>
    %7 = arith.addf %3, %6 : vector<24x384xf32>
    %c0_6 = arith.constant 0 : index
    %c0_7 = arith.constant 0 : index
    %8 = vector.load %arg7[%c0_6, %c0_7] : memref<24x384xf32, #tpu.memory_space<vmem>>, vector<24x384xf32>
    tpu.vector_store %arg7[%c0_6, %c0_7], %7 {strides = array<i32>} : memref<24x384xf32, #tpu.memory_space<vmem>>, vector<24x384xf32>,
    %c1_i32 = arith.constant 1 : i32
    %9 = arith.cmpi eq, %arg2, %c1_i32 : i32
    %10 = arith.extui %9 : i1 to i32
    %c0_i32_8 = arith.constant 0 : i32
    %11 = arith.cmpi ne, %10, %c0_i32_8 : i32
    scf.if %11 {
      %c0_9 = arith.constant 0 : index
      %c0_10 = arith.constant 0 : index
      %12 = vector.load %arg7[%c0_9, %c0_10] : memref<24x384xf32, #tpu.memory_space<vmem>>, vector<24x384xf32>
      %c0_11 = arith.constant 0 : index
      %c0_12 = arith.constant 0 : index
      %13 = vector.load %arg5[%c0_11, %c0_12] : memref<1x384xf32, #tpu.memory_space<vmem>>, vector<1x384xf32>
      %14 = vector.broadcast %13 : vector<1x384xf32> to vector<24x384xf32>
      %15 = arith.addf %12, %14 : vector<24x384xf32>
      %cst_13 = arith.constant 0.000000e+00 : f32
      %16 = vector.broadcast %cst_13 : f32 to vector<24x384xf32>
      %17 = arith.maximumf %15, %16 : vector<24x384xf32>
      %c0_14 = arith.constant 0 : index
      %c0_15 = arith.constant 0 : index
      %18 = vector.load %arg6[%c0_14, %c0_15] : memref<24x384xf32, #tpu.memory_space<vmem>>, vector<24x384xf32>
      tpu.vector_store %arg6[%c0_14, %c0_15], %17 {strides = array<i32>} : memref<24x384xf32, #tpu.memory_space<vmem>>, vector<24x384xf32>,
    } else {
    }
    return
  }
  func.func @transform_0(%arg0: i32, %arg1: i32, %arg2: i32) -> (i32, i32) {
    %c0_i32 = arith.constant 0 : i32
    return %arg0, %arg2 : i32, i32
  }
  func.func @transform_1(%arg0: i32, %arg1: i32, %arg2: i32) -> (i32, i32) {
    %c0_i32 = arith.constant 0 : i32
    return %arg2, %arg1 : i32, i32
  }
  func.func @transform_2(%arg0: i32, %arg1: i32, %arg2: i32) -> (i32, i32) {
    %c0_i32 = arith.constant 0 : i32
    %c0_i32_0 = arith.constant 0 : i32
    return %c0_i32, %arg1 : i32, i32
  }
  func.func @transform_3(%arg0: i32, %arg1: i32, %arg2: i32) -> (i32, i32) {
    %c0_i32 = arith.constant 0 : i32
    return %arg0, %arg1 : i32, i32
  }
}

module attributes {stable_mosaic.version = 11 : i64} {
  func.func @_matmul_bias_relu_kernel(%arg0: i32, %arg1: i32, %arg2: i32, %arg3: memref<24x896xbf16, #tpu.memory_space<vmem>>, %arg4: memref<896x256xbf16, #tpu.memory_space<vmem>>, %arg5: memref<1x256xf32, #tpu.memory_space<vmem>>, %arg6: memref<24x256xf32, #tpu.memory_space<vmem>>, %arg7: memref<24x256xf32, #tpu.memory_space<vmem>>) attributes {dimension_semantics = [#tpu.dimension_semantics<parallel>, #tpu.dimension_semantics<parallel>, #tpu.dimension_semantics<arbitrary>], iteration_bounds = array<i64: 1, 1, 4>, scalar_prefetch = 0 : i64, scratch_operands = 1 : i64, tpu.core_type = #tpu.core_type<tc>, window_params = [{transform_indices = @transform_0, window_bounds = array<i64: 24, 896>}, {transform_indices = @transform_1, window_bounds = array<i64: 896, 256>}, {transform_indices = @transform_2, window_bounds = array<i64: 1, 256>}, {transform_indices = @transform_3, window_bounds = array<i64: 24, 256>}]} {
    %c0_i32 = arith.constant 0 : i32
    %0 = arith.cmpi eq, %arg2, %c0_i32 : i32
    %1 = arith.extui %0 : i1 to i32
    %c0_i32_0 = arith.constant 0 : i32
    %2 = arith.cmpi ne, %1, %c0_i32_0 : i32
    scf.if %2 {
      %cst_9 = arith.constant 0.000000e+00 : f32
      %12 = vector.broadcast %cst_9 : f32 to vector<24x256xf32>
      %c0_10 = arith.constant 0 : index
      %c0_11 = arith.constant 0 : index
      %13 = vector.load %arg7[%c0_10, %c0_11] : memref<24x256xf32, #tpu.memory_space<vmem>>, vector<24x256xf32>
      tpu.vector_store %arg7[%c0_10, %c0_11], %12 {strides = array<i32>} : memref<24x256xf32, #tpu.memory_space<vmem>>, vector<24x256xf32>,
    } else {
    }
    %c0 = arith.constant 0 : index
    %c0_1 = arith.constant 0 : index
    %3 = vector.load %arg7[%c0, %c0_1] : memref<24x256xf32, #tpu.memory_space<vmem>>, vector<24x256xf32>
    %c0_2 = arith.constant 0 : index
    %c0_3 = arith.constant 0 : index
    %4 = vector.load %arg3[%c0_2, %c0_3] : memref<24x896xbf16, #tpu.memory_space<vmem>>, vector<24x896xbf16>
    %c0_4 = arith.constant 0 : index
    %c0_5 = arith.constant 0 : index
    %5 = vector.load %arg4[%c0_4, %c0_5] : memref<896x256xbf16, #tpu.memory_space<vmem>>, vector<896x256xbf16>
    %cst = arith.constant dense<0.000000e+00> : vector<24x256xf32>
    %6 = tpu.matmul %4, %5, %cst {dimension_numbers = #tpu.dot_dimension_numbers<[1], [0], [0], [1], [0, 0, 1, 1], [], []>} : vector<24x896xbf16>, vector<896x256xbf16>, vector<24x256xf32> -> vector<24x256xf32>
    %7 = arith.addf %3, %6 : vector<24x256xf32>
    %c0_6 = arith.constant 0 : index
    %c0_7 = arith.constant 0 : index
    %8 = vector.load %arg7[%c0_6, %c0_7] : memref<24x256xf32, #tpu.memory_space<vmem>>, vector<24x256xf32>
    tpu.vector_store %arg7[%c0_6, %c0_7], %7 {strides = array<i32>} : memref<24x256xf32, #tpu.memory_space<vmem>>, vector<24x256xf32>,
    %c3_i32 = arith.constant 3 : i32
    %9 = arith.cmpi eq, %arg2, %c3_i32 : i32
    %10 = arith.extui %9 : i1 to i32
    %c0_i32_8 = arith.constant 0 : i32
    %11 = arith.cmpi ne, %10, %c0_i32_8 : i32
    scf.if %11 {
      %c0_9 = arith.constant 0 : index
      %c0_10 = arith.constant 0 : index
      %12 = vector.load %arg7[%c0_9, %c0_10] : memref<24x256xf32, #tpu.memory_space<vmem>>, vector<24x256xf32>
      %c0_11 = arith.constant 0 : index
      %c0_12 = arith.constant 0 : index
      %13 = vector.load %arg5[%c0_11, %c0_12] : memref<1x256xf32, #tpu.memory_space<vmem>>, vector<1x256xf32>
      %14 = vector.broadcast %13 : vector<1x256xf32> to vector<24x256xf32>
      %15 = arith.addf %12, %14 : vector<24x256xf32>
      %cst_13 = arith.constant 0.000000e+00 : f32
      %16 = vector.broadcast %cst_13 : f32 to vector<24x256xf32>
      %17 = arith.maximumf %15, %16 : vector<24x256xf32>
      %c0_14 = arith.constant 0 : index
      %c0_15 = arith.constant 0 : index
      %18 = vector.load %arg6[%c0_14, %c0_15] : memref<24x256xf32, #tpu.memory_space<vmem>>, vector<24x256xf32>
      tpu.vector_store %arg6[%c0_14, %c0_15], %17 {strides = array<i32>} : memref<24x256xf32, #tpu.memory_space<vmem>>, vector<24x256xf32>,
    } else {
    }
    return
  }
  func.func @transform_0(%arg0: i32, %arg1: i32, %arg2: i32) -> (i32, i32) {
    %c0_i32 = arith.constant 0 : i32
    return %arg0, %arg2 : i32, i32
  }
  func.func @transform_1(%arg0: i32, %arg1: i32, %arg2: i32) -> (i32, i32) {
    %c0_i32 = arith.constant 0 : i32
    return %arg2, %arg1 : i32, i32
  }
  func.func @transform_2(%arg0: i32, %arg1: i32, %arg2: i32) -> (i32, i32) {
    %c0_i32 = arith.constant 0 : i32
    %c0_i32_0 = arith.constant 0 : i32
    return %c0_i32, %arg1 : i32, i32
  }
  func.func @transform_3(%arg0: i32, %arg1: i32, %arg2: i32) -> (i32, i32) {
    %c0_i32 = arith.constant 0 : i32
    return %arg0, %arg1 : i32, i32
  }
}

module attributes {stable_mosaic.version = 11 : i64} {
  func.func @_matmul_bias_relu_kernel(%arg0: i32, %arg1: i32, %arg2: i32, %arg3: memref<24x768xbf16, #tpu.memory_space<vmem>>, %arg4: memref<768x256xbf16, #tpu.memory_space<vmem>>, %arg5: memref<1x256xf32, #tpu.memory_space<vmem>>, %arg6: memref<24x256xf32, #tpu.memory_space<vmem>>, %arg7: memref<24x256xf32, #tpu.memory_space<vmem>>) attributes {dimension_semantics = [#tpu.dimension_semantics<parallel>, #tpu.dimension_semantics<parallel>, #tpu.dimension_semantics<arbitrary>], iteration_bounds = array<i64: 1, 1, 3>, scalar_prefetch = 0 : i64, scratch_operands = 1 : i64, tpu.core_type = #tpu.core_type<tc>, window_params = [{transform_indices = @transform_0, window_bounds = array<i64: 24, 768>}, {transform_indices = @transform_1, window_bounds = array<i64: 768, 256>}, {transform_indices = @transform_2, window_bounds = array<i64: 1, 256>}, {transform_indices = @transform_3, window_bounds = array<i64: 24, 256>}]} {
    %c0_i32 = arith.constant 0 : i32
    %0 = arith.cmpi eq, %arg2, %c0_i32 : i32
    %1 = arith.extui %0 : i1 to i32
    %c0_i32_0 = arith.constant 0 : i32
    %2 = arith.cmpi ne, %1, %c0_i32_0 : i32
    scf.if %2 {
      %cst_9 = arith.constant 0.000000e+00 : f32
      %12 = vector.broadcast %cst_9 : f32 to vector<24x256xf32>
      %c0_10 = arith.constant 0 : index
      %c0_11 = arith.constant 0 : index
      %13 = vector.load %arg7[%c0_10, %c0_11] : memref<24x256xf32, #tpu.memory_space<vmem>>, vector<24x256xf32>
      tpu.vector_store %arg7[%c0_10, %c0_11], %12 {strides = array<i32>} : memref<24x256xf32, #tpu.memory_space<vmem>>, vector<24x256xf32>,
    } else {
    }
    %c0 = arith.constant 0 : index
    %c0_1 = arith.constant 0 : index
    %3 = vector.load %arg7[%c0, %c0_1] : memref<24x256xf32, #tpu.memory_space<vmem>>, vector<24x256xf32>
    %c0_2 = arith.constant 0 : index
    %c0_3 = arith.constant 0 : index
    %4 = vector.load %arg3[%c0_2, %c0_3] : memref<24x768xbf16, #tpu.memory_space<vmem>>, vector<24x768xbf16>
    %c0_4 = arith.constant 0 : index
    %c0_5 = arith.constant 0 : index
    %5 = vector.load %arg4[%c0_4, %c0_5] : memref<768x256xbf16, #tpu.memory_space<vmem>>, vector<768x256xbf16>
    %cst = arith.constant dense<0.000000e+00> : vector<24x256xf32>
    %6 = tpu.matmul %4, %5, %cst {dimension_numbers = #tpu.dot_dimension_numbers<[1], [0], [0], [1], [0, 0, 1, 1], [], []>} : vector<24x768xbf16>, vector<768x256xbf16>, vector<24x256xf32> -> vector<24x256xf32>
    %7 = arith.addf %3, %6 : vector<24x256xf32>
    %c0_6 = arith.constant 0 : index
    %c0_7 = arith.constant 0 : index
    %8 = vector.load %arg7[%c0_6, %c0_7] : memref<24x256xf32, #tpu.memory_space<vmem>>, vector<24x256xf32>
    tpu.vector_store %arg7[%c0_6, %c0_7], %7 {strides = array<i32>} : memref<24x256xf32, #tpu.memory_space<vmem>>, vector<24x256xf32>,
    %c2_i32 = arith.constant 2 : i32
    %9 = arith.cmpi eq, %arg2, %c2_i32 : i32
    %10 = arith.extui %9 : i1 to i32
    %c0_i32_8 = arith.constant 0 : i32
    %11 = arith.cmpi ne, %10, %c0_i32_8 : i32
    scf.if %11 {
      %c0_9 = arith.constant 0 : index
      %c0_10 = arith.constant 0 : index
      %12 = vector.load %arg7[%c0_9, %c0_10] : memref<24x256xf32, #tpu.memory_space<vmem>>, vector<24x256xf32>
      %c0_11 = arith.constant 0 : index
      %c0_12 = arith.constant 0 : index
      %13 = vector.load %arg5[%c0_11, %c0_12] : memref<1x256xf32, #tpu.memory_space<vmem>>, vector<1x256xf32>
      %14 = vector.broadcast %13 : vector<1x256xf32> to vector<24x256xf32>
      %15 = arith.addf %12, %14 : vector<24x256xf32>
      %cst_13 = arith.constant 0.000000e+00 : f32
      %16 = vector.broadcast %cst_13 : f32 to vector<24x256xf32>
      %17 = arith.maximumf %15, %16 : vector<24x256xf32>
      %c0_14 = arith.constant 0 : index
      %c0_15 = arith.constant 0 : index
      %18 = vector.load %arg6[%c0_14, %c0_15] : memref<24x256xf32, #tpu.memory_space<vmem>>, vector<24x256xf32>
      tpu.vector_store %arg6[%c0_14, %c0_15], %17 {strides = array<i32>} : memref<24x256xf32, #tpu.memory_space<vmem>>, vector<24x256xf32>,
    } else {
    }
    return
  }
  func.func @transform_0(%arg0: i32, %arg1: i32, %arg2: i32) -> (i32, i32) {
    %c0_i32 = arith.constant 0 : i32
    return %arg0, %arg2 : i32, i32
  }
  func.func @transform_1(%arg0: i32, %arg1: i32, %arg2: i32) -> (i32, i32) {
    %c0_i32 = arith.constant 0 : i32
    return %arg2, %arg1 : i32, i32
  }
  func.func @transform_2(%arg0: i32, %arg1: i32, %arg2: i32) -> (i32, i32) {
    %c0_i32 = arith.constant 0 : i32
    %c0_i32_0 = arith.constant 0 : i32
    return %c0_i32, %arg1 : i32, i32
  }
  func.func @transform_3(%arg0: i32, %arg1: i32, %arg2: i32) -> (i32, i32) {
    %c0_i32 = arith.constant 0 : i32
    return %arg0, %arg1 : i32, i32
  }
}

module attributes {stable_mosaic.version = 11 : i64} {
  func.func @_maxpool3_s2_kernel(%arg0: i32, %arg1: memref<1x2x2x256xf32, #tpu.memory_space<vmem>>, %arg2: memref<1x2x1x256xf32, #tpu.memory_space<vmem>>, %arg3: memref<1x1x2x256xf32, #tpu.memory_space<vmem>>, %arg4: memref<1x1x1x256xf32, #tpu.memory_space<vmem>>, %arg5: memref<1x1x1x256xf32, #tpu.memory_space<vmem>>) attributes {dimension_semantics = [#tpu.dimension_semantics<parallel>], iteration_bounds = array<i64: 2>, scalar_prefetch = 0 : i64, scratch_operands = 0 : i64, tpu.core_type = #tpu.core_type<tc>, window_params = [{transform_indices = @transform_0, window_bounds = array<i64: 1, 2, 2, 256>}, {transform_indices = @transform_1, window_bounds = array<i64: 1, 2, 1, 256>}, {transform_indices = @transform_2, window_bounds = array<i64: 1, 1, 2, 256>}, {transform_indices = @transform_3, window_bounds = array<i64: 1, 1, 1, 256>}, {transform_indices = @transform_4, window_bounds = array<i64: 1, 1, 1, 256>}]} {
    %c0 = arith.constant 0 : index
    %c0_0 = arith.constant 0 : index
    %c0_1 = arith.constant 0 : index
    %c0_2 = arith.constant 0 : index
    %0 = vector.load %arg1[%c0, %c0_0, %c0_1, %c0_2] : memref<1x2x2x256xf32, #tpu.memory_space<vmem>>, vector<1x2x1x256xf32>
    %c0_3 = arith.constant 0 : index
    %c0_4 = arith.constant 0 : index
    %c1 = arith.constant 1 : index
    %c0_5 = arith.constant 0 : index
    %1 = vector.load %arg1[%c0_3, %c0_4, %c1, %c0_5] : memref<1x2x2x256xf32, #tpu.memory_space<vmem>>, vector<1x2x1x256xf32>
    %2 = arith.maximumf %0, %1 : vector<1x2x1x256xf32>
    %c0_6 = arith.constant 0 : index
    %c0_7 = arith.constant 0 : index
    %c0_8 = arith.constant 0 : index
    %c0_9 = arith.constant 0 : index
    %3 = vector.load %arg2[%c0_6, %c0_7, %c0_8, %c0_9] : memref<1x2x1x256xf32, #tpu.memory_space<vmem>>, vector<1x2x1x256xf32>
    %4 = arith.maximumf %2, %3 : vector<1x2x1x256xf32>
    %c0_10 = arith.constant 0 : index
    %c0_11 = arith.constant 0 : index
    %c0_12 = arith.constant 0 : index
    %c0_13 = arith.constant 0 : index
    %5 = vector.load %arg3[%c0_10, %c0_11, %c0_12, %c0_13] : memref<1x1x2x256xf32, #tpu.memory_space<vmem>>, vector<1x1x1x256xf32>
    %c0_14 = arith.constant 0 : index
    %c0_15 = arith.constant 0 : index
    %c1_16 = arith.constant 1 : index
    %c0_17 = arith.constant 0 : index
    %6 = vector.load %arg3[%c0_14, %c0_15, %c1_16, %c0_17] : memref<1x1x2x256xf32, #tpu.memory_space<vmem>>, vector<1x1x1x256xf32>
    %7 = arith.maximumf %5, %6 : vector<1x1x1x256xf32>
    %c0_18 = arith.constant 0 : index
    %c0_19 = arith.constant 0 : index
    %c0_20 = arith.constant 0 : index
    %c0_21 = arith.constant 0 : index
    %8 = vector.load %arg4[%c0_18, %c0_19, %c0_20, %c0_21] : memref<1x1x1x256xf32, #tpu.memory_space<vmem>>, vector<1x1x1x256xf32>
    %9 = arith.maximumf %7, %8 : vector<1x1x1x256xf32>
    %10 = vector.extract_strided_slice %4 {offsets = [0, 0, 0, 0], sizes = [1, 1, 1, 256], strides = [1, 1, 1, 1]} : vector<1x2x1x256xf32> to vector<1x1x1x256xf32>
    %11 = vector.extract_strided_slice %4 {offsets = [0, 1, 0, 0], sizes = [1, 1, 1, 256], strides = [1, 1, 1, 1]} : vector<1x2x1x256xf32> to vector<1x1x1x256xf32>
    %12 = arith.maximumf %10, %11 : vector<1x1x1x256xf32>
    %13 = arith.maximumf %12, %9 : vector<1x1x1x256xf32>
    %c0_22 = arith.constant 0 : index
    %c0_23 = arith.constant 0 : index
    %c0_24 = arith.constant 0 : index
    %c0_25 = arith.constant 0 : index
    %14 = vector.load %arg5[%c0_22, %c0_23, %c0_24, %c0_25] : memref<1x1x1x256xf32, #tpu.memory_space<vmem>>, vector<1x1x1x256xf32>
    tpu.vector_store %arg5[%c0_22, %c0_23, %c0_24, %c0_25], %13 {strides = array<i32>} : memref<1x1x1x256xf32, #tpu.memory_space<vmem>>, vector<1x1x1x256xf32>,
    return
  }
  func.func @transform_0(%arg0: i32) -> (i32, i32, i32, i32) {
    %c0_i32 = arith.constant 0 : i32
    %c0_i32_0 = arith.constant 0 : i32
    %c0_i32_1 = arith.constant 0 : i32
    %c0_i32_2 = arith.constant 0 : i32
    return %arg0, %c0_i32, %c0_i32_0, %c0_i32_1 : i32, i32, i32, i32
  }
  func.func @transform_1(%arg0: i32) -> (i32, i32, i32, i32) {
    %c0_i32 = arith.constant 0 : i32
    %c0_i32_0 = arith.constant 0 : i32
    %c0_i32_1 = arith.constant 0 : i32
    %c0_i32_2 = arith.constant 0 : i32
    return %arg0, %c0_i32, %c0_i32_0, %c0_i32_1 : i32, i32, i32, i32
  }
  func.func @transform_2(%arg0: i32) -> (i32, i32, i32, i32) {
    %c0_i32 = arith.constant 0 : i32
    %c0_i32_0 = arith.constant 0 : i32
    %c0_i32_1 = arith.constant 0 : i32
    %c0_i32_2 = arith.constant 0 : i32
    return %arg0, %c0_i32, %c0_i32_0, %c0_i32_1 : i32, i32, i32, i32
  }
  func.func @transform_3(%arg0: i32) -> (i32, i32, i32, i32) {
    %c0_i32 = arith.constant 0 : i32
    %c0_i32_0 = arith.constant 0 : i32
    %c0_i32_1 = arith.constant 0 : i32
    %c0_i32_2 = arith.constant 0 : i32
    return %arg0, %c0_i32, %c0_i32_0, %c0_i32_1 : i32, i32, i32, i32
  }
  func.func @transform_4(%arg0: i32) -> (i32, i32, i32, i32) {
    %c0_i32 = arith.constant 0 : i32
    %c0_i32_0 = arith.constant 0 : i32
    %c0_i32_1 = arith.constant 0 : i32
    %c0_i32_2 = arith.constant 0 : i32
    return %arg0, %c0_i32, %c0_i32_0, %c0_i32_1 : i32, i32, i32, i32
  }
}

module attributes {stable_mosaic.version = 11 : i64} {
  func.func @_adaptive_avgpool_kernel(%arg0: i32, %arg1: memref<1x1x1x256xf32, #tpu.memory_space<vmem>>, %arg2: memref<1x6x6x256xf32, #tpu.memory_space<vmem>>) attributes {dimension_semantics = [#tpu.dimension_semantics<parallel>], iteration_bounds = array<i64: 2>, scalar_prefetch = 0 : i64, scratch_operands = 0 : i64, tpu.core_type = #tpu.core_type<tc>, window_params = [{transform_indices = @transform_0, window_bounds = array<i64: 1, 1, 1, 256>}, {transform_indices = @transform_1, window_bounds = array<i64: 1, 6, 6, 256>}]} {
    %c0 = arith.constant 0 : index
    %c0_0 = arith.constant 0 : index
    %c0_1 = arith.constant 0 : index
    %c0_2 = arith.constant 0 : index
    %0 = vector.load %arg1[%c0, %c0_0, %c0_1, %c0_2] : memref<1x1x1x256xf32, #tpu.memory_space<vmem>>, vector<1x1x1x256xf32>
    %cst = arith.constant dense<0.000000e+00> : vector<1x256xf32>
    %1 = vector.multi_reduction <add>, %0, %cst [1, 2] : vector<1x1x1x256xf32> to vector<1x256xf32>
    %2 = vector.shape_cast %1 : vector<1x256xf32> to vector<1x1x1x256xf32>
    %cst_3 = arith.constant 1.000000e+00 : f32
    %3 = vector.broadcast %cst_3 : f32 to vector<1x1x1x256xf32>
    %4 = arith.divf %2, %3 : vector<1x1x1x256xf32>
    %c0_4 = arith.constant 0 : index
    %c0_5 = arith.constant 0 : index
    %c0_6 = arith.constant 0 : index
    %c0_7 = arith.constant 0 : index
    %5 = vector.load %arg2[%c0_4, %c0_5, %c0_6, %c0_7] : memref<1x6x6x256xf32, #tpu.memory_space<vmem>>, vector<1x1x1x256xf32>
    tpu.vector_store %arg2[%c0_4, %c0_5, %c0_6, %c0_7], %4 {strides = array<i32>} : memref<1x6x6x256xf32, #tpu.memory_space<vmem>>, vector<1x1x1x256xf32>,
    %c0_8 = arith.constant 0 : index
    %c0_9 = arith.constant 0 : index
    %c0_10 = arith.constant 0 : index
    %c0_11 = arith.constant 0 : index
    %6 = vector.load %arg1[%c0_8, %c0_9, %c0_10, %c0_11] : memref<1x1x1x256xf32, #tpu.memory_space<vmem>>, vector<1x1x1x256xf32>
    %cst_12 = arith.constant dense<0.000000e+00> : vector<1x256xf32>
    %7 = vector.multi_reduction <add>, %6, %cst_12 [1, 2] : vector<1x1x1x256xf32> to vector<1x256xf32>
    %8 = vector.shape_cast %7 : vector<1x256xf32> to vector<1x1x1x256xf32>
    %cst_13 = arith.constant 1.000000e+00 : f32
    %9 = vector.broadcast %cst_13 : f32 to vector<1x1x1x256xf32>
    %10 = arith.divf %8, %9 : vector<1x1x1x256xf32>
    %c0_14 = arith.constant 0 : index
    %c0_15 = arith.constant 0 : index
    %c1 = arith.constant 1 : index
    %c0_16 = arith.constant 0 : index
    %11 = vector.load %arg2[%c0_14, %c0_15, %c1, %c0_16] : memref<1x6x6x256xf32, #tpu.memory_space<vmem>>, vector<1x1x1x256xf32>
    tpu.vector_store %arg2[%c0_14, %c0_15, %c1, %c0_16], %10 {strides = array<i32>} : memref<1x6x6x256xf32, #tpu.memory_space<vmem>>, vector<1x1x1x256xf32>,
    %c0_17 = arith.constant 0 : index
    %c0_18 = arith.constant 0 : index
    %c0_19 = arith.constant 0 : index
    %c0_20 = arith.constant 0 : index
    %12 = vector.load %arg1[%c0_17, %c0_18, %c0_19, %c0_20] : memref<1x1x1x256xf32, #tpu.memory_space<vmem>>, vector<1x1x1x256xf32>
    %cst_21 = arith.constant dense<0.000000e+00> : vector<1x256xf32>
    %13 = vector.multi_reduction <add>, %12, %cst_21 [1, 2] : vector<1x1x1x256xf32> to vector<1x256xf32>
    %14 = vector.shape_cast %13 : vector<1x256xf32> to vector<1x1x1x256xf32>
    %cst_22 = arith.constant 1.000000e+00 : f32
    %15 = vector.broadcast %cst_22 : f32 to vector<1x1x1x256xf32>
    %16 = arith.divf %14, %15 : vector<1x1x1x256xf32>
    %c0_23 = arith.constant 0 : index
    %c0_24 = arith.constant 0 : index
    %c2 = arith.constant 2 : index
    %c0_25 = arith.constant 0 : index
    %17 = vector.load %arg2[%c0_23, %c0_24, %c2, %c0_25] : memref<1x6x6x256xf32, #tpu.memory_space<vmem>>, vector<1x1x1x256xf32>
    tpu.vector_store %arg2[%c0_23, %c0_24, %c2, %c0_25], %16 {strides = array<i32>} : memref<1x6x6x256xf32, #tpu.memory_space<vmem>>, vector<1x1x1x256xf32>,
    %c0_26 = arith.constant 0 : index
    %c0_27 = arith.constant 0 : index
    %c0_28 = arith.constant 0 : index
    %c0_29 = arith.constant 0 : index
    %18 = vector.load %arg1[%c0_26, %c0_27, %c0_28, %c0_29] : memref<1x1x1x256xf32, #tpu.memory_space<vmem>>, vector<1x1x1x256xf32>
    %cst_30 = arith.constant dense<0.000000e+00> : vector<1x256xf32>
    %19 = vector.multi_reduction <add>, %18, %cst_30 [1, 2] : vector<1x1x1x256xf32> to vector<1x256xf32>
    %20 = vector.shape_cast %19 : vector<1x256xf32> to vector<1x1x1x256xf32>
    %cst_31 = arith.constant 1.000000e+00 : f32
    %21 = vector.broadcast %cst_31 : f32 to vector<1x1x1x256xf32>
    %22 = arith.divf %20, %21 : vector<1x1x1x256xf32>
    %c0_32 = arith.constant 0 : index
    %c0_33 = arith.constant 0 : index
    %c3 = arith.constant 3 : index
    %c0_34 = arith.constant 0 : index
    %23 = vector.load %arg2[%c0_32, %c0_33, %c3, %c0_34] : memref<1x6x6x256xf32, #tpu.memory_space<vmem>>, vector<1x1x1x256xf32>
    tpu.vector_store %arg2[%c0_32, %c0_33, %c3, %c0_34], %22 {strides = array<i32>} : memref<1x6x6x256xf32, #tpu.memory_space<vmem>>, vector<1x1x1x256xf32>,
    %c0_35 = arith.constant 0 : index
    %c0_36 = arith.constant 0 : index
    %c0_37 = arith.constant 0 : index
    %c0_38 = arith.constant 0 : index
    %24 = vector.load %arg1[%c0_35, %c0_36, %c0_37, %c0_38] : memref<1x1x1x256xf32, #tpu.memory_space<vmem>>, vector<1x1x1x256xf32>
    %cst_39 = arith.constant dense<0.000000e+00> : vector<1x256xf32>
    %25 = vector.multi_reduction <add>, %24, %cst_39 [1, 2] : vector<1x1x1x256xf32> to vector<1x256xf32>
    %26 = vector.shape_cast %25 : vector<1x256xf32> to vector<1x1x1x256xf32>
    %cst_40 = arith.constant 1.000000e+00 : f32
    %27 = vector.broadcast %cst_40 : f32 to vector<1x1x1x256xf32>
    %28 = arith.divf %26, %27 : vector<1x1x1x256xf32>
    %c0_41 = arith.constant 0 : index
    %c0_42 = arith.constant 0 : index
    %c4 = arith.constant 4 : index
    %c0_43 = arith.constant 0 : index
    %29 = vector.load %arg2[%c0_41, %c0_42, %c4, %c0_43] : memref<1x6x6x256xf32, #tpu.memory_space<vmem>>, vector<1x1x1x256xf32>
    tpu.vector_store %arg2[%c0_41, %c0_42, %c4, %c0_43], %28 {strides = array<i32>} : memref<1x6x6x256xf32, #tpu.memory_space<vmem>>, vector<1x1x1x256xf32>,
    %c0_44 = arith.constant 0 : index
    %c0_45 = arith.constant 0 : index
    %c0_46 = arith.constant 0 : index
    %c0_47 = arith.constant 0 : index
    %30 = vector.load %arg1[%c0_44, %c0_45, %c0_46, %c0_47] : memref<1x1x1x256xf32, #tpu.memory_space<vmem>>, vector<1x1x1x256xf32>
    %cst_48 = arith.constant dense<0.000000e+00> : vector<1x256xf32>
    %31 = vector.multi_reduction <add>, %30, %cst_48 [1, 2] : vector<1x1x1x256xf32> to vector<1x256xf32>
    %32 = vector.shape_cast %31 : vector<1x256xf32> to vector<1x1x1x256xf32>
    %cst_49 = arith.constant 1.000000e+00 : f32
    %33 = vector.broadcast %cst_49 : f32 to vector<1x1x1x256xf32>
    %34 = arith.divf %32, %33 : vector<1x1x1x256xf32>
    %c0_50 = arith.constant 0 : index
    %c0_51 = arith.constant 0 : index
    %c5 = arith.constant 5 : index
    %c0_52 = arith.constant 0 : index
    %35 = vector.load %arg2[%c0_50, %c0_51, %c5, %c0_52] : memref<1x6x6x256xf32, #tpu.memory_space<vmem>>, vector<1x1x1x256xf32>
    tpu.vector_store %arg2[%c0_50, %c0_51, %c5, %c0_52], %34 {strides = array<i32>} : memref<1x6x6x256xf32, #tpu.memory_space<vmem>>, vector<1x1x1x256xf32>,
    %c0_53 = arith.constant 0 : index
    %c0_54 = arith.constant 0 : index
    %c0_55 = arith.constant 0 : index
    %c0_56 = arith.constant 0 : index
    %36 = vector.load %arg1[%c0_53, %c0_54, %c0_55, %c0_56] : memref<1x1x1x256xf32, #tpu.memory_space<vmem>>, vector<1x1x1x256xf32>
    %cst_57 = arith.constant dense<0.000000e+00> : vector<1x256xf32>
    %37 = vector.multi_reduction <add>, %36, %cst_57 [1, 2] : vector<1x1x1x256xf32> to vector<1x256xf32>
    %38 = vector.shape_cast %37 : vector<1x256xf32> to vector<1x1x1x256xf32>
    %cst_58 = arith.constant 1.000000e+00 : f32
    %39 = vector.broadcast %cst_58 : f32 to vector<1x1x1x256xf32>
    %40 = arith.divf %38, %39 : vector<1x1x1x256xf32>
    %c0_59 = arith.constant 0 : index
    %c1_60 = arith.constant 1 : index
    %c0_61 = arith.constant 0 : index
    %c0_62 = arith.constant 0 : index
    %41 = vector.load %arg2[%c0_59, %c1_60, %c0_61, %c0_62] : memref<1x6x6x256xf32, #tpu.memory_space<vmem>>, vector<1x1x1x256xf32>
    tpu.vector_store %arg2[%c0_59, %c1_60, %c0_61, %c0_62], %40 {strides = array<i32>} : memref<1x6x6x256xf32, #tpu.memory_space<vmem>>, vector<1x1x1x256xf32>,
    %c0_63 = arith.constant 0 : index
    %c0_64 = arith.constant 0 : index
    %c0_65 = arith.constant 0 : index
    %c0_66 = arith.constant 0 : index
    %42 = vector.load %arg1[%c0_63, %c0_64, %c0_65, %c0_66] : memref<1x1x1x256xf32, #tpu.memory_space<vmem>>, vector<1x1x1x256xf32>
    %cst_67 = arith.constant dense<0.000000e+00> : vector<1x256xf32>
    %43 = vector.multi_reduction <add>, %42, %cst_67 [1, 2] : vector<1x1x1x256xf32> to vector<1x256xf32>
    %44 = vector.shape_cast %43 : vector<1x256xf32> to vector<1x1x1x256xf32>
    %cst_68 = arith.constant 1.000000e+00 : f32
    %45 = vector.broadcast %cst_68 : f32 to vector<1x1x1x256xf32>
    %46 = arith.divf %44, %45 : vector<1x1x1x256xf32>
    %c0_69 = arith.constant 0 : index
    %c1_70 = arith.constant 1 : index
    %c1_71 = arith.constant 1 : index
    %c0_72 = arith.constant 0 : index
    %47 = vector.load %arg2[%c0_69, %c1_70, %c1_71, %c0_72] : memref<1x6x6x256xf32, #tpu.memory_space<vmem>>, vector<1x1x1x256xf32>
    tpu.vector_store %arg2[%c0_69, %c1_70, %c1_71, %c0_72], %46 {strides = array<i32>} : memref<1x6x6x256xf32, #tpu.memory_space<vmem>>, vector<1x1x1x256xf32>,
    %c0_73 = arith.constant 0 : index
    %c0_74 = arith.constant 0 : index
    %c0_75 = arith.constant 0 : index
    %c0_76 = arith.constant 0 : index
    %48 = vector.load %arg1[%c0_73, %c0_74, %c0_75, %c0_76] : memref<1x1x1x256xf32, #tpu.memory_space<vmem>>, vector<1x1x1x256xf32>
    %cst_77 = arith.constant dense<0.000000e+00> : vector<1x256xf32>
    %49 = vector.multi_reduction <add>, %48, %cst_77 [1, 2] : vector<1x1x1x256xf32> to vector<1x256xf32>
    %50 = vector.shape_cast %49 : vector<1x256xf32> to vector<1x1x1x256xf32>
    %cst_78 = arith.constant 1.000000e+00 : f32
    %51 = vector.broadcast %cst_78 : f32 to vector<1x1x1x256xf32>
    %52 = arith.divf %50, %51 : vector<1x1x1x256xf32>
    %c0_79 = arith.constant 0 : index
    %c1_80 = arith.constant 1 : index
    %c2_81 = arith.constant 2 : index
    %c0_82 = arith.constant 0 : index
    %53 = vector.load %arg2[%c0_79, %c1_80, %c2_81, %c0_82] : memref<1x6x6x256xf32, #tpu.memory_space<vmem>>, vector<1x1x1x256xf32>
    tpu.vector_store %arg2[%c0_79, %c1_80, %c2_81, %c0_82], %52 {strides = array<i32>} : memref<1x6x6x256xf32, #tpu.memory_space<vmem>>, vector<1x1x1x256xf32>,
    %c0_83 = arith.constant 0 : index
    %c0_84 = arith.constant 0 : index
    %c0_85 = arith.constant 0 : index
    %c0_86 = arith.constant 0 : index
    %54 = vector.load %arg1[%c0_83, %c0_84, %c0_85, %c0_86] : memref<1x1x1x256xf32, #tpu.memory_space<vmem>>, vector<1x1x1x256xf32>
    %cst_87 = arith.constant dense<0.000000e+00> : vector<1x256xf32>
    %55 = vector.multi_reduction <add>, %54, %cst_87 [1, 2] : vector<1x1x1x256xf32> to vector<1x256xf32>
    %56 = vector.shape_cast %55 : vector<1x256xf32> to vector<1x1x1x256xf32>
    %cst_88 = arith.constant 1.000000e+00 : f32
    %57 = vector.broadcast %cst_88 : f32 to vector<1x1x1x256xf32>
    %58 = arith.divf %56, %57 : vector<1x1x1x256xf32>
    %c0_89 = arith.constant 0 : index
    %c1_90 = arith.constant 1 : index
    %c3_91 = arith.constant 3 : index
    %c0_92 = arith.constant 0 : index
    %59 = vector.load %arg2[%c0_89, %c1_90, %c3_91, %c0_92] : memref<1x6x6x256xf32, #tpu.memory_space<vmem>>, vector<1x1x1x256xf32>
    tpu.vector_store %arg2[%c0_89, %c1_90, %c3_91, %c0_92], %58 {strides = array<i32>} : memref<1x6x6x256xf32, #tpu.memory_space<vmem>>, vector<1x1x1x256xf32>,
    %c0_93 = arith.constant 0 : index
    %c0_94 = arith.constant 0 : index
    %c0_95 = arith.constant 0 : index
    %c0_96 = arith.constant 0 : index
    %60 = vector.load %arg1[%c0_93, %c0_94, %c0_95, %c0_96] : memref<1x1x1x256xf32, #tpu.memory_space<vmem>>, vector<1x1x1x256xf32>
    %cst_97 = arith.constant dense<0.000000e+00> : vector<1x256xf32>
    %61 = vector.multi_reduction <add>, %60, %cst_97 [1, 2] : vector<1x1x1x256xf32> to vector<1x256xf32>
    %62 = vector.shape_cast %61 : vector<1x256xf32> to vector<1x1x1x256xf32>
    %cst_98 = arith.constant 1.000000e+00 : f32
    %63 = vector.broadcast %cst_98 : f32 to vector<1x1x1x256xf32>
    %64 = arith.divf %62, %63 : vector<1x1x1x256xf32>
    %c0_99 = arith.constant 0 : index
    %c1_100 = arith.constant 1 : index
    %c4_101 = arith.constant 4 : index
    %c0_102 = arith.constant 0 : index
    %65 = vector.load %arg2[%c0_99, %c1_100, %c4_101, %c0_102] : memref<1x6x6x256xf32, #tpu.memory_space<vmem>>, vector<1x1x1x256xf32>
    tpu.vector_store %arg2[%c0_99, %c1_100, %c4_101, %c0_102], %64 {strides = array<i32>} : memref<1x6x6x256xf32, #tpu.memory_space<vmem>>, vector<1x1x1x256xf32>,
    %c0_103 = arith.constant 0 : index
    %c0_104 = arith.constant 0 : index
    %c0_105 = arith.constant 0 : index
    %c0_106 = arith.constant 0 : index
    %66 = vector.load %arg1[%c0_103, %c0_104, %c0_105, %c0_106] : memref<1x1x1x256xf32, #tpu.memory_space<vmem>>, vector<1x1x1x256xf32>
    %cst_107 = arith.constant dense<0.000000e+00> : vector<1x256xf32>
    %67 = vector.multi_reduction <add>, %66, %cst_107 [1, 2] : vector<1x1x1x256xf32> to vector<1x256xf32>
    %68 = vector.shape_cast %67 : vector<1x256xf32> to vector<1x1x1x256xf32>
    %cst_108 = arith.constant 1.000000e+00 : f32
    %69 = vector.broadcast %cst_108 : f32 to vector<1x1x1x256xf32>
    %70 = arith.divf %68, %69 : vector<1x1x1x256xf32>
    %c0_109 = arith.constant 0 : index
    %c1_110 = arith.constant 1 : index
    %c5_111 = arith.constant 5 : index
    %c0_112 = arith.constant 0 : index
    %71 = vector.load %arg2[%c0_109, %c1_110, %c5_111, %c0_112] : memref<1x6x6x256xf32, #tpu.memory_space<vmem>>, vector<1x1x1x256xf32>
    tpu.vector_store %arg2[%c0_109, %c1_110, %c5_111, %c0_112], %70 {strides = array<i32>} : memref<1x6x6x256xf32, #tpu.memory_space<vmem>>, vector<1x1x1x256xf32>,
    %c0_113 = arith.constant 0 : index
    %c0_114 = arith.constant 0 : index
    %c0_115 = arith.constant 0 : index
    %c0_116 = arith.constant 0 : index
    %72 = vector.load %arg1[%c0_113, %c0_114, %c0_115, %c0_116] : memref<1x1x1x256xf32, #tpu.memory_space<vmem>>, vector<1x1x1x256xf32>
    %cst_117 = arith.constant dense<0.000000e+00> : vector<1x256xf32>
    %73 = vector.multi_reduction <add>, %72, %cst_117 [1, 2] : vector<1x1x1x256xf32> to vector<1x256xf32>
    %74 = vector.shape_cast %73 : vector<1x256xf32> to vector<1x1x1x256xf32>
    %cst_118 = arith.constant 1.000000e+00 : f32
    %75 = vector.broadcast %cst_118 : f32 to vector<1x1x1x256xf32>
    %76 = arith.divf %74, %75 : vector<1x1x1x256xf32>
    %c0_119 = arith.constant 0 : index
    %c2_120 = arith.constant 2 : index
    %c0_121 = arith.constant 0 : index
    %c0_122 = arith.constant 0 : index
    %77 = vector.load %arg2[%c0_119, %c2_120, %c0_121, %c0_122] : memref<1x6x6x256xf32, #tpu.memory_space<vmem>>, vector<1x1x1x256xf32>
    tpu.vector_store %arg2[%c0_119, %c2_120, %c0_121, %c0_122], %76 {strides = array<i32>} : memref<1x6x6x256xf32, #tpu.memory_space<vmem>>, vector<1x1x1x256xf32>,
    %c0_123 = arith.constant 0 : index
    %c0_124 = arith.constant 0 : index
    %c0_125 = arith.constant 0 : index
    %c0_126 = arith.constant 0 : index
    %78 = vector.load %arg1[%c0_123, %c0_124, %c0_125, %c0_126] : memref<1x1x1x256xf32, #tpu.memory_space<vmem>>, vector<1x1x1x256xf32>
    %cst_127 = arith.constant dense<0.000000e+00> : vector<1x256xf32>
    %79 = vector.multi_reduction <add>, %78, %cst_127 [1, 2] : vector<1x1x1x256xf32> to vector<1x256xf32>
    %80 = vector.shape_cast %79 : vector<1x256xf32> to vector<1x1x1x256xf32>
    %cst_128 = arith.constant 1.000000e+00 : f32
    %81 = vector.broadcast %cst_128 : f32 to vector<1x1x1x256xf32>
    %82 = arith.divf %80, %81 : vector<1x1x1x256xf32>
    %c0_129 = arith.constant 0 : index
    %c2_130 = arith.constant 2 : index
    %c1_131 = arith.constant 1 : index
    %c0_132 = arith.constant 0 : index
    %83 = vector.load %arg2[%c0_129, %c2_130, %c1_131, %c0_132] : memref<1x6x6x256xf32, #tpu.memory_space<vmem>>, vector<1x1x1x256xf32>
    tpu.vector_store %arg2[%c0_129, %c2_130, %c1_131, %c0_132], %82 {strides = array<i32>} : memref<1x6x6x256xf32, #tpu.memory_space<vmem>>, vector<1x1x1x256xf32>,
    %c0_133 = arith.constant 0 : index
    %c0_134 = arith.constant 0 : index
    %c0_135 = arith.constant 0 : index
    %c0_136 = arith.constant 0 : index
    %84 = vector.load %arg1[%c0_133, %c0_134, %c0_135, %c0_136] : memref<1x1x1x256xf32, #tpu.memory_space<vmem>>, vector<1x1x1x256xf32>
    %cst_137 = arith.constant dense<0.000000e+00> : vector<1x256xf32>
    %85 = vector.multi_reduction <add>, %84, %cst_137 [1, 2] : vector<1x1x1x256xf32> to vector<1x256xf32>
    %86 = vector.shape_cast %85 : vector<1x256xf32> to vector<1x1x1x256xf32>
    %cst_138 = arith.constant 1.000000e+00 : f32
    %87 = vector.broadcast %cst_138 : f32 to vector<1x1x1x256xf32>
    %88 = arith.divf %86, %87 : vector<1x1x1x256xf32>
    %c0_139 = arith.constant 0 : index
    %c2_140 = arith.constant 2 : index
    %c2_141 = arith.constant 2 : index
    %c0_142 = arith.constant 0 : index
    %89 = vector.load %arg2[%c0_139, %c2_140, %c2_141, %c0_142] : memref<1x6x6x256xf32, #tpu.memory_space<vmem>>, vector<1x1x1x256xf32>
    tpu.vector_store %arg2[%c0_139, %c2_140, %c2_141, %c0_142], %88 {strides = array<i32>} : memref<1x6x6x256xf32, #tpu.memory_space<vmem>>, vector<1x1x1x256xf32>,
    %c0_143 = arith.constant 0 : index
    %c0_144 = arith.constant 0 : index
    %c0_145 = arith.constant 0 : index
    %c0_146 = arith.constant 0 : index
    %90 = vector.load %arg1[%c0_143, %c0_144, %c0_145, %c0_146] : memref<1x1x1x256xf32, #tpu.memory_space<vmem>>, vector<1x1x1x256xf32>
    %cst_147 = arith.constant dense<0.000000e+00> : vector<1x256xf32>
    %91 = vector.multi_reduction <add>, %90, %cst_147 [1, 2] : vector<1x1x1x256xf32> to vector<1x256xf32>
    %92 = vector.shape_cast %91 : vector<1x256xf32> to vector<1x1x1x256xf32>
    %cst_148 = arith.constant 1.000000e+00 : f32
    %93 = vector.broadcast %cst_148 : f32 to vector<1x1x1x256xf32>
    %94 = arith.divf %92, %93 : vector<1x1x1x256xf32>
    %c0_149 = arith.constant 0 : index
    %c2_150 = arith.constant 2 : index
    %c3_151 = arith.constant 3 : index
    %c0_152 = arith.constant 0 : index
    %95 = vector.load %arg2[%c0_149, %c2_150, %c3_151, %c0_152] : memref<1x6x6x256xf32, #tpu.memory_space<vmem>>, vector<1x1x1x256xf32>
    tpu.vector_store %arg2[%c0_149, %c2_150, %c3_151, %c0_152], %94 {strides = array<i32>} : memref<1x6x6x256xf32, #tpu.memory_space<vmem>>, vector<1x1x1x256xf32>,
    %c0_153 = arith.constant 0 : index
    %c0_154 = arith.constant 0 : index
    %c0_155 = arith.constant 0 : index
    %c0_156 = arith.constant 0 : index
    %96 = vector.load %arg1[%c0_153, %c0_154, %c0_155, %c0_156] : memref<1x1x1x256xf32, #tpu.memory_space<vmem>>, vector<1x1x1x256xf32>
    %cst_157 = arith.constant dense<0.000000e+00> : vector<1x256xf32>
    %97 = vector.multi_reduction <add>, %96, %cst_157 [1, 2] : vector<1x1x1x256xf32> to vector<1x256xf32>
    %98 = vector.shape_cast %97 : vector<1x256xf32> to vector<1x1x1x256xf32>
    %cst_158 = arith.constant 1.000000e+00 : f32
    %99 = vector.broadcast %cst_158 : f32 to vector<1x1x1x256xf32>
    %100 = arith.divf %98, %99 : vector<1x1x1x256xf32>
    %c0_159 = arith.constant 0 : index
    %c2_160 = arith.constant 2 : index
    %c4_161 = arith.constant 4 : index
    %c0_162 = arith.constant 0 : index
    %101 = vector.load %arg2[%c0_159, %c2_160, %c4_161, %c0_162] : memref<1x6x6x256xf32, #tpu.memory_space<vmem>>, vector<1x1x1x256xf32>
    tpu.vector_store %arg2[%c0_159, %c2_160, %c4_161, %c0_162], %100 {strides = array<i32>} : memref<1x6x6x256xf32, #tpu.memory_space<vmem>>, vector<1x1x1x256xf32>,
    %c0_163 = arith.constant 0 : index
    %c0_164 = arith.constant 0 : index
    %c0_165 = arith.constant 0 : index
    %c0_166 = arith.constant 0 : index
    %102 = vector.load %arg1[%c0_163, %c0_164, %c0_165, %c0_166] : memref<1x1x1x256xf32, #tpu.memory_space<vmem>>, vector<1x1x1x256xf32>
    %cst_167 = arith.constant dense<0.000000e+00> : vector<1x256xf32>
    %103 = vector.multi_reduction <add>, %102, %cst_167 [1, 2] : vector<1x1x1x256xf32> to vector<1x256xf32>
    %104 = vector.shape_cast %103 : vector<1x256xf32> to vector<1x1x1x256xf32>
    %cst_168 = arith.constant 1.000000e+00 : f32
    %105 = vector.broadcast %cst_168 : f32 to vector<1x1x1x256xf32>
    %106 = arith.divf %104, %105 : vector<1x1x1x256xf32>
    %c0_169 = arith.constant 0 : index
    %c2_170 = arith.constant 2 : index
    %c5_171 = arith.constant 5 : index
    %c0_172 = arith.constant 0 : index
    %107 = vector.load %arg2[%c0_169, %c2_170, %c5_171, %c0_172] : memref<1x6x6x256xf32, #tpu.memory_space<vmem>>, vector<1x1x1x256xf32>
    tpu.vector_store %arg2[%c0_169, %c2_170, %c5_171, %c0_172], %106 {strides = array<i32>} : memref<1x6x6x256xf32, #tpu.memory_space<vmem>>, vector<1x1x1x256xf32>,
    %c0_173 = arith.constant 0 : index
    %c0_174 = arith.constant 0 : index
    %c0_175 = arith.constant 0 : index
    %c0_176 = arith.constant 0 : index
    %108 = vector.load %arg1[%c0_173, %c0_174, %c0_175, %c0_176] : memref<1x1x1x256xf32, #tpu.memory_space<vmem>>, vector<1x1x1x256xf32>
    %cst_177 = arith.constant dense<0.000000e+00> : vector<1x256xf32>
    %109 = vector.multi_reduction <add>, %108, %cst_177 [1, 2] : vector<1x1x1x256xf32> to vector<1x256xf32>
    %110 = vector.shape_cast %109 : vector<1x256xf32> to vector<1x1x1x256xf32>
    %cst_178 = arith.constant 1.000000e+00 : f32
    %111 = vector.broadcast %cst_178 : f32 to vector<1x1x1x256xf32>
    %112 = arith.divf %110, %111 : vector<1x1x1x256xf32>
    %c0_179 = arith.constant 0 : index
    %c3_180 = arith.constant 3 : index
    %c0_181 = arith.constant 0 : index
    %c0_182 = arith.constant 0 : index
    %113 = vector.load %arg2[%c0_179, %c3_180, %c0_181, %c0_182] : memref<1x6x6x256xf32, #tpu.memory_space<vmem>>, vector<1x1x1x256xf32>
    tpu.vector_store %arg2[%c0_179, %c3_180, %c0_181, %c0_182], %112 {strides = array<i32>} : memref<1x6x6x256xf32, #tpu.memory_space<vmem>>, vector<1x1x1x256xf32>,
    %c0_183 = arith.constant 0 : index
    %c0_184 = arith.constant 0 : index
    %c0_185 = arith.constant 0 : index
    %c0_186 = arith.constant 0 : index
    %114 = vector.load %arg1[%c0_183, %c0_184, %c0_185, %c0_186] : memref<1x1x1x256xf32, #tpu.memory_space<vmem>>, vector<1x1x1x256xf32>
    %cst_187 = arith.constant dense<0.000000e+00> : vector<1x256xf32>
    %115 = vector.multi_reduction <add>, %114, %cst_187 [1, 2] : vector<1x1x1x256xf32> to vector<1x256xf32>
    %116 = vector.shape_cast %115 : vector<1x256xf32> to vector<1x1x1x256xf32>
    %cst_188 = arith.constant 1.000000e+00 : f32
    %117 = vector.broadcast %cst_188 : f32 to vector<1x1x1x256xf32>
    %118 = arith.divf %116, %117 : vector<1x1x1x256xf32>
    %c0_189 = arith.constant 0 : index
    %c3_190 = arith.constant 3 : index
    %c1_191 = arith.constant 1 : index
    %c0_192 = arith.constant 0 : index
    %119 = vector.load %arg2[%c0_189, %c3_190, %c1_191, %c0_192] : memref<1x6x6x256xf32, #tpu.memory_space<vmem>>, vector<1x1x1x256xf32>
    tpu.vector_store %arg2[%c0_189, %c3_190, %c1_191, %c0_192], %118 {strides = array<i32>} : memref<1x6x6x256xf32, #tpu.memory_space<vmem>>, vector<1x1x1x256xf32>,
    %c0_193 = arith.constant 0 : index
    %c0_194 = arith.constant 0 : index
    %c0_195 = arith.constant 0 : index
    %c0_196 = arith.constant 0 : index
    %120 = vector.load %arg1[%c0_193, %c0_194, %c0_195, %c0_196] : memref<1x1x1x256xf32, #tpu.memory_space<vmem>>, vector<1x1x1x256xf32>
    %cst_197 = arith.constant dense<0.000000e+00> : vector<1x256xf32>
    %121 = vector.multi_reduction <add>, %120, %cst_197 [1, 2] : vector<1x1x1x256xf32> to vector<1x256xf32>
    %122 = vector.shape_cast %121 : vector<1x256xf32> to vector<1x1x1x256xf32>
    %cst_198 = arith.constant 1.000000e+00 : f32
    %123 = vector.broadcast %cst_198 : f32 to vector<1x1x1x256xf32>
    %124 = arith.divf %122, %123 : vector<1x1x1x256xf32>
    %c0_199 = arith.constant 0 : index
    %c3_200 = arith.constant 3 : index
    %c2_201 = arith.constant 2 : index
    %c0_202 = arith.constant 0 : index
    %125 = vector.load %arg2[%c0_199, %c3_200, %c2_201, %c0_202] : memref<1x6x6x256xf32, #tpu.memory_space<vmem>>, vector<1x1x1x256xf32>
    tpu.vector_store %arg2[%c0_199, %c3_200, %c2_201, %c0_202], %124 {strides = array<i32>} : memref<1x6x6x256xf32, #tpu.memory_space<vmem>>, vector<1x1x1x256xf32>,
    %c0_203 = arith.constant 0 : index
    %c0_204 = arith.constant 0 : index
    %c0_205 = arith.constant 0 : index
    %c0_206 = arith.constant 0 : index
    %126 = vector.load %arg1[%c0_203, %c0_204, %c0_205, %c0_206] : memref<1x1x1x256xf32, #tpu.memory_space<vmem>>, vector<1x1x1x256xf32>
    %cst_207 = arith.constant dense<0.000000e+00> : vector<1x256xf32>
    %127 = vector.multi_reduction <add>, %126, %cst_207 [1, 2] : vector<1x1x1x256xf32> to vector<1x256xf32>
    %128 = vector.shape_cast %127 : vector<1x256xf32> to vector<1x1x1x256xf32>
    %cst_208 = arith.constant 1.000000e+00 : f32
    %129 = vector.broadcast %cst_208 : f32 to vector<1x1x1x256xf32>
    %130 = arith.divf %128, %129 : vector<1x1x1x256xf32>
    %c0_209 = arith.constant 0 : index
    %c3_210 = arith.constant 3 : index
    %c3_211 = arith.constant 3 : index
    %c0_212 = arith.constant 0 : index
    %131 = vector.load %arg2[%c0_209, %c3_210, %c3_211, %c0_212] : memref<1x6x6x256xf32, #tpu.memory_space<vmem>>, vector<1x1x1x256xf32>
    tpu.vector_store %arg2[%c0_209, %c3_210, %c3_211, %c0_212], %130 {strides = array<i32>} : memref<1x6x6x256xf32, #tpu.memory_space<vmem>>, vector<1x1x1x256xf32>,
    %c0_213 = arith.constant 0 : index
    %c0_214 = arith.constant 0 : index
    %c0_215 = arith.constant 0 : index
    %c0_216 = arith.constant 0 : index
    %132 = vector.load %arg1[%c0_213, %c0_214, %c0_215, %c0_216] : memref<1x1x1x256xf32, #tpu.memory_space<vmem>>, vector<1x1x1x256xf32>
    %cst_217 = arith.constant dense<0.000000e+00> : vector<1x256xf32>
    %133 = vector.multi_reduction <add>, %132, %cst_217 [1, 2] : vector<1x1x1x256xf32> to vector<1x256xf32>
    %134 = vector.shape_cast %133 : vector<1x256xf32> to vector<1x1x1x256xf32>
    %cst_218 = arith.constant 1.000000e+00 : f32
    %135 = vector.broadcast %cst_218 : f32 to vector<1x1x1x256xf32>
    %136 = arith.divf %134, %135 : vector<1x1x1x256xf32>
    %c0_219 = arith.constant 0 : index
    %c3_220 = arith.constant 3 : index
    %c4_221 = arith.constant 4 : index
    %c0_222 = arith.constant 0 : index
    %137 = vector.load %arg2[%c0_219, %c3_220, %c4_221, %c0_222] : memref<1x6x6x256xf32, #tpu.memory_space<vmem>>, vector<1x1x1x256xf32>
    tpu.vector_store %arg2[%c0_219, %c3_220, %c4_221, %c0_222], %136 {strides = array<i32>} : memref<1x6x6x256xf32, #tpu.memory_space<vmem>>, vector<1x1x1x256xf32>,
    %c0_223 = arith.constant 0 : index
    %c0_224 = arith.constant 0 : index
    %c0_225 = arith.constant 0 : index
    %c0_226 = arith.constant 0 : index
    %138 = vector.load %arg1[%c0_223, %c0_224, %c0_225, %c0_226] : memref<1x1x1x256xf32, #tpu.memory_space<vmem>>, vector<1x1x1x256xf32>
    %cst_227 = arith.constant dense<0.000000e+00> : vector<1x256xf32>
    %139 = vector.multi_reduction <add>, %138, %cst_227 [1, 2] : vector<1x1x1x256xf32> to vector<1x256xf32>
    %140 = vector.shape_cast %139 : vector<1x256xf32> to vector<1x1x1x256xf32>
    %cst_228 = arith.constant 1.000000e+00 : f32
    %141 = vector.broadcast %cst_228 : f32 to vector<1x1x1x256xf32>
    %142 = arith.divf %140, %141 : vector<1x1x1x256xf32>
    %c0_229 = arith.constant 0 : index
    %c3_230 = arith.constant 3 : index
    %c5_231 = arith.constant 5 : index
    %c0_232 = arith.constant 0 : index
    %143 = vector.load %arg2[%c0_229, %c3_230, %c5_231, %c0_232] : memref<1x6x6x256xf32, #tpu.memory_space<vmem>>, vector<1x1x1x256xf32>
    tpu.vector_store %arg2[%c0_229, %c3_230, %c5_231, %c0_232], %142 {strides = array<i32>} : memref<1x6x6x256xf32, #tpu.memory_space<vmem>>, vector<1x1x1x256xf32>,
    %c0_233 = arith.constant 0 : index
    %c0_234 = arith.constant 0 : index
    %c0_235 = arith.constant 0 : index
    %c0_236 = arith.constant 0 : index
    %144 = vector.load %arg1[%c0_233, %c0_234, %c0_235, %c0_236] : memref<1x1x1x256xf32, #tpu.memory_space<vmem>>, vector<1x1x1x256xf32>
    %cst_237 = arith.constant dense<0.000000e+00> : vector<1x256xf32>
    %145 = vector.multi_reduction <add>, %144, %cst_237 [1, 2] : vector<1x1x1x256xf32> to vector<1x256xf32>
    %146 = vector.shape_cast %145 : vector<1x256xf32> to vector<1x1x1x256xf32>
    %cst_238 = arith.constant 1.000000e+00 : f32
    %147 = vector.broadcast %cst_238 : f32 to vector<1x1x1x256xf32>
    %148 = arith.divf %146, %147 : vector<1x1x1x256xf32>
    %c0_239 = arith.constant 0 : index
    %c4_240 = arith.constant 4 : index
    %c0_241 = arith.constant 0 : index
    %c0_242 = arith.constant 0 : index
    %149 = vector.load %arg2[%c0_239, %c4_240, %c0_241, %c0_242] : memref<1x6x6x256xf32, #tpu.memory_space<vmem>>, vector<1x1x1x256xf32>
    tpu.vector_store %arg2[%c0_239, %c4_240, %c0_241, %c0_242], %148 {strides = array<i32>} : memref<1x6x6x256xf32, #tpu.memory_space<vmem>>, vector<1x1x1x256xf32>,
    %c0_243 = arith.constant 0 : index
    %c0_244 = arith.constant 0 : index
    %c0_245 = arith.constant 0 : index
    %c0_246 = arith.constant 0 : index
    %150 = vector.load %arg1[%c0_243, %c0_244, %c0_245, %c0_246] : memref<1x1x1x256xf32, #tpu.memory_space<vmem>>, vector<1x1x1x256xf32>
    %cst_247 = arith.constant dense<0.000000e+00> : vector<1x256xf32>
    %151 = vector.multi_reduction <add>, %150, %cst_247 [1, 2] : vector<1x1x1x256xf32> to vector<1x256xf32>
    %152 = vector.shape_cast %151 : vector<1x256xf32> to vector<1x1x1x256xf32>
    %cst_248 = arith.constant 1.000000e+00 : f32
    %153 = vector.broadcast %cst_248 : f32 to vector<1x1x1x256xf32>
    %154 = arith.divf %152, %153 : vector<1x1x1x256xf32>
    %c0_249 = arith.constant 0 : index
    %c4_250 = arith.constant 4 : index
    %c1_251 = arith.constant 1 : index
    %c0_252 = arith.constant 0 : index
    %155 = vector.load %arg2[%c0_249, %c4_250, %c1_251, %c0_252] : memref<1x6x6x256xf32, #tpu.memory_space<vmem>>, vector<1x1x1x256xf32>
    tpu.vector_store %arg2[%c0_249, %c4_250, %c1_251, %c0_252], %154 {strides = array<i32>} : memref<1x6x6x256xf32, #tpu.memory_space<vmem>>, vector<1x1x1x256xf32>,
    %c0_253 = arith.constant 0 : index
    %c0_254 = arith.constant 0 : index
    %c0_255 = arith.constant 0 : index
    %c0_256 = arith.constant 0 : index
    %156 = vector.load %arg1[%c0_253, %c0_254, %c0_255, %c0_256] : memref<1x1x1x256xf32, #tpu.memory_space<vmem>>, vector<1x1x1x256xf32>
    %cst_257 = arith.constant dense<0.000000e+00> : vector<1x256xf32>
    %157 = vector.multi_reduction <add>, %156, %cst_257 [1, 2] : vector<1x1x1x256xf32> to vector<1x256xf32>
    %158 = vector.shape_cast %157 : vector<1x256xf32> to vector<1x1x1x256xf32>
    %cst_258 = arith.constant 1.000000e+00 : f32
    %159 = vector.broadcast %cst_258 : f32 to vector<1x1x1x256xf32>
    %160 = arith.divf %158, %159 : vector<1x1x1x256xf32>
    %c0_259 = arith.constant 0 : index
    %c4_260 = arith.constant 4 : index
    %c2_261 = arith.constant 2 : index
    %c0_262 = arith.constant 0 : index
    %161 = vector.load %arg2[%c0_259, %c4_260, %c2_261, %c0_262] : memref<1x6x6x256xf32, #tpu.memory_space<vmem>>, vector<1x1x1x256xf32>
    tpu.vector_store %arg2[%c0_259, %c4_260, %c2_261, %c0_262], %160 {strides = array<i32>} : memref<1x6x6x256xf32, #tpu.memory_space<vmem>>, vector<1x1x1x256xf32>,
    %c0_263 = arith.constant 0 : index
    %c0_264 = arith.constant 0 : index
    %c0_265 = arith.constant 0 : index
    %c0_266 = arith.constant 0 : index
    %162 = vector.load %arg1[%c0_263, %c0_264, %c0_265, %c0_266] : memref<1x1x1x256xf32, #tpu.memory_space<vmem>>, vector<1x1x1x256xf32>
    %cst_267 = arith.constant dense<0.000000e+00> : vector<1x256xf32>
    %163 = vector.multi_reduction <add>, %162, %cst_267 [1, 2] : vector<1x1x1x256xf32> to vector<1x256xf32>
    %164 = vector.shape_cast %163 : vector<1x256xf32> to vector<1x1x1x256xf32>
    %cst_268 = arith.constant 1.000000e+00 : f32
    %165 = vector.broadcast %cst_268 : f32 to vector<1x1x1x256xf32>
    %166 = arith.divf %164, %165 : vector<1x1x1x256xf32>
    %c0_269 = arith.constant 0 : index
    %c4_270 = arith.constant 4 : index
    %c3_271 = arith.constant 3 : index
    %c0_272 = arith.constant 0 : index
    %167 = vector.load %arg2[%c0_269, %c4_270, %c3_271, %c0_272] : memref<1x6x6x256xf32, #tpu.memory_space<vmem>>, vector<1x1x1x256xf32>
    tpu.vector_store %arg2[%c0_269, %c4_270, %c3_271, %c0_272], %166 {strides = array<i32>} : memref<1x6x6x256xf32, #tpu.memory_space<vmem>>, vector<1x1x1x256xf32>,
    %c0_273 = arith.constant 0 : index
    %c0_274 = arith.constant 0 : index
    %c0_275 = arith.constant 0 : index
    %c0_276 = arith.constant 0 : index
    %168 = vector.load %arg1[%c0_273, %c0_274, %c0_275, %c0_276] : memref<1x1x1x256xf32, #tpu.memory_space<vmem>>, vector<1x1x1x256xf32>
    %cst_277 = arith.constant dense<0.000000e+00> : vector<1x256xf32>
    %169 = vector.multi_reduction <add>, %168, %cst_277 [1, 2] : vector<1x1x1x256xf32> to vector<1x256xf32>
    %170 = vector.shape_cast %169 : vector<1x256xf32> to vector<1x1x1x256xf32>
    %cst_278 = arith.constant 1.000000e+00 : f32
    %171 = vector.broadcast %cst_278 : f32 to vector<1x1x1x256xf32>
    %172 = arith.divf %170, %171 : vector<1x1x1x256xf32>
    %c0_279 = arith.constant 0 : index
    %c4_280 = arith.constant 4 : index
    %c4_281 = arith.constant 4 : index
    %c0_282 = arith.constant 0 : index
    %173 = vector.load %arg2[%c0_279, %c4_280, %c4_281, %c0_282] : memref<1x6x6x256xf32, #tpu.memory_space<vmem>>, vector<1x1x1x256xf32>
    tpu.vector_store %arg2[%c0_279, %c4_280, %c4_281, %c0_282], %172 {strides = array<i32>} : memref<1x6x6x256xf32, #tpu.memory_space<vmem>>, vector<1x1x1x256xf32>,
    %c0_283 = arith.constant 0 : index
    %c0_284 = arith.constant 0 : index
    %c0_285 = arith.constant 0 : index
    %c0_286 = arith.constant 0 : index
    %174 = vector.load %arg1[%c0_283, %c0_284, %c0_285, %c0_286] : memref<1x1x1x256xf32, #tpu.memory_space<vmem>>, vector<1x1x1x256xf32>
    %cst_287 = arith.constant dense<0.000000e+00> : vector<1x256xf32>
    %175 = vector.multi_reduction <add>, %174, %cst_287 [1, 2] : vector<1x1x1x256xf32> to vector<1x256xf32>
    %176 = vector.shape_cast %175 : vector<1x256xf32> to vector<1x1x1x256xf32>
    %cst_288 = arith.constant 1.000000e+00 : f32
    %177 = vector.broadcast %cst_288 : f32 to vector<1x1x1x256xf32>
    %178 = arith.divf %176, %177 : vector<1x1x1x256xf32>
    %c0_289 = arith.constant 0 : index
    %c4_290 = arith.constant 4 : index
    %c5_291 = arith.constant 5 : index
    %c0_292 = arith.constant 0 : index
    %179 = vector.load %arg2[%c0_289, %c4_290, %c5_291, %c0_292] : memref<1x6x6x256xf32, #tpu.memory_space<vmem>>, vector<1x1x1x256xf32>
    tpu.vector_store %arg2[%c0_289, %c4_290, %c5_291, %c0_292], %178 {strides = array<i32>} : memref<1x6x6x256xf32, #tpu.memory_space<vmem>>, vector<1x1x1x256xf32>,
    %c0_293 = arith.constant 0 : index
    %c0_294 = arith.constant 0 : index
    %c0_295 = arith.constant 0 : index
    %c0_296 = arith.constant 0 : index
    %180 = vector.load %arg1[%c0_293, %c0_294, %c0_295, %c0_296] : memref<1x1x1x256xf32, #tpu.memory_space<vmem>>, vector<1x1x1x256xf32>
    %cst_297 = arith.constant dense<0.000000e+00> : vector<1x256xf32>
    %181 = vector.multi_reduction <add>, %180, %cst_297 [1, 2] : vector<1x1x1x256xf32> to vector<1x256xf32>
    %182 = vector.shape_cast %181 : vector<1x256xf32> to vector<1x1x1x256xf32>
    %cst_298 = arith.constant 1.000000e+00 : f32
    %183 = vector.broadcast %cst_298 : f32 to vector<1x1x1x256xf32>
    %184 = arith.divf %182, %183 : vector<1x1x1x256xf32>
    %c0_299 = arith.constant 0 : index
    %c5_300 = arith.constant 5 : index
    %c0_301 = arith.constant 0 : index
    %c0_302 = arith.constant 0 : index
    %185 = vector.load %arg2[%c0_299, %c5_300, %c0_301, %c0_302] : memref<1x6x6x256xf32, #tpu.memory_space<vmem>>, vector<1x1x1x256xf32>
    tpu.vector_store %arg2[%c0_299, %c5_300, %c0_301, %c0_302], %184 {strides = array<i32>} : memref<1x6x6x256xf32, #tpu.memory_space<vmem>>, vector<1x1x1x256xf32>,
    %c0_303 = arith.constant 0 : index
    %c0_304 = arith.constant 0 : index
    %c0_305 = arith.constant 0 : index
    %c0_306 = arith.constant 0 : index
    %186 = vector.load %arg1[%c0_303, %c0_304, %c0_305, %c0_306] : memref<1x1x1x256xf32, #tpu.memory_space<vmem>>, vector<1x1x1x256xf32>
    %cst_307 = arith.constant dense<0.000000e+00> : vector<1x256xf32>
    %187 = vector.multi_reduction <add>, %186, %cst_307 [1, 2] : vector<1x1x1x256xf32> to vector<1x256xf32>
    %188 = vector.shape_cast %187 : vector<1x256xf32> to vector<1x1x1x256xf32>
    %cst_308 = arith.constant 1.000000e+00 : f32
    %189 = vector.broadcast %cst_308 : f32 to vector<1x1x1x256xf32>
    %190 = arith.divf %188, %189 : vector<1x1x1x256xf32>
    %c0_309 = arith.constant 0 : index
    %c5_310 = arith.constant 5 : index
    %c1_311 = arith.constant 1 : index
    %c0_312 = arith.constant 0 : index
    %191 = vector.load %arg2[%c0_309, %c5_310, %c1_311, %c0_312] : memref<1x6x6x256xf32, #tpu.memory_space<vmem>>, vector<1x1x1x256xf32>
    tpu.vector_store %arg2[%c0_309, %c5_310, %c1_311, %c0_312], %190 {strides = array<i32>} : memref<1x6x6x256xf32, #tpu.memory_space<vmem>>, vector<1x1x1x256xf32>,
    %c0_313 = arith.constant 0 : index
    %c0_314 = arith.constant 0 : index
    %c0_315 = arith.constant 0 : index
    %c0_316 = arith.constant 0 : index
    %192 = vector.load %arg1[%c0_313, %c0_314, %c0_315, %c0_316] : memref<1x1x1x256xf32, #tpu.memory_space<vmem>>, vector<1x1x1x256xf32>
    %cst_317 = arith.constant dense<0.000000e+00> : vector<1x256xf32>
    %193 = vector.multi_reduction <add>, %192, %cst_317 [1, 2] : vector<1x1x1x256xf32> to vector<1x256xf32>
    %194 = vector.shape_cast %193 : vector<1x256xf32> to vector<1x1x1x256xf32>
    %cst_318 = arith.constant 1.000000e+00 : f32
    %195 = vector.broadcast %cst_318 : f32 to vector<1x1x1x256xf32>
    %196 = arith.divf %194, %195 : vector<1x1x1x256xf32>
    %c0_319 = arith.constant 0 : index
    %c5_320 = arith.constant 5 : index
    %c2_321 = arith.constant 2 : index
    %c0_322 = arith.constant 0 : index
    %197 = vector.load %arg2[%c0_319, %c5_320, %c2_321, %c0_322] : memref<1x6x6x256xf32, #tpu.memory_space<vmem>>, vector<1x1x1x256xf32>
    tpu.vector_store %arg2[%c0_319, %c5_320, %c2_321, %c0_322], %196 {strides = array<i32>} : memref<1x6x6x256xf32, #tpu.memory_space<vmem>>, vector<1x1x1x256xf32>,
    %c0_323 = arith.constant 0 : index
    %c0_324 = arith.constant 0 : index
    %c0_325 = arith.constant 0 : index
    %c0_326 = arith.constant 0 : index
    %198 = vector.load %arg1[%c0_323, %c0_324, %c0_325, %c0_326] : memref<1x1x1x256xf32, #tpu.memory_space<vmem>>, vector<1x1x1x256xf32>
    %cst_327 = arith.constant dense<0.000000e+00> : vector<1x256xf32>
    %199 = vector.multi_reduction <add>, %198, %cst_327 [1, 2] : vector<1x1x1x256xf32> to vector<1x256xf32>
    %200 = vector.shape_cast %199 : vector<1x256xf32> to vector<1x1x1x256xf32>
    %cst_328 = arith.constant 1.000000e+00 : f32
    %201 = vector.broadcast %cst_328 : f32 to vector<1x1x1x256xf32>
    %202 = arith.divf %200, %201 : vector<1x1x1x256xf32>
    %c0_329 = arith.constant 0 : index
    %c5_330 = arith.constant 5 : index
    %c3_331 = arith.constant 3 : index
    %c0_332 = arith.constant 0 : index
    %203 = vector.load %arg2[%c0_329, %c5_330, %c3_331, %c0_332] : memref<1x6x6x256xf32, #tpu.memory_space<vmem>>, vector<1x1x1x256xf32>
    tpu.vector_store %arg2[%c0_329, %c5_330, %c3_331, %c0_332], %202 {strides = array<i32>} : memref<1x6x6x256xf32, #tpu.memory_space<vmem>>, vector<1x1x1x256xf32>,
    %c0_333 = arith.constant 0 : index
    %c0_334 = arith.constant 0 : index
    %c0_335 = arith.constant 0 : index
    %c0_336 = arith.constant 0 : index
    %204 = vector.load %arg1[%c0_333, %c0_334, %c0_335, %c0_336] : memref<1x1x1x256xf32, #tpu.memory_space<vmem>>, vector<1x1x1x256xf32>
    %cst_337 = arith.constant dense<0.000000e+00> : vector<1x256xf32>
    %205 = vector.multi_reduction <add>, %204, %cst_337 [1, 2] : vector<1x1x1x256xf32> to vector<1x256xf32>
    %206 = vector.shape_cast %205 : vector<1x256xf32> to vector<1x1x1x256xf32>
    %cst_338 = arith.constant 1.000000e+00 : f32
    %207 = vector.broadcast %cst_338 : f32 to vector<1x1x1x256xf32>
    %208 = arith.divf %206, %207 : vector<1x1x1x256xf32>
    %c0_339 = arith.constant 0 : index
    %c5_340 = arith.constant 5 : index
    %c4_341 = arith.constant 4 : index
    %c0_342 = arith.constant 0 : index
    %209 = vector.load %arg2[%c0_339, %c5_340, %c4_341, %c0_342] : memref<1x6x6x256xf32, #tpu.memory_space<vmem>>, vector<1x1x1x256xf32>
    tpu.vector_store %arg2[%c0_339, %c5_340, %c4_341, %c0_342], %208 {strides = array<i32>} : memref<1x6x6x256xf32, #tpu.memory_space<vmem>>, vector<1x1x1x256xf32>,
    %c0_343 = arith.constant 0 : index
    %c0_344 = arith.constant 0 : index
    %c0_345 = arith.constant 0 : index
    %c0_346 = arith.constant 0 : index
    %210 = vector.load %arg1[%c0_343, %c0_344, %c0_345, %c0_346] : memref<1x1x1x256xf32, #tpu.memory_space<vmem>>, vector<1x1x1x256xf32>
    %cst_347 = arith.constant dense<0.000000e+00> : vector<1x256xf32>
    %211 = vector.multi_reduction <add>, %210, %cst_347 [1, 2] : vector<1x1x1x256xf32> to vector<1x256xf32>
    %212 = vector.shape_cast %211 : vector<1x256xf32> to vector<1x1x1x256xf32>
    %cst_348 = arith.constant 1.000000e+00 : f32
    %213 = vector.broadcast %cst_348 : f32 to vector<1x1x1x256xf32>
    %214 = arith.divf %212, %213 : vector<1x1x1x256xf32>
    %c0_349 = arith.constant 0 : index
    %c5_350 = arith.constant 5 : index
    %c5_351 = arith.constant 5 : index
    %c0_352 = arith.constant 0 : index
    %215 = vector.load %arg2[%c0_349, %c5_350, %c5_351, %c0_352] : memref<1x6x6x256xf32, #tpu.memory_space<vmem>>, vector<1x1x1x256xf32>
    tpu.vector_store %arg2[%c0_349, %c5_350, %c5_351, %c0_352], %214 {strides = array<i32>} : memref<1x6x6x256xf32, #tpu.memory_space<vmem>>, vector<1x1x1x256xf32>,
    return
  }
  func.func @transform_0(%arg0: i32) -> (i32, i32, i32, i32) {
    %c0_i32 = arith.constant 0 : i32
    %c0_i32_0 = arith.constant 0 : i32
    %c0_i32_1 = arith.constant 0 : i32
    %c0_i32_2 = arith.constant 0 : i32
    return %arg0, %c0_i32, %c0_i32_0, %c0_i32_1 : i32, i32, i32, i32
  }
  func.func @transform_1(%arg0: i32) -> (i32, i32, i32, i32) {
    %c0_i32 = arith.constant 0 : i32
    %c0_i32_0 = arith.constant 0 : i32
    %c0_i32_1 = arith.constant 0 : i32
    %c0_i32_2 = arith.constant 0 : i32
    return %arg0, %c0_i32, %c0_i32_0, %c0_i32_1 : i32, i32, i32, i32
  }
}

</mosaic_0001>

<llo_original>
// kernel: alexnet_forward.9
$region0: #{alexnet_forward.9}
  #allocation0 [shape = 'u32[]', space=smem, size = 0x4, offset = 0x4, fixed_abs, tag = 'smem constant byte address 0x4 - core index']
  #allocation1 [shape = 'u32[144,128]{1,0:T(1,128)}', space=vmem, size = 0x12000, scoped, tag = 'internal scratch']
  #allocation2 [shape = 'f32[256,128]{1,0:T(8,128)}', space=vmem, size = 0x20000, scoped, tag = 'scratch operand']
  %s0 = inlined_call_operand.vmem [shape: bf16[512,384], index: 0, kind: input, shape index: {}]
  %s1 = inlined_call_operand.vmem [shape: bf16[384,128], index: 1, kind: input, shape index: {}]
  %s2 = inlined_call_operand.vmem [shape: f32[1,128], index: 2, kind: input, shape index: {}]
  %s3 = inlined_call_operand.vmem [shape: f32[512,128], index: 3, kind: output, shape index: {}]
  %s4 = sld [smem:[#allocation0]]
  $region53: #{alexnet_forward.9} parent=0
    _
  %s6 = ssub.s32 1, %s4
  %s7 = scalar_select 0, %s6, %s4
  loop: start=0, step=1, limit=4
  $region2: #{alexnet_forward.9} parent=0 // loop_pre_header
    _
  $region3: #{alexnet_forward.9} parent=0 // loop_header
    %s9 = sphi 0, %s13
    %p10 = scmp.ge.s32.totalorder %s9, 4
    %s16 = sphi 0, %s35
    %s17 = sphi 0, %s31
    %s18 = sphi 0, %s27
    %s19 = sphi 0, %s16
    %s20 = sphi 0, %s17
    %s21 = sphi 0, %s18
    %s22 = sphi 0, %s19
    %s23 = sphi 0, %s20
    %s24 = sphi 0, %s21
    %s40 = sphi 0, %s42
    %s43 = sphi 0, %s40
    %s44 = sphi 0, %s43
    %s60 = sphi 0, %s44
    %s68 = sphi 0, %s70
    %s71 = sphi 0, %s68
    %s72 = sphi 0, %s71
    %s88 = sphi 0, %s72
    %s94 = sphi 0, %s96
    %s97 = sphi 0, %s94
    %s98 = sphi 0, %s97
    %s114 = sphi 0, %s98
    %s122 = sphi 0, %s124
    %s125 = sphi 0, %s122
    %s126 = sphi 0, %s125
    %s142 = sphi 0, %s126
  $region4: #{alexnet_forward.9} parent=0 // loop_header_branch
    %12 = sbr.rel (%p10) target = $region8
  $region5: #{alexnet_forward.9} parent=0 // loop_body
    %s14 = ssub.s32 %s9, 1
    %s15 = ssub.s32 %s9, 2
    %s25 = sadd.s32 1, %s18
    %p26 = scmp.ge.s32.totalorder %s25, 1
    %s27 = scalar_select %p26, 0, %s25
    %s28 = sadd.s32 1, %s17
    %s29 = scalar_select %p26, %s28, %s17
    %p30 = scmp.ge.s32.totalorder %s29, 1
    %s31 = scalar_select %p30, 0, %s29
    %s32 = sadd.s32 1, %s16
    %s33 = scalar_select %p30, %s32, %s16
    %p34 = scmp.ge.s32.totalorder %s33, 2
    %s35 = scalar_select %p34, 0, %s33
    %s36 = ssub.s32 %s16, %s35
    %s37 = ssub.s32 %s18, %s27
    %s38 = sor.u32 %s36, %s37
    %p39 = scmp.eq.s32.totalorder %s38, 0
    %s41 = sadd.s32 %s40, 1
    %s42 = scalar_select %p39, %s40, %s41
    %p45 = pneg %p39
    %p46 = scmp.eq.s32.totalorder %s9, 1
    %p47 = por %p45, %p46
    %p48 = scmp.ne.s32.totalorder %s40, %s43
    %p49 = scmp.eq.s32.totalorder %s9, 0
    %p50 = por %p48, %p49
    %p51 = scmp.ne.s32.totalorder %s40, %s43
    %p52 = scmp.eq.s32.totalorder %s14, 1
    %p53 = por %p51, %p52
    %p54 = scmp.ne.s32.totalorder %s43, %s44
    %p55 = scmp.eq.s32.totalorder %s14, 0
    %p56 = por %p54, %p55
    %p57 = scmp.ne.s32.totalorder %s43, %s44
    %p58 = scmp.eq.s32.totalorder %s15, 1
    %p59 = por %p57, %p58
    %p61 = scmp.ne.s32.totalorder %s44, %s60
    %p62 = scmp.eq.s32.totalorder %s15, 0
    %p63 = por %p61, %p62
    %s64 = ssub.s32 %s18, %s27
    %s65 = ssub.s32 %s17, %s31
    %s66 = sor.u32 %s64, %s65
    %p67 = scmp.eq.s32.totalorder %s66, 0
    %s69 = sadd.s32 %s68, 1
    %s70 = scalar_select %p67, %s68, %s69
    %p73 = pneg %p67
    %p74 = scmp.eq.s32.totalorder %s9, 1
    %p75 = por %p73, %p74
    %p76 = scmp.ne.s32.totalorder %s68, %s71
    %p77 = scmp.eq.s32.totalorder %s9, 0
    %p78 = por %p76, %p77
    %p79 = scmp.ne.s32.totalorder %s68, %s71
    %p80 = scmp.eq.s32.totalorder %s14, 1
    %p81 = por %p79, %p80
    %p82 = scmp.ne.s32.totalorder %s71, %s72
    %p83 = scmp.eq.s32.totalorder %s14, 0
    %p84 = por %p82, %p83
    %p85 = scmp.ne.s32.totalorder %s71, %s72
    %p86 = scmp.eq.s32.totalorder %s15, 1
    %p87 = por %p85, %p86
    %p89 = scmp.ne.s32.totalorder %s72, %s88
    %p90 = scmp.eq.s32.totalorder %s15, 0
    %p91 = por %p89, %p90
    %s92 = ssub.s32 %s17, %s31
    %p93 = scmp.eq.s32.totalorder %s92, 0
    %s95 = sadd.s32 %s94, 1
    %s96 = scalar_select %p93, %s94, %s95
    %p99 = pneg %p93
    %p100 = scmp.eq.s32.totalorder %s9, 1
    %p101 = por %p99, %p100
    %p102 = scmp.ne.s32.totalorder %s94, %s97
    %p103 = scmp.eq.s32.totalorder %s9, 0
    %p104 = por %p102, %p103
    %p105 = scmp.ne.s32.totalorder %s94, %s97
    %p106 = scmp.eq.s32.totalorder %s14, 1
    %p107 = por %p105, %p106
    %p108 = scmp.ne.s32.totalorder %s97, %s98
    %p109 = scmp.eq.s32.totalorder %s14, 0
    %p110 = por %p108, %p109
    %p111 = scmp.ne.s32.totalorder %s97, %s98
    %p112 = scmp.eq.s32.totalorder %s15, 1
    %p113 = por %p111, %p112
    %p115 = scmp.ne.s32.totalorder %s98, %s114
    %p116 = scmp.eq.s32.totalorder %s15, 0
    %p117 = por %p115, %p116
    %s118 = ssub.s32 %s16, %s35
    %s119 = ssub.s32 %s17, %s31
    %s120 = sor.u32 %s118, %s119
    %p121 = scmp.eq.s32.totalorder %s120, 0
    %s123 = sadd.s32 %s122, 1
    %s124 = scalar_select %p121, %s122, %s123
    %p127 = pneg %p121
    %p128 = scmp.eq.s32.totalorder %s9, 1
    %p129 = por %p127, %p128
    %p130 = scmp.ne.s32.totalorder %s122, %s125
    %p131 = scmp.eq.s32.totalorder %s9, 0
    %p132 = por %p130, %p131
    %p133 = scmp.ne.s32.totalorder %s122, %s125
    %p134 = scmp.eq.s32.totalorder %s14, 1
    %p135 = por %p133, %p134
    %p136 = scmp.ne.s32.totalorder %s125, %s126
    %p137 = scmp.eq.s32.totalorder %s14, 0
    %p138 = por %p136, %p137
    %p139 = scmp.ne.s32.totalorder %s125, %s126
    %p140 = scmp.eq.s32.totalorder %s15, 1
    %p141 = por %p139, %p140
    %p143 = scmp.ne.s32.totalorder %s126, %s142
    %p144 = scmp.eq.s32.totalorder %s15, 0
    %p145 = por %p143, %p144
    %p146 = scmp.le.s32.totalorder 1, %s9
    %p147 = scmp.lt.s32.totalorder %s9, 3
    %p148 = pnand %p146, %p147
    %p149 = pneg %p148
    // Predicated region
    $region9: #{alexnet_forward.9} parent=5 // pred_check
      _
    $region10: #{alexnet_forward.9} parent=5 // pred_check_branch
      %151 = sbr.rel (%p148) target = $region12
    $region11: #{alexnet_forward.9} parent=5 // pred_region
      %s152 = ssub.s32 %s9, 1
      // Predicated region
      $region13: #{alexnet_forward.9} parent=11 // pred_check
        %p153 = pneg %p84
      $region14: #{alexnet_forward.9} parent=11 // pred_check_branch
        %155 = sbr.rel (%p153) target = $region16
      $region15: #{alexnet_forward.9} parent=11 // pred_region
        %s156 = smul.u32 48, %s21
        %p157 = scmp.lt.s32.totalorder %s156, 47
        %s158 = scalar_select %p157, %s156, 47
        %p159 = scmp.lt.s32.totalorder %s20, 0
        %s160 = scalar_select %p159, %s20, 0
        %s161 = sadd.s32 %s160, %s158
        %s162 = smul.addr %s161, 4
        %s163 = scalar_lea.vmem %s1, %s162
        %s164 = smul.u32 48, %s21
      $region16: #{alexnet_forward.9} parent=11 // pred_fallthru
        _
      // Predicated region
      $region17: #{alexnet_forward.9} parent=11 // pred_check
        %p165 = pneg %p110
      $region18: #{alexnet_forward.9} parent=11 // pred_check_branch
        %167 = sbr.rel (%p165) target = $region20
      $region19: #{alexnet_forward.9} parent=11 // pred_region
        %p168 = scmp.lt.s32.totalorder %s20, 0
        %s169 = scalar_select %p168, %s20, 0
        %s170 = scalar_lea.vmem %s2, %s169
      $region20: #{alexnet_forward.9} parent=11 // pred_fallthru
        _
    $region12: #{alexnet_forward.9} parent=5 // pred_fallthru
      _
    %p171 = scmp.lt.s32.totalorder %s9, 2
    // Predicated region
    $region21: #{alexnet_forward.9} parent=5 // pred_check
      %p172 = pneg %p171
    $region22: #{alexnet_forward.9} parent=5 // pred_check_branch
      %174 = sbr.rel (%p172) target = $region24
    $region23: #{alexnet_forward.9} parent=5 // pred_region
      // Predicated region
      $region25: #{alexnet_forward.9} parent=23 // pred_check
        %p175 = pneg %p50
      $region26: #{alexnet_forward.9} parent=23 // pred_check_branch
        %177 = sbr.rel (%p175) target = $region28
      $region27: #{alexnet_forward.9} parent=23 // pred_region
        %s178 = smul.u32 32, %s16
        %s179 = smul.u32 3, %s18
        %p180 = scmp.lt.s32.totalorder %s178, 63
        %s181 = scalar_select %p180, %s178, 63
        %p182 = scmp.lt.s32.totalorder %s179, 2
        %s183 = scalar_select %p182, %s179, 2
        %s184 = smul.addr %s181, 3
        %s185 = sadd.s32 %s183, %s184
        %s186 = smul.addr %s185, 4
        %s187 = scalar_lea.vmem %s0, %s186
        %s188 = smul.u32 32, %s16
        %s189 = smul.u32 3, %s18
      $region28: #{alexnet_forward.9} parent=23 // pred_fallthru
        _
    $region24: #{alexnet_forward.9} parent=5 // pred_fallthru
      _
    %p190 = scmp.le.s32.totalorder 1, %s9
    %p191 = scmp.lt.s32.totalorder %s9, 3
    %p192 = pnand %p190, %p191
    %p193 = pneg %p192
    // Predicated region
    $region29: #{alexnet_forward.9} parent=5 // pred_check
      _
    $region30: #{alexnet_forward.9} parent=5 // pred_check_branch
      %195 = sbr.rel (%p192) target = $region32
    $region31: #{alexnet_forward.9} parent=5 // pred_region
      %s196 = ssub.s32 %s9, 1
      %s197 = smul.u32 32, %s19
      %s198 = smul.u32 3, %s21
      %p199 = scmp.lt.s32.totalorder %s197, 63
      %s200 = scalar_select %p199, %s197, 63
      %p201 = scmp.lt.s32.totalorder %s198, 2
      %s202 = scalar_select %p201, %s198, 2
      %s203 = smul.addr %s200, 3
      %s204 = sadd.s32 %s202, %s203
      %s205 = smul.addr %s204, 4
      %s206 = scalar_lea.vmem %s0, %s205
      %p207 = pneg %p56
      %p208 = pneg %p53
      %s209 = smul.u32 48, %s21
      %p210 = scmp.lt.s32.totalorder %s209, 47
      %s211 = scalar_select %p210, %s209, 47
      %p212 = scmp.lt.s32.totalorder %s20, 0
      %s213 = scalar_select %p212, %s20, 0
      %s214 = sadd.s32 %s213, %s211
      %s215 = smul.addr %s214, 4
      %s216 = scalar_lea.vmem %s1, %s215
      %p217 = pneg %p84
      %p218 = pneg %p81
      %p219 = scmp.lt.s32.totalorder %s20, 0
      %s220 = scalar_select %p219, %s20, 0
      %s221 = scalar_lea.vmem %s2, %s220
      %p222 = pneg %p110
      %p223 = pneg %p107
      %p224 = pneg %p138
      %p225 = pneg %p135
      %s226 = smul.u32 32, %s19
      %p227 = scmp.lt.s32.totalorder %s226, 63
      %s228 = scalar_select %p227, %s226, 63
      %p229 = scmp.lt.s32.totalorder %s20, 0
      %s230 = scalar_select %p229, %s20, 0
      %s231 = sadd.s32 %s230, %s228
      %s232 = smul.addr %s231, 8
      %s233 = scalar_lea.vmem %s3, %s232
      %s234 = smul.u32 32, %s19
      %s235 = smul.u32 3, %s21
      %p236 = scmp.lt.s32.totalorder %s234, 63
      %s237 = scalar_select %p236, %s234, 63
      %p238 = scmp.lt.s32.totalorder %s235, 2
      %s239 = scalar_select %p238, %s235, 2
      %s240 = smul.addr %s237, 3
      %s241 = sadd.s32 %s239, %s240
      %s242 = smul.addr %s241, 4
      %s243 = scalar_lea.vmem %s0, %s242
      %s244 = smul.u32 32, %s19
      %s245 = smul.u32 3, %s21
      %s246 = smul.u32 48, %s21
      %p247 = scmp.lt.s32.totalorder %s246, 47
      %s248 = scalar_select %p247, %s246, 47
      %p249 = scmp.lt.s32.totalorder %s20, 0
      %s250 = scalar_select %p249, %s20, 0
      %s251 = sadd.s32 %s250, %s248
      %s252 = smul.addr %s251, 4
      %s253 = scalar_lea.vmem %s1, %s252
      %s254 = smul.u32 48, %s21
      %p255 = scmp.lt.s32.totalorder %s20, 0
      %s256 = scalar_select %p255, %s20, 0
      %s257 = scalar_lea.vmem %s2, %s256
      %s258 = smul.u32 32, %s19
      %p259 = scmp.lt.s32.totalorder %s258, 63
      %s260 = scalar_select %p259, %s258, 63
      %p261 = scmp.lt.s32.totalorder %s20, 0
      %s262 = scalar_select %p261, %s20, 0
      %s263 = sadd.s32 %s262, %s260
      %s264 = smul.addr %s263, 8
      %s265 = scalar_lea.vmem %s3, %s264
      %s266 = smul.u32 32, %s19
      %p268 = scmp.eq.s32.totalorder %s21, 0
      // Predicated region
      $region33: #{alexnet_forward.9} parent=31 // pred_check
        %p269 = pneg %p268
      $region34: #{alexnet_forward.9} parent=31 // pred_check_branch
        %271 = sbr.rel (%p269) target = $region36
      $region35: #{alexnet_forward.9} parent=31 // pred_region
        %272 = vst [vmem:[#allocation2] sm:$0xff] 0.0
        %273 = vst [vmem:[#allocation2 + $0x8] sm:$0xff] 0.0
        %274 = vst [vmem:[#allocation2 + $0x10] sm:$0xff] 0.0
        %275 = vst [vmem:[#allocation2 + $0x18] sm:$0xff] 0.0
        %276 = vst [vmem:[#allocation2 + $0x20] sm:$0xff] 0.0
        %277 = vst [vmem:[#allocation2 + $0x28] sm:$0xff] 0.0
        %278 = vst [vmem:[#allocation2 + $0x30] sm:$0xff] 0.0
        %279 = vst [vmem:[#allocation2 + $0x38] sm:$0xff] 0.0
        %280 = vst [vmem:[#allocation2 + $0x40] sm:$0xff] 0.0
        %281 = vst [vmem:[#allocation2 + $0x48] sm:$0xff] 0.0
        %282 = vst [vmem:[#allocation2 + $0x50] sm:$0xff] 0.0
        %283 = vst [vmem:[#allocation2 + $0x58] sm:$0xff] 0.0
        %284 = vst [vmem:[#allocation2 + $0x60] sm:$0xff] 0.0
        %285 = vst [vmem:[#allocation2 + $0x68] sm:$0xff] 0.0
        %286 = vst [vmem:[#allocation2 + $0x70] sm:$0xff] 0.0
        %287 = vst [vmem:[#allocation2 + $0x78] sm:$0xff] 0.0
        %288 = vst [vmem:[#allocation2 + $0x80] sm:$0xff] 0.0
        %289 = vst [vmem:[#allocation2 + $0x88] sm:$0xff] 0.0
        %290 = vst [vmem:[#allocation2 + $0x90] sm:$0xff] 0.0
        %291 = vst [vmem:[#allocation2 + $0x98] sm:$0xff] 0.0
        %292 = vst [vmem:[#allocation2 + $0xa0] sm:$0xff] 0.0
        %293 = vst [vmem:[#allocation2 + $0xa8] sm:$0xff] 0.0
        %294 = vst [vmem:[#allocation2 + $0xb0] sm:$0xff] 0.0
        %295 = vst [vmem:[#allocation2 + $0xb8] sm:$0xff] 0.0
        %296 = vst [vmem:[#allocation2 + $0xc0] sm:$0xff] 0.0
        %297 = vst [vmem:[#allocation2 + $0xc8] sm:$0xff] 0.0
        %298 = vst [vmem:[#allocation2 + $0xd0] sm:$0xff] 0.0
        %299 = vst [vmem:[#allocation2 + $0xd8] sm:$0xff] 0.0
        %300 = vst [vmem:[#allocation2 + $0xe0] sm:$0xff] 0.0
        %301 = vst [vmem:[#allocation2 + $0xe8] sm:$0xff] 0.0
        %302 = vst [vmem:[#allocation2 + $0xf0] sm:$0xff] 0.0
        %303 = vst [vmem:[#allocation2 + $0xf8] sm:$0xff] 0.0
      $region36: #{alexnet_forward.9} parent=31 // pred_fallthru
        _
      %v304 = vld [vmem:[#allocation2] sm:$0xff]
      %v305 = vld [vmem:[#allocation2 + $0x8] sm:$0xff]
      %v306 = vld [vmem:[#allocation2 + $0x10] sm:$0xff]
      %v307 = vld [vmem:[#allocation2 + $0x18] sm:$0xff]
      %v308 = vld [vmem:[#allocation2 + $0x20] sm:$0xff]
      %v309 = vld [vmem:[#allocation2 + $0x28] sm:$0xff]
      %v310 = vld [vmem:[#allocation2 + $0x30] sm:$0xff]
      %v311 = vld [vmem:[#allocation2 + $0x38] sm:$0xff]
      %v312 = vld [vmem:[#allocation2 + $0x40] sm:$0xff]
      %v313 = vld [vmem:[#allocation2 + $0x48] sm:$0xff]
      %v314 = vld [vmem:[#allocation2 + $0x50] sm:$0xff]
      %v315 = vld [vmem:[#allocation2 + $0x58] sm:$0xff]
      %v316 = vld [vmem:[#allocation2 + $0x60] sm:$0xff]
      %v317 = vld [vmem:[#allocation2 + $0x68] sm:$0xff]
      %v318 = vld [vmem:[#allocation2 + $0x70] sm:$0xff]
      %v319 = vld [vmem:[#allocation2 + $0x78] sm:$0xff]
      %v320 = vld [vmem:[#allocation2 + $0x80] sm:$0xff]
      %v321 = vld [vmem:[#allocation2 + $0x88] sm:$0xff]
      %v322 = vld [vmem:[#allocation2 + $0x90] sm:$0xff]
      %v323 = vld [vmem:[#allocation2 + $0x98] sm:$0xff]
      %v324 = vld [vmem:[#allocation2 + $0xa0] sm:$0xff]
      %v325 = vld [vmem:[#allocation2 + $0xa8] sm:$0xff]
      %v326 = vld [vmem:[#allocation2 + $0xb0] sm:$0xff]
      %v327 = vld [vmem:[#allocation2 + $0xb8] sm:$0xff]
      %v328 = vld [vmem:[#allocation2 + $0xc0] sm:$0xff]
      %v329 = vld [vmem:[#allocation2 + $0xc8] sm:$0xff]
      %v330 = vld [vmem:[#allocation2 + $0xd0] sm:$0xff]
      %v331 = vld [vmem:[#allocation2 + $0xd8] sm:$0xff]
      %v332 = vld [vmem:[#allocation2 + $0xe0] sm:$0xff]
      %v333 = vld [vmem:[#allocation2 + $0xe8] sm:$0xff]
      %v334 = vld [vmem:[#allocation2 + $0xf0] sm:$0xff]
      %v335 = vld [vmem:[#allocation2 + $0xf8] sm:$0xff]
      %v336 = vld [vmem:[%s243] sm:$0xff]
      %v337 = vld [vmem:[%s243 + $0x8] sm:$0xf]
      %v338 = vld [vmem:[%s243 + $0xc] sm:$0xff]
      %v339 = vld [vmem:[%s243 + $0x14] sm:$0xf]
      %v340 = vld [vmem:[%s243 + $0x18] sm:$0xff]
      %v341 = vld [vmem:[%s243 + $0x20] sm:$0xf]
      %v342 = vld [vmem:[%s243 + $0x24] sm:$0xff]
      %v343 = vld [vmem:[%s243 + $0x2c] sm:$0xf]
      %v344 = vld [vmem:[%s243 + $0x30] sm:$0xff]
      %v345 = vld [vmem:[%s243 + $0x38] sm:$0xf]
      %v346 = vld [vmem:[%s243 + $0x3c] sm:$0xff]
      %v347 = vld [vmem:[%s243 + $0x44] sm:$0xf]
      %v348 = vld [vmem:[%s243 + $0x48] sm:$0xff]
      %v349 = vld [vmem:[%s243 + $0x50] sm:$0xf]
      %v350 = vld [vmem:[%s243 + $0x54] sm:$0xff]
      %v351 = vld [vmem:[%s243 + $0x5c] sm:$0xf]
      %v352 = vld [vmem:[%s243 + $0x60] sm:$0xff]
      %v353 = vld [vmem:[%s243 + $0x68] sm:$0xf]
      %v354 = vld [vmem:[%s243 + $0x6c] sm:$0xff]
      %v355 = vld [vmem:[%s243 + $0x74] sm:$0xf]
      %v356 = vld [vmem:[%s243 + $0x78] sm:$0xff]
      %v357 = vld [vmem:[%s243 + $0x80] sm:$0xf]
      %v358 = vld [vmem:[%s243 + $0x84] sm:$0xff]
      %v359 = vld [vmem:[%s243 + $0x8c] sm:$0xf]
      %v360 = vld [vmem:[%s243 + $0x90] sm:$0xff]
      %v361 = vld [vmem:[%s243 + $0x98] sm:$0xf]
      %v362 = vld [vmem:[%s243 + $0x9c] sm:$0xff]
      %v363 = vld [vmem:[%s243 + $0xa4] sm:$0xf]
      %v364 = vld [vmem:[%s243 + $0xa8] sm:$0xff]
      %v365 = vld [vmem:[%s243 + $0xb0] sm:$0xf]
      %v366 = vld [vmem:[%s243 + $0xb4] sm:$0xff]
      %v367 = vld [vmem:[%s243 + $0xbc] sm:$0xf]
      %v368 = vld [vmem:[%s243 + $0xc0] sm:$0xff]
      %v369 = vld [vmem:[%s243 + $0xc8] sm:$0xf]
      %v370 = vld [vmem:[%s243 + $0xcc] sm:$0xff]
      %v371 = vld [vmem:[%s243 + $0xd4] sm:$0xf]
      %v372 = vld [vmem:[%s243 + $0xd8] sm:$0xff]
      %v373 = vld [vmem:[%s243 + $0xe0] sm:$0xf]
      %v374 = vld [vmem:[%s243 + $0xe4] sm:$0xff]
      %v375 = vld [vmem:[%s243 + $0xec] sm:$0xf]
      %v376 = vld [vmem:[%s243 + $0xf0] sm:$0xff]
      %v377 = vld [vmem:[%s243 + $0xf8] sm:$0xf]
      %v378 = vld [vmem:[%s243 + $0xfc] sm:$0xff]
      %v379 = vld [vmem:[%s243 + $0x104] sm:$0xf]
      %v380 = vld [vmem:[%s243 + $0x108] sm:$0xff]
      %v381 = vld [vmem:[%s243 + $0x110] sm:$0xf]
      %v382 = vld [vmem:[%s243 + $0x114] sm:$0xff]
      %v383 = vld [vmem:[%s243 + $0x11c] sm:$0xf]
      %v384 = vld [vmem:[%s243 + $0x120] sm:$0xff]
      %v385 = vld [vmem:[%s243 + $0x128] sm:$0xf]
      %v386 = vld [vmem:[%s243 + $0x12c] sm:$0xff]
      %v387 = vld [vmem:[%s243 + $0x134] sm:$0xf]
      %v388 = vld [vmem:[%s243 + $0x138] sm:$0xff]
      %v389 = vld [vmem:[%s243 + $0x140] sm:$0xf]
      %v390 = vld [vmem:[%s243 + $0x144] sm:$0xff]
      %v391 = vld [vmem:[%s243 + $0x14c] sm:$0xf]
      %v392 = vld [vmem:[%s243 + $0x150] sm:$0xff]
      %v393 = vld [vmem:[%s243 + $0x158] sm:$0xf]
      %v394 = vld [vmem:[%s243 + $0x15c] sm:$0xff]
      %v395 = vld [vmem:[%s243 + $0x164] sm:$0xf]
      %v396 = vld [vmem:[%s243 + $0x168] sm:$0xff]
      %v397 = vld [vmem:[%s243 + $0x170] sm:$0xf]
      %v398 = vld [vmem:[%s243 + $0x174] sm:$0xff]
      %v399 = vld [vmem:[%s243 + $0x17c] sm:$0xf]
      %v400 = vld [vmem:[%s253] sm:$0xf]
      %v401 = vld [vmem:[%s253 + $0x4] sm:$0xf]
      %v402 = vld [vmem:[%s253 + $0x8] sm:$0xf]
      %v403 = vld [vmem:[%s253 + $0xc] sm:$0xf]
      %v404 = vld [vmem:[%s253 + $0x10] sm:$0xf]
      %v405 = vld [vmem:[%s253 + $0x14] sm:$0xf]
      %v406 = vld [vmem:[%s253 + $0x18] sm:$0xf]
      %v407 = vld [vmem:[%s253 + $0x1c] sm:$0xf]
      %v408 = vld [vmem:[%s253 + $0x20] sm:$0xf]
      %v409 = vld [vmem:[%s253 + $0x24] sm:$0xf]
      %v410 = vld [vmem:[%s253 + $0x28] sm:$0xf]
      %v411 = vld [vmem:[%s253 + $0x2c] sm:$0xf]
      %v412 = vld [vmem:[%s253 + $0x30] sm:$0xf]
      %v413 = vld [vmem:[%s253 + $0x34] sm:$0xf]
      %v414 = vld [vmem:[%s253 + $0x38] sm:$0xf]
      %v415 = vld [vmem:[%s253 + $0x3c] sm:$0xf]
      %v416 = vld [vmem:[%s253 + $0x40] sm:$0xf]
      %v417 = vld [vmem:[%s253 + $0x44] sm:$0xf]
      %v418 = vld [vmem:[%s253 + $0x48] sm:$0xf]
      %v419 = vld [vmem:[%s253 + $0x4c] sm:$0xf]
      %v420 = vld [vmem:[%s253 + $0x50] sm:$0xf]
      %v421 = vld [vmem:[%s253 + $0x54] sm:$0xf]
      %v422 = vld [vmem:[%s253 + $0x58] sm:$0xf]
      %v423 = vld [vmem:[%s253 + $0x5c] sm:$0xf]
      %v424 = vld [vmem:[%s253 + $0x60] sm:$0xf]
      %v425 = vld [vmem:[%s253 + $0x64] sm:$0xf]
      %v426 = vld [vmem:[%s253 + $0x68] sm:$0xf]
      %v427 = vld [vmem:[%s253 + $0x6c] sm:$0xf]
      %v428 = vld [vmem:[%s253 + $0x70] sm:$0xf]
      %v429 = vld [vmem:[%s253 + $0x74] sm:$0xf]
      %v430 = vld [vmem:[%s253 + $0x78] sm:$0xf]
      %v431 = vld [vmem:[%s253 + $0x7c] sm:$0xf]
      %v432 = vld [vmem:[%s253 + $0x80] sm:$0xf]
      %v433 = vld [vmem:[%s253 + $0x84] sm:$0xf]
      %v434 = vld [vmem:[%s253 + $0x88] sm:$0xf]
      %v435 = vld [vmem:[%s253 + $0x8c] sm:$0xf]
      %v436 = vld [vmem:[%s253 + $0x90] sm:$0xf]
      %v437 = vld [vmem:[%s253 + $0x94] sm:$0xf]
      %v438 = vld [vmem:[%s253 + $0x98] sm:$0xf]
      %v439 = vld [vmem:[%s253 + $0x9c] sm:$0xf]
      %v440 = vld [vmem:[%s253 + $0xa0] sm:$0xf]
      %v441 = vld [vmem:[%s253 + $0xa4] sm:$0xf]
      %v442 = vld [vmem:[%s253 + $0xa8] sm:$0xf]
      %v443 = vld [vmem:[%s253 + $0xac] sm:$0xf]
      %v444 = vld [vmem:[%s253 + $0xb0] sm:$0xf]
      %v445 = vld [vmem:[%s253 + $0xb4] sm:$0xf]
      %v446 = vld [vmem:[%s253 + $0xb8] sm:$0xf]
      %v447 = vld [vmem:[%s253 + $0xbc] sm:$0xf]
      %v512 = vunpack.c.l.b16 %v336
      %v513 = vunpack.c.h.b16 %v336
      %v514 = vunpack.c.l.b16 %v337
      %v515 = vunpack.c.l.b16 %v338
      %v516 = vunpack.c.h.b16 %v338
      %v517 = vunpack.c.l.b16 %v339
      %v518 = vunpack.c.l.b16 %v340
      %v519 = vunpack.c.h.b16 %v340
      %v520 = vunpack.c.l.b16 %v341
      %v521 = vunpack.c.l.b16 %v342
      %v522 = vunpack.c.h.b16 %v342
      %v523 = vunpack.c.l.b16 %v343
      %v524 = vunpack.c.l.b16 %v344
      %v525 = vunpack.c.h.b16 %v344
      %v526 = vunpack.c.l.b16 %v345
      %v527 = vunpack.c.l.b16 %v346
      %v528 = vunpack.c.h.b16 %v346
      %v529 = vunpack.c.l.b16 %v347
      %v530 = vunpack.c.l.b16 %v348
      %v531 = vunpack.c.h.b16 %v348
      %v532 = vunpack.c.l.b16 %v349
      %v533 = vunpack.c.l.b16 %v350
      %v534 = vunpack.c.h.b16 %v350
      %v535 = vunpack.c.l.b16 %v351
      %v536 = vunpack.c.l.b16 %v352
      %v537 = vunpack.c.h.b16 %v352
      %v538 = vunpack.c.l.b16 %v353
      %v539 = vunpack.c.l.b16 %v354
      %v540 = vunpack.c.h.b16 %v354
      %v541 = vunpack.c.l.b16 %v355
      %v542 = vunpack.c.l.b16 %v356
      %v543 = vunpack.c.h.b16 %v356
      %v544 = vunpack.c.l.b16 %v357
      %v545 = vunpack.c.l.b16 %v358
      %v546 = vunpack.c.h.b16 %v358
      %v547 = vunpack.c.l.b16 %v359
      %v548 = vunpack.c.l.b16 %v360
      %v549 = vunpack.c.h.b16 %v360
      %v550 = vunpack.c.l.b16 %v361
      %v551 = vunpack.c.l.b16 %v362
      %v552 = vunpack.c.h.b16 %v362
      %v553 = vunpack.c.l.b16 %v363
      %v554 = vunpack.c.l.b16 %v364
      %v555 = vunpack.c.h.b16 %v364
      %v556 = vunpack.c.l.b16 %v365
      %v557 = vunpack.c.l.b16 %v366
      %v558 = vunpack.c.h.b16 %v366
      %v559 = vunpack.c.l.b16 %v367
      %v560 = vunpack.c.l.b16 %v368
      %v561 = vunpack.c.h.b16 %v368
      %v562 = vunpack.c.l.b16 %v369
      %v563 = vunpack.c.l.b16 %v370
      %v564 = vunpack.c.h.b16 %v370
      %v565 = vunpack.c.l.b16 %v371
      %v566 = vunpack.c.l.b16 %v372
      %v567 = vunpack.c.h.b16 %v372
      %v568 = vunpack.c.l.b16 %v373
      %v569 = vunpack.c.l.b16 %v374
      %v570 = vunpack.c.h.b16 %v374
      %v571 = vunpack.c.l.b16 %v375
      %v572 = vunpack.c.l.b16 %v376
      %v573 = vunpack.c.h.b16 %v376
      %v574 = vunpack.c.l.b16 %v377
      %v575 = vunpack.c.l.b16 %v378
      %v576 = vunpack.c.h.b16 %v378
      %v577 = vunpack.c.l.b16 %v379
      %v578 = vunpack.c.l.b16 %v380
      %v579 = vunpack.c.h.b16 %v380
      %v580 = vunpack.c.l.b16 %v381
      %v581 = vunpack.c.l.b16 %v382
      %v582 = vunpack.c.h.b16 %v382
      %v583 = vunpack.c.l.b16 %v383
      %v584 = vunpack.c.l.b16 %v384
      %v585 = vunpack.c.h.b16 %v384
      %v586 = vunpack.c.l.b16 %v385
      %v587 = vunpack.c.l.b16 %v386
      %v588 = vunpack.c.h.b16 %v386
      %v589 = vunpack.c.l.b16 %v387
      %v590 = vunpack.c.l.b16 %v388
      %v591 = vunpack.c.h.b16 %v388
      %v592 = vunpack.c.l.b16 %v389
      %v593 = vunpack.c.l.b16 %v390
      %v594 = vunpack.c.h.b16 %v390
      %v595 = vunpack.c.l.b16 %v391
      %v596 = vunpack.c.l.b16 %v392
      %v597 = vunpack.c.h.b16 %v392
      %v598 = vunpack.c.l.b16 %v393
      %v599 = vunpack.c.l.b16 %v394
      %v600 = vunpack.c.h.b16 %v394
      %v601 = vunpack.c.l.b16 %v395
      %v602 = vunpack.c.l.b16 %v396
      %v603 = vunpack.c.h.b16 %v396
      %v604 = vunpack.c.l.b16 %v397
      %v605 = vunpack.c.l.b16 %v398
      %v606 = vunpack.c.h.b16 %v398
      %v607 = vunpack.c.l.b16 %v399
      %v608 = vpack.c.b16 %v515, %v512
      %v609 = vpack.c.b16 %v516, %v513
      %v610 = vpack.c.b16 %v517, %v514
      %v611 = vpack.c.b16 %v521, %v518
      %v612 = vpack.c.b16 %v522, %v519
      %v613 = vpack.c.b16 %v523, %v520
      %v614 = vpack.c.b16 %v527, %v524
      %v615 = vpack.c.b16 %v528, %v525
      %v616 = vpack.c.b16 %v529, %v526
      %v617 = vpack.c.b16 %v533, %v530
      %v618 = vpack.c.b16 %v534, %v531
      %v619 = vpack.c.b16 %v535, %v532
      %v620 = vpack.c.b16 %v539, %v536
      %v621 = vpack.c.b16 %v540, %v537
      %v622 = vpack.c.b16 %v541, %v538
      %v623 = vpack.c.b16 %v545, %v542
      %v624 = vpack.c.b16 %v546, %v543
      %v625 = vpack.c.b16 %v547, %v544
      %v626 = vpack.c.b16 %v551, %v548
      %v627 = vpack.c.b16 %v552, %v549
      %v628 = vpack.c.b16 %v553, %v550
      %v629 = vpack.c.b16 %v557, %v554
      %v630 = vpack.c.b16 %v558, %v555
      %v631 = vpack.c.b16 %v559, %v556
      %v632 = vpack.c.b16 %v563, %v560
      %v633 = vpack.c.b16 %v564, %v561
      %v634 = vpack.c.b16 %v565, %v562
      %v635 = vpack.c.b16 %v569, %v566
      %v636 = vpack.c.b16 %v570, %v567
      %v637 = vpack.c.b16 %v571, %v568
      %v638 = vpack.c.b16 %v575, %v572
      %v639 = vpack.c.b16 %v576, %v573
      %v640 = vpack.c.b16 %v577, %v574
      %v641 = vpack.c.b16 %v581, %v578
      %v642 = vpack.c.b16 %v582, %v579
      %v643 = vpack.c.b16 %v583, %v580
      %v644 = vpack.c.b16 %v587, %v584
      %v645 = vpack.c.b16 %v588, %v585
      %v646 = vpack.c.b16 %v589, %v586
      %v647 = vpack.c.b16 %v593, %v590
      %v648 = vpack.c.b16 %v594, %v591
      %v649 = vpack.c.b16 %v595, %v592
      %v650 = vpack.c.b16 %v599, %v596
      %v651 = vpack.c.b16 %v600, %v597
      %v652 = vpack.c.b16 %v601, %v598
      %v653 = vpack.c.b16 %v605, %v602
      %v654 = vpack.c.b16 %v606, %v603
      %v655 = vpack.c.b16 %v607, %v604
      %v752 = vunpack.c.l.b16 %v400
      %v753 = vunpack.c.l.b16 %v401
      %v754 = vunpack.c.l.b16 %v402
      %v755 = vunpack.c.l.b16 %v403
      %v756 = vunpack.c.l.b16 %v404
      %v757 = vunpack.c.l.b16 %v405
      %v758 = vunpack.c.l.b16 %v406
      %v759 = vunpack.c.l.b16 %v407
      %v760 = vunpack.c.l.b16 %v408
      %v761 = vunpack.c.l.b16 %v409
      %v762 = vunpack.c.l.b16 %v410
      %v763 = vunpack.c.l.b16 %v411
      %v764 = vunpack.c.l.b16 %v412
      %v765 = vunpack.c.l.b16 %v413
      %v766 = vunpack.c.l.b16 %v414
      %v767 = vunpack.c.l.b16 %v415
      %v768 = vunpack.c.l.b16 %v416
      %v769 = vunpack.c.l.b16 %v417
      %v770 = vunpack.c.l.b16 %v418
      %v771 = vunpack.c.l.b16 %v419
      %v772 = vunpack.c.l.b16 %v420
      %v773 = vunpack.c.l.b16 %v421
      %v774 = vunpack.c.l.b16 %v422
      %v775 = vunpack.c.l.b16 %v423
      %v776 = vunpack.c.l.b16 %v424
      %v777 = vunpack.c.l.b16 %v425
      %v778 = vunpack.c.l.b16 %v426
      %v779 = vunpack.c.l.b16 %v427
      %v780 = vunpack.c.l.b16 %v428
      %v781 = vunpack.c.l.b16 %v429
      %v782 = vunpack.c.l.b16 %v430
      %v783 = vunpack.c.l.b16 %v431
      %v784 = vunpack.c.l.b16 %v432
      %v785 = vunpack.c.l.b16 %v433
      %v786 = vunpack.c.l.b16 %v434
      %v787 = vunpack.c.l.b16 %v435
      %v788 = vunpack.c.l.b16 %v436
      %v789 = vunpack.c.l.b16 %v437
      %v790 = vunpack.c.l.b16 %v438
      %v791 = vunpack.c.l.b16 %v439
      %v792 = vunpack.c.l.b16 %v440
      %v793 = vunpack.c.l.b16 %v441
      %v794 = vunpack.c.l.b16 %v442
      %v795 = vunpack.c.l.b16 %v443
      %v796 = vunpack.c.l.b16 %v444
      %v797 = vunpack.c.l.b16 %v445
      %v798 = vunpack.c.l.b16 %v446
      %v799 = vunpack.c.l.b16 %v447
      %v800 = vpack.c.b16 %v753, %v752
      %v801 = vpack.c.b16 %v755, %v754
      %v802 = vpack.c.b16 %v757, %v756
      %v803 = vpack.c.b16 %v759, %v758
      %v804 = vpack.c.b16 %v761, %v760
      %v805 = vpack.c.b16 %v763, %v762
      %v806 = vpack.c.b16 %v765, %v764
      %v807 = vpack.c.b16 %v767, %v766
      %v808 = vpack.c.b16 %v769, %v768
      %v809 = vpack.c.b16 %v771, %v770
      %v810 = vpack.c.b16 %v773, %v772
      %v811 = vpack.c.b16 %v775, %v774
      %v812 = vpack.c.b16 %v777, %v776
      %v813 = vpack.c.b16 %v779, %v778
      %v814 = vpack.c.b16 %v781, %v780
      %v815 = vpack.c.b16 %v783, %v782
      %v816 = vpack.c.b16 %v785, %v784
      %v817 = vpack.c.b16 %v787, %v786
      %v818 = vpack.c.b16 %v789, %v788
      %v819 = vpack.c.b16 %v791, %v790
      %v820 = vpack.c.b16 %v793, %v792
      %v821 = vpack.c.b16 %v795, %v794
      %v822 = vpack.c.b16 %v797, %v796
      %v823 = vpack.c.b16 %v799, %v798
      %848 = vmatprep.subr.bf16.mxu0 0
      %849 = vmatpush1.bf16.msra.mxu0 %v800
      %850 = vmatprep.subr.bf16.mxu0 0
      %851 = vmatpush1.bf16.msra.mxu0 %v801
      %852 = vmatprep.subr.bf16.mxu0 0
      %853 = vmatpush1.bf16.msra.mxu0 %v802
      %854 = vmatprep.subr.bf16.mxu0 0
      %855 = vmatpush1.bf16.msra.mxu0 %v803
      %856 = vmatprep.subr.bf16.mxu0 0
      %857 = vmatpush1.bf16.msra.mxu0 %v804
      %858 = vmatprep.subr.bf16.mxu0 0
      %859 = vmatpush1.bf16.msra.mxu0 %v805
      %860 = vmatprep.subr.bf16.mxu0 0
      %861 = vmatpush1.bf16.msra.mxu0 %v806
      %862 = vmatprep.subr.bf16.mxu0 0
      %863 = vmatpush1.bf16.msra.mxu0 %v807
      %864 = vmatprep.subr.bf16.mxu0 0
      %865 = vmatpush1.bf16.msra.mxu0 %v808
      %866 = vmatprep.subr.bf16.mxu0 0
      %867 = vmatpush1.bf16.msra.mxu0 %v809
      %868 = vmatprep.subr.bf16.mxu0 0
      %869 = vmatpush1.bf16.msra.mxu0 %v810
      %870 = vmatprep.subr.bf16.mxu0 0
      %871 = vmatpush1.bf16.msra.mxu0 %v811
      %872 = vmatprep.subr.bf16.mxu0 0
      %873 = vmatpush1.bf16.msra.mxu0 %v812
      %874 = vmatprep.subr.bf16.mxu0 0
      %875 = vmatpush1.bf16.msra.mxu0 %v813
      %876 = vmatprep.subr.bf16.mxu0 0
      %877 = vmatpush1.bf16.msra.mxu0 %v814
      %878 = vmatprep.subr.bf16.mxu0 0
      %879 = vmatpush1.bf16.msra.mxu0 %v815
      %880 = vmatprep.mubr.bf16.mxu0 %v609
      %881 = vmatmul.mubr.bf16.gmra.mrb[0].mxu0 %v608
      %v882 = vpop.f32.mrb[0].mxu0
      %v883 = vadd.f32 0.0, %v882
      %v884 = vpop.f32.mrb[0].mxu0
      %v885 = vpop.f32.mrb[0].mxu0
      %v886 = vadd.f32 0.0, %v885
      %v887 = vpop.f32.mrb[0].mxu0
      %888 = vmatprep.mubr.bf16.mxu0 %v612
      %889 = vmatmul.mubr.bf16.gmra.mrb[0].mxu0 %v611
      %v890 = vpop.f32.mrb[0].mxu0
      %v891 = vadd.f32 0.0, %v890
      %v892 = vpop.f32.mrb[0].mxu0
      %v893 = vpop.f32.mrb[0].mxu0
      %v894 = vadd.f32 0.0, %v893
      %v895 = vpop.f32.mrb[0].mxu0
      %896 = vmatprep.mubr.bf16.mxu0 %v615
      %897 = vmatmul.mubr.bf16.gmra.mrb[0].mxu0 %v614
      %v898 = vpop.f32.mrb[0].mxu0
      %v899 = vadd.f32 0.0, %v898
      %v900 = vpop.f32.mrb[0].mxu0
      %v901 = vpop.f32.mrb[0].mxu0
      %v902 = vadd.f32 0.0, %v901
      %v903 = vpop.f32.mrb[0].mxu0
      %904 = vmatprep.mubr.bf16.mxu0 %v618
      %905 = vmatmul.mubr.bf16.gmra.mrb[0].mxu0 %v617
      %v906 = vpop.f32.mrb[0].mxu0
      %v907 = vadd.f32 0.0, %v906
      %v908 = vpop.f32.mrb[0].mxu0
      %v909 = vpop.f32.mrb[0].mxu0
      %v910 = vadd.f32 0.0, %v909
      %v911 = vpop.f32.mrb[0].mxu0
      %912 = vmatprep.mubr.bf16.mxu0 %v621
      %913 = vmatmul.mubr.bf16.gmra.mrb[0].mxu0 %v620
      %v914 = vpop.f32.mrb[0].mxu0
      %v915 = vadd.f32 0.0, %v914
      %v916 = vpop.f32.mrb[0].mxu0
      %v917 = vpop.f32.mrb[0].mxu0
      %v918 = vadd.f32 0.0, %v917
      %v919 = vpop.f32.mrb[0].mxu0
      %920 = vmatprep.mubr.bf16.mxu0 %v624
      %921 = vmatmul.mubr.bf16.gmra.mrb[0].mxu0 %v623
      %v922 = vpop.f32.mrb[0].mxu0
      %v923 = vadd.f32 0.0, %v922
      %v924 = vpop.f32.mrb[0].mxu0
      %v925 = vpop.f32.mrb[0].mxu0
      %v926 = vadd.f32 0.0, %v925
      %v927 = vpop.f32.mrb[0].mxu0
      %928 = vmatprep.mubr.bf16.mxu0 %v627
      %929 = vmatmul.mubr.bf16.gmra.mrb[0].mxu0 %v626
      %v930 = vpop.f32.mrb[0].mxu0
      %v931 = vadd.f32 0.0, %v930
      %v932 = vpop.f32.mrb[0].mxu0
      %v933 = vpop.f32.mrb[0].mxu0
      %v934 = vadd.f32 0.0, %v933
      %v935 = vpop.f32.mrb[0].mxu0
      %936 = vmatprep.mubr.bf16.mxu0 %v630
      %937 = vmatmul.mubr.bf16.gmra.mrb[0].mxu0 %v629
      %v938 = vpop.f32.mrb[0].mxu0
      %v939 = vadd.f32 0.0, %v938
      %v940 = vpop.f32.mrb[0].mxu0
      %v941 = vpop.f32.mrb[0].mxu0
      %v942 = vadd.f32 0.0, %v941
      %v943 = vpop.f32.mrb[0].mxu0
      %944 = vmatprep.mubr.bf16.mxu0 %v633
      %945 = vmatmul.mubr.bf16.gmra.mrb[0].mxu0 %v632
      %v946 = vpop.f32.mrb[0].mxu0
      %v947 = vadd.f32 0.0, %v946
      %v948 = vpop.f32.mrb[0].mxu0
      %v949 = vpop.f32.mrb[0].mxu0
      %v950 = vadd.f32 0.0, %v949
      %v951 = vpop.f32.mrb[0].mxu0
      %952 = vmatprep.mubr.bf16.mxu0 %v636
      %953 = vmatmul.mubr.bf16.gmra.mrb[0].mxu0 %v635
      %v954 = vpop.f32.mrb[0].mxu0
      %v955 = vadd.f32 0.0, %v954
      %v956 = vpop.f32.mrb[0].mxu0
      %v957 = vpop.f32.mrb[0].mxu0
      %v958 = vadd.f32 0.0, %v957
      %v959 = vpop.f32.mrb[0].mxu0
      %960 = vmatprep.mubr.bf16.mxu0 %v639
      %961 = vmatmul.mubr.bf16.gmra.mrb[0].mxu0 %v638
      %v962 = vpop.f32.mrb[0].mxu0
      %v963 = vadd.f32 0.0, %v962
      %v964 = vpop.f32.mrb[0].mxu0
      %v965 = vpop.f32.mrb[0].mxu0
      %v966 = vadd.f32 0.0, %v965
      %v967 = vpop.f32.mrb[0].mxu0
      %968 = vmatprep.mubr.bf16.mxu0 %v642
      %969 = vmatmul.mubr.bf16.gmra.mrb[0].mxu0 %v641
      %v970 = vpop.f32.mrb[0].mxu0
      %v971 = vadd.f32 0.0, %v970
      %v972 = vpop.f32.mrb[0].mxu0
      %v973 = vpop.f32.mrb[0].mxu0
      %v974 = vadd.f32 0.0, %v973
      %v975 = vpop.f32.mrb[0].mxu0
      %976 = vmatprep.mubr.bf16.mxu0 %v645
      %977 = vmatmul.mubr.bf16.gmra.mrb[0].mxu0 %v644
      %v978 = vpop.f32.mrb[0].mxu0
      %v979 = vadd.f32 0.0, %v978
      %v980 = vpop.f32.mrb[0].mxu0
      %v981 = vpop.f32.mrb[0].mxu0
      %v982 = vadd.f32 0.0, %v981
      %v983 = vpop.f32.mrb[0].mxu0
      %984 = vmatprep.mubr.bf16.mxu0 %v648
      %985 = vmatmul.mubr.bf16.gmra.mrb[0].mxu0 %v647
      %v986 = vpop.f32.mrb[0].mxu0
      %v987 = vadd.f32 0.0, %v986
      %v988 = vpop.f32.mrb[0].mxu0
      %v989 = vpop.f32.mrb[0].mxu0
      %v990 = vadd.f32 0.0, %v989
      %v991 = vpop.f32.mrb[0].mxu0
      %992 = vmatprep.mubr.bf16.mxu0 %v651
      %993 = vmatmul.mubr.bf16.gmra.mrb[0].mxu0 %v650
      %v994 = vpop.f32.mrb[0].mxu0
      %v995 = vadd.f32 0.0, %v994
      %v996 = vpop.f32.mrb[0].mxu0
      %v997 = vpop.f32.mrb[0].mxu0
      %v998 = vadd.f32 0.0, %v997
      %v999 = vpop.f32.mrb[0].mxu0
      %1000 = vmatprep.mubr.bf16.mxu0 %v654
      %1001 = vmatmul.mubr.bf16.gmra.mrb[0].mxu0 %v653
      %v1002 = vpop.f32.mrb[0].mxu0
      %v1003 = vadd.f32 0.0, %v1002
      %v1004 = vpop.f32.mrb[0].mxu0
      %v1005 = vpop.f32.mrb[0].mxu0
      %v1006 = vadd.f32 0.0, %v1005
      %v1007 = vpop.f32.mrb[0].mxu0
      %1008 = vdwg.mxu0
      %1009 = vmatprep.subr.bf16.mxu0 0
      %1010 = vmatpush1.bf16.msra.mxu0 %v816
      %1011 = vmatprep.subr.bf16.mxu0 0
      %1012 = vmatpush1.bf16.msra.mxu0 %v817
      %1013 = vmatprep.subr.bf16.mxu0 0
      %1014 = vmatpush1.bf16.msra.mxu0 %v818
      %1015 = vmatprep.subr.bf16.mxu0 0
      %1016 = vmatpush1.bf16.msra.mxu0 %v819
      %1017 = vmatprep.subr.bf16.mxu0 0
      %1018 = vmatpush1.bf16.msra.mxu0 %v820
      %1019 = vmatprep.subr.bf16.mxu0 0
      %1020 = vmatpush1.bf16.msra.mxu0 %v821
      %1021 = vmatprep.subr.bf16.mxu0 0
      %1022 = vmatpush1.bf16.msra.mxu0 %v822
      %1023 = vmatprep.subr.bf16.mxu0 0
      %1024 = vmatpush1.bf16.msra.mxu0 %v823
      %1025 = vmatprep.subr.bf16.mxu0 0
      %1026 = vmatpush1.bf16.msra.mxu0 0
      %1027 = vmatprep.subr.bf16.mxu0 0
      %1028 = vmatpush1.bf16.msra.mxu0 0
      %1029 = vmatprep.subr.bf16.mxu0 0
      %1030 = vmatpush1.bf16.msra.mxu0 0
      %1031 = vmatprep.subr.bf16.mxu0 0
      %1032 = vmatpush1.bf16.msra.mxu0 0
      %1033 = vmatprep.subr.bf16.mxu0 0
      %1034 = vmatpush1.bf16.msra.mxu0 0
      %1035 = vmatprep.subr.bf16.mxu0 0
      %1036 = vmatpush1.bf16.msra.mxu0 0
      %1037 = vmatprep.subr.bf16.mxu0 0
      %1038 = vmatpush1.bf16.msra.mxu0 0
      %1039 = vmatprep.subr.bf16.mxu0 0
      %1040 = vmatpush1.bf16.msra.mxu0 0
      %1041 = vmatprep.mubr.bf16.mxu0 0
      %1042 = vmatmul.mubr.bf16.gmra.mrb[0].mxu0 %v610
      %v1043 = vpop.f32.mrb[0].mxu0
      %v1044 = vadd.f32 %v883, %v1043
      %v1045 = vpop.f32.mrb[0].mxu0
      %v1046 = vpop.f32.mrb[0].mxu0
      %v1047 = vadd.f32 %v886, %v1046
      %v1048 = vpop.f32.mrb[0].mxu0
      %1049 = vmatprep.mubr.bf16.mxu0 0
      %1050 = vmatmul.mubr.bf16.gmra.mrb[0].mxu0 %v613
      %v1051 = vpop.f32.mrb[0].mxu0
      %v1052 = vadd.f32 %v891, %v1051
      %v1053 = vpop.f32.mrb[0].mxu0
      %v1054 = vpop.f32.mrb[0].mxu0
      %v1055 = vadd.f32 %v894, %v1054
      %v1056 = vpop.f32.mrb[0].mxu0
      %1057 = vmatprep.mubr.bf16.mxu0 0
      %1058 = vmatmul.mubr.bf16.gmra.mrb[0].mxu0 %v616
      %v1059 = vpop.f32.mrb[0].mxu0
      %v1060 = vadd.f32 %v899, %v1059
      %v1061 = vpop.f32.mrb[0].mxu0
      %v1062 = vpop.f32.mrb[0].mxu0
      %v1063 = vadd.f32 %v902, %v1062
      %v1064 = vpop.f32.mrb[0].mxu0
      %1065 = vmatprep.mubr.bf16.mxu0 0
      %1066 = vmatmul.mubr.bf16.gmra.mrb[0].mxu0 %v619
      %v1067 = vpop.f32.mrb[0].mxu0
      %v1068 = vadd.f32 %v907, %v1067
      %v1069 = vpop.f32.mrb[0].mxu0
      %v1070 = vpop.f32.mrb[0].mxu0
      %v1071 = vadd.f32 %v910, %v1070
      %v1072 = vpop.f32.mrb[0].mxu0
      %1073 = vmatprep.mubr.bf16.mxu0 0
      %1074 = vmatmul.mubr.bf16.gmra.mrb[0].mxu0 %v622
      %v1075 = vpop.f32.mrb[0].mxu0
      %v1076 = vadd.f32 %v915, %v1075
      %v1077 = vpop.f32.mrb[0].mxu0
      %v1078 = vpop.f32.mrb[0].mxu0
      %v1079 = vadd.f32 %v918, %v1078
      %v1080 = vpop.f32.mrb[0].mxu0
      %1081 = vmatprep.mubr.bf16.mxu0 0
      %1082 = vmatmul.mubr.bf16.gmra.mrb[0].mxu0 %v625
      %v1083 = vpop.f32.mrb[0].mxu0
      %v1084 = vadd.f32 %v923, %v1083
      %v1085 = vpop.f32.mrb[0].mxu0
      %v1086 = vpop.f32.mrb[0].mxu0
      %v1087 = vadd.f32 %v926, %v1086
      %v1088 = vpop.f32.mrb[0].mxu0
      %1089 = vmatprep.mubr.bf16.mxu0 0
      %1090 = vmatmul.mubr.bf16.gmra.mrb[0].mxu0 %v628
      %v1091 = vpop.f32.mrb[0].mxu0
      %v1092 = vadd.f32 %v931, %v1091
      %v1093 = vpop.f32.mrb[0].mxu0
      %v1094 = vpop.f32.mrb[0].mxu0
      %v1095 = vadd.f32 %v934, %v1094
      %v1096 = vpop.f32.mrb[0].mxu0
      %1097 = vmatprep.mubr.bf16.mxu0 0
      %1098 = vmatmul.mubr.bf16.gmra.mrb[0].mxu0 %v631
      %v1099 = vpop.f32.mrb[0].mxu0
      %v1100 = vadd.f32 %v939, %v1099
      %v1101 = vpop.f32.mrb[0].mxu0
      %v1102 = vpop.f32.mrb[0].mxu0
      %v1103 = vadd.f32 %v942, %v1102
      %v1104 = vpop.f32.mrb[0].mxu0
      %1105 = vmatprep.mubr.bf16.mxu0 0
      %1106 = vmatmul.mubr.bf16.gmra.mrb[0].mxu0 %v634
      %v1107 = vpop.f32.mrb[0].mxu0
      %v1108 = vadd.f32 %v947, %v1107
      %v1109 = vpop.f32.mrb[0].mxu0
      %v1110 = vpop.f32.mrb[0].mxu0
      %v1111 = vadd.f32 %v950, %v1110
      %v1112 = vpop.f32.mrb[0].mxu0
      %1113 = vmatprep.mubr.bf16.mxu0 0
      %1114 = vmatmul.mubr.bf16.gmra.mrb[0].mxu0 %v637
      %v1115 = vpop.f32.mrb[0].mxu0
      %v1116 = vadd.f32 %v955, %v1115
      %v1117 = vpop.f32.mrb[0].mxu0
      %v1118 = vpop.f32.mrb[0].mxu0
      %v1119 = vadd.f32 %v958, %v1118
      %v1120 = vpop.f32.mrb[0].mxu0
      %1121 = vmatprep.mubr.bf16.mxu0 0
      %1122 = vmatmul.mubr.bf16.gmra.mrb[0].mxu0 %v640
      %v1123 = vpop.f32.mrb[0].mxu0
      %v1124 = vadd.f32 %v963, %v1123
      %v1125 = vpop.f32.mrb[0].mxu0
      %v1126 = vpop.f32.mrb[0].mxu0
      %v1127 = vadd.f32 %v966, %v1126
      %v1128 = vpop.f32.mrb[0].mxu0
      %1129 = vmatprep.mubr.bf16.mxu0 0
      %1130 = vmatmul.mubr.bf16.gmra.mrb[0].mxu0 %v643
      %v1131 = vpop.f32.mrb[0].mxu0
      %v1132 = vadd.f32 %v971, %v1131
      %v1133 = vpop.f32.mrb[0].mxu0
      %v1134 = vpop.f32.mrb[0].mxu0
      %v1135 = vadd.f32 %v974, %v1134
      %v1136 = vpop.f32.mrb[0].mxu0
      %1137 = vmatprep.mubr.bf16.mxu0 0
      %1138 = vmatmul.mubr.bf16.gmra.mrb[0].mxu0 %v646
      %v1139 = vpop.f32.mrb[0].mxu0
      %v1140 = vadd.f32 %v979, %v1139
      %v1141 = vpop.f32.mrb[0].mxu0
      %v1142 = vpop.f32.mrb[0].mxu0
      %v1143 = vadd.f32 %v982, %v1142
      %v1144 = vpop.f32.mrb[0].mxu0
      %1145 = vmatprep.mubr.bf16.mxu0 0
      %1146 = vmatmul.mubr.bf16.gmra.mrb[0].mxu0 %v649
      %v1147 = vpop.f32.mrb[0].mxu0
      %v1148 = vadd.f32 %v987, %v1147
      %v1149 = vpop.f32.mrb[0].mxu0
      %v1150 = vpop.f32.mrb[0].mxu0
      %v1151 = vadd.f32 %v990, %v1150
      %v1152 = vpop.f32.mrb[0].mxu0
      %1153 = vmatprep.mubr.bf16.mxu0 0
      %1154 = vmatmul.mubr.bf16.gmra.mrb[0].mxu0 %v652
      %v1155 = vpop.f32.mrb[0].mxu0
      %v1156 = vadd.f32 %v995, %v1155
      %v1157 = vpop.f32.mrb[0].mxu0
      %v1158 = vpop.f32.mrb[0].mxu0
      %v1159 = vadd.f32 %v998, %v1158
      %v1160 = vpop.f32.mrb[0].mxu0
      %1161 = vmatprep.mubr.bf16.mxu0 0
      %1162 = vmatmul.mubr.bf16.gmra.mrb[0].mxu0 %v655
      %v1163 = vpop.f32.mrb[0].mxu0
      %v1164 = vadd.f32 %v1003, %v1163
      %v1165 = vpop.f32.mrb[0].mxu0
      %v1166 = vpop.f32.mrb[0].mxu0
      %v1167 = vadd.f32 %v1006, %v1166
      %v1168 = vpop.f32.mrb[0].mxu0
      %1169 = vdwg.mxu0
      %v1170 = vadd.f32 %v304, %v1044
      %v1171 = vadd.f32 %v305, %v1047
      %v1172 = vadd.f32 %v306, %v1052
      %v1173 = vadd.f32 %v307, %v1055
      %v1174 = vadd.f32 %v308, %v1060
      %v1175 = vadd.f32 %v309, %v1063
      %v1176 = vadd.f32 %v310, %v1068
      %v1177 = vadd.f32 %v311, %v1071
      %v1178 = vadd.f32 %v312, %v1076
      %v1179 = vadd.f32 %v313, %v1079
      %v1180 = vadd.f32 %v314, %v1084
      %v1181 = vadd.f32 %v315, %v1087
      %v1182 = vadd.f32 %v316, %v1092
      %v1183 = vadd.f32 %v317, %v1095
      %v1184 = vadd.f32 %v318, %v1100
      %v1185 = vadd.f32 %v319, %v1103
      %v1186 = vadd.f32 %v320, %v1108
      %v1187 = vadd.f32 %v321, %v1111
      %v1188 = vadd.f32 %v322, %v1116
      %v1189 = vadd.f32 %v323, %v1119
      %v1190 = vadd.f32 %v324, %v1124
      %v1191 = vadd.f32 %v325, %v1127
      %v1192 = vadd.f32 %v326, %v1132
      %v1193 = vadd.f32 %v327, %v1135
      %v1194 = vadd.f32 %v328, %v1140
      %v1195 = vadd.f32 %v329, %v1143
      %v1196 = vadd.f32 %v330, %v1148
      %v1197 = vadd.f32 %v331, %v1151
      %v1198 = vadd.f32 %v332, %v1156
      %v1199 = vadd.f32 %v333, %v1159
      %v1200 = vadd.f32 %v334, %v1164
      %v1201 = vadd.f32 %v335, %v1167
      %1202 = vst [vmem:[#allocation2] sm:$0xff] %v1170
      %1203 = vst [vmem:[#allocation2 + $0x8] sm:$0xff] %v1171
      %1204 = vst [vmem:[#allocation2 + $0x10] sm:$0xff] %v1172
      %1205 = vst [vmem:[#allocation2 + $0x18] sm:$0xff] %v1173
      %1206 = vst [vmem:[#allocation2 + $0x20] sm:$0xff] %v1174
      %1207 = vst [vmem:[#allocation2 + $0x28] sm:$0xff] %v1175
      %1208 = vst [vmem:[#allocation2 + $0x30] sm:$0xff] %v1176
      %1209 = vst [vmem:[#allocation2 + $0x38] sm:$0xff] %v1177
      %1210 = vst [vmem:[#allocation2 + $0x40] sm:$0xff] %v1178
      %1211 = vst [vmem:[#allocation2 + $0x48] sm:$0xff] %v1179
      %1212 = vst [vmem:[#allocation2 + $0x50] sm:$0xff] %v1180
      %1213 = vst [vmem:[#allocation2 + $0x58] sm:$0xff] %v1181
      %1214 = vst [vmem:[#allocation2 + $0x60] sm:$0xff] %v1182
      %1215 = vst [vmem:[#allocation2 + $0x68] sm:$0xff] %v1183
      %1216 = vst [vmem:[#allocation2 + $0x70] sm:$0xff] %v1184
      %1217 = vst [vmem:[#allocation2 + $0x78] sm:$0xff] %v1185
      %1218 = vst [vmem:[#allocation2 + $0x80] sm:$0xff] %v1186
      %1219 = vst [vmem:[#allocation2 + $0x88] sm:$0xff] %v1187
      %1220 = vst [vmem:[#allocation2 + $0x90] sm:$0xff] %v1188
      %1221 = vst [vmem:[#allocation2 + $0x98] sm:$0xff] %v1189
      %1222 = vst [vmem:[#allocation2 + $0xa0] sm:$0xff] %v1190
      %1223 = vst [vmem:[#allocation2 + $0xa8] sm:$0xff] %v1191
      %1224 = vst [vmem:[#allocation2 + $0xb0] sm:$0xff] %v1192
      %1225 = vst [vmem:[#allocation2 + $0xb8] sm:$0xff] %v1193
      %1226 = vst [vmem:[#allocation2 + $0xc0] sm:$0xff] %v1194
      %1227 = vst [vmem:[#allocation2 + $0xc8] sm:$0xff] %v1195
      %1228 = vst [vmem:[#allocation2 + $0xd0] sm:$0xff] %v1196
      %1229 = vst [vmem:[#allocation2 + $0xd8] sm:$0xff] %v1197
      %1230 = vst [vmem:[#allocation2 + $0xe0] sm:$0xff] %v1198
      %1231 = vst [vmem:[#allocation2 + $0xe8] sm:$0xff] %v1199
      %1232 = vst [vmem:[#allocation2 + $0xf0] sm:$0xff] %v1200
      %1233 = vst [vmem:[#allocation2 + $0xf8] sm:$0xff] %v1201
      // Predicated region
      $region37: #{alexnet_forward.9} parent=31 // pred_check
        %p1234 = pneg %p268
      $region38: #{alexnet_forward.9} parent=31 // pred_check_branch
        %1236 = sbr.rel (%p1234) target = $region40
      $region39: #{alexnet_forward.9} parent=31 // pred_region
        %v1237 = vld [vmem:[#allocation2] sm:$0xff]
        %v1238 = vld [vmem:[#allocation2 + $0x8] sm:$0xff]
        %v1239 = vld [vmem:[#allocation2 + $0x10] sm:$0xff]
        %v1240 = vld [vmem:[#allocation2 + $0x18] sm:$0xff]
        %v1241 = vld [vmem:[#allocation2 + $0x20] sm:$0xff]
        %v1242 = vld [vmem:[#allocation2 + $0x28] sm:$0xff]
        %v1243 = vld [vmem:[#allocation2 + $0x30] sm:$0xff]
        %v1244 = vld [vmem:[#allocation2 + $0x38] sm:$0xff]
        %v1245 = vld [vmem:[#allocation2 + $0x40] sm:$0xff]
        %v1246 = vld [vmem:[#allocation2 + $0x48] sm:$0xff]
        %v1247 = vld [vmem:[#allocation2 + $0x50] sm:$0xff]
        %v1248 = vld [vmem:[#allocation2 + $0x58] sm:$0xff]
        %v1249 = vld [vmem:[#allocation2 + $0x60] sm:$0xff]
        %v1250 = vld [vmem:[#allocation2 + $0x68] sm:$0xff]
        %v1251 = vld [vmem:[#allocation2 + $0x70] sm:$0xff]
        %v1252 = vld [vmem:[#allocation2 + $0x78] sm:$0xff]
        %v1253 = vld [vmem:[#allocation2 + $0x80] sm:$0xff]
        %v1254 = vld [vmem:[#allocation2 + $0x88] sm:$0xff]
        %v1255 = vld [vmem:[#allocation2 + $0x90] sm:$0xff]
        %v1256 = vld [vmem:[#allocation2 + $0x98] sm:$0xff]
        %v1257 = vld [vmem:[#allocation2 + $0xa0] sm:$0xff]
        %v1258 = vld [vmem:[#allocation2 + $0xa8] sm:$0xff]
        %v1259 = vld [vmem:[#allocation2 + $0xb0] sm:$0xff]
        %v1260 = vld [vmem:[#allocation2 + $0xb8] sm:$0xff]
        %v1261 = vld [vmem:[#allocation2 + $0xc0] sm:$0xff]
        %v1262 = vld [vmem:[#allocation2 + $0xc8] sm:$0xff]
        %v1263 = vld [vmem:[#allocation2 + $0xd0] sm:$0xff]
        %v1264 = vld [vmem:[#allocation2 + $0xd8] sm:$0xff]
        %v1265 = vld [vmem:[#allocation2 + $0xe0] sm:$0xff]
        %v1266 = vld [vmem:[#allocation2 + $0xe8] sm:$0xff]
        %v1267 = vld [vmem:[#allocation2 + $0xf0] sm:$0xff]
        %v1268 = vld [vmem:[#allocation2 + $0xf8] sm:$0xff]
        %v1269 = vld [vmem:[%s257] sm:$0x1]
        %v1271 = vlaneseq
        %v1272 = vshrl.u32 %v1271, 7
        %v1273 = vsub.s32 0, %v1272
        %v1274 = vrot.slane %v1269, %v1273
        %v1276 = vadd.f32 %v1237, %v1274
        %v1277 = vadd.f32 %v1238, %v1274
        %v1278 = vadd.f32 %v1239, %v1274
        %v1279 = vadd.f32 %v1240, %v1274
        %v1280 = vadd.f32 %v1241, %v1274
        %v1281 = vadd.f32 %v1242, %v1274
        %v1282 = vadd.f32 %v1243, %v1274
        %v1283 = vadd.f32 %v1244, %v1274
        %v1284 = vadd.f32 %v1245, %v1274
        %v1285 = vadd.f32 %v1246, %v1274
        %v1286 = vadd.f32 %v1247, %v1274
        %v1287 = vadd.f32 %v1248, %v1274
        %v1288 = vadd.f32 %v1249, %v1274
        %v1289 = vadd.f32 %v1250, %v1274
        %v1290 = vadd.f32 %v1251, %v1274
        %v1291 = vadd.f32 %v1252, %v1274
        %v1292 = vadd.f32 %v1253, %v1274
        %v1293 = vadd.f32 %v1254, %v1274
        %v1294 = vadd.f32 %v1255, %v1274
        %v1295 = vadd.f32 %v1256, %v1274
        %v1296 = vadd.f32 %v1257, %v1274
        %v1297 = vadd.f32 %v1258, %v1274
        %v1298 = vadd.f32 %v1259, %v1274
        %v1299 = vadd.f32 %v1260, %v1274
        %v1300 = vadd.f32 %v1261, %v1274
        %v1301 = vadd.f32 %v1262, %v1274
        %v1302 = vadd.f32 %v1263, %v1274
        %v1303 = vadd.f32 %v1264, %v1274
        %v1304 = vadd.f32 %v1265, %v1274
        %v1305 = vadd.f32 %v1266, %v1274
        %v1306 = vadd.f32 %v1267, %v1274
        %v1307 = vadd.f32 %v1268, %v1274
        %v1308 = vmax.f32 %v1276, 0.0
        %v1309 = vmax.f32 %v1277, 0.0
        %v1310 = vmax.f32 %v1278, 0.0
        %v1311 = vmax.f32 %v1279, 0.0
        %v1312 = vmax.f32 %v1280, 0.0
        %v1313 = vmax.f32 %v1281, 0.0
        %v1314 = vmax.f32 %v1282, 0.0
        %v1315 = vmax.f32 %v1283, 0.0
        %v1316 = vmax.f32 %v1284, 0.0
        %v1317 = vmax.f32 %v1285, 0.0
        %v1318 = vmax.f32 %v1286, 0.0
        %v1319 = vmax.f32 %v1287, 0.0
        %v1320 = vmax.f32 %v1288, 0.0
        %v1321 = vmax.f32 %v1289, 0.0
        %v1322 = vmax.f32 %v1290, 0.0
        %v1323 = vmax.f32 %v1291, 0.0
        %v1324 = vmax.f32 %v1292, 0.0
        %v1325 = vmax.f32 %v1293, 0.0
        %v1326 = vmax.f32 %v1294, 0.0
        %v1327 = vmax.f32 %v1295, 0.0
        %v1328 = vmax.f32 %v1296, 0.0
        %v1329 = vmax.f32 %v1297, 0.0
        %v1330 = vmax.f32 %v1298, 0.0
        %v1331 = vmax.f32 %v1299, 0.0
        %v1332 = vmax.f32 %v1300, 0.0
        %v1333 = vmax.f32 %v1301, 0.0
        %v1334 = vmax.f32 %v1302, 0.0
        %v1335 = vmax.f32 %v1303, 0.0
        %v1336 = vmax.f32 %v1304, 0.0
        %v1337 = vmax.f32 %v1305, 0.0
        %v1338 = vmax.f32 %v1306, 0.0
        %v1339 = vmax.f32 %v1307, 0.0
        %1340 = vst [vmem:[%s265] sm:$0xff] %v1308
        %1341 = vst [vmem:[%s265 + $0x8] sm:$0xff] %v1309
        %1342 = vst [vmem:[%s265 + $0x10] sm:$0xff] %v1310
        %1343 = vst [vmem:[%s265 + $0x18] sm:$0xff] %v1311
        %1344 = vst [vmem:[%s265 + $0x20] sm:$0xff] %v1312
        %1345 = vst [vmem:[%s265 + $0x28] sm:$0xff] %v1313
        %1346 = vst [vmem:[%s265 + $0x30] sm:$0xff] %v1314
        %1347 = vst [vmem:[%s265 + $0x38] sm:$0xff] %v1315
        %1348 = vst [vmem:[%s265 + $0x40] sm:$0xff] %v1316
        %1349 = vst [vmem:[%s265 + $0x48] sm:$0xff] %v1317
        %1350 = vst [vmem:[%s265 + $0x50] sm:$0xff] %v1318
        %1351 = vst [vmem:[%s265 + $0x58] sm:$0xff] %v1319
        %1352 = vst [vmem:[%s265 + $0x60] sm:$0xff] %v1320
        %1353 = vst [vmem:[%s265 + $0x68] sm:$0xff] %v1321
        %1354 = vst [vmem:[%s265 + $0x70] sm:$0xff] %v1322
        %1355 = vst [vmem:[%s265 + $0x78] sm:$0xff] %v1323
        %1356 = vst [vmem:[%s265 + $0x80] sm:$0xff] %v1324
        %1357 = vst [vmem:[%s265 + $0x88] sm:$0xff] %v1325
        %1358 = vst [vmem:[%s265 + $0x90] sm:$0xff] %v1326
        %1359 = vst [vmem:[%s265 + $0x98] sm:$0xff] %v1327
        %1360 = vst [vmem:[%s265 + $0xa0] sm:$0xff] %v1328
        %1361 = vst [vmem:[%s265 + $0xa8] sm:$0xff] %v1329
        %1362 = vst [vmem:[%s265 + $0xb0] sm:$0xff] %v1330
        %1363 = vst [vmem:[%s265 + $0xb8] sm:$0xff] %v1331
        %1364 = vst [vmem:[%s265 + $0xc0] sm:$0xff] %v1332
        %1365 = vst [vmem:[%s265 + $0xc8] sm:$0xff] %v1333
        %1366 = vst [vmem:[%s265 + $0xd0] sm:$0xff] %v1334
        %1367 = vst [vmem:[%s265 + $0xd8] sm:$0xff] %v1335
        %1368 = vst [vmem:[%s265 + $0xe0] sm:$0xff] %v1336
        %1369 = vst [vmem:[%s265 + $0xe8] sm:$0xff] %v1337
        %1370 = vst [vmem:[%s265 + $0xf0] sm:$0xff] %v1338
        %1371 = vst [vmem:[%s265 + $0xf8] sm:$0xff] %v1339
      $region40: #{alexnet_forward.9} parent=31 // pred_fallthru
        _
      %s1372 = smul.u32 32, %s19
      %p1373 = scmp.lt.s32.totalorder %s1372, 63
      %s1374 = scalar_select %p1373, %s1372, 63
      %p1375 = scmp.lt.s32.totalorder %s20, 0
      %s1376 = scalar_select %p1375, %s20, 0
      %s1377 = sadd.s32 %s1376, %s1374
      %s1378 = smul.addr %s1377, 8
      %s1379 = scalar_lea.vmem %s3, %s1378
      // Predicated region
      $region41: #{alexnet_forward.9} parent=31 // pred_check
        %p1380 = pneg %p135
      $region42: #{alexnet_forward.9} parent=31 // pred_check_branch
        %1382 = sbr.rel (%p1380) target = $region44
      $region43: #{alexnet_forward.9} parent=31 // pred_region
        %s1383 = smul.u32 32, %s19
      $region44: #{alexnet_forward.9} parent=31 // pred_fallthru
        _
    $region32: #{alexnet_forward.9} parent=5 // pred_fallthru
      _
    %p1384 = scmp.le.s32.totalorder 2, %s9
    // Predicated region
    $region45: #{alexnet_forward.9} parent=5 // pred_check
      %p1385 = pneg %p1384
    $region46: #{alexnet_forward.9} parent=5 // pred_check_branch
      %1387 = sbr.rel (%p1385) target = $region48
    $region47: #{alexnet_forward.9} parent=5 // pred_region
      %s1388 = ssub.s32 %s9, 2
      // Predicated region
      $region49: #{alexnet_forward.9} parent=47 // pred_check
        %p1389 = pneg %p141
      $region50: #{alexnet_forward.9} parent=47 // pred_check_branch
        %1391 = sbr.rel (%p1389) target = $region52
      $region51: #{alexnet_forward.9} parent=47 // pred_region
        %s1392 = smul.u32 32, %s22
        %p1393 = scmp.lt.s32.totalorder %s1392, 63
        %s1394 = scalar_select %p1393, %s1392, 63
        %p1395 = scmp.lt.s32.totalorder %s23, 0
        %s1396 = scalar_select %p1395, %s23, 0
        %s1397 = sadd.s32 %s1396, %s1394
        %s1398 = smul.addr %s1397, 8
        %s1399 = scalar_lea.vmem %s3, %s1398
      $region52: #{alexnet_forward.9} parent=47 // pred_fallthru
        _
    $region48: #{alexnet_forward.9} parent=5 // pred_fallthru
      _
  $region6: #{alexnet_forward.9} parent=0 // loop_footer
    %s13 = sadd.s32 1, %s9
  $region7: #{alexnet_forward.9} parent=0 // loop_footer_branch
    %8 = sbr.rel target = $region3
  $region8: #{alexnet_forward.9} parent=0 // loop_exit
    _

// kernel: alexnet_forward.10
$region0: #{alexnet_forward.10}
  #allocation0 [shape = 'u32[]', space=smem, size = 0x4, offset = 0x4, fixed_abs, tag = 'smem constant byte address 0x4 - core index']
  #allocation1 [shape = 'u32[144,128]{1,0:T(1,128)}', space=vmem, size = 0x12000, scoped, tag = 'internal scratch']
  %s0 = inlined_call_operand.vmem [shape: f32[2,8,8,64], index: 0, kind: input, shape index: {}]
  %s1 = inlined_call_operand.vmem [shape: f32[2,8,7,64], index: 1, kind: input, shape index: {}]
  %s2 = inlined_call_operand.vmem [shape: f32[2,7,8,64], index: 2, kind: input, shape index: {}]
  %s3 = inlined_call_operand.vmem [shape: f32[2,7,7,64], index: 3, kind: input, shape index: {}]
  %s4 = inlined_call_operand.vmem [shape: f32[2,7,7,64], index: 4, kind: output, shape index: {}]
  %s5 = sld [smem:[#allocation0]]
  $region49: #{alexnet_forward.10} parent=0
    _
  %s7 = ssub.s32 1, %s5
  %s8 = scalar_select 0, %s7, %s5
  loop: start=0, step=1, limit=4
  $region2: #{alexnet_forward.10} parent=0 // loop_pre_header
    _
  $region3: #{alexnet_forward.10} parent=0 // loop_header
    %s10 = sphi 0, %s14
    %p11 = scmp.ge.s32.totalorder %s10, 4
    %s20 = sphi 0, %s22
    %s23 = sphi 0, %s20
    %s24 = sphi 0, %s23
    %s40 = sphi 0, %s24
    %s46 = sphi 0, %s48
    %s49 = sphi 0, %s46
    %s50 = sphi 0, %s49
    %s66 = sphi 0, %s50
    %s72 = sphi 0, %s74
    %s75 = sphi 0, %s72
    %s76 = sphi 0, %s75
    %s92 = sphi 0, %s76
    %s98 = sphi 0, %s100
    %s101 = sphi 0, %s98
    %s102 = sphi 0, %s101
    %s118 = sphi 0, %s102
    %s124 = sphi 0, %s126
    %s127 = sphi 0, %s124
    %s128 = sphi 0, %s127
    %s144 = sphi 0, %s128
  $region4: #{alexnet_forward.10} parent=0 // loop_header_branch
    %13 = sbr.rel (%p11) target = $region8
  $region5: #{alexnet_forward.10} parent=0 // loop_body
    %s15 = ssub.s32 %s10, 1
    %s16 = ssub.s32 %s10, 2
    %s17 = sadd.s32 %s10, 1
    %s18 = ssub.s32 %s10, %s17
    %p19 = scmp.eq.s32.totalorder %s18, 0
    %s21 = sadd.s32 %s20, 1
    %s22 = scalar_select %p19, %s20, %s21
    %p25 = pneg %p19
    %p26 = scmp.eq.s32.totalorder %s10, 1
    %p27 = por %p25, %p26
    %p28 = scmp.ne.s32.totalorder %s20, %s23
    %p29 = scmp.eq.s32.totalorder %s10, 0
    %p30 = por %p28, %p29
    %p31 = scmp.ne.s32.totalorder %s20, %s23
    %p32 = scmp.eq.s32.totalorder %s15, 1
    %p33 = por %p31, %p32
    %p34 = scmp.ne.s32.totalorder %s23, %s24
    %p35 = scmp.eq.s32.totalorder %s15, 0
    %p36 = por %p34, %p35
    %p37 = scmp.ne.s32.totalorder %s23, %s24
    %p38 = scmp.eq.s32.totalorder %s16, 1
    %p39 = por %p37, %p38
    %p41 = scmp.ne.s32.totalorder %s24, %s40
    %p42 = scmp.eq.s32.totalorder %s16, 0
    %p43 = por %p41, %p42
    %s44 = ssub.s32 %s10, %s17
    %p45 = scmp.eq.s32.totalorder %s44, 0
    %s47 = sadd.s32 %s46, 1
    %s48 = scalar_select %p45, %s46, %s47
    %p51 = pneg %p45
    %p52 = scmp.eq.s32.totalorder %s10, 1
    %p53 = por %p51, %p52
    %p54 = scmp.ne.s32.totalorder %s46, %s49
    %p55 = scmp.eq.s32.totalorder %s10, 0
    %p56 = por %p54, %p55
    %p57 = scmp.ne.s32.totalorder %s46, %s49
    %p58 = scmp.eq.s32.totalorder %s15, 1
    %p59 = por %p57, %p58
    %p60 = scmp.ne.s32.totalorder %s49, %s50
    %p61 = scmp.eq.s32.totalorder %s15, 0
    %p62 = por %p60, %p61
    %p63 = scmp.ne.s32.totalorder %s49, %s50
    %p64 = scmp.eq.s32.totalorder %s16, 1
    %p65 = por %p63, %p64
    %p67 = scmp.ne.s32.totalorder %s50, %s66
    %p68 = scmp.eq.s32.totalorder %s16, 0
    %p69 = por %p67, %p68
    %s70 = ssub.s32 %s10, %s17
    %p71 = scmp.eq.s32.totalorder %s70, 0
    %s73 = sadd.s32 %s72, 1
    %s74 = scalar_select %p71, %s72, %s73
    %p77 = pneg %p71
    %p78 = scmp.eq.s32.totalorder %s10, 1
    %p79 = por %p77, %p78
    %p80 = scmp.ne.s32.totalorder %s72, %s75
    %p81 = scmp.eq.s32.totalorder %s10, 0
    %p82 = por %p80, %p81
    %p83 = scmp.ne.s32.totalorder %s72, %s75
    %p84 = scmp.eq.s32.totalorder %s15, 1
    %p85 = por %p83, %p84
    %p86 = scmp.ne.s32.totalorder %s75, %s76
    %p87 = scmp.eq.s32.totalorder %s15, 0
    %p88 = por %p86, %p87
    %p89 = scmp.ne.s32.totalorder %s75, %s76
    %p90 = scmp.eq.s32.totalorder %s16, 1
    %p91 = por %p89, %p90
    %p93 = scmp.ne.s32.totalorder %s76, %s92
    %p94 = scmp.eq.s32.totalorder %s16, 0
    %p95 = por %p93, %p94
    %s96 = ssub.s32 %s10, %s17
    %p97 = scmp.eq.s32.totalorder %s96, 0
    %s99 = sadd.s32 %s98, 1
    %s100 = scalar_select %p97, %s98, %s99
    %p103 = pneg %p97
    %p104 = scmp.eq.s32.totalorder %s10, 1
    %p105 = por %p103, %p104
    %p106 = scmp.ne.s32.totalorder %s98, %s101
    %p107 = scmp.eq.s32.totalorder %s10, 0
    %p108 = por %p106, %p107
    %p109 = scmp.ne.s32.totalorder %s98, %s101
    %p110 = scmp.eq.s32.totalorder %s15, 1
    %p111 = por %p109, %p110
    %p112 = scmp.ne.s32.totalorder %s101, %s102
    %p113 = scmp.eq.s32.totalorder %s15, 0
    %p114 = por %p112, %p113
    %p115 = scmp.ne.s32.totalorder %s101, %s102
    %p116 = scmp.eq.s32.totalorder %s16, 1
    %p117 = por %p115, %p116
    %p119 = scmp.ne.s32.totalorder %s102, %s118
    %p120 = scmp.eq.s32.totalorder %s16, 0
    %p121 = por %p119, %p120
    %s122 = ssub.s32 %s10, %s17
    %p123 = scmp.eq.s32.totalorder %s122, 0
    %s125 = sadd.s32 %s124, 1
    %s126 = scalar_select %p123, %s124, %s125
    %p129 = pneg %p123
    %p130 = scmp.eq.s32.totalorder %s10, 1
    %p131 = por %p129, %p130
    %p132 = scmp.ne.s32.totalorder %s124, %s127
    %p133 = scmp.eq.s32.totalorder %s10, 0
    %p134 = por %p132, %p133
    %p135 = scmp.ne.s32.totalorder %s124, %s127
    %p136 = scmp.eq.s32.totalorder %s15, 1
    %p137 = por %p135, %p136
    %p138 = scmp.ne.s32.totalorder %s127, %s128
    %p139 = scmp.eq.s32.totalorder %s15, 0
    %p140 = por %p138, %p139
    %p141 = scmp.ne.s32.totalorder %s127, %s128
    %p142 = scmp.eq.s32.totalorder %s16, 1
    %p143 = por %p141, %p142
    %p145 = scmp.ne.s32.totalorder %s128, %s144
    %p146 = scmp.eq.s32.totalorder %s16, 0
    %p147 = por %p145, %p146
    %p148 = scmp.le.s32.totalorder 1, %s10
    %p149 = scmp.lt.s32.totalorder %s10, 3
    %p150 = pnand %p148, %p149
    %p151 = pneg %p150
    // Predicated region
    $region9: #{alexnet_forward.10} parent=5 // pred_check
      _
    $region10: #{alexnet_forward.10} parent=5 // pred_check_branch
      %153 = sbr.rel (%p150) target = $region12
    $region11: #{alexnet_forward.10} parent=5 // pred_region
      %s154 = ssub.s32 %s10, 1
    $region12: #{alexnet_forward.10} parent=5 // pred_fallthru
      _
    %p155 = scmp.lt.s32.totalorder %s10, 2
    // Predicated region
    $region13: #{alexnet_forward.10} parent=5 // pred_check
      %p156 = pneg %p155
    $region14: #{alexnet_forward.10} parent=5 // pred_check_branch
      %158 = sbr.rel (%p156) target = $region16
    $region15: #{alexnet_forward.10} parent=5 // pred_region
      // Predicated region
      $region17: #{alexnet_forward.10} parent=15 // pred_check
        %p159 = pneg %p30
      $region18: #{alexnet_forward.10} parent=15 // pred_check_branch
        %161 = sbr.rel (%p159) target = $region20
      $region19: #{alexnet_forward.10} parent=15 // pred_region
        %p162 = scmp.lt.s32.totalorder %s10, 1
        %s163 = scalar_select %p162, %s10, 1
        %s164 = smul.addr %s163, 8
        %s165 = smul.addr %s164, 8
        %s166 = scalar_lea.vmem %s0, %s165
      $region20: #{alexnet_forward.10} parent=15 // pred_fallthru
        _
      // Predicated region
      $region21: #{alexnet_forward.10} parent=15 // pred_check
        %p167 = pneg %p56
      $region22: #{alexnet_forward.10} parent=15 // pred_check_branch
        %169 = sbr.rel (%p167) target = $region24
      $region23: #{alexnet_forward.10} parent=15 // pred_region
        %p170 = scmp.lt.s32.totalorder %s10, 1
        %s171 = scalar_select %p170, %s10, 1
        %s172 = smul.addr %s171, 8
        %s173 = smul.addr %s172, 8
        %s174 = scalar_lea.vmem %s1, %s173
      $region24: #{alexnet_forward.10} parent=15 // pred_fallthru
        _
      // Predicated region
      $region25: #{alexnet_forward.10} parent=15 // pred_check
        %p175 = pneg %p82
      $region26: #{alexnet_forward.10} parent=15 // pred_check_branch
        %177 = sbr.rel (%p175) target = $region28
      $region27: #{alexnet_forward.10} parent=15 // pred_region
        %p178 = scmp.lt.s32.totalorder %s10, 1
        %s179 = scalar_select %p178, %s10, 1
        %s180 = smul.addr %s179, 7
        %s181 = smul.addr %s180, 8
        %s182 = scalar_lea.vmem %s2, %s181
      $region28: #{alexnet_forward.10} parent=15 // pred_fallthru
        _
      // Predicated region
      $region29: #{alexnet_forward.10} parent=15 // pred_check
        %p183 = pneg %p108
      $region30: #{alexnet_forward.10} parent=15 // pred_check_branch
        %185 = sbr.rel (%p183) target = $region32
      $region31: #{alexnet_forward.10} parent=15 // pred_region
        %p186 = scmp.lt.s32.totalorder %s10, 1
        %s187 = scalar_select %p186, %s10, 1
        %s188 = smul.addr %s187, 7
        %s189 = smul.addr %s188, 8
        %s190 = scalar_lea.vmem %s3, %s189
      $region32: #{alexnet_forward.10} parent=15 // pred_fallthru
        _
    $region16: #{alexnet_forward.10} parent=5 // pred_fallthru
      _
    %p191 = scmp.le.s32.totalorder 1, %s10
    %p192 = scmp.lt.s32.totalorder %s10, 3
    %p193 = pnand %p191, %p192
    %p194 = pneg %p193
    // Predicated region
    $region33: #{alexnet_forward.10} parent=5 // pred_check
      _
    $region34: #{alexnet_forward.10} parent=5 // pred_check_branch
      %196 = sbr.rel (%p193) target = $region36
    $region35: #{alexnet_forward.10} parent=5 // pred_region
      %s197 = ssub.s32 %s10, 1
      %p198 = scmp.lt.s32.totalorder %s15, 1
      %s199 = scalar_select %p198, %s15, 1
      %s200 = smul.addr %s199, 8
      %s201 = smul.addr %s200, 8
      %s202 = scalar_lea.vmem %s0, %s201
      %p203 = pneg %p36
      %p204 = pneg %p33
      %p205 = scmp.lt.s32.totalorder %s15, 1
      %s206 = scalar_select %p205, %s15, 1
      %s207 = smul.addr %s206, 8
      %s208 = smul.addr %s207, 8
      %s209 = scalar_lea.vmem %s1, %s208
      %p210 = pneg %p62
      %p211 = pneg %p59
      %p212 = scmp.lt.s32.totalorder %s15, 1
      %s213 = scalar_select %p212, %s15, 1
      %s214 = smul.addr %s213, 7
      %s215 = smul.addr %s214, 8
      %s216 = scalar_lea.vmem %s2, %s215
      %p217 = pneg %p88
      %p218 = pneg %p85
      %p219 = scmp.lt.s32.totalorder %s15, 1
      %s220 = scalar_select %p219, %s15, 1
      %s221 = smul.addr %s220, 7
      %s222 = smul.addr %s221, 8
      %s223 = scalar_lea.vmem %s3, %s222
      %p224 = pneg %p114
      %p225 = pneg %p111
      %p226 = pneg %p140
      %p227 = pneg %p137
      %p228 = scmp.lt.s32.totalorder %s15, 1
      %s229 = scalar_select %p228, %s15, 1
      %s230 = smul.addr %s229, 7
      %s231 = smul.addr %s230, 8
      %s232 = scalar_lea.vmem %s4, %s231
      %p233 = scmp.lt.s32.totalorder %s15, 1
      %s234 = scalar_select %p233, %s15, 1
      %s235 = smul.addr %s234, 8
      %s236 = smul.addr %s235, 8
      %s237 = scalar_lea.vmem %s0, %s236
      %p238 = scmp.lt.s32.totalorder %s15, 1
      %s239 = scalar_select %p238, %s15, 1
      %s240 = smul.addr %s239, 8
      %s241 = smul.addr %s240, 8
      %s242 = scalar_lea.vmem %s1, %s241
      %p243 = scmp.lt.s32.totalorder %s15, 1
      %s244 = scalar_select %p243, %s15, 1
      %s245 = smul.addr %s244, 7
      %s246 = smul.addr %s245, 8
      %s247 = scalar_lea.vmem %s2, %s246
      %p248 = scmp.lt.s32.totalorder %s15, 1
      %s249 = scalar_select %p248, %s15, 1
      %s250 = smul.addr %s249, 7
      %s251 = smul.addr %s250, 8
      %s252 = scalar_lea.vmem %s3, %s251
      %p253 = scmp.lt.s32.totalorder %s15, 1
      %s254 = scalar_select %p253, %s15, 1
      %s255 = smul.addr %s254, 7
      %s256 = smul.addr %s255, 8
      %s257 = scalar_lea.vmem %s4, %s256
      %v258 = vld [vmem:[%s237] sm:$0x7f]
      %v259 = vld [vmem:[%s237 + $0x8] sm:$0x7f]
      %v260 = vld [vmem:[%s237 + $0x10] sm:$0x7f]
      %v261 = vld [vmem:[%s237 + $0x18] sm:$0x7f]
      %v262 = vld [vmem:[%s237 + $0x20] sm:$0x7f]
      %v263 = vld [vmem:[%s237 + $0x28] sm:$0x7f]
      %v264 = vld [vmem:[%s237 + $0x30] sm:$0x7f]
      %v265 = vld [vmem:[%s237 + $0x38] sm:$0x7f]
      %v266 = vld [vmem:[%s237 + $0x1] sm:$0x7f]
      %v267 = vld [vmem:[%s237 + $0x9] sm:$0x7f]
      %v268 = vld [vmem:[%s237 + $0x11] sm:$0x7f]
      %v269 = vld [vmem:[%s237 + $0x19] sm:$0x7f]
      %v270 = vld [vmem:[%s237 + $0x21] sm:$0x7f]
      %v271 = vld [vmem:[%s237 + $0x29] sm:$0x7f]
      %v272 = vld [vmem:[%s237 + $0x31] sm:$0x7f]
      %v273 = vld [vmem:[%s237 + $0x39] sm:$0x7f]
      %v274 = vmax.f32 %v258, %v266
      %v275 = vmax.f32 %v259, %v267
      %v276 = vmax.f32 %v260, %v268
      %v277 = vmax.f32 %v261, %v269
      %v278 = vmax.f32 %v262, %v270
      %v279 = vmax.f32 %v263, %v271
      %v280 = vmax.f32 %v264, %v272
      %v281 = vmax.f32 %v265, %v273
      %v282 = vld [vmem:[%s242] sm:$0x7f]
      %v283 = vld [vmem:[%s242 + $0x8] sm:$0x7f]
      %v284 = vld [vmem:[%s242 + $0x10] sm:$0x7f]
      %v285 = vld [vmem:[%s242 + $0x18] sm:$0x7f]
      %v286 = vld [vmem:[%s242 + $0x20] sm:$0x7f]
      %v287 = vld [vmem:[%s242 + $0x28] sm:$0x7f]
      %v288 = vld [vmem:[%s242 + $0x30] sm:$0x7f]
      %v289 = vld [vmem:[%s242 + $0x38] sm:$0x7f]
      %v290 = vmax.f32 %v274, %v282
      %v291 = vmax.f32 %v275, %v283
      %v292 = vmax.f32 %v276, %v284
      %v293 = vmax.f32 %v277, %v285
      %v294 = vmax.f32 %v278, %v286
      %v295 = vmax.f32 %v279, %v287
      %v296 = vmax.f32 %v280, %v288
      %v297 = vmax.f32 %v281, %v289
      %v298 = vld [vmem:[%s247] sm:$0x7f]
      %v299 = vld [vmem:[%s247 + $0x8] sm:$0x7f]
      %v300 = vld [vmem:[%s247 + $0x10] sm:$0x7f]
      %v301 = vld [vmem:[%s247 + $0x18] sm:$0x7f]
      %v302 = vld [vmem:[%s247 + $0x20] sm:$0x7f]
      %v303 = vld [vmem:[%s247 + $0x28] sm:$0x7f]
      %v304 = vld [vmem:[%s247 + $0x30] sm:$0x7f]
      %v305 = vld [vmem:[%s247 + $0x1] sm:$0x7f]
      %v306 = vld [vmem:[%s247 + $0x9] sm:$0x7f]
      %v307 = vld [vmem:[%s247 + $0x11] sm:$0x7f]
      %v308 = vld [vmem:[%s247 + $0x19] sm:$0x7f]
      %v309 = vld [vmem:[%s247 + $0x21] sm:$0x7f]
      %v310 = vld [vmem:[%s247 + $0x29] sm:$0x7f]
      %v311 = vld [vmem:[%s247 + $0x31] sm:$0x7f]
      %v312 = vmax.f32 %v298, %v305
      %v313 = vmax.f32 %v299, %v306
      %v314 = vmax.f32 %v300, %v307
      %v315 = vmax.f32 %v301, %v308
      %v316 = vmax.f32 %v302, %v309
      %v317 = vmax.f32 %v303, %v310
      %v318 = vmax.f32 %v304, %v311
      %v319 = vld [vmem:[%s252] sm:$0x7f]
      %v320 = vld [vmem:[%s252 + $0x8] sm:$0x7f]
      %v321 = vld [vmem:[%s252 + $0x10] sm:$0x7f]
      %v322 = vld [vmem:[%s252 + $0x18] sm:$0x7f]
      %v323 = vld [vmem:[%s252 + $0x20] sm:$0x7f]
      %v324 = vld [vmem:[%s252 + $0x28] sm:$0x7f]
      %v325 = vld [vmem:[%s252 + $0x30] sm:$0x7f]
      %v326 = vmax.f32 %v312, %v319
      %v327 = vmax.f32 %v313, %v320
      %v328 = vmax.f32 %v314, %v321
      %v329 = vmax.f32 %v315, %v322
      %v330 = vmax.f32 %v316, %v323
      %v331 = vmax.f32 %v317, %v324
      %v332 = vmax.f32 %v318, %v325
      %v333 = vmax.f32 %v290, %v291
      %v334 = vmax.f32 %v291, %v292
      %v335 = vmax.f32 %v292, %v293
      %v336 = vmax.f32 %v293, %v294
      %v337 = vmax.f32 %v294, %v295
      %v338 = vmax.f32 %v295, %v296
      %v339 = vmax.f32 %v296, %v297
      %v340 = vmax.f32 %v333, %v326
      %v341 = vmax.f32 %v334, %v327
      %v342 = vmax.f32 %v335, %v328
      %v343 = vmax.f32 %v336, %v329
      %v344 = vmax.f32 %v337, %v330
      %v345 = vmax.f32 %v338, %v331
      %v346 = vmax.f32 %v339, %v332
      %vm347 = vcmask 522240
      %348 = vst.msk [vmem:[%s257] sm:$0x7f] %vm347, %v340
      %349 = vst.msk [vmem:[%s257 + $0x8] sm:$0x7f] %vm347, %v341
      %350 = vst.msk [vmem:[%s257 + $0x10] sm:$0x7f] %vm347, %v342
      %351 = vst.msk [vmem:[%s257 + $0x18] sm:$0x7f] %vm347, %v343
      %352 = vst.msk [vmem:[%s257 + $0x20] sm:$0x7f] %vm347, %v344
      %353 = vst.msk [vmem:[%s257 + $0x28] sm:$0x7f] %vm347, %v345
      %354 = vst.msk [vmem:[%s257 + $0x30] sm:$0x7f] %vm347, %v346
      %p355 = scmp.lt.s32.totalorder %s15, 1
      %s356 = scalar_select %p355, %s15, 1
      %s357 = smul.addr %s356, 7
      %s358 = smul.addr %s357, 8
      %s359 = scalar_lea.vmem %s4, %s358
      // Predicated region
      $region37: #{alexnet_forward.10} parent=35 // pred_check
        %p360 = pneg %p137
      $region38: #{alexnet_forward.10} parent=35 // pred_check_branch
        %362 = sbr.rel (%p360) target = $region40
      $region39: #{alexnet_forward.10} parent=35 // pred_region
        _
      $region40: #{alexnet_forward.10} parent=35 // pred_fallthru
        _
    $region36: #{alexnet_forward.10} parent=5 // pred_fallthru
      _
    %p363 = scmp.le.s32.totalorder 2, %s10
    // Predicated region
    $region41: #{alexnet_forward.10} parent=5 // pred_check
      %p364 = pneg %p363
    $region42: #{alexnet_forward.10} parent=5 // pred_check_branch
      %366 = sbr.rel (%p364) target = $region44
    $region43: #{alexnet_forward.10} parent=5 // pred_region
      %s367 = ssub.s32 %s10, 2
      // Predicated region
      $region45: #{alexnet_forward.10} parent=43 // pred_check
        %p368 = pneg %p143
      $region46: #{alexnet_forward.10} parent=43 // pred_check_branch
        %370 = sbr.rel (%p368) target = $region48
      $region47: #{alexnet_forward.10} parent=43 // pred_region
        %p371 = scmp.lt.s32.totalorder %s16, 1
        %s372 = scalar_select %p371, %s16, 1
        %s373 = smul.addr %s372, 7
        %s374 = smul.addr %s373, 8
        %s375 = scalar_lea.vmem %s4, %s374
      $region48: #{alexnet_forward.10} parent=43 // pred_fallthru
        _
    $region44: #{alexnet_forward.10} parent=5 // pred_fallthru
      _
  $region6: #{alexnet_forward.10} parent=0 // loop_footer
    %s14 = sadd.s32 1, %s10
  $region7: #{alexnet_forward.10} parent=0 // loop_footer_branch
    %9 = sbr.rel target = $region3
  $region8: #{alexnet_forward.10} parent=0 // loop_exit
    _

// kernel: alexnet_forward.11
$region0: #{alexnet_forward.11}
  #allocation0 [shape = 'u32[]', space=smem, size = 0x4, offset = 0x4, fixed_abs, tag = 'smem constant byte address 0x4 - core index']
  #allocation1 [shape = 'u32[144,128]{1,0:T(1,128)}', space=vmem, size = 0x12000, scoped, tag = 'internal scratch']
  #allocation2 [shape = 'f32[104,256]{1,0:T(8,128)}', space=vmem, size = 0x1a000, scoped, tag = 'scratch operand']
  %s0 = inlined_call_operand.vmem [shape: bf16[104,1792], index: 0, kind: input, shape index: {}]
  %s1 = inlined_call_operand.vmem [shape: bf16[1792,256], index: 1, kind: input, shape index: {}]
  %s2 = inlined_call_operand.vmem [shape: f32[1,256], index: 2, kind: input, shape index: {}]
  %s3 = inlined_call_operand.vmem [shape: f32[104,256], index: 3, kind: output, shape index: {}]
  %s4 = sld [smem:[#allocation0]]
  $region79: #{alexnet_forward.11} parent=0
    _
  %s6 = ssub.s32 1, %s4
  %s7 = scalar_select 0, %s6, %s4
  $region1: #{alexnet_forward.11} parent=0
    #allocation3 [shape = 'u8[372736]{0}', space=vmem, size = 0x5b000, scoped, tag = 'input window, operand 0']
    loop: start=0, step=1, limit=4
    $region2: #{alexnet_forward.11} parent=1 // loop_pre_header
      _
    $region3: #{alexnet_forward.11} parent=1 // loop_header
      %s9 = sphi 0, %s13
      %p10 = scmp.ge.s32.totalorder %s9, 4
      %s16 = sphi 0, %s35
      %s17 = sphi 0, %s31
      %s18 = sphi 0, %s27
      %s19 = sphi 0, %s16
      %s20 = sphi 0, %s17
      %s21 = sphi 0, %s18
      %s22 = sphi 0, %s19
      %s23 = sphi 0, %s20
      %s24 = sphi 0, %s21
      %s40 = sphi 0, %s42
      %s43 = sphi 0, %s40
      %s44 = sphi 0, %s43
      %s60 = sphi 0, %s44
      %s68 = sphi 0, %s70
      %s71 = sphi 0, %s68
      %s72 = sphi 0, %s71
      %s88 = sphi 0, %s72
      %s94 = sphi 0, %s96
      %s97 = sphi 0, %s94
      %s98 = sphi 0, %s97
      %s114 = sphi 0, %s98
      %s122 = sphi 0, %s124
      %s125 = sphi 0, %s122
      %s126 = sphi 0, %s125
      %s142 = sphi 0, %s126
    $region4: #{alexnet_forward.11} parent=1 // loop_header_branch
      %12 = sbr.rel (%p10) target = $region8
    $region5: #{alexnet_forward.11} parent=1 // loop_body
      %s14 = ssub.s32 %s9, 1
      %s15 = ssub.s32 %s9, 2
      %s25 = sadd.s32 1, %s18
      %p26 = scmp.ge.s32.totalorder %s25, 2
      %s27 = scalar_select %p26, 0, %s25
      %s28 = sadd.s32 1, %s17
      %s29 = scalar_select %p26, %s28, %s17
      %p30 = scmp.ge.s32.totalorder %s29, 1
      %s31 = scalar_select %p30, 0, %s29
      %s32 = sadd.s32 1, %s16
      %s33 = scalar_select %p30, %s32, %s16
      %p34 = scmp.ge.s32.totalorder %s33, 1
      %s35 = scalar_select %p34, 0, %s33
      %s36 = ssub.s32 %s16, %s35
      %s37 = ssub.s32 %s18, %s27
      %s38 = sor.u32 %s36, %s37
      %p39 = scmp.eq.s32.totalorder %s38, 0
      %s41 = sadd.s32 %s40, 1
      %s42 = scalar_select %p39, %s40, %s41
      %p45 = pneg %p39
      %p46 = scmp.eq.s32.totalorder %s9, 1
      %p47 = por %p45, %p46
      %p48 = scmp.ne.s32.totalorder %s40, %s43
      %p49 = scmp.eq.s32.totalorder %s9, 0
      %p50 = por %p48, %p49
      %p51 = scmp.ne.s32.totalorder %s40, %s43
      %p52 = scmp.eq.s32.totalorder %s14, 1
      %p53 = por %p51, %p52
      %p54 = scmp.ne.s32.totalorder %s43, %s44
      %p55 = scmp.eq.s32.totalorder %s14, 0
      %p56 = por %p54, %p55
      %p57 = scmp.ne.s32.totalorder %s43, %s44
      %p58 = scmp.eq.s32.totalorder %s15, 1
      %p59 = por %p57, %p58
      %p61 = scmp.ne.s32.totalorder %s44, %s60
      %p62 = scmp.eq.s32.totalorder %s15, 0
      %p63 = por %p61, %p62
      %s64 = ssub.s32 %s18, %s27
      %s65 = ssub.s32 %s17, %s31
      %s66 = sor.u32 %s64, %s65
      %p67 = scmp.eq.s32.totalorder %s66, 0
      %s69 = sadd.s32 %s68, 1
      %s70 = scalar_select %p67, %s68, %s69
      %p73 = pneg %p67
      %p74 = scmp.eq.s32.totalorder %s9, 1
      %p75 = por %p73, %p74
      %p76 = scmp.ne.s32.totalorder %s68, %s71
      %p77 = scmp.eq.s32.totalorder %s9, 0
      %p78 = por %p76, %p77
      %p79 = scmp.ne.s32.totalorder %s68, %s71
      %p80 = scmp.eq.s32.totalorder %s14, 1
      %p81 = por %p79, %p80
      %p82 = scmp.ne.s32.totalorder %s71, %s72
      %p83 = scmp.eq.s32.totalorder %s14, 0
      %p84 = por %p82, %p83
      %p85 = scmp.ne.s32.totalorder %s71, %s72
      %p86 = scmp.eq.s32.totalorder %s15, 1
      %p87 = por %p85, %p86
      %p89 = scmp.ne.s32.totalorder %s72, %s88
      %p90 = scmp.eq.s32.totalorder %s15, 0
      %p91 = por %p89, %p90
      %s92 = ssub.s32 %s17, %s31
      %p93 = scmp.eq.s32.totalorder %s92, 0
      %s95 = sadd.s32 %s94, 1
      %s96 = scalar_select %p93, %s94, %s95
      %p99 = pneg %p93
      %p100 = scmp.eq.s32.totalorder %s9, 1
      %p101 = por %p99, %p100
      %p102 = scmp.ne.s32.totalorder %s94, %s97
      %p103 = scmp.eq.s32.totalorder %s9, 0
      %p104 = por %p102, %p103
      %p105 = scmp.ne.s32.totalorder %s94, %s97
      %p106 = scmp.eq.s32.totalorder %s14, 1
      %p107 = por %p105, %p106
      %p108 = scmp.ne.s32.totalorder %s97, %s98
      %p109 = scmp.eq.s32.totalorder %s14, 0
      %p110 = por %p108, %p109
      %p111 = scmp.ne.s32.totalorder %s97, %s98
      %p112 = scmp.eq.s32.totalorder %s15, 1
      %p113 = por %p111, %p112
      %p115 = scmp.ne.s32.totalorder %s98, %s114
      %p116 = scmp.eq.s32.totalorder %s15, 0
      %p117 = por %p115, %p116
      %s118 = ssub.s32 %s16, %s35
      %s119 = ssub.s32 %s17, %s31
      %s120 = sor.u32 %s118, %s119
      %p121 = scmp.eq.s32.totalorder %s120, 0
      %s123 = sadd.s32 %s122, 1
      %s124 = scalar_select %p121, %s122, %s123
      %p127 = pneg %p121
      %p128 = scmp.eq.s32.totalorder %s9, 1
      %p129 = por %p127, %p128
      %p130 = scmp.ne.s32.totalorder %s122, %s125
      %p131 = scmp.eq.s32.totalorder %s9, 0
      %p132 = por %p130, %p131
      %p133 = scmp.ne.s32.totalorder %s122, %s125
      %p134 = scmp.eq.s32.totalorder %s14, 1
      %p135 = por %p133, %p134
      %p136 = scmp.ne.s32.totalorder %s125, %s126
      %p137 = scmp.eq.s32.totalorder %s14, 0
      %p138 = por %p136, %p137
      %p139 = scmp.ne.s32.totalorder %s125, %s126
      %p140 = scmp.eq.s32.totalorder %s15, 1
      %p141 = por %p139, %p140
      %p143 = scmp.ne.s32.totalorder %s126, %s142
      %p144 = scmp.eq.s32.totalorder %s15, 0
      %p145 = por %p143, %p144
      %p146 = scmp.le.s32.totalorder 1, %s9
      %p147 = scmp.lt.s32.totalorder %s9, 3
      %p148 = pnand %p146, %p147
      %p149 = pneg %p148
      // Predicated region
      $region9: #{alexnet_forward.11} parent=5 // pred_check
        _
      $region10: #{alexnet_forward.11} parent=5 // pred_check_branch
        %151 = sbr.rel (%p148) target = $region12
      $region11: #{alexnet_forward.11} parent=5 // pred_region
        %s152 = ssub.s32 %s9, 1
        // Predicated region
        $region13: #{alexnet_forward.11} parent=11 // pred_check
          %p153 = pneg %p110
        $region14: #{alexnet_forward.11} parent=11 // pred_check_branch
          %155 = sbr.rel (%p153) target = $region16
        $region15: #{alexnet_forward.11} parent=11 // pred_region
          %s156 = smul.u32 2, %s20
          %p157 = scmp.lt.s32.totalorder %s156, 1
          %s158 = scalar_select %p157, %s156, 1
          %s159 = scalar_lea.vmem %s2, %s158
          %s160 = smul.u32 2, %s20
        $region16: #{alexnet_forward.11} parent=11 // pred_fallthru
          _
      $region12: #{alexnet_forward.11} parent=5 // pred_fallthru
        _
      %p161 = scmp.lt.s32.totalorder %s9, 2
      // Predicated region
      $region17: #{alexnet_forward.11} parent=5 // pred_check
        %p162 = pneg %p161
      $region18: #{alexnet_forward.11} parent=5 // pred_check_branch
        %164 = sbr.rel (%p162) target = $region20
      $region19: #{alexnet_forward.11} parent=5 // pred_region
        // Predicated region
        $region21: #{alexnet_forward.11} parent=19 // pred_check
          %p165 = pneg %p50
        $region22: #{alexnet_forward.11} parent=19 // pred_check_branch
          %167 = sbr.rel (%p165) target = $region24
        $region23: #{alexnet_forward.11} parent=19 // pred_region
          %s168 = sand.u32 %s40, 1
          %s169 = sand.u32 %s40, 1
          %s170 = smul.addr %s169, 364
          %s171 = scalar_lea.vmem [#allocation3], %s170
          %s172 = smul.u32 13, %s16
          %s173 = smul.u32 7, %s18
          %s174 = smul.addr %s172, 14
          %s175 = sadd.s32 %s173, %s174
          %s176 = smul.addr %s175, 4
          %s177 = scalar_lea.vmem %s0, %s176
          // Predicated region
          $region25: #{alexnet_forward.11} parent=23 // pred_check
            _
          $region26: #{alexnet_forward.11} parent=23 // pred_check_branch
            %179 = sbr.rel (0) target = $region28
          $region27: #{alexnet_forward.11} parent=23 // pred_region
            // Predicated region
            $region29: #{alexnet_forward.11} parent=27 // pred_check
              _
            $region30: #{alexnet_forward.11} parent=27 // pred_check_branch
              %181 = sbr.rel (0) target = $region32
            $region31: #{alexnet_forward.11} parent=27 // pred_region
              %s182 = scalar_lea.vmem %s177, 24
              %s183 = scalar_lea.vmem %s171, 24 [#allocation3]
              loop: start=0, step=1, limit=1
              $region33: #{alexnet_forward.11} parent=31 // loop_pre_header
                _
              $region34: #{alexnet_forward.11} parent=31 // loop_header
                %s185 = sphi 0, %s189
                %p186 = scmp.ge.s32.totalorder %s185, 1
                %s190 = sphi %s177, %s177
                %s191 = sphi %s171, %s171
              $region35: #{alexnet_forward.11} parent=31 // loop_header_branch
                %188 = sbr.rel (%p186) target = $region39
              $region36: #{alexnet_forward.11} parent=31 // loop_body
                %v192 = vld [vmem:[%s190] sm:$0xff]
                %193 = vst [vmem:[%s191] sm:$0xff] %v192
                %v194 = vld [vmem:[%s190 + $0x8] sm:$0xff]
                %195 = vst [vmem:[%s191 + $0x8] sm:$0xff] %v194
                %v196 = vld [vmem:[%s190 + $0x10] sm:$0xff]
                %197 = vst [vmem:[%s191 + $0x10] sm:$0xff] %v196
                %v198 = vld [vmem:[%s190 + $0x38] sm:$0xff]
                %199 = vst [vmem:[%s191 + $0x1c] sm:$0xff] %v198
                %v200 = vld [vmem:[%s190 + $0x40] sm:$0xff]
                %201 = vst [vmem:[%s191 + $0x24] sm:$0xff] %v200
                %v202 = vld [vmem:[%s190 + $0x48] sm:$0xff]
                %203 = vst [vmem:[%s191 + $0x2c] sm:$0xff] %v202
                %v204 = vld [vmem:[%s190 + $0x70] sm:$0xff]
                %205 = vst [vmem:[%s191 + $0x38] sm:$0xff] %v204
                %v206 = vld [vmem:[%s190 + $0x78] sm:$0xff]
                %207 = vst [vmem:[%s191 + $0x40] sm:$0xff] %v206
                %v208 = vld [vmem:[%s190 + $0x80] sm:$0xff]
                %209 = vst [vmem:[%s191 + $0x48] sm:$0xff] %v208
                %v210 = vld [vmem:[%s190 + $0xa8] sm:$0xff]
                %211 = vst [vmem:[%s191 + $0x54] sm:$0xff] %v210
                %v212 = vld [vmem:[%s190 + $0xb0] sm:$0xff]
                %213 = vst [vmem:[%s191 + $0x5c] sm:$0xff] %v212
                %v214 = vld [vmem:[%s190 + $0xb8] sm:$0xff]
                %215 = vst [vmem:[%s191 + $0x64] sm:$0xff] %v214
                %v216 = vld [vmem:[%s190 + $0xe0] sm:$0xff]
                %217 = vst [vmem:[%s191 + $0x70] sm:$0xff] %v216
                %v218 = vld [vmem:[%s190 + $0xe8] sm:$0xff]
                %219 = vst [vmem:[%s191 + $0x78] sm:$0xff] %v218
                %v220 = vld [vmem:[%s190 + $0xf0] sm:$0xff]
                %221 = vst [vmem:[%s191 + $0x80] sm:$0xff] %v220
                %v222 = vld [vmem:[%s190 + $0x118] sm:$0xff]
                %223 = vst [vmem:[%s191 + $0x8c] sm:$0xff] %v222
                %v224 = vld [vmem:[%s190 + $0x120] sm:$0xff]
                %225 = vst [vmem:[%s191 + $0x94] sm:$0xff] %v224
                %v226 = vld [vmem:[%s190 + $0x128] sm:$0xff]
                %227 = vst [vmem:[%s191 + $0x9c] sm:$0xff] %v226
                %v228 = vld [vmem:[%s190 + $0x150] sm:$0xff]
                %229 = vst [vmem:[%s191 + $0xa8] sm:$0xff] %v228
                %v230 = vld [vmem:[%s190 + $0x158] sm:$0xff]
                %231 = vst [vmem:[%s191 + $0xb0] sm:$0xff] %v230
                %v232 = vld [vmem:[%s190 + $0x160] sm:$0xff]
                %233 = vst [vmem:[%s191 + $0xb8] sm:$0xff] %v232
                %v234 = vld [vmem:[%s190 + $0x188] sm:$0xff]
                %235 = vst [vmem:[%s191 + $0xc4] sm:$0xff] %v234
                %v236 = vld [vmem:[%s190 + $0x190] sm:$0xff]
                %237 = vst [vmem:[%s191 + $0xcc] sm:$0xff] %v236
                %v238 = vld [vmem:[%s190 + $0x198] sm:$0xff]
                %239 = vst [vmem:[%s191 + $0xd4] sm:$0xff] %v238
                %v240 = vld [vmem:[%s190 + $0x1c0] sm:$0xff]
                %241 = vst [vmem:[%s191 + $0xe0] sm:$0xff] %v240
                %v242 = vld [vmem:[%s190 + $0x1c8] sm:$0xff]
                %243 = vst [vmem:[%s191 + $0xe8] sm:$0xff] %v242
                %v244 = vld [vmem:[%s190 + $0x1d0] sm:$0xff]
                %245 = vst [vmem:[%s191 + $0xf0] sm:$0xff] %v244
                %v246 = vld [vmem:[%s190 + $0x1f8] sm:$0xff]
                %247 = vst [vmem:[%s191 + $0xfc] sm:$0xff] %v246
                %v248 = vld [vmem:[%s190 + $0x200] sm:$0xff]
                %249 = vst [vmem:[%s191 + $0x104] sm:$0xff] %v248
                %v250 = vld [vmem:[%s190 + $0x208] sm:$0xff]
                %251 = vst [vmem:[%s191 + $0x10c] sm:$0xff] %v250
                %v252 = vld [vmem:[%s190 + $0x230] sm:$0xff]
                %253 = vst [vmem:[%s191 + $0x118] sm:$0xff] %v252
                %v254 = vld [vmem:[%s190 + $0x238] sm:$0xff]
                %255 = vst [vmem:[%s191 + $0x120] sm:$0xff] %v254
                %v256 = vld [vmem:[%s190 + $0x240] sm:$0xff]
                %257 = vst [vmem:[%s191 + $0x128] sm:$0xff] %v256
                %v258 = vld [vmem:[%s190 + $0x268] sm:$0xff]
                %259 = vst [vmem:[%s191 + $0x134] sm:$0xff] %v258
                %v260 = vld [vmem:[%s190 + $0x270] sm:$0xff]
                %261 = vst [vmem:[%s191 + $0x13c] sm:$0xff] %v260
                %v262 = vld [vmem:[%s190 + $0x278] sm:$0xff]
                %263 = vst [vmem:[%s191 + $0x144] sm:$0xff] %v262
                %v264 = vld [vmem:[%s190 + $0x2a0] sm:$0xff]
                %265 = vst [vmem:[%s191 + $0x150] sm:$0xff] %v264
                %v266 = vld [vmem:[%s190 + $0x2a8] sm:$0xff]
                %267 = vst [vmem:[%s191 + $0x158] sm:$0xff] %v266
                %v268 = vld [vmem:[%s190 + $0x2b0] sm:$0xff]
                %269 = vst [vmem:[%s191 + $0x160] sm:$0xff] %v268
              $region37: #{alexnet_forward.11} parent=31 // loop_footer
                %s189 = sadd.s32 1, %s185
              $region38: #{alexnet_forward.11} parent=31 // loop_footer_branch
                %184 = sbr.rel target = $region34
              $region39: #{alexnet_forward.11} parent=31 // loop_exit
                _
              loop: start=0, step=1, limit=1
              $region40: #{alexnet_forward.11} parent=31 // loop_pre_header
                _
              $region41: #{alexnet_forward.11} parent=31 // loop_header
                %s272 = sphi 0, %s276
                %p273 = scmp.ge.s32.totalorder %s272, 1
                %s277 = sphi %s182, %s182
                %s278 = sphi %s183, %s183
              $region42: #{alexnet_forward.11} parent=31 // loop_header_branch
                %275 = sbr.rel (%p273) target = $region46
              $region43: #{alexnet_forward.11} parent=31 // loop_body
                %v279 = vld [vmem:[%s277] sm:$0xf]
                %280 = vst [vmem:[%s278] sm:$0xf] %v279
                %v281 = vld [vmem:[%s277 + $0x38] sm:$0xf]
                %282 = vst [vmem:[%s278 + $0x1c] sm:$0xf] %v281
                %v283 = vld [vmem:[%s277 + $0x70] sm:$0xf]
                %284 = vst [vmem:[%s278 + $0x38] sm:$0xf] %v283
                %v285 = vld [vmem:[%s277 + $0xa8] sm:$0xf]
                %286 = vst [vmem:[%s278 + $0x54] sm:$0xf] %v285
                %v287 = vld [vmem:[%s277 + $0xe0] sm:$0xf]
                %288 = vst [vmem:[%s278 + $0x70] sm:$0xf] %v287
                %v289 = vld [vmem:[%s277 + $0x118] sm:$0xf]
                %290 = vst [vmem:[%s278 + $0x8c] sm:$0xf] %v289
                %v291 = vld [vmem:[%s277 + $0x150] sm:$0xf]
                %292 = vst [vmem:[%s278 + $0xa8] sm:$0xf] %v291
                %v293 = vld [vmem:[%s277 + $0x188] sm:$0xf]
                %294 = vst [vmem:[%s278 + $0xc4] sm:$0xf] %v293
                %v295 = vld [vmem:[%s277 + $0x1c0] sm:$0xf]
                %296 = vst [vmem:[%s278 + $0xe0] sm:$0xf] %v295
                %v297 = vld [vmem:[%s277 + $0x1f8] sm:$0xf]
                %298 = vst [vmem:[%s278 + $0xfc] sm:$0xf] %v297
                %v299 = vld [vmem:[%s277 + $0x230] sm:$0xf]
                %300 = vst [vmem:[%s278 + $0x118] sm:$0xf] %v299
                %v301 = vld [vmem:[%s277 + $0x268] sm:$0xf]
                %302 = vst [vmem:[%s278 + $0x134] sm:$0xf] %v301
                %v303 = vld [vmem:[%s277 + $0x2a0] sm:$0xf]
                %304 = vst [vmem:[%s278 + $0x150] sm:$0xf] %v303
              $region44: #{alexnet_forward.11} parent=31 // loop_footer
                %s276 = sadd.s32 1, %s272
              $region45: #{alexnet_forward.11} parent=31 // loop_footer_branch
                %271 = sbr.rel target = $region41
              $region46: #{alexnet_forward.11} parent=31 // loop_exit
                _
            $region32: #{alexnet_forward.11} parent=27 // pred_fallthru
              _
          $region28: #{alexnet_forward.11} parent=23 // pred_fallthru
            _
          %305 = vnop
        $region24: #{alexnet_forward.11} parent=19 // pred_fallthru
          _
        // Predicated region
        $region47: #{alexnet_forward.11} parent=19 // pred_check
          %p306 = pneg %p78
        $region48: #{alexnet_forward.11} parent=19 // pred_check_branch
          %308 = sbr.rel (%p306) target = $region50
        $region49: #{alexnet_forward.11} parent=19 // pred_region
          %s309 = smul.u32 112, %s18
          %s310 = smul.u32 2, %s17
          %p311 = scmp.lt.s32.totalorder %s309, 223
          %s312 = scalar_select %p311, %s309, 223
          %p313 = scmp.lt.s32.totalorder %s310, 1
          %s314 = scalar_select %p313, %s310, 1
          %s315 = smul.addr %s312, 2
          %s316 = sadd.s32 %s314, %s315
          %s317 = smul.addr %s316, 4
          %s318 = scalar_lea.vmem %s1, %s317
          %s319 = smul.u32 112, %s18
          %s320 = smul.u32 2, %s17
        $region50: #{alexnet_forward.11} parent=19 // pred_fallthru
          _
      $region20: #{alexnet_forward.11} parent=5 // pred_fallthru
        _
      %p321 = scmp.le.s32.totalorder 1, %s9
      %p322 = scmp.lt.s32.totalorder %s9, 3
      %p323 = pnand %p321, %p322
      %p324 = pneg %p323
      // Predicated region
      $region51: #{alexnet_forward.11} parent=5 // pred_check
        _
      $region52: #{alexnet_forward.11} parent=5 // pred_check_branch
        %326 = sbr.rel (%p323) target = $region54
      $region53: #{alexnet_forward.11} parent=5 // pred_region
        %s327 = ssub.s32 %s9, 1
        %s328 = sand.u32 %s43, 1
        %s329 = sand.u32 %s43, 1
        %s330 = smul.addr %s329, 364
        %s331 = scalar_lea.vmem [#allocation3], %s330
        // Predicated region
        $region55: #{alexnet_forward.11} parent=53 // pred_check
          %p332 = pneg %p56
        $region56: #{alexnet_forward.11} parent=53 // pred_check_branch
          %334 = sbr.rel (%p332) target = $region58
        $region57: #{alexnet_forward.11} parent=53 // pred_region
          _
        $region58: #{alexnet_forward.11} parent=53 // pred_fallthru
          _
        %s335 = sand.u32 %s43, 1
        %s336 = sand.u32 %s43, 1
        %s337 = smul.addr %s336, 364
        %s338 = scalar_lea.vmem [#allocation3], %s337
        %p339 = pneg %p56
        %p340 = pneg %p53
        %s341 = smul.u32 112, %s21
        %s342 = smul.u32 2, %s20
        %p343 = scmp.lt.s32.totalorder %s341, 223
        %s344 = scalar_select %p343, %s341, 223
        %p345 = scmp.lt.s32.totalorder %s342, 1
        %s346 = scalar_select %p345, %s342, 1
        %s347 = smul.addr %s344, 2
        %s348 = sadd.s32 %s346, %s347
        %s349 = smul.addr %s348, 4
        %s350 = scalar_lea.vmem %s1, %s349
        %p351 = pneg %p84
        %p352 = pneg %p81
        %s353 = smul.u32 2, %s20
        %p354 = scmp.lt.s32.totalorder %s353, 1
        %s355 = scalar_select %p354, %s353, 1
        %s356 = scalar_lea.vmem %s2, %s355
        %p357 = pneg %p110
        %p358 = pneg %p107
        %p359 = pneg %p138
        %p360 = pneg %p135
        %s361 = smul.u32 13, %s19
        %s362 = smul.u32 2, %s20
        %p363 = scmp.lt.s32.totalorder %s361, 12
        %s364 = scalar_select %p363, %s361, 12
        %p365 = scmp.lt.s32.totalorder %s362, 1
        %s366 = scalar_select %p365, %s362, 1
        %s367 = smul.addr %s364, 2
        %s368 = sadd.s32 %s366, %s367
        %s369 = smul.addr %s368, 8
        %s370 = scalar_lea.vmem %s3, %s369
        %s371 = smul.u32 13, %s19
        %s372 = smul.u32 7, %s21
        %s373 = smul.u32 112, %s21
        %s374 = smul.u32 2, %s20
        %p375 = scmp.lt.s32.totalorder %s373, 223
        %s376 = scalar_select %p375, %s373, 223
        %p377 = scmp.lt.s32.totalorder %s374, 1
        %s378 = scalar_select %p377, %s374, 1
        %s379 = smul.addr %s376, 2
        %s380 = sadd.s32 %s378, %s379
        %s381 = smul.addr %s380, 4
        %s382 = scalar_lea.vmem %s1, %s381
        %s383 = smul.u32 112, %s21
        %s384 = smul.u32 2, %s20
        %s385 = smul.u32 2, %s20
        %p386 = scmp.lt.s32.totalorder %s385, 1
        %s387 = scalar_select %p386, %s385, 1
        %s388 = scalar_lea.vmem %s2, %s387
        %s389 = smul.u32 2, %s20
        %s390 = smul.u32 13, %s19
        %s391 = smul.u32 2, %s20
        %p392 = scmp.lt.s32.totalorder %s390, 12
        %s393 = scalar_select %p392, %s390, 12
        %p394 = scmp.lt.s32.totalorder %s391, 1
        %s395 = scalar_select %p394, %s391, 1
        %s396 = smul.addr %s393, 2
        %s397 = sadd.s32 %s395, %s396
        %s398 = smul.addr %s397, 8
        %s399 = scalar_lea.vmem %s3, %s398
        %s400 = smul.u32 13, %s19
        %s401 = smul.u32 2, %s20
        %p403 = scmp.eq.s32.totalorder %s21, 0
        // Predicated region
        $region59: #{alexnet_forward.11} parent=53 // pred_check
          %p404 = pneg %p403
        $region60: #{alexnet_forward.11} parent=53 // pred_check_branch
          %406 = sbr.rel (%p404) target = $region62
        $region61: #{alexnet_forward.11} parent=53 // pred_region
          %407 = vst [vmem:[#allocation2] sm:$0xff] 0.0
          %408 = vst [vmem:[#allocation2 + $0x8] sm:$0xff] 0.0
          %409 = vst [vmem:[#allocation2 + $0x10] sm:$0xff] 0.0
          %410 = vst [vmem:[#allocation2 + $0x18] sm:$0xff] 0.0
          %411 = vst [vmem:[#allocation2 + $0x20] sm:$0xff] 0.0
          %412 = vst [vmem:[#allocation2 + $0x28] sm:$0xff] 0.0
          %413 = vst [vmem:[#allocation2 + $0x30] sm:$0xff] 0.0
          %414 = vst [vmem:[#allocation2 + $0x38] sm:$0xff] 0.0
          %415 = vst [vmem:[#allocation2 + $0x40] sm:$0xff] 0.0
          %416 = vst [vmem:[#allocation2 + $0x48] sm:$0xff] 0.0
          %417 = vst [vmem:[#allocation2 + $0x50] sm:$0xff] 0.0
          %418 = vst [vmem:[#allocation2 + $0x58] sm:$0xff] 0.0
          %419 = vst [vmem:[#allocation2 + $0x60] sm:$0xff] 0.0
          %420 = vst [vmem:[#allocation2 + $0x68] sm:$0xff] 0.0
          %421 = vst [vmem:[#allocation2 + $0x70] sm:$0xff] 0.0
          %422 = vst [vmem:[#allocation2 + $0x78] sm:$0xff] 0.0
          %423 = vst [vmem:[#allocation2 + $0x80] sm:$0xff] 0.0
          %424 = vst [vmem:[#allocation2 + $0x88] sm:$0xff] 0.0
          %425 = vst [vmem:[#allocation2 + $0x90] sm:$0xff] 0.0
          %426 = vst [vmem:[#allocation2 + $0x98] sm:$0xff] 0.0
          %427 = vst [vmem:[#allocation2 + $0xa0] sm:$0xff] 0.0
          %428 = vst [vmem:[#allocation2 + $0xa8] sm:$0xff] 0.0
          %429 = vst [vmem:[#allocation2 + $0xb0] sm:$0xff] 0.0
          %430 = vst [vmem:[#allocation2 + $0xb8] sm:$0xff] 0.0
          %431 = vst [vmem:[#allocation2 + $0xc0] sm:$0xff] 0.0
          %432 = vst [vmem:[#allocation2 + $0xc8] sm:$0xff] 0.0
        $region62: #{alexnet_forward.11} parent=53 // pred_fallthru
          _
        %v433 = vld [vmem:[#allocation2] sm:$0xff]
        %v434 = vld [vmem:[#allocation2 + $0x8] sm:$0xff]
        %v435 = vld [vmem:[#allocation2 + $0x10] sm:$0xff]
        %v436 = vld [vmem:[#allocation2 + $0x18] sm:$0xff]
        %v437 = vld [vmem:[#allocation2 + $0x20] sm:$0xff]
        %v438 = vld [vmem:[#allocation2 + $0x28] sm:$0xff]
        %v439 = vld [vmem:[#allocation2 + $0x30] sm:$0xff]
        %v440 = vld [vmem:[#allocation2 + $0x38] sm:$0xff]
        %v441 = vld [vmem:[#allocation2 + $0x40] sm:$0xff]
        %v442 = vld [vmem:[#allocation2 + $0x48] sm:$0xff]
        %v443 = vld [vmem:[#allocation2 + $0x50] sm:$0xff]
        %v444 = vld [vmem:[#allocation2 + $0x58] sm:$0xff]
        %v445 = vld [vmem:[#allocation2 + $0x60] sm:$0xff]
        %v446 = vld [vmem:[#allocation2 + $0x68] sm:$0xff]
        %v447 = vld [vmem:[#allocation2 + $0x70] sm:$0xff]
        %v448 = vld [vmem:[#allocation2 + $0x78] sm:$0xff]
        %v449 = vld [vmem:[#allocation2 + $0x80] sm:$0xff]
        %v450 = vld [vmem:[#allocation2 + $0x88] sm:$0xff]
        %v451 = vld [vmem:[#allocation2 + $0x90] sm:$0xff]
        %v452 = vld [vmem:[#allocation2 + $0x98] sm:$0xff]
        %v453 = vld [vmem:[#allocation2 + $0xa0] sm:$0xff]
        %v454 = vld [vmem:[#allocation2 + $0xa8] sm:$0xff]
        %v455 = vld [vmem:[#allocation2 + $0xb0] sm:$0xff]
        %v456 = vld [vmem:[#allocation2 + $0xb8] sm:$0xff]
        %v457 = vld [vmem:[#allocation2 + $0xc0] sm:$0xff]
        %v458 = vld [vmem:[#allocation2 + $0xc8] sm:$0xff]
        %v459 = vld [vmem:[%s331] sm:$0xff]
        %v460 = vld [vmem:[%s331 + $0x8] sm:$0xff]
        %v461 = vld [vmem:[%s331 + $0x10] sm:$0xff]
        %v462 = vld [vmem:[%s331 + $0x18] sm:$0xf]
        %v463 = vld [vmem:[%s331 + $0x1c] sm:$0xff]
        %v464 = vld [vmem:[%s331 + $0x24] sm:$0xff]
        %v465 = vld [vmem:[%s331 + $0x2c] sm:$0xff]
        %v466 = vld [vmem:[%s331 + $0x34] sm:$0xf]
        %v467 = vld [vmem:[%s331 + $0x38] sm:$0xff]
        %v468 = vld [vmem:[%s331 + $0x40] sm:$0xff]
        %v469 = vld [vmem:[%s331 + $0x48] sm:$0xff]
        %v470 = vld [vmem:[%s331 + $0x50] sm:$0xf]
        %v471 = vld [vmem:[%s331 + $0x54] sm:$0xff]
        %v472 = vld [vmem:[%s331 + $0x5c] sm:$0xff]
        %v473 = vld [vmem:[%s331 + $0x64] sm:$0xff]
        %v474 = vld [vmem:[%s331 + $0x6c] sm:$0xf]
        %v475 = vld [vmem:[%s331 + $0x70] sm:$0xff]
        %v476 = vld [vmem:[%s331 + $0x78] sm:$0xff]
        %v477 = vld [vmem:[%s331 + $0x80] sm:$0xff]
        %v478 = vld [vmem:[%s331 + $0x88] sm:$0xf]
        %v479 = vld [vmem:[%s331 + $0x8c] sm:$0xff]
        %v480 = vld [vmem:[%s331 + $0x94] sm:$0xff]
        %v481 = vld [vmem:[%s331 + $0x9c] sm:$0xff]
        %v482 = vld [vmem:[%s331 + $0xa4] sm:$0xf]
        %v483 = vld [vmem:[%s331 + $0xa8] sm:$0xff]
        %v484 = vld [vmem:[%s331 + $0xb0] sm:$0xff]
        %v485 = vld [vmem:[%s331 + $0xb8] sm:$0xff]
        %v486 = vld [vmem:[%s331 + $0xc0] sm:$0xf]
        %v487 = vld [vmem:[%s331 + $0xc4] sm:$0xff]
        %v488 = vld [vmem:[%s331 + $0xcc] sm:$0xff]
        %v489 = vld [vmem:[%s331 + $0xd4] sm:$0xff]
        %v490 = vld [vmem:[%s331 + $0xdc] sm:$0xf]
        %v491 = vld [vmem:[%s331 + $0xe0] sm:$0xff]
        %v492 = vld [vmem:[%s331 + $0xe8] sm:$0xff]
        %v493 = vld [vmem:[%s331 + $0xf0] sm:$0xff]
        %v494 = vld [vmem:[%s331 + $0xf8] sm:$0xf]
        %v495 = vld [vmem:[%s331 + $0xfc] sm:$0xff]
        %v496 = vld [vmem:[%s331 + $0x104] sm:$0xff]
        %v497 = vld [vmem:[%s331 + $0x10c] sm:$0xff]
        %v498 = vld [vmem:[%s331 + $0x114] sm:$0xf]
        %v499 = vld [vmem:[%s331 + $0x118] sm:$0xff]
        %v500 = vld [vmem:[%s331 + $0x120] sm:$0xff]
        %v501 = vld [vmem:[%s331 + $0x128] sm:$0xff]
        %v502 = vld [vmem:[%s331 + $0x130] sm:$0xf]
        %v503 = vld [vmem:[%s331 + $0x134] sm:$0xff]
        %v504 = vld [vmem:[%s331 + $0x13c] sm:$0xff]
        %v505 = vld [vmem:[%s331 + $0x144] sm:$0xff]
        %v506 = vld [vmem:[%s331 + $0x14c] sm:$0xf]
        %v507 = vld [vmem:[%s331 + $0x150] sm:$0xff]
        %v508 = vld [vmem:[%s331 + $0x158] sm:$0xff]
        %v509 = vld [vmem:[%s331 + $0x160] sm:$0xff]
        %v510 = vld [vmem:[%s331 + $0x168] sm:$0xf]
        %v511 = vld [vmem:[%s382] sm:$0xff]
        %v512 = vld [vmem:[%s382 + $0x8] sm:$0xff]
        %v513 = vld [vmem:[%s382 + $0x10] sm:$0xff]
        %v514 = vld [vmem:[%s382 + $0x18] sm:$0xff]
        %v515 = vld [vmem:[%s382 + $0x20] sm:$0xff]
        %v516 = vld [vmem:[%s382 + $0x28] sm:$0xff]
        %v517 = vld [vmem:[%s382 + $0x30] sm:$0xff]
        %v518 = vld [vmem:[%s382 + $0x38] sm:$0xff]
        %v519 = vld [vmem:[%s382 + $0x40] sm:$0xff]
        %v520 = vld [vmem:[%s382 + $0x48] sm:$0xff]
        %v521 = vld [vmem:[%s382 + $0x50] sm:$0xff]
        %v522 = vld [vmem:[%s382 + $0x58] sm:$0xff]
        %v523 = vld [vmem:[%s382 + $0x60] sm:$0xff]
        %v524 = vld [vmem:[%s382 + $0x68] sm:$0xff]
        %v525 = vld [vmem:[%s382 + $0x70] sm:$0xff]
        %v526 = vld [vmem:[%s382 + $0x78] sm:$0xff]
        %v527 = vld [vmem:[%s382 + $0x80] sm:$0xff]
        %v528 = vld [vmem:[%s382 + $0x88] sm:$0xff]
        %v529 = vld [vmem:[%s382 + $0x90] sm:$0xff]
        %v530 = vld [vmem:[%s382 + $0x98] sm:$0xff]
        %v531 = vld [vmem:[%s382 + $0xa0] sm:$0xff]
        %v532 = vld [vmem:[%s382 + $0xa8] sm:$0xff]
        %v533 = vld [vmem:[%s382 + $0xb0] sm:$0xff]
        %v534 = vld [vmem:[%s382 + $0xb8] sm:$0xff]
        %v535 = vld [vmem:[%s382 + $0xc0] sm:$0xff]
        %v536 = vld [vmem:[%s382 + $0xc8] sm:$0xff]
        %v537 = vld [vmem:[%s382 + $0xd0] sm:$0xff]
        %v538 = vld [vmem:[%s382 + $0xd8] sm:$0xff]
        %v539 = vld [vmem:[%s382 + $0xe0] sm:$0xff]
        %v540 = vld [vmem:[%s382 + $0xe8] sm:$0xff]
        %v541 = vld [vmem:[%s382 + $0xf0] sm:$0xff]
        %v542 = vld [vmem:[%s382 + $0xf8] sm:$0xff]
        %v543 = vld [vmem:[%s382 + $0x100] sm:$0xff]
        %v544 = vld [vmem:[%s382 + $0x108] sm:$0xff]
        %v545 = vld [vmem:[%s382 + $0x110] sm:$0xff]
        %v546 = vld [vmem:[%s382 + $0x118] sm:$0xff]
        %v547 = vld [vmem:[%s382 + $0x120] sm:$0xff]
        %v548 = vld [vmem:[%s382 + $0x128] sm:$0xff]
        %v549 = vld [vmem:[%s382 + $0x130] sm:$0xff]
        %v550 = vld [vmem:[%s382 + $0x138] sm:$0xff]
        %v551 = vld [vmem:[%s382 + $0x140] sm:$0xff]
        %v552 = vld [vmem:[%s382 + $0x148] sm:$0xff]
        %v553 = vld [vmem:[%s382 + $0x150] sm:$0xff]
        %v554 = vld [vmem:[%s382 + $0x158] sm:$0xff]
        %v555 = vld [vmem:[%s382 + $0x160] sm:$0xff]
        %v556 = vld [vmem:[%s382 + $0x168] sm:$0xff]
        %v557 = vld [vmem:[%s382 + $0x170] sm:$0xff]
        %v558 = vld [vmem:[%s382 + $0x178] sm:$0xff]
        %v559 = vld [vmem:[%s382 + $0x180] sm:$0xff]
        %v560 = vld [vmem:[%s382 + $0x188] sm:$0xff]
        %v561 = vld [vmem:[%s382 + $0x190] sm:$0xff]
        %v562 = vld [vmem:[%s382 + $0x198] sm:$0xff]
        %v563 = vld [vmem:[%s382 + $0x1a0] sm:$0xff]
        %v564 = vld [vmem:[%s382 + $0x1a8] sm:$0xff]
        %v565 = vld [vmem:[%s382 + $0x1b0] sm:$0xff]
        %v566 = vld [vmem:[%s382 + $0x1b8] sm:$0xff]
        %v567 = vld [vmem:[%s382 + $0x1c0] sm:$0xff]
        %v568 = vld [vmem:[%s382 + $0x1c8] sm:$0xff]
        %v569 = vld [vmem:[%s382 + $0x1d0] sm:$0xff]
        %v570 = vld [vmem:[%s382 + $0x1d8] sm:$0xff]
        %v571 = vld [vmem:[%s382 + $0x1e0] sm:$0xff]
        %v572 = vld [vmem:[%s382 + $0x1e8] sm:$0xff]
        %v573 = vld [vmem:[%s382 + $0x1f0] sm:$0xff]
        %v574 = vld [vmem:[%s382 + $0x1f8] sm:$0xff]
        %v575 = vld [vmem:[%s382 + $0x200] sm:$0xff]
        %v576 = vld [vmem:[%s382 + $0x208] sm:$0xff]
        %v577 = vld [vmem:[%s382 + $0x210] sm:$0xff]
        %v578 = vld [vmem:[%s382 + $0x218] sm:$0xff]
        %v579 = vld [vmem:[%s382 + $0x220] sm:$0xff]
        %v580 = vld [vmem:[%s382 + $0x228] sm:$0xff]
        %v581 = vld [vmem:[%s382 + $0x230] sm:$0xff]
        %v582 = vld [vmem:[%s382 + $0x238] sm:$0xff]
        %v583 = vld [vmem:[%s382 + $0x240] sm:$0xff]
        %v584 = vld [vmem:[%s382 + $0x248] sm:$0xff]
        %v585 = vld [vmem:[%s382 + $0x250] sm:$0xff]
        %v586 = vld [vmem:[%s382 + $0x258] sm:$0xff]
        %v587 = vld [vmem:[%s382 + $0x260] sm:$0xff]
        %v588 = vld [vmem:[%s382 + $0x268] sm:$0xff]
        %v589 = vld [vmem:[%s382 + $0x270] sm:$0xff]
        %v590 = vld [vmem:[%s382 + $0x278] sm:$0xff]
        %v591 = vld [vmem:[%s382 + $0x280] sm:$0xff]
        %v592 = vld [vmem:[%s382 + $0x288] sm:$0xff]
        %v593 = vld [vmem:[%s382 + $0x290] sm:$0xff]
        %v594 = vld [vmem:[%s382 + $0x298] sm:$0xff]
        %v595 = vld [vmem:[%s382 + $0x2a0] sm:$0xff]
        %v596 = vld [vmem:[%s382 + $0x2a8] sm:$0xff]
        %v597 = vld [vmem:[%s382 + $0x2b0] sm:$0xff]
        %v598 = vld [vmem:[%s382 + $0x2b8] sm:$0xff]
        %v599 = vld [vmem:[%s382 + $0x2c0] sm:$0xff]
        %v600 = vld [vmem:[%s382 + $0x2c8] sm:$0xff]
        %v601 = vld [vmem:[%s382 + $0x2d0] sm:$0xff]
        %v602 = vld [vmem:[%s382 + $0x2d8] sm:$0xff]
        %v603 = vld [vmem:[%s382 + $0x2e0] sm:$0xff]
        %v604 = vld [vmem:[%s382 + $0x2e8] sm:$0xff]
        %v605 = vld [vmem:[%s382 + $0x2f0] sm:$0xff]
        %v606 = vld [vmem:[%s382 + $0x2f8] sm:$0xff]
        %v607 = vld [vmem:[%s382 + $0x300] sm:$0xff]
        %v608 = vld [vmem:[%s382 + $0x308] sm:$0xff]
        %v609 = vld [vmem:[%s382 + $0x310] sm:$0xff]
        %v610 = vld [vmem:[%s382 + $0x318] sm:$0xff]
        %v611 = vld [vmem:[%s382 + $0x320] sm:$0xff]
        %v612 = vld [vmem:[%s382 + $0x328] sm:$0xff]
        %v613 = vld [vmem:[%s382 + $0x330] sm:$0xff]
        %v614 = vld [vmem:[%s382 + $0x338] sm:$0xff]
        %v615 = vld [vmem:[%s382 + $0x340] sm:$0xff]
        %v616 = vld [vmem:[%s382 + $0x348] sm:$0xff]
        %v617 = vld [vmem:[%s382 + $0x350] sm:$0xff]
        %v618 = vld [vmem:[%s382 + $0x358] sm:$0xff]
        %v619 = vld [vmem:[%s382 + $0x360] sm:$0xff]
        %v620 = vld [vmem:[%s382 + $0x368] sm:$0xff]
        %v621 = vld [vmem:[%s382 + $0x370] sm:$0xff]
        %v622 = vld [vmem:[%s382 + $0x378] sm:$0xff]
        %v675 = vunpack.c.l.b16 %v459
        %v676 = vunpack.c.h.b16 %v459
        %v677 = vunpack.c.l.b16 %v460
        %v678 = vunpack.c.h.b16 %v460
        %v679 = vunpack.c.l.b16 %v461
        %v680 = vunpack.c.h.b16 %v461
        %v681 = vunpack.c.l.b16 %v462
        %v682 = vunpack.c.l.b16 %v463
        %v683 = vunpack.c.h.b16 %v463
        %v684 = vunpack.c.l.b16 %v464
        %v685 = vunpack.c.h.b16 %v464
        %v686 = vunpack.c.l.b16 %v465
        %v687 = vunpack.c.h.b16 %v465
        %v688 = vunpack.c.l.b16 %v466
        %v689 = vunpack.c.l.b16 %v467
        %v690 = vunpack.c.h.b16 %v467
        %v691 = vunpack.c.l.b16 %v468
        %v692 = vunpack.c.h.b16 %v468
        %v693 = vunpack.c.l.b16 %v469
        %v694 = vunpack.c.h.b16 %v469
        %v695 = vunpack.c.l.b16 %v470
        %v696 = vunpack.c.l.b16 %v471
        %v697 = vunpack.c.h.b16 %v471
        %v698 = vunpack.c.l.b16 %v472
        %v699 = vunpack.c.h.b16 %v472
        %v700 = vunpack.c.l.b16 %v473
        %v701 = vunpack.c.h.b16 %v473
        %v702 = vunpack.c.l.b16 %v474
        %v703 = vunpack.c.l.b16 %v475
        %v704 = vunpack.c.h.b16 %v475
        %v705 = vunpack.c.l.b16 %v476
        %v706 = vunpack.c.h.b16 %v476
        %v707 = vunpack.c.l.b16 %v477
        %v708 = vunpack.c.h.b16 %v477
        %v709 = vunpack.c.l.b16 %v478
        %v710 = vunpack.c.l.b16 %v479
        %v711 = vunpack.c.h.b16 %v479
        %v712 = vunpack.c.l.b16 %v480
        %v713 = vunpack.c.h.b16 %v480
        %v714 = vunpack.c.l.b16 %v481
        %v715 = vunpack.c.h.b16 %v481
        %v716 = vunpack.c.l.b16 %v482
        %v717 = vunpack.c.l.b16 %v483
        %v718 = vunpack.c.h.b16 %v483
        %v719 = vunpack.c.l.b16 %v484
        %v720 = vunpack.c.h.b16 %v484
        %v721 = vunpack.c.l.b16 %v485
        %v722 = vunpack.c.h.b16 %v485
        %v723 = vunpack.c.l.b16 %v486
        %v724 = vunpack.c.l.b16 %v487
        %v725 = vunpack.c.h.b16 %v487
        %v726 = vunpack.c.l.b16 %v488
        %v727 = vunpack.c.h.b16 %v488
        %v728 = vunpack.c.l.b16 %v489
        %v729 = vunpack.c.h.b16 %v489
        %v730 = vunpack.c.l.b16 %v490
        %v731 = vunpack.c.l.b16 %v491
        %v732 = vunpack.c.h.b16 %v491
        %v733 = vunpack.c.l.b16 %v492
        %v734 = vunpack.c.h.b16 %v492
        %v735 = vunpack.c.l.b16 %v493
        %v736 = vunpack.c.h.b16 %v493
        %v737 = vunpack.c.l.b16 %v494
        %v738 = vunpack.c.l.b16 %v495
        %v739 = vunpack.c.h.b16 %v495
        %v740 = vunpack.c.l.b16 %v496
        %v741 = vunpack.c.h.b16 %v496
        %v742 = vunpack.c.l.b16 %v497
        %v743 = vunpack.c.h.b16 %v497
        %v744 = vunpack.c.l.b16 %v498
        %v745 = vunpack.c.l.b16 %v499
        %v746 = vunpack.c.h.b16 %v499
        %v747 = vunpack.c.l.b16 %v500
        %v748 = vunpack.c.h.b16 %v500
        %v749 = vunpack.c.l.b16 %v501
        %v750 = vunpack.c.h.b16 %v501
        %v751 = vunpack.c.l.b16 %v502
        %v752 = vunpack.c.l.b16 %v503
        %v753 = vunpack.c.h.b16 %v503
        %v754 = vunpack.c.l.b16 %v504
        %v755 = vunpack.c.h.b16 %v504
        %v756 = vunpack.c.l.b16 %v505
        %v757 = vunpack.c.h.b16 %v505
        %v758 = vunpack.c.l.b16 %v506
        %v759 = vunpack.c.l.b16 %v507
        %v760 = vunpack.c.h.b16 %v507
        %v761 = vunpack.c.l.b16 %v508
        %v762 = vunpack.c.h.b16 %v508
        %v763 = vunpack.c.l.b16 %v509
        %v764 = vunpack.c.h.b16 %v509
        %v765 = vunpack.c.l.b16 %v510
        %v766 = vpack.c.b16 %v682, %v675
        %v767 = vpack.c.b16 %v683, %v676
        %v768 = vpack.c.b16 %v684, %v677
        %v769 = vpack.c.b16 %v685, %v678
        %v770 = vpack.c.b16 %v686, %v679
        %v771 = vpack.c.b16 %v687, %v680
        %v772 = vpack.c.b16 %v688, %v681
        %v773 = vpack.c.b16 %v696, %v689
        %v774 = vpack.c.b16 %v697, %v690
        %v775 = vpack.c.b16 %v698, %v691
        %v776 = vpack.c.b16 %v699, %v692
        %v777 = vpack.c.b16 %v700, %v693
        %v778 = vpack.c.b16 %v701, %v694
        %v779 = vpack.c.b16 %v702, %v695
        %v780 = vpack.c.b16 %v710, %v703
        %v781 = vpack.c.b16 %v711, %v704
        %v782 = vpack.c.b16 %v712, %v705
        %v783 = vpack.c.b16 %v713, %v706
        %v784 = vpack.c.b16 %v714, %v707
        %v785 = vpack.c.b16 %v715, %v708
        %v786 = vpack.c.b16 %v716, %v709
        %v787 = vpack.c.b16 %v724, %v717
        %v788 = vpack.c.b16 %v725, %v718
        %v789 = vpack.c.b16 %v726, %v719
        %v790 = vpack.c.b16 %v727, %v720
        %v791 = vpack.c.b16 %v728, %v721
        %v792 = vpack.c.b16 %v729, %v722
        %v793 = vpack.c.b16 %v730, %v723
        %v794 = vpack.c.b16 %v738, %v731
        %v795 = vpack.c.b16 %v739, %v732
        %v796 = vpack.c.b16 %v740, %v733
        %v797 = vpack.c.b16 %v741, %v734
        %v798 = vpack.c.b16 %v742, %v735
        %v799 = vpack.c.b16 %v743, %v736
        %v800 = vpack.c.b16 %v744, %v737
        %v801 = vpack.c.b16 %v752, %v745
        %v802 = vpack.c.b16 %v753, %v746
        %v803 = vpack.c.b16 %v754, %v747
        %v804 = vpack.c.b16 %v755, %v748
        %v805 = vpack.c.b16 %v756, %v749
        %v806 = vpack.c.b16 %v757, %v750
        %v807 = vpack.c.b16 %v758, %v751
        %v808 = vpack.c.b16 %v759, %v759
        %v809 = vpack.c.b16 %v760, %v760
        %v810 = vpack.c.b16 %v761, %v761
        %v811 = vpack.c.b16 %v762, %v762
        %v812 = vpack.c.b16 %v763, %v763
        %v813 = vpack.c.b16 %v764, %v764
        %v814 = vpack.c.b16 %v765, %v765
        %v976 = vunpack.c.l.b16 %v511
        %v977 = vunpack.c.h.b16 %v511
        %v978 = vunpack.c.l.b16 %v512
        %v979 = vunpack.c.h.b16 %v512
        %v980 = vunpack.c.l.b16 %v513
        %v981 = vunpack.c.h.b16 %v513
        %v982 = vunpack.c.l.b16 %v514
        %v983 = vunpack.c.h.b16 %v514
        %v984 = vunpack.c.l.b16 %v515
        %v985 = vunpack.c.h.b16 %v515
        %v986 = vunpack.c.l.b16 %v516
        %v987 = vunpack.c.h.b16 %v516
        %v988 = vunpack.c.l.b16 %v517
        %v989 = vunpack.c.h.b16 %v517
        %v990 = vunpack.c.l.b16 %v518
        %v991 = vunpack.c.h.b16 %v518
        %v992 = vunpack.c.l.b16 %v519
        %v993 = vunpack.c.h.b16 %v519
        %v994 = vunpack.c.l.b16 %v520
        %v995 = vunpack.c.h.b16 %v520
        %v996 = vunpack.c.l.b16 %v521
        %v997 = vunpack.c.h.b16 %v521
        %v998 = vunpack.c.l.b16 %v522
        %v999 = vunpack.c.h.b16 %v522
        %v1000 = vunpack.c.l.b16 %v523
        %v1001 = vunpack.c.h.b16 %v523
        %v1002 = vunpack.c.l.b16 %v524
        %v1003 = vunpack.c.h.b16 %v524
        %v1004 = vunpack.c.l.b16 %v525
        %v1005 = vunpack.c.h.b16 %v525
        %v1006 = vunpack.c.l.b16 %v526
        %v1007 = vunpack.c.h.b16 %v526
        %v1008 = vunpack.c.l.b16 %v527
        %v1009 = vunpack.c.h.b16 %v527
        %v1010 = vunpack.c.l.b16 %v528
        %v1011 = vunpack.c.h.b16 %v528
        %v1012 = vunpack.c.l.b16 %v529
        %v1013 = vunpack.c.h.b16 %v529
        %v1014 = vunpack.c.l.b16 %v530
        %v1015 = vunpack.c.h.b16 %v530
        %v1016 = vunpack.c.l.b16 %v531
        %v1017 = vunpack.c.h.b16 %v531
        %v1018 = vunpack.c.l.b16 %v532
        %v1019 = vunpack.c.h.b16 %v532
        %v1020 = vunpack.c.l.b16 %v533
        %v1021 = vunpack.c.h.b16 %v533
        %v1022 = vunpack.c.l.b16 %v534
        %v1023 = vunpack.c.h.b16 %v534
        %v1024 = vunpack.c.l.b16 %v535
        %v1025 = vunpack.c.h.b16 %v535
        %v1026 = vunpack.c.l.b16 %v536
        %v1027 = vunpack.c.h.b16 %v536
        %v1028 = vunpack.c.l.b16 %v537
        %v1029 = vunpack.c.h.b16 %v537
        %v1030 = vunpack.c.l.b16 %v538
        %v1031 = vunpack.c.h.b16 %v538
        %v1032 = vunpack.c.l.b16 %v539
        %v1033 = vunpack.c.h.b16 %v539
        %v1034 = vunpack.c.l.b16 %v540
        %v1035 = vunpack.c.h.b16 %v540
        %v1036 = vunpack.c.l.b16 %v541
        %v1037 = vunpack.c.h.b16 %v541
        %v1038 = vunpack.c.l.b16 %v542
        %v1039 = vunpack.c.h.b16 %v542
        %v1040 = vunpack.c.l.b16 %v543
        %v1041 = vunpack.c.h.b16 %v543
        %v1042 = vunpack.c.l.b16 %v544
        %v1043 = vunpack.c.h.b16 %v544
        %v1044 = vunpack.c.l.b16 %v545
        %v1045 = vunpack.c.h.b16 %v545
        %v1046 = vunpack.c.l.b16 %v546
        %v1047 = vunpack.c.h.b16 %v546
        %v1048 = vunpack.c.l.b16 %v547
        %v1049 = vunpack.c.h.b16 %v547
        %v1050 = vunpack.c.l.b16 %v548
        %v1051 = vunpack.c.h.b16 %v548
        %v1052 = vunpack.c.l.b16 %v549
        %v1053 = vunpack.c.h.b16 %v549
        %v1054 = vunpack.c.l.b16 %v550
        %v1055 = vunpack.c.h.b16 %v550
        %v1056 = vunpack.c.l.b16 %v551
        %v1057 = vunpack.c.h.b16 %v551
        %v1058 = vunpack.c.l.b16 %v552
        %v1059 = vunpack.c.h.b16 %v552
        %v1060 = vunpack.c.l.b16 %v553
        %v1061 = vunpack.c.h.b16 %v553
        %v1062 = vunpack.c.l.b16 %v554
        %v1063 = vunpack.c.h.b16 %v554
        %v1064 = vunpack.c.l.b16 %v555
        %v1065 = vunpack.c.h.b16 %v555
        %v1066 = vunpack.c.l.b16 %v556
        %v1067 = vunpack.c.h.b16 %v556
        %v1068 = vunpack.c.l.b16 %v557
        %v1069 = vunpack.c.h.b16 %v557
        %v1070 = vunpack.c.l.b16 %v558
        %v1071 = vunpack.c.h.b16 %v558
        %v1072 = vunpack.c.l.b16 %v559
        %v1073 = vunpack.c.h.b16 %v559
        %v1074 = vunpack.c.l.b16 %v560
        %v1075 = vunpack.c.h.b16 %v560
        %v1076 = vunpack.c.l.b16 %v561
        %v1077 = vunpack.c.h.b16 %v561
        %v1078 = vunpack.c.l.b16 %v562
        %v1079 = vunpack.c.h.b16 %v562
        %v1080 = vunpack.c.l.b16 %v563
        %v1081 = vunpack.c.h.b16 %v563
        %v1082 = vunpack.c.l.b16 %v564
        %v1083 = vunpack.c.h.b16 %v564
        %v1084 = vunpack.c.l.b16 %v565
        %v1085 = vunpack.c.h.b16 %v565
        %v1086 = vunpack.c.l.b16 %v566
        %v1087 = vunpack.c.h.b16 %v566
        %v1088 = vunpack.c.l.b16 %v567
        %v1089 = vunpack.c.h.b16 %v567
        %v1090 = vunpack.c.l.b16 %v568
        %v1091 = vunpack.c.h.b16 %v568
        %v1092 = vunpack.c.l.b16 %v569
        %v1093 = vunpack.c.h.b16 %v569
        %v1094 = vunpack.c.l.b16 %v570
        %v1095 = vunpack.c.h.b16 %v570
        %v1096 = vunpack.c.l.b16 %v571
        %v1097 = vunpack.c.h.b16 %v571
        %v1098 = vunpack.c.l.b16 %v572
        %v1099 = vunpack.c.h.b16 %v572
        %v1100 = vunpack.c.l.b16 %v573
        %v1101 = vunpack.c.h.b16 %v573
        %v1102 = vunpack.c.l.b16 %v574
        %v1103 = vunpack.c.h.b16 %v574
        %v1104 = vunpack.c.l.b16 %v575
        %v1105 = vunpack.c.h.b16 %v575
        %v1106 = vunpack.c.l.b16 %v576
        %v1107 = vunpack.c.h.b16 %v576
        %v1108 = vunpack.c.l.b16 %v577
        %v1109 = vunpack.c.h.b16 %v577
        %v1110 = vunpack.c.l.b16 %v578
        %v1111 = vunpack.c.h.b16 %v578
        %v1112 = vunpack.c.l.b16 %v579
        %v1113 = vunpack.c.h.b16 %v579
        %v1114 = vunpack.c.l.b16 %v580
        %v1115 = vunpack.c.h.b16 %v580
        %v1116 = vunpack.c.l.b16 %v581
        %v1117 = vunpack.c.h.b16 %v581
        %v1118 = vunpack.c.l.b16 %v582
        %v1119 = vunpack.c.h.b16 %v582
        %v1120 = vunpack.c.l.b16 %v583
        %v1121 = vunpack.c.h.b16 %v583
        %v1122 = vunpack.c.l.b16 %v584
        %v1123 = vunpack.c.h.b16 %v584
        %v1124 = vunpack.c.l.b16 %v585
        %v1125 = vunpack.c.h.b16 %v585
        %v1126 = vunpack.c.l.b16 %v586
        %v1127 = vunpack.c.h.b16 %v586
        %v1128 = vunpack.c.l.b16 %v587
        %v1129 = vunpack.c.h.b16 %v587
        %v1130 = vunpack.c.l.b16 %v588
        %v1131 = vunpack.c.h.b16 %v588
        %v1132 = vunpack.c.l.b16 %v589
        %v1133 = vunpack.c.h.b16 %v589
        %v1134 = vunpack.c.l.b16 %v590
        %v1135 = vunpack.c.h.b16 %v590
        %v1136 = vunpack.c.l.b16 %v591
        %v1137 = vunpack.c.h.b16 %v591
        %v1138 = vunpack.c.l.b16 %v592
        %v1139 = vunpack.c.h.b16 %v592
        %v1140 = vunpack.c.l.b16 %v593
        %v1141 = vunpack.c.h.b16 %v593
        %v1142 = vunpack.c.l.b16 %v594
        %v1143 = vunpack.c.h.b16 %v594
        %v1144 = vunpack.c.l.b16 %v595
        %v1145 = vunpack.c.h.b16 %v595
        %v1146 = vunpack.c.l.b16 %v596
        %v1147 = vunpack.c.h.b16 %v596
        %v1148 = vunpack.c.l.b16 %v597
        %v1149 = vunpack.c.h.b16 %v597
        %v1150 = vunpack.c.l.b16 %v598
        %v1151 = vunpack.c.h.b16 %v598
        %v1152 = vunpack.c.l.b16 %v599
        %v1153 = vunpack.c.h.b16 %v599
        %v1154 = vunpack.c.l.b16 %v600
        %v1155 = vunpack.c.h.b16 %v600
        %v1156 = vunpack.c.l.b16 %v601
        %v1157 = vunpack.c.h.b16 %v601
        %v1158 = vunpack.c.l.b16 %v602
        %v1159 = vunpack.c.h.b16 %v602
        %v1160 = vunpack.c.l.b16 %v603
        %v1161 = vunpack.c.h.b16 %v603
        %v1162 = vunpack.c.l.b16 %v604
        %v1163 = vunpack.c.h.b16 %v604
        %v1164 = vunpack.c.l.b16 %v605
        %v1165 = vunpack.c.h.b16 %v605
        %v1166 = vunpack.c.l.b16 %v606
        %v1167 = vunpack.c.h.b16 %v606
        %v1168 = vunpack.c.l.b16 %v607
        %v1169 = vunpack.c.h.b16 %v607
        %v1170 = vunpack.c.l.b16 %v608
        %v1171 = vunpack.c.h.b16 %v608
        %v1172 = vunpack.c.l.b16 %v609
        %v1173 = vunpack.c.h.b16 %v609
        %v1174 = vunpack.c.l.b16 %v610
        %v1175 = vunpack.c.h.b16 %v610
        %v1176 = vunpack.c.l.b16 %v611
        %v1177 = vunpack.c.h.b16 %v611
        %v1178 = vunpack.c.l.b16 %v612
        %v1179 = vunpack.c.h.b16 %v612
        %v1180 = vunpack.c.l.b16 %v613
        %v1181 = vunpack.c.h.b16 %v613
        %v1182 = vunpack.c.l.b16 %v614
        %v1183 = vunpack.c.h.b16 %v614
        %v1184 = vunpack.c.l.b16 %v615
        %v1185 = vunpack.c.h.b16 %v615
        %v1186 = vunpack.c.l.b16 %v616
        %v1187 = vunpack.c.h.b16 %v616
        %v1188 = vunpack.c.l.b16 %v617
        %v1189 = vunpack.c.h.b16 %v617
        %v1190 = vunpack.c.l.b16 %v618
        %v1191 = vunpack.c.h.b16 %v618
        %v1192 = vunpack.c.l.b16 %v619
        %v1193 = vunpack.c.h.b16 %v619
        %v1194 = vunpack.c.l.b16 %v620
        %v1195 = vunpack.c.h.b16 %v620
        %v1196 = vunpack.c.l.b16 %v621
        %v1197 = vunpack.c.h.b16 %v621
        %v1198 = vunpack.c.l.b16 %v622
        %v1199 = vunpack.c.h.b16 %v622
        %v1200 = vpack.c.b16 %v978, %v976
        %v1201 = vpack.c.b16 %v979, %v977
        %v1202 = vpack.c.b16 %v982, %v980
        %v1203 = vpack.c.b16 %v983, %v981
        %v1204 = vpack.c.b16 %v986, %v984
        %v1205 = vpack.c.b16 %v987, %v985
        %v1206 = vpack.c.b16 %v990, %v988
        %v1207 = vpack.c.b16 %v991, %v989
        %v1208 = vpack.c.b16 %v994, %v992
        %v1209 = vpack.c.b16 %v995, %v993
        %v1210 = vpack.c.b16 %v998, %v996
        %v1211 = vpack.c.b16 %v999, %v997
        %v1212 = vpack.c.b16 %v1002, %v1000
        %v1213 = vpack.c.b16 %v1003, %v1001
        %v1214 = vpack.c.b16 %v1006, %v1004
        %v1215 = vpack.c.b16 %v1007, %v1005
        %v1216 = vpack.c.b16 %v1010, %v1008
        %v1217 = vpack.c.b16 %v1011, %v1009
        %v1218 = vpack.c.b16 %v1014, %v1012
        %v1219 = vpack.c.b16 %v1015, %v1013
        %v1220 = vpack.c.b16 %v1018, %v1016
        %v1221 = vpack.c.b16 %v1019, %v1017
        %v1222 = vpack.c.b16 %v1022, %v1020
        %v1223 = vpack.c.b16 %v1023, %v1021
        %v1224 = vpack.c.b16 %v1026, %v1024
        %v1225 = vpack.c.b16 %v1027, %v1025
        %v1226 = vpack.c.b16 %v1030, %v1028
        %v1227 = vpack.c.b16 %v1031, %v1029
        %v1228 = vpack.c.b16 %v1034, %v1032
        %v1229 = vpack.c.b16 %v1035, %v1033
        %v1230 = vpack.c.b16 %v1038, %v1036
        %v1231 = vpack.c.b16 %v1039, %v1037
        %v1232 = vpack.c.b16 %v1042, %v1040
        %v1233 = vpack.c.b16 %v1043, %v1041
        %v1234 = vpack.c.b16 %v1046, %v1044
        %v1235 = vpack.c.b16 %v1047, %v1045
        %v1236 = vpack.c.b16 %v1050, %v1048
        %v1237 = vpack.c.b16 %v1051, %v1049
        %v1238 = vpack.c.b16 %v1054, %v1052
        %v1239 = vpack.c.b16 %v1055, %v1053
        %v1240 = vpack.c.b16 %v1058, %v1056
        %v1241 = vpack.c.b16 %v1059, %v1057
        %v1242 = vpack.c.b16 %v1062, %v1060
        %v1243 = vpack.c.b16 %v1063, %v1061
        %v1244 = vpack.c.b16 %v1066, %v1064
        %v1245 = vpack.c.b16 %v1067, %v1065
        %v1246 = vpack.c.b16 %v1070, %v1068
        %v1247 = vpack.c.b16 %v1071, %v1069
        %v1248 = vpack.c.b16 %v1074, %v1072
        %v1249 = vpack.c.b16 %v1075, %v1073
        %v1250 = vpack.c.b16 %v1078, %v1076
        %v1251 = vpack.c.b16 %v1079, %v1077
        %v1252 = vpack.c.b16 %v1082, %v1080
        %v1253 = vpack.c.b16 %v1083, %v1081
        %v1254 = vpack.c.b16 %v1086, %v1084
        %v1255 = vpack.c.b16 %v1087, %v1085
        %v1256 = vpack.c.b16 %v1090, %v1088
        %v1257 = vpack.c.b16 %v1091, %v1089
        %v1258 = vpack.c.b16 %v1094, %v1092
        %v1259 = vpack.c.b16 %v1095, %v1093
        %v1260 = vpack.c.b16 %v1098, %v1096
        %v1261 = vpack.c.b16 %v1099, %v1097
        %v1262 = vpack.c.b16 %v1102, %v1100
        %v1263 = vpack.c.b16 %v1103, %v1101
        %v1264 = vpack.c.b16 %v1106, %v1104
        %v1265 = vpack.c.b16 %v1107, %v1105
        %v1266 = vpack.c.b16 %v1110, %v1108
        %v1267 = vpack.c.b16 %v1111, %v1109
        %v1268 = vpack.c.b16 %v1114, %v1112
        %v1269 = vpack.c.b16 %v1115, %v1113
        %v1270 = vpack.c.b16 %v1118, %v1116
        %v1271 = vpack.c.b16 %v1119, %v1117
        %v1272 = vpack.c.b16 %v1122, %v1120
        %v1273 = vpack.c.b16 %v1123, %v1121
        %v1274 = vpack.c.b16 %v1126, %v1124
        %v1275 = vpack.c.b16 %v1127, %v1125
        %v1276 = vpack.c.b16 %v1130, %v1128
        %v1277 = vpack.c.b16 %v1131, %v1129
        %v1278 = vpack.c.b16 %v1134, %v1132
        %v1279 = vpack.c.b16 %v1135, %v1133
        %v1280 = vpack.c.b16 %v1138, %v1136
        %v1281 = vpack.c.b16 %v1139, %v1137
        %v1282 = vpack.c.b16 %v1142, %v1140
        %v1283 = vpack.c.b16 %v1143, %v1141
        %v1284 = vpack.c.b16 %v1146, %v1144
        %v1285 = vpack.c.b16 %v1147, %v1145
        %v1286 = vpack.c.b16 %v1150, %v1148
        %v1287 = vpack.c.b16 %v1151, %v1149
        %v1288 = vpack.c.b16 %v1154, %v1152
        %v1289 = vpack.c.b16 %v1155, %v1153
        %v1290 = vpack.c.b16 %v1158, %v1156
        %v1291 = vpack.c.b16 %v1159, %v1157
        %v1292 = vpack.c.b16 %v1162, %v1160
        %v1293 = vpack.c.b16 %v1163, %v1161
        %v1294 = vpack.c.b16 %v1166, %v1164
        %v1295 = vpack.c.b16 %v1167, %v1165
        %v1296 = vpack.c.b16 %v1170, %v1168
        %v1297 = vpack.c.b16 %v1171, %v1169
        %v1298 = vpack.c.b16 %v1174, %v1172
        %v1299 = vpack.c.b16 %v1175, %v1173
        %v1300 = vpack.c.b16 %v1178, %v1176
        %v1301 = vpack.c.b16 %v1179, %v1177
        %v1302 = vpack.c.b16 %v1182, %v1180
        %v1303 = vpack.c.b16 %v1183, %v1181
        %v1304 = vpack.c.b16 %v1186, %v1184
        %v1305 = vpack.c.b16 %v1187, %v1185
        %v1306 = vpack.c.b16 %v1190, %v1188
        %v1307 = vpack.c.b16 %v1191, %v1189
        %v1308 = vpack.c.b16 %v1194, %v1192
        %v1309 = vpack.c.b16 %v1195, %v1193
        %v1310 = vpack.c.b16 %v1198, %v1196
        %v1311 = vpack.c.b16 %v1199, %v1197
        %1424 = vmatprep.subr.bf16.mxu0 %v1201
        %1425 = vmatpush1.bf16.msra.mxu0 %v1200
        %1426 = vmatprep.subr.bf16.mxu0 %v1203
        %1427 = vmatpush1.bf16.msra.mxu0 %v1202
        %1428 = vmatprep.subr.bf16.mxu0 %v1205
        %1429 = vmatpush1.bf16.msra.mxu0 %v1204
        %1430 = vmatprep.subr.bf16.mxu0 %v1207
        %1431 = vmatpush1.bf16.msra.mxu0 %v1206
        %1432 = vmatprep.subr.bf16.mxu0 %v1209
        %1433 = vmatpush1.bf16.msra.mxu0 %v1208
        %1434 = vmatprep.subr.bf16.mxu0 %v1211
        %1435 = vmatpush1.bf16.msra.mxu0 %v1210
        %1436 = vmatprep.subr.bf16.mxu0 %v1213
        %1437 = vmatpush1.bf16.msra.mxu0 %v1212
        %1438 = vmatprep.subr.bf16.mxu0 %v1215
        %1439 = vmatpush1.bf16.msra.mxu0 %v1214
        %1440 = vmatprep.subr.bf16.mxu0 %v1217
        %1441 = vmatpush1.bf16.msra.mxu0 %v1216
        %1442 = vmatprep.subr.bf16.mxu0 %v1219
        %1443 = vmatpush1.bf16.msra.mxu0 %v1218
        %1444 = vmatprep.subr.bf16.mxu0 %v1221
        %1445 = vmatpush1.bf16.msra.mxu0 %v1220
        %1446 = vmatprep.subr.bf16.mxu0 %v1223
        %1447 = vmatpush1.bf16.msra.mxu0 %v1222
        %1448 = vmatprep.subr.bf16.mxu0 %v1225
        %1449 = vmatpush1.bf16.msra.mxu0 %v1224
        %1450 = vmatprep.subr.bf16.mxu0 %v1227
        %1451 = vmatpush1.bf16.msra.mxu0 %v1226
        %1452 = vmatprep.subr.bf16.mxu0 %v1229
        %1453 = vmatpush1.bf16.msra.mxu0 %v1228
        %1454 = vmatprep.subr.bf16.mxu0 %v1231
        %1455 = vmatpush1.bf16.msra.mxu0 %v1230
        %1456 = vmatprep.mubr.bf16.mxu0 %v767
        %1457 = vmatmul.mubr.bf16.gmra.mrb[0].mxu0 %v766
        %v1458 = vpop.f32.mrb[0].mxu0
        %v1459 = vadd.f32 0.0, %v1458
        %v1460 = vpop.f32.mrb[0].mxu0
        %v1461 = vadd.f32 0.0, %v1460
        %v1462 = vpop.f32.mrb[0].mxu0
        %v1463 = vadd.f32 0.0, %v1462
        %v1464 = vpop.f32.mrb[0].mxu0
        %v1465 = vadd.f32 0.0, %v1464
        %1466 = vmatprep.mubr.bf16.mxu0 %v774
        %1467 = vmatmul.mubr.bf16.gmra.mrb[0].mxu0 %v773
        %v1468 = vpop.f32.mrb[0].mxu0
        %v1469 = vadd.f32 0.0, %v1468
        %v1470 = vpop.f32.mrb[0].mxu0
        %v1471 = vadd.f32 0.0, %v1470
        %v1472 = vpop.f32.mrb[0].mxu0
        %v1473 = vadd.f32 0.0, %v1472
        %v1474 = vpop.f32.mrb[0].mxu0
        %v1475 = vadd.f32 0.0, %v1474
        %1476 = vmatprep.mubr.bf16.mxu0 %v781
        %1477 = vmatmul.mubr.bf16.gmra.mrb[0].mxu0 %v780
        %v1478 = vpop.f32.mrb[0].mxu0
        %v1479 = vadd.f32 0.0, %v1478
        %v1480 = vpop.f32.mrb[0].mxu0
        %v1481 = vadd.f32 0.0, %v1480
        %v1482 = vpop.f32.mrb[0].mxu0
        %v1483 = vadd.f32 0.0, %v1482
        %v1484 = vpop.f32.mrb[0].mxu0
        %v1485 = vadd.f32 0.0, %v1484
        %1486 = vmatprep.mubr.bf16.mxu0 %v788
        %1487 = vmatmul.mubr.bf16.gmra.mrb[0].mxu0 %v787
        %v1488 = vpop.f32.mrb[0].mxu0
        %v1489 = vadd.f32 0.0, %v1488
        %v1490 = vpop.f32.mrb[0].mxu0
        %v1491 = vadd.f32 0.0, %v1490
        %v1492 = vpop.f32.mrb[0].mxu0
        %v1493 = vadd.f32 0.0, %v1492
        %v1494 = vpop.f32.mrb[0].mxu0
        %v1495 = vadd.f32 0.0, %v1494
        %1496 = vmatprep.mubr.bf16.mxu0 %v795
        %1497 = vmatmul.mubr.bf16.gmra.mrb[0].mxu0 %v794
        %v1498 = vpop.f32.mrb[0].mxu0
        %v1499 = vadd.f32 0.0, %v1498
        %v1500 = vpop.f32.mrb[0].mxu0
        %v1501 = vadd.f32 0.0, %v1500
        %v1502 = vpop.f32.mrb[0].mxu0
        %v1503 = vadd.f32 0.0, %v1502
        %v1504 = vpop.f32.mrb[0].mxu0
        %v1505 = vadd.f32 0.0, %v1504
        %1506 = vmatprep.mubr.bf16.mxu0 %v802
        %1507 = vmatmul.mubr.bf16.gmra.mrb[0].mxu0 %v801
        %v1508 = vpop.f32.mrb[0].mxu0
        %v1509 = vadd.f32 0.0, %v1508
        %v1510 = vpop.f32.mrb[0].mxu0
        %v1511 = vadd.f32 0.0, %v1510
        %v1512 = vpop.f32.mrb[0].mxu0
        %v1513 = vadd.f32 0.0, %v1512
        %v1514 = vpop.f32.mrb[0].mxu0
        %v1515 = vadd.f32 0.0, %v1514
        %1516 = vmatprep.mubr.bf16.mxu0 %v809
        %1517 = vmatmul.mubr.bf16.gmra.mrb[0].mxu0 %v808
        %v1518 = vpop.f32.mrb[0].mxu0
        %v1519 = vadd.f32 0.0, %v1518
        %v1520 = vpop.f32.mrb[0].mxu0
        %v1521 = vadd.f32 0.0, %v1520
        %v1522 = vpop.f32.mrb[0].mxu0
        %v1523 = vpop.f32.mrb[0].mxu0
        %1524 = vdwg.mxu0
        %1525 = vmatprep.subr.bf16.mxu0 %v1233
        %1526 = vmatpush1.bf16.msra.mxu0 %v1232
        %1527 = vmatprep.subr.bf16.mxu0 %v1235
        %1528 = vmatpush1.bf16.msra.mxu0 %v1234
        %1529 = vmatprep.subr.bf16.mxu0 %v1237
        %1530 = vmatpush1.bf16.msra.mxu0 %v1236
        %1531 = vmatprep.subr.bf16.mxu0 %v1239
        %1532 = vmatpush1.bf16.msra.mxu0 %v1238
        %1533 = vmatprep.subr.bf16.mxu0 %v1241
        %1534 = vmatpush1.bf16.msra.mxu0 %v1240
        %1535 = vmatprep.subr.bf16.mxu0 %v1243
        %1536 = vmatpush1.bf16.msra.mxu0 %v1242
        %1537 = vmatprep.subr.bf16.mxu0 %v1245
        %1538 = vmatpush1.bf16.msra.mxu0 %v1244
        %1539 = vmatprep.subr.bf16.mxu0 %v1247
        %1540 = vmatpush1.bf16.msra.mxu0 %v1246
        %1541 = vmatprep.subr.bf16.mxu0 %v1249
        %1542 = vmatpush1.bf16.msra.mxu0 %v1248
        %1543 = vmatprep.subr.bf16.mxu0 %v1251
        %1544 = vmatpush1.bf16.msra.mxu0 %v1250
        %1545 = vmatprep.subr.bf16.mxu0 %v1253
        %1546 = vmatpush1.bf16.msra.mxu0 %v1252
        %1547 = vmatprep.subr.bf16.mxu0 %v1255
        %1548 = vmatpush1.bf16.msra.mxu0 %v1254
        %1549 = vmatprep.subr.bf16.mxu0 %v1257
        %1550 = vmatpush1.bf16.msra.mxu0 %v1256
        %1551 = vmatprep.subr.bf16.mxu0 %v1259
        %1552 = vmatpush1.bf16.msra.mxu0 %v1258
        %1553 = vmatprep.subr.bf16.mxu0 %v1261
        %1554 = vmatpush1.bf16.msra.mxu0 %v1260
        %1555 = vmatprep.subr.bf16.mxu0 %v1263
        %1556 = vmatpush1.bf16.msra.mxu0 %v1262
        %1557 = vmatprep.mubr.bf16.mxu0 %v769
        %1558 = vmatmul.mubr.bf16.gmra.mrb[0].mxu0 %v768
        %v1559 = vpop.f32.mrb[0].mxu0
        %v1560 = vadd.f32 %v1459, %v1559
        %v1561 = vpop.f32.mrb[0].mxu0
        %v1562 = vadd.f32 %v1461, %v1561
        %v1563 = vpop.f32.mrb[0].mxu0
        %v1564 = vadd.f32 %v1463, %v1563
        %v1565 = vpop.f32.mrb[0].mxu0
        %v1566 = vadd.f32 %v1465, %v1565
        %1567 = vmatprep.mubr.bf16.mxu0 %v776
        %1568 = vmatmul.mubr.bf16.gmra.mrb[0].mxu0 %v775
        %v1569 = vpop.f32.mrb[0].mxu0
        %v1570 = vadd.f32 %v1469, %v1569
        %v1571 = vpop.f32.mrb[0].mxu0
        %v1572 = vadd.f32 %v1471, %v1571
        %v1573 = vpop.f32.mrb[0].mxu0
        %v1574 = vadd.f32 %v1473, %v1573
        %v1575 = vpop.f32.mrb[0].mxu0
        %v1576 = vadd.f32 %v1475, %v1575
        %1577 = vmatprep.mubr.bf16.mxu0 %v783
        %1578 = vmatmul.mubr.bf16.gmra.mrb[0].mxu0 %v782
        %v1579 = vpop.f32.mrb[0].mxu0
        %v1580 = vadd.f32 %v1479, %v1579
        %v1581 = vpop.f32.mrb[0].mxu0
        %v1582 = vadd.f32 %v1481, %v1581
        %v1583 = vpop.f32.mrb[0].mxu0
        %v1584 = vadd.f32 %v1483, %v1583
        %v1585 = vpop.f32.mrb[0].mxu0
        %v1586 = vadd.f32 %v1485, %v1585
        %1587 = vmatprep.mubr.bf16.mxu0 %v790
        %1588 = vmatmul.mubr.bf16.gmra.mrb[0].mxu0 %v789
        %v1589 = vpop.f32.mrb[0].mxu0
        %v1590 = vadd.f32 %v1489, %v1589
        %v1591 = vpop.f32.mrb[0].mxu0
        %v1592 = vadd.f32 %v1491, %v1591
        %v1593 = vpop.f32.mrb[0].mxu0
        %v1594 = vadd.f32 %v1493, %v1593
        %v1595 = vpop.f32.mrb[0].mxu0
        %v1596 = vadd.f32 %v1495, %v1595
        %1597 = vmatprep.mubr.bf16.mxu0 %v797
        %1598 = vmatmul.mubr.bf16.gmra.mrb[0].mxu0 %v796
        %v1599 = vpop.f32.mrb[0].mxu0
        %v1600 = vadd.f32 %v1499, %v1599
        %v1601 = vpop.f32.mrb[0].mxu0
        %v1602 = vadd.f32 %v1501, %v1601
        %v1603 = vpop.f32.mrb[0].mxu0
        %v1604 = vadd.f32 %v1503, %v1603
        %v1605 = vpop.f32.mrb[0].mxu0
        %v1606 = vadd.f32 %v1505, %v1605
        %1607 = vmatprep.mubr.bf16.mxu0 %v804
        %1608 = vmatmul.mubr.bf16.gmra.mrb[0].mxu0 %v803
        %v1609 = vpop.f32.mrb[0].mxu0
        %v1610 = vadd.f32 %v1509, %v1609
        %v1611 = vpop.f32.mrb[0].mxu0
        %v1612 = vadd.f32 %v1511, %v1611
        %v1613 = vpop.f32.mrb[0].mxu0
        %v1614 = vadd.f32 %v1513, %v1613
        %v1615 = vpop.f32.mrb[0].mxu0
        %v1616 = vadd.f32 %v1515, %v1615
        %1617 = vmatprep.mubr.bf16.mxu0 %v811
        %1618 = vmatmul.mubr.bf16.gmra.mrb[0].mxu0 %v810
        %v1619 = vpop.f32.mrb[0].mxu0
        %v1620 = vadd.f32 %v1519, %v1619
        %v1621 = vpop.f32.mrb[0].mxu0
        %v1622 = vadd.f32 %v1521, %v1621
        %v1623 = vpop.f32.mrb[0].mxu0
        %v1624 = vpop.f32.mrb[0].mxu0
        %1625 = vdwg.mxu0
        %1626 = vmatprep.subr.bf16.mxu0 %v1265
        %1627 = vmatpush1.bf16.msra.mxu0 %v1264
        %1628 = vmatprep.subr.bf16.mxu0 %v1267
        %1629 = vmatpush1.bf16.msra.mxu0 %v1266
        %1630 = vmatprep.subr.bf16.mxu0 %v1269
        %1631 = vmatpush1.bf16.msra.mxu0 %v1268
        %1632 = vmatprep.subr.bf16.mxu0 %v1271
        %1633 = vmatpush1.bf16.msra.mxu0 %v1270
        %1634 = vmatprep.subr.bf16.mxu0 %v1273
        %1635 = vmatpush1.bf16.msra.mxu0 %v1272
        %1636 = vmatprep.subr.bf16.mxu0 %v1275
        %1637 = vmatpush1.bf16.msra.mxu0 %v1274
        %1638 = vmatprep.subr.bf16.mxu0 %v1277
        %1639 = vmatpush1.bf16.msra.mxu0 %v1276
        %1640 = vmatprep.subr.bf16.mxu0 %v1279
        %1641 = vmatpush1.bf16.msra.mxu0 %v1278
        %1642 = vmatprep.subr.bf16.mxu0 %v1281
        %1643 = vmatpush1.bf16.msra.mxu0 %v1280
        %1644 = vmatprep.subr.bf16.mxu0 %v1283
        %1645 = vmatpush1.bf16.msra.mxu0 %v1282
        %1646 = vmatprep.subr.bf16.mxu0 %v1285
        %1647 = vmatpush1.bf16.msra.mxu0 %v1284
        %1648 = vmatprep.subr.bf16.mxu0 %v1287
        %1649 = vmatpush1.bf16.msra.mxu0 %v1286
        %1650 = vmatprep.subr.bf16.mxu0 %v1289
        %1651 = vmatpush1.bf16.msra.mxu0 %v1288
        %1652 = vmatprep.subr.bf16.mxu0 %v1291
        %1653 = vmatpush1.bf16.msra.mxu0 %v1290
        %1654 = vmatprep.subr.bf16.mxu0 %v1293
        %1655 = vmatpush1.bf16.msra.mxu0 %v1292
        %1656 = vmatprep.subr.bf16.mxu0 %v1295
        %1657 = vmatpush1.bf16.msra.mxu0 %v1294
        %1658 = vmatprep.mubr.bf16.mxu0 %v771
        %1659 = vmatmul.mubr.bf16.gmra.mrb[0].mxu0 %v770
        %v1660 = vpop.f32.mrb[0].mxu0
        %v1661 = vadd.f32 %v1560, %v1660
        %v1662 = vpop.f32.mrb[0].mxu0
        %v1663 = vadd.f32 %v1562, %v1662
        %v1664 = vpop.f32.mrb[0].mxu0
        %v1665 = vadd.f32 %v1564, %v1664
        %v1666 = vpop.f32.mrb[0].mxu0
        %v1667 = vadd.f32 %v1566, %v1666
        %1668 = vmatprep.mubr.bf16.mxu0 %v778
        %1669 = vmatmul.mubr.bf16.gmra.mrb[0].mxu0 %v777
        %v1670 = vpop.f32.mrb[0].mxu0
        %v1671 = vadd.f32 %v1570, %v1670
        %v1672 = vpop.f32.mrb[0].mxu0
        %v1673 = vadd.f32 %v1572, %v1672
        %v1674 = vpop.f32.mrb[0].mxu0
        %v1675 = vadd.f32 %v1574, %v1674
        %v1676 = vpop.f32.mrb[0].mxu0
        %v1677 = vadd.f32 %v1576, %v1676
        %1678 = vmatprep.mubr.bf16.mxu0 %v785
        %1679 = vmatmul.mubr.bf16.gmra.mrb[0].mxu0 %v784
        %v1680 = vpop.f32.mrb[0].mxu0
        %v1681 = vadd.f32 %v1580, %v1680
        %v1682 = vpop.f32.mrb[0].mxu0
        %v1683 = vadd.f32 %v1582, %v1682
        %v1684 = vpop.f32.mrb[0].mxu0
        %v1685 = vadd.f32 %v1584, %v1684
        %v1686 = vpop.f32.mrb[0].mxu0
        %v1687 = vadd.f32 %v1586, %v1686
        %1688 = vmatprep.mubr.bf16.mxu0 %v792
        %1689 = vmatmul.mubr.bf16.gmra.mrb[0].mxu0 %v791
        %v1690 = vpop.f32.mrb[0].mxu0
        %v1691 = vadd.f32 %v1590, %v1690
        %v1692 = vpop.f32.mrb[0].mxu0
        %v1693 = vadd.f32 %v1592, %v1692
        %v1694 = vpop.f32.mrb[0].mxu0
        %v1695 = vadd.f32 %v1594, %v1694
        %v1696 = vpop.f32.mrb[0].mxu0
        %v1697 = vadd.f32 %v1596, %v1696
        %1698 = vmatprep.mubr.bf16.mxu0 %v799
        %1699 = vmatmul.mubr.bf16.gmra.mrb[0].mxu0 %v798
        %v1700 = vpop.f32.mrb[0].mxu0
        %v1701 = vadd.f32 %v1600, %v1700
        %v1702 = vpop.f32.mrb[0].mxu0
        %v1703 = vadd.f32 %v1602, %v1702
        %v1704 = vpop.f32.mrb[0].mxu0
        %v1705 = vadd.f32 %v1604, %v1704
        %v1706 = vpop.f32.mrb[0].mxu0
        %v1707 = vadd.f32 %v1606, %v1706
        %1708 = vmatprep.mubr.bf16.mxu0 %v806
        %1709 = vmatmul.mubr.bf16.gmra.mrb[0].mxu0 %v805
        %v1710 = vpop.f32.mrb[0].mxu0
        %v1711 = vadd.f32 %v1610, %v1710
        %v1712 = vpop.f32.mrb[0].mxu0
        %v1713 = vadd.f32 %v1612, %v1712
        %v1714 = vpop.f32.mrb[0].mxu0
        %v1715 = vadd.f32 %v1614, %v1714
        %v1716 = vpop.f32.mrb[0].mxu0
        %v1717 = vadd.f32 %v1616, %v1716
        %1718 = vmatprep.mubr.bf16.mxu0 %v813
        %1719 = vmatmul.mubr.bf16.gmra.mrb[0].mxu0 %v812
        %v1720 = vpop.f32.mrb[0].mxu0
        %v1721 = vadd.f32 %v1620, %v1720
        %v1722 = vpop.f32.mrb[0].mxu0
        %v1723 = vadd.f32 %v1622, %v1722
        %v1724 = vpop.f32.mrb[0].mxu0
        %v1725 = vpop.f32.mrb[0].mxu0
        %1726 = vdwg.mxu0
        %1727 = vmatprep.subr.bf16.mxu0 %v1297
        %1728 = vmatpush1.bf16.msra.mxu0 %v1296
        %1729 = vmatprep.subr.bf16.mxu0 %v1299
        %1730 = vmatpush1.bf16.msra.mxu0 %v1298
        %1731 = vmatprep.subr.bf16.mxu0 %v1301
        %1732 = vmatpush1.bf16.msra.mxu0 %v1300
        %1733 = vmatprep.subr.bf16.mxu0 %v1303
        %1734 = vmatpush1.bf16.msra.mxu0 %v1302
        %1735 = vmatprep.subr.bf16.mxu0 %v1305
        %1736 = vmatpush1.bf16.msra.mxu0 %v1304
        %1737 = vmatprep.subr.bf16.mxu0 %v1307
        %1738 = vmatpush1.bf16.msra.mxu0 %v1306
        %1739 = vmatprep.subr.bf16.mxu0 %v1309
        %1740 = vmatpush1.bf16.msra.mxu0 %v1308
        %1741 = vmatprep.subr.bf16.mxu0 %v1311
        %1742 = vmatpush1.bf16.msra.mxu0 %v1310
        %1743 = vmatprep.subr.bf16.mxu0 0
        %1744 = vmatpush1.bf16.msra.mxu0 0
        %1745 = vmatprep.subr.bf16.mxu0 0
        %1746 = vmatpush1.bf16.msra.mxu0 0
        %1747 = vmatprep.subr.bf16.mxu0 0
        %1748 = vmatpush1.bf16.msra.mxu0 0
        %1749 = vmatprep.subr.bf16.mxu0 0
        %1750 = vmatpush1.bf16.msra.mxu0 0
        %1751 = vmatprep.subr.bf16.mxu0 0
        %1752 = vmatpush1.bf16.msra.mxu0 0
        %1753 = vmatprep.subr.bf16.mxu0 0
        %1754 = vmatpush1.bf16.msra.mxu0 0
        %1755 = vmatprep.subr.bf16.mxu0 0
        %1756 = vmatpush1.bf16.msra.mxu0 0
        %1757 = vmatprep.subr.bf16.mxu0 0
        %1758 = vmatpush1.bf16.msra.mxu0 0
        %1759 = vmatprep.mubr.bf16.mxu0 0
        %1760 = vmatmul.mubr.bf16.gmra.mrb[0].mxu0 %v772
        %v1761 = vpop.f32.mrb[0].mxu0
        %v1762 = vadd.f32 %v1661, %v1761
        %v1763 = vpop.f32.mrb[0].mxu0
        %v1764 = vadd.f32 %v1663, %v1763
        %v1765 = vpop.f32.mrb[0].mxu0
        %v1766 = vadd.f32 %v1665, %v1765
        %v1767 = vpop.f32.mrb[0].mxu0
        %v1768 = vadd.f32 %v1667, %v1767
        %1769 = vmatprep.mubr.bf16.mxu0 0
        %1770 = vmatmul.mubr.bf16.gmra.mrb[0].mxu0 %v779
        %v1771 = vpop.f32.mrb[0].mxu0
        %v1772 = vadd.f32 %v1671, %v1771
        %v1773 = vpop.f32.mrb[0].mxu0
        %v1774 = vadd.f32 %v1673, %v1773
        %v1775 = vpop.f32.mrb[0].mxu0
        %v1776 = vadd.f32 %v1675, %v1775
        %v1777 = vpop.f32.mrb[0].mxu0
        %v1778 = vadd.f32 %v1677, %v1777
        %1779 = vmatprep.mubr.bf16.mxu0 0
        %1780 = vmatmul.mubr.bf16.gmra.mrb[0].mxu0 %v786
        %v1781 = vpop.f32.mrb[0].mxu0
        %v1782 = vadd.f32 %v1681, %v1781
        %v1783 = vpop.f32.mrb[0].mxu0
        %v1784 = vadd.f32 %v1683, %v1783
        %v1785 = vpop.f32.mrb[0].mxu0
        %v1786 = vadd.f32 %v1685, %v1785
        %v1787 = vpop.f32.mrb[0].mxu0
        %v1788 = vadd.f32 %v1687, %v1787
        %1789 = vmatprep.mubr.bf16.mxu0 0
        %1790 = vmatmul.mubr.bf16.gmra.mrb[0].mxu0 %v793
        %v1791 = vpop.f32.mrb[0].mxu0
        %v1792 = vadd.f32 %v1691, %v1791
        %v1793 = vpop.f32.mrb[0].mxu0
        %v1794 = vadd.f32 %v1693, %v1793
        %v1795 = vpop.f32.mrb[0].mxu0
        %v1796 = vadd.f32 %v1695, %v1795
        %v1797 = vpop.f32.mrb[0].mxu0
        %v1798 = vadd.f32 %v1697, %v1797
        %1799 = vmatprep.mubr.bf16.mxu0 0
        %1800 = vmatmul.mubr.bf16.gmra.mrb[0].mxu0 %v800
        %v1801 = vpop.f32.mrb[0].mxu0
        %v1802 = vadd.f32 %v1701, %v1801
        %v1803 = vpop.f32.mrb[0].mxu0
        %v1804 = vadd.f32 %v1703, %v1803
        %v1805 = vpop.f32.mrb[0].mxu0
        %v1806 = vadd.f32 %v1705, %v1805
        %v1807 = vpop.f32.mrb[0].mxu0
        %v1808 = vadd.f32 %v1707, %v1807
        %1809 = vmatprep.mubr.bf16.mxu0 0
        %1810 = vmatmul.mubr.bf16.gmra.mrb[0].mxu0 %v807
        %v1811 = vpop.f32.mrb[0].mxu0
        %v1812 = vadd.f32 %v1711, %v1811
        %v1813 = vpop.f32.mrb[0].mxu0
        %v1814 = vadd.f32 %v1713, %v1813
        %v1815 = vpop.f32.mrb[0].mxu0
        %v1816 = vadd.f32 %v1715, %v1815
        %v1817 = vpop.f32.mrb[0].mxu0
        %v1818 = vadd.f32 %v1717, %v1817
        %1819 = vmatprep.mubr.bf16.mxu0 0
        %1820 = vmatmul.mubr.bf16.gmra.mrb[0].mxu0 %v814
        %v1821 = vpop.f32.mrb[0].mxu0
        %v1822 = vadd.f32 %v1721, %v1821
        %v1823 = vpop.f32.mrb[0].mxu0
        %v1824 = vadd.f32 %v1723, %v1823
        %v1825 = vpop.f32.mrb[0].mxu0
        %v1826 = vpop.f32.mrb[0].mxu0
        %1827 = vdwg.mxu0
        %v1828 = vadd.f32 %v433, %v1762
        %v1829 = vadd.f32 %v434, %v1764
        %v1830 = vadd.f32 %v435, %v1766
        %v1831 = vadd.f32 %v436, %v1768
        %v1832 = vadd.f32 %v437, %v1772
        %v1833 = vadd.f32 %v438, %v1774
        %v1834 = vadd.f32 %v439, %v1776
        %v1835 = vadd.f32 %v440, %v1778
        %v1836 = vadd.f32 %v441, %v1782
        %v1837 = vadd.f32 %v442, %v1784
        %v1838 = vadd.f32 %v443, %v1786
        %v1839 = vadd.f32 %v444, %v1788
        %v1840 = vadd.f32 %v445, %v1792
        %v1841 = vadd.f32 %v446, %v1794
        %v1842 = vadd.f32 %v447, %v1796
        %v1843 = vadd.f32 %v448, %v1798
        %v1844 = vadd.f32 %v449, %v1802
        %v1845 = vadd.f32 %v450, %v1804
        %v1846 = vadd.f32 %v451, %v1806
        %v1847 = vadd.f32 %v452, %v1808
        %v1848 = vadd.f32 %v453, %v1812
        %v1849 = vadd.f32 %v454, %v1814
        %v1850 = vadd.f32 %v455, %v1816
        %v1851 = vadd.f32 %v456, %v1818
        %v1852 = vadd.f32 %v457, %v1822
        %v1853 = vadd.f32 %v458, %v1824
        %1854 = vst [vmem:[#allocation2] sm:$0xff] %v1828
        %1855 = vst [vmem:[#allocation2 + $0x8] sm:$0xff] %v1829
        %1856 = vst [vmem:[#allocation2 + $0x10] sm:$0xff] %v1830
        %1857 = vst [vmem:[#allocation2 + $0x18] sm:$0xff] %v1831
        %1858 = vst [vmem:[#allocation2 + $0x20] sm:$0xff] %v1832
        %1859 = vst [vmem:[#allocation2 + $0x28] sm:$0xff] %v1833
        %1860 = vst [vmem:[#allocation2 + $0x30] sm:$0xff] %v1834
        %1861 = vst [vmem:[#allocation2 + $0x38] sm:$0xff] %v1835
        %1862 = vst [vmem:[#allocation2 + $0x40] sm:$0xff] %v1836
        %1863 = vst [vmem:[#allocation2 + $0x48] sm:$0xff] %v1837
        %1864 = vst [vmem:[#allocation2 + $0x50] sm:$0xff] %v1838
        %1865 = vst [vmem:[#allocation2 + $0x58] sm:$0xff] %v1839
        %1866 = vst [vmem:[#allocation2 + $0x60] sm:$0xff] %v1840
        %1867 = vst [vmem:[#allocation2 + $0x68] sm:$0xff] %v1841
        %1868 = vst [vmem:[#allocation2 + $0x70] sm:$0xff] %v1842
        %1869 = vst [vmem:[#allocation2 + $0x78] sm:$0xff] %v1843
        %1870 = vst [vmem:[#allocation2 + $0x80] sm:$0xff] %v1844
        %1871 = vst [vmem:[#allocation2 + $0x88] sm:$0xff] %v1845
        %1872 = vst [vmem:[#allocation2 + $0x90] sm:$0xff] %v1846
        %1873 = vst [vmem:[#allocation2 + $0x98] sm:$0xff] %v1847
        %1874 = vst [vmem:[#allocation2 + $0xa0] sm:$0xff] %v1848
        %1875 = vst [vmem:[#allocation2 + $0xa8] sm:$0xff] %v1849
        %1876 = vst [vmem:[#allocation2 + $0xb0] sm:$0xff] %v1850
        %1877 = vst [vmem:[#allocation2 + $0xb8] sm:$0xff] %v1851
        %1878 = vst [vmem:[#allocation2 + $0xc0] sm:$0xff] %v1852
        %1879 = vst [vmem:[#allocation2 + $0xc8] sm:$0xff] %v1853
        %p1880 = scmp.eq.s32.totalorder %s21, 1
        // Predicated region
        $region63: #{alexnet_forward.11} parent=53 // pred_check
          %p1881 = pneg %p1880
        $region64: #{alexnet_forward.11} parent=53 // pred_check_branch
          %1883 = sbr.rel (%p1881) target = $region66
        $region65: #{alexnet_forward.11} parent=53 // pred_region
          %v1884 = vld [vmem:[#allocation2] sm:$0xff]
          %v1885 = vld [vmem:[#allocation2 + $0x8] sm:$0xff]
          %v1886 = vld [vmem:[#allocation2 + $0x10] sm:$0xff]
          %v1887 = vld [vmem:[#allocation2 + $0x18] sm:$0xff]
          %v1888 = vld [vmem:[#allocation2 + $0x20] sm:$0xff]
          %v1889 = vld [vmem:[#allocation2 + $0x28] sm:$0xff]
          %v1890 = vld [vmem:[#allocation2 + $0x30] sm:$0xff]
          %v1891 = vld [vmem:[#allocation2 + $0x38] sm:$0xff]
          %v1892 = vld [vmem:[#allocation2 + $0x40] sm:$0xff]
          %v1893 = vld [vmem:[#allocation2 + $0x48] sm:$0xff]
          %v1894 = vld [vmem:[#allocation2 + $0x50] sm:$0xff]
          %v1895 = vld [vmem:[#allocation2 + $0x58] sm:$0xff]
          %v1896 = vld [vmem:[#allocation2 + $0x60] sm:$0xff]
          %v1897 = vld [vmem:[#allocation2 + $0x68] sm:$0xff]
          %v1898 = vld [vmem:[#allocation2 + $0x70] sm:$0xff]
          %v1899 = vld [vmem:[#allocation2 + $0x78] sm:$0xff]
          %v1900 = vld [vmem:[#allocation2 + $0x80] sm:$0xff]
          %v1901 = vld [vmem:[#allocation2 + $0x88] sm:$0xff]
          %v1902 = vld [vmem:[#allocation2 + $0x90] sm:$0xff]
          %v1903 = vld [vmem:[#allocation2 + $0x98] sm:$0xff]
          %v1904 = vld [vmem:[#allocation2 + $0xa0] sm:$0xff]
          %v1905 = vld [vmem:[#allocation2 + $0xa8] sm:$0xff]
          %v1906 = vld [vmem:[#allocation2 + $0xb0] sm:$0xff]
          %v1907 = vld [vmem:[#allocation2 + $0xb8] sm:$0xff]
          %v1908 = vld [vmem:[#allocation2 + $0xc0] sm:$0xff]
          %v1909 = vld [vmem:[#allocation2 + $0xc8] sm:$0xff]
          %v1910 = vld [vmem:[%s388] sm:$0x3]
          %v1912 = vlaneseq
          %v1913 = vshrl.u32 %v1912, 7
          %v1914 = vsub.s32 0, %v1913
          %v1915 = vrot.slane %v1910, %v1914
          %v1916 = vlaneseq
          %v1917 = vshrl.u32 %v1916, 7
          %v1918 = vsub.s32 1, %v1917
          %v1919 = vrot.slane %v1910, %v1918
          %v1922 = vadd.f32 %v1884, %v1915
          %v1923 = vadd.f32 %v1885, %v1919
          %v1924 = vadd.f32 %v1886, %v1915
          %v1925 = vadd.f32 %v1887, %v1919
          %v1926 = vadd.f32 %v1888, %v1915
          %v1927 = vadd.f32 %v1889, %v1919
          %v1928 = vadd.f32 %v1890, %v1915
          %v1929 = vadd.f32 %v1891, %v1919
          %v1930 = vadd.f32 %v1892, %v1915
          %v1931 = vadd.f32 %v1893, %v1919
          %v1932 = vadd.f32 %v1894, %v1915
          %v1933 = vadd.f32 %v1895, %v1919
          %v1934 = vadd.f32 %v1896, %v1915
          %v1935 = vadd.f32 %v1897, %v1919
          %v1936 = vadd.f32 %v1898, %v1915
          %v1937 = vadd.f32 %v1899, %v1919
          %v1938 = vadd.f32 %v1900, %v1915
          %v1939 = vadd.f32 %v1901, %v1919
          %v1940 = vadd.f32 %v1902, %v1915
          %v1941 = vadd.f32 %v1903, %v1919
          %v1942 = vadd.f32 %v1904, %v1915
          %v1943 = vadd.f32 %v1905, %v1919
          %v1944 = vadd.f32 %v1906, %v1915
          %v1945 = vadd.f32 %v1907, %v1919
          %v1946 = vadd.f32 %v1908, %v1915
          %v1947 = vadd.f32 %v1909, %v1919
          %v1948 = vmax.f32 %v1922, 0.0
          %v1949 = vmax.f32 %v1923, 0.0
          %v1950 = vmax.f32 %v1924, 0.0
          %v1951 = vmax.f32 %v1925, 0.0
          %v1952 = vmax.f32 %v1926, 0.0
          %v1953 = vmax.f32 %v1927, 0.0
          %v1954 = vmax.f32 %v1928, 0.0
          %v1955 = vmax.f32 %v1929, 0.0
          %v1956 = vmax.f32 %v1930, 0.0
          %v1957 = vmax.f32 %v1931, 0.0
          %v1958 = vmax.f32 %v1932, 0.0
          %v1959 = vmax.f32 %v1933, 0.0
          %v1960 = vmax.f32 %v1934, 0.0
          %v1961 = vmax.f32 %v1935, 0.0
          %v1962 = vmax.f32 %v1936, 0.0
          %v1963 = vmax.f32 %v1937, 0.0
          %v1964 = vmax.f32 %v1938, 0.0
          %v1965 = vmax.f32 %v1939, 0.0
          %v1966 = vmax.f32 %v1940, 0.0
          %v1967 = vmax.f32 %v1941, 0.0
          %v1968 = vmax.f32 %v1942, 0.0
          %v1969 = vmax.f32 %v1943, 0.0
          %v1970 = vmax.f32 %v1944, 0.0
          %v1971 = vmax.f32 %v1945, 0.0
          %v1972 = vmax.f32 %v1946, 0.0
          %v1973 = vmax.f32 %v1947, 0.0
          %1974 = vst [vmem:[%s399] sm:$0xff] %v1948
          %1975 = vst [vmem:[%s399 + $0x8] sm:$0xff] %v1949
          %1976 = vst [vmem:[%s399 + $0x10] sm:$0xff] %v1950
          %1977 = vst [vmem:[%s399 + $0x18] sm:$0xff] %v1951
          %1978 = vst [vmem:[%s399 + $0x20] sm:$0xff] %v1952
          %1979 = vst [vmem:[%s399 + $0x28] sm:$0xff] %v1953
          %1980 = vst [vmem:[%s399 + $0x30] sm:$0xff] %v1954
          %1981 = vst [vmem:[%s399 + $0x38] sm:$0xff] %v1955
          %1982 = vst [vmem:[%s399 + $0x40] sm:$0xff] %v1956
          %1983 = vst [vmem:[%s399 + $0x48] sm:$0xff] %v1957
          %1984 = vst [vmem:[%s399 + $0x50] sm:$0xff] %v1958
          %1985 = vst [vmem:[%s399 + $0x58] sm:$0xff] %v1959
          %1986 = vst [vmem:[%s399 + $0x60] sm:$0xff] %v1960
          %1987 = vst [vmem:[%s399 + $0x68] sm:$0xff] %v1961
          %1988 = vst [vmem:[%s399 + $0x70] sm:$0xff] %v1962
          %1989 = vst [vmem:[%s399 + $0x78] sm:$0xff] %v1963
          %1990 = vst [vmem:[%s399 + $0x80] sm:$0xff] %v1964
          %1991 = vst [vmem:[%s399 + $0x88] sm:$0xff] %v1965
          %1992 = vst [vmem:[%s399 + $0x90] sm:$0xff] %v1966
          %1993 = vst [vmem:[%s399 + $0x98] sm:$0xff] %v1967
          %1994 = vst [vmem:[%s399 + $0xa0] sm:$0xff] %v1968
          %1995 = vst [vmem:[%s399 + $0xa8] sm:$0xff] %v1969
          %1996 = vst [vmem:[%s399 + $0xb0] sm:$0xff] %v1970
          %1997 = vst [vmem:[%s399 + $0xb8] sm:$0xff] %v1971
          %1998 = vst [vmem:[%s399 + $0xc0] sm:$0xff] %v1972
          %1999 = vst [vmem:[%s399 + $0xc8] sm:$0xff] %v1973
        $region66: #{alexnet_forward.11} parent=53 // pred_fallthru
          _
        %s2000 = smul.u32 13, %s19
        %s2001 = smul.u32 2, %s20
        %p2002 = scmp.lt.s32.totalorder %s2000, 12
        %s2003 = scalar_select %p2002, %s2000, 12
        %p2004 = scmp.lt.s32.totalorder %s2001, 1
        %s2005 = scalar_select %p2004, %s2001, 1
        %s2006 = smul.addr %s2003, 2
        %s2007 = sadd.s32 %s2005, %s2006
        %s2008 = smul.addr %s2007, 8
        %s2009 = scalar_lea.vmem %s3, %s2008
        // Predicated region
        $region67: #{alexnet_forward.11} parent=53 // pred_check
          %p2010 = pneg %p135
        $region68: #{alexnet_forward.11} parent=53 // pred_check_branch
          %2012 = sbr.rel (%p2010) target = $region70
        $region69: #{alexnet_forward.11} parent=53 // pred_region
          %s2013 = smul.u32 13, %s19
          %s2014 = smul.u32 2, %s20
        $region70: #{alexnet_forward.11} parent=53 // pred_fallthru
          _
        // Predicated region
        $region71: #{alexnet_forward.11} parent=53 // pred_check
          %p2015 = pneg %p135
        $region72: #{alexnet_forward.11} parent=53 // pred_check_branch
          %2017 = sbr.rel (%p2015) target = $region74
        $region73: #{alexnet_forward.11} parent=53 // pred_region
          %s2018 = smul.u32 13, %s19
          %s2019 = smul.u32 2, %s20
          %p2020 = scmp.lt.s32.totalorder %s2018, 12
          %s2021 = scalar_select %p2020, %s2018, 12
          %p2022 = scmp.lt.s32.totalorder %s2019, 1
          %s2023 = scalar_select %p2022, %s2019, 1
          %s2024 = smul.addr %s2021, 2
          %s2025 = sadd.s32 %s2023, %s2024
          %s2026 = smul.addr %s2025, 8
          %s2027 = scalar_lea.vmem %s3, %s2026
        $region74: #{alexnet_forward.11} parent=53 // pred_fallthru
          _
      $region54: #{alexnet_forward.11} parent=5 // pred_fallthru
        _
      %p2028 = scmp.le.s32.totalorder 2, %s9
      // Predicated region
      $region75: #{alexnet_forward.11} parent=5 // pred_check
        %p2029 = pneg %p2028
      $region76: #{alexnet_forward.11} parent=5 // pred_check_branch
        %2031 = sbr.rel (%p2029) target = $region78
      $region77: #{alexnet_forward.11} parent=5 // pred_region
        %s2032 = ssub.s32 %s9, 2
      $region78: #{alexnet_forward.11} parent=5 // pred_fallthru
        _
    $region6: #{alexnet_forward.11} parent=1 // loop_footer
      %s13 = sadd.s32 1, %s9
    $region7: #{alexnet_forward.11} parent=1 // loop_footer_branch
      %8 = sbr.rel target = $region3
    $region8: #{alexnet_forward.11} parent=1 // loop_exit
      _

// kernel: alexnet_forward.12
$region0: #{alexnet_forward.12}
  #allocation0 [shape = 'u32[]', space=smem, size = 0x4, offset = 0x4, fixed_abs, tag = 'smem constant byte address 0x4 - core index']
  #allocation1 [shape = 'u32[144,128]{1,0:T(1,128)}', space=vmem, size = 0x12000, scoped, tag = 'internal scratch']
  %s0 = inlined_call_operand.vmem [shape: f32[2,4,4,192], index: 0, kind: input, shape index: {}]
  %s1 = inlined_call_operand.vmem [shape: f32[2,4,3,192], index: 1, kind: input, shape index: {}]
  %s2 = inlined_call_operand.vmem [shape: f32[2,3,4,192], index: 2, kind: input, shape index: {}]
  %s3 = inlined_call_operand.vmem [shape: f32[2,3,3,192], index: 3, kind: input, shape index: {}]
  %s4 = inlined_call_operand.vmem [shape: f32[2,3,3,192], index: 4, kind: output, shape index: {}]
  %s5 = sld [smem:[#allocation0]]
  $region49: #{alexnet_forward.12} parent=0
    _
  %s7 = ssub.s32 1, %s5
  %s8 = scalar_select 0, %s7, %s5
  loop: start=0, step=1, limit=4
  $region2: #{alexnet_forward.12} parent=0 // loop_pre_header
    _
  $region3: #{alexnet_forward.12} parent=0 // loop_header
    %s10 = sphi 0, %s14
    %p11 = scmp.ge.s32.totalorder %s10, 4
    %s20 = sphi 0, %s22
    %s23 = sphi 0, %s20
    %s24 = sphi 0, %s23
    %s40 = sphi 0, %s24
    %s46 = sphi 0, %s48
    %s49 = sphi 0, %s46
    %s50 = sphi 0, %s49
    %s66 = sphi 0, %s50
    %s72 = sphi 0, %s74
    %s75 = sphi 0, %s72
    %s76 = sphi 0, %s75
    %s92 = sphi 0, %s76
    %s98 = sphi 0, %s100
    %s101 = sphi 0, %s98
    %s102 = sphi 0, %s101
    %s118 = sphi 0, %s102
    %s124 = sphi 0, %s126
    %s127 = sphi 0, %s124
    %s128 = sphi 0, %s127
    %s144 = sphi 0, %s128
  $region4: #{alexnet_forward.12} parent=0 // loop_header_branch
    %13 = sbr.rel (%p11) target = $region8
  $region5: #{alexnet_forward.12} parent=0 // loop_body
    %s15 = ssub.s32 %s10, 1
    %s16 = ssub.s32 %s10, 2
    %s17 = sadd.s32 %s10, 1
    %s18 = ssub.s32 %s10, %s17
    %p19 = scmp.eq.s32.totalorder %s18, 0
    %s21 = sadd.s32 %s20, 1
    %s22 = scalar_select %p19, %s20, %s21
    %p25 = pneg %p19
    %p26 = scmp.eq.s32.totalorder %s10, 1
    %p27 = por %p25, %p26
    %p28 = scmp.ne.s32.totalorder %s20, %s23
    %p29 = scmp.eq.s32.totalorder %s10, 0
    %p30 = por %p28, %p29
    %p31 = scmp.ne.s32.totalorder %s20, %s23
    %p32 = scmp.eq.s32.totalorder %s15, 1
    %p33 = por %p31, %p32
    %p34 = scmp.ne.s32.totalorder %s23, %s24
    %p35 = scmp.eq.s32.totalorder %s15, 0
    %p36 = por %p34, %p35
    %p37 = scmp.ne.s32.totalorder %s23, %s24
    %p38 = scmp.eq.s32.totalorder %s16, 1
    %p39 = por %p37, %p38
    %p41 = scmp.ne.s32.totalorder %s24, %s40
    %p42 = scmp.eq.s32.totalorder %s16, 0
    %p43 = por %p41, %p42
    %s44 = ssub.s32 %s10, %s17
    %p45 = scmp.eq.s32.totalorder %s44, 0
    %s47 = sadd.s32 %s46, 1
    %s48 = scalar_select %p45, %s46, %s47
    %p51 = pneg %p45
    %p52 = scmp.eq.s32.totalorder %s10, 1
    %p53 = por %p51, %p52
    %p54 = scmp.ne.s32.totalorder %s46, %s49
    %p55 = scmp.eq.s32.totalorder %s10, 0
    %p56 = por %p54, %p55
    %p57 = scmp.ne.s32.totalorder %s46, %s49
    %p58 = scmp.eq.s32.totalorder %s15, 1
    %p59 = por %p57, %p58
    %p60 = scmp.ne.s32.totalorder %s49, %s50
    %p61 = scmp.eq.s32.totalorder %s15, 0
    %p62 = por %p60, %p61
    %p63 = scmp.ne.s32.totalorder %s49, %s50
    %p64 = scmp.eq.s32.totalorder %s16, 1
    %p65 = por %p63, %p64
    %p67 = scmp.ne.s32.totalorder %s50, %s66
    %p68 = scmp.eq.s32.totalorder %s16, 0
    %p69 = por %p67, %p68
    %s70 = ssub.s32 %s10, %s17
    %p71 = scmp.eq.s32.totalorder %s70, 0
    %s73 = sadd.s32 %s72, 1
    %s74 = scalar_select %p71, %s72, %s73
    %p77 = pneg %p71
    %p78 = scmp.eq.s32.totalorder %s10, 1
    %p79 = por %p77, %p78
    %p80 = scmp.ne.s32.totalorder %s72, %s75
    %p81 = scmp.eq.s32.totalorder %s10, 0
    %p82 = por %p80, %p81
    %p83 = scmp.ne.s32.totalorder %s72, %s75
    %p84 = scmp.eq.s32.totalorder %s15, 1
    %p85 = por %p83, %p84
    %p86 = scmp.ne.s32.totalorder %s75, %s76
    %p87 = scmp.eq.s32.totalorder %s15, 0
    %p88 = por %p86, %p87
    %p89 = scmp.ne.s32.totalorder %s75, %s76
    %p90 = scmp.eq.s32.totalorder %s16, 1
    %p91 = por %p89, %p90
    %p93 = scmp.ne.s32.totalorder %s76, %s92
    %p94 = scmp.eq.s32.totalorder %s16, 0
    %p95 = por %p93, %p94
    %s96 = ssub.s32 %s10, %s17
    %p97 = scmp.eq.s32.totalorder %s96, 0
    %s99 = sadd.s32 %s98, 1
    %s100 = scalar_select %p97, %s98, %s99
    %p103 = pneg %p97
    %p104 = scmp.eq.s32.totalorder %s10, 1
    %p105 = por %p103, %p104
    %p106 = scmp.ne.s32.totalorder %s98, %s101
    %p107 = scmp.eq.s32.totalorder %s10, 0
    %p108 = por %p106, %p107
    %p109 = scmp.ne.s32.totalorder %s98, %s101
    %p110 = scmp.eq.s32.totalorder %s15, 1
    %p111 = por %p109, %p110
    %p112 = scmp.ne.s32.totalorder %s101, %s102
    %p113 = scmp.eq.s32.totalorder %s15, 0
    %p114 = por %p112, %p113
    %p115 = scmp.ne.s32.totalorder %s101, %s102
    %p116 = scmp.eq.s32.totalorder %s16, 1
    %p117 = por %p115, %p116
    %p119 = scmp.ne.s32.totalorder %s102, %s118
    %p120 = scmp.eq.s32.totalorder %s16, 0
    %p121 = por %p119, %p120
    %s122 = ssub.s32 %s10, %s17
    %p123 = scmp.eq.s32.totalorder %s122, 0
    %s125 = sadd.s32 %s124, 1
    %s126 = scalar_select %p123, %s124, %s125
    %p129 = pneg %p123
    %p130 = scmp.eq.s32.totalorder %s10, 1
    %p131 = por %p129, %p130
    %p132 = scmp.ne.s32.totalorder %s124, %s127
    %p133 = scmp.eq.s32.totalorder %s10, 0
    %p134 = por %p132, %p133
    %p135 = scmp.ne.s32.totalorder %s124, %s127
    %p136 = scmp.eq.s32.totalorder %s15, 1
    %p137 = por %p135, %p136
    %p138 = scmp.ne.s32.totalorder %s127, %s128
    %p139 = scmp.eq.s32.totalorder %s15, 0
    %p140 = por %p138, %p139
    %p141 = scmp.ne.s32.totalorder %s127, %s128
    %p142 = scmp.eq.s32.totalorder %s16, 1
    %p143 = por %p141, %p142
    %p145 = scmp.ne.s32.totalorder %s128, %s144
    %p146 = scmp.eq.s32.totalorder %s16, 0
    %p147 = por %p145, %p146
    %p148 = scmp.le.s32.totalorder 1, %s10
    %p149 = scmp.lt.s32.totalorder %s10, 3
    %p150 = pnand %p148, %p149
    %p151 = pneg %p150
    // Predicated region
    $region9: #{alexnet_forward.12} parent=5 // pred_check
      _
    $region10: #{alexnet_forward.12} parent=5 // pred_check_branch
      %153 = sbr.rel (%p150) target = $region12
    $region11: #{alexnet_forward.12} parent=5 // pred_region
      %s154 = ssub.s32 %s10, 1
    $region12: #{alexnet_forward.12} parent=5 // pred_fallthru
      _
    %p155 = scmp.lt.s32.totalorder %s10, 2
    // Predicated region
    $region13: #{alexnet_forward.12} parent=5 // pred_check
      %p156 = pneg %p155
    $region14: #{alexnet_forward.12} parent=5 // pred_check_branch
      %158 = sbr.rel (%p156) target = $region16
    $region15: #{alexnet_forward.12} parent=5 // pred_region
      // Predicated region
      $region17: #{alexnet_forward.12} parent=15 // pred_check
        %p159 = pneg %p30
      $region18: #{alexnet_forward.12} parent=15 // pred_check_branch
        %161 = sbr.rel (%p159) target = $region20
      $region19: #{alexnet_forward.12} parent=15 // pred_region
        %p162 = scmp.lt.s32.totalorder %s10, 1
        %s163 = scalar_select %p162, %s10, 1
        %s164 = smul.addr %s163, 8
        %s165 = smul.addr %s164, 4
        %s166 = scalar_lea.vmem %s0, %s165
      $region20: #{alexnet_forward.12} parent=15 // pred_fallthru
        _
      // Predicated region
      $region21: #{alexnet_forward.12} parent=15 // pred_check
        %p167 = pneg %p56
      $region22: #{alexnet_forward.12} parent=15 // pred_check_branch
        %169 = sbr.rel (%p167) target = $region24
      $region23: #{alexnet_forward.12} parent=15 // pred_region
        %p170 = scmp.lt.s32.totalorder %s10, 1
        %s171 = scalar_select %p170, %s10, 1
        %s172 = smul.addr %s171, 8
        %s173 = smul.addr %s172, 4
        %s174 = scalar_lea.vmem %s1, %s173
      $region24: #{alexnet_forward.12} parent=15 // pred_fallthru
        _
      // Predicated region
      $region25: #{alexnet_forward.12} parent=15 // pred_check
        %p175 = pneg %p82
      $region26: #{alexnet_forward.12} parent=15 // pred_check_branch
        %177 = sbr.rel (%p175) target = $region28
      $region27: #{alexnet_forward.12} parent=15 // pred_region
        %p178 = scmp.lt.s32.totalorder %s10, 1
        %s179 = scalar_select %p178, %s10, 1
        %s180 = smul.addr %s179, 6
        %s181 = smul.addr %s180, 4
        %s182 = scalar_lea.vmem %s2, %s181
      $region28: #{alexnet_forward.12} parent=15 // pred_fallthru
        _
      // Predicated region
      $region29: #{alexnet_forward.12} parent=15 // pred_check
        %p183 = pneg %p108
      $region30: #{alexnet_forward.12} parent=15 // pred_check_branch
        %185 = sbr.rel (%p183) target = $region32
      $region31: #{alexnet_forward.12} parent=15 // pred_region
        %p186 = scmp.lt.s32.totalorder %s10, 1
        %s187 = scalar_select %p186, %s10, 1
        %s188 = smul.addr %s187, 6
        %s189 = smul.addr %s188, 4
        %s190 = scalar_lea.vmem %s3, %s189
      $region32: #{alexnet_forward.12} parent=15 // pred_fallthru
        _
    $region16: #{alexnet_forward.12} parent=5 // pred_fallthru
      _
    %p191 = scmp.le.s32.totalorder 1, %s10
    %p192 = scmp.lt.s32.totalorder %s10, 3
    %p193 = pnand %p191, %p192
    %p194 = pneg %p193
    // Predicated region
    $region33: #{alexnet_forward.12} parent=5 // pred_check
      _
    $region34: #{alexnet_forward.12} parent=5 // pred_check_branch
      %196 = sbr.rel (%p193) target = $region36
    $region35: #{alexnet_forward.12} parent=5 // pred_region
      %s197 = ssub.s32 %s10, 1
      %p198 = scmp.lt.s32.totalorder %s15, 1
      %s199 = scalar_select %p198, %s15, 1
      %s200 = smul.addr %s199, 8
      %s201 = smul.addr %s200, 4
      %s202 = scalar_lea.vmem %s0, %s201
      %p203 = pneg %p36
      %p204 = pneg %p33
      %p205 = scmp.lt.s32.totalorder %s15, 1
      %s206 = scalar_select %p205, %s15, 1
      %s207 = smul.addr %s206, 8
      %s208 = smul.addr %s207, 4
      %s209 = scalar_lea.vmem %s1, %s208
      %p210 = pneg %p62
      %p211 = pneg %p59
      %p212 = scmp.lt.s32.totalorder %s15, 1
      %s213 = scalar_select %p212, %s15, 1
      %s214 = smul.addr %s213, 6
      %s215 = smul.addr %s214, 4
      %s216 = scalar_lea.vmem %s2, %s215
      %p217 = pneg %p88
      %p218 = pneg %p85
      %p219 = scmp.lt.s32.totalorder %s15, 1
      %s220 = scalar_select %p219, %s15, 1
      %s221 = smul.addr %s220, 6
      %s222 = smul.addr %s221, 4
      %s223 = scalar_lea.vmem %s3, %s222
      %p224 = pneg %p114
      %p225 = pneg %p111
      %p226 = pneg %p140
      %p227 = pneg %p137
      %p228 = scmp.lt.s32.totalorder %s15, 1
      %s229 = scalar_select %p228, %s15, 1
      %s230 = smul.addr %s229, 6
      %s231 = smul.addr %s230, 4
      %s232 = scalar_lea.vmem %s4, %s231
      %p233 = scmp.lt.s32.totalorder %s15, 1
      %s234 = scalar_select %p233, %s15, 1
      %s235 = smul.addr %s234, 8
      %s236 = smul.addr %s235, 4
      %s237 = scalar_lea.vmem %s0, %s236
      %p238 = scmp.lt.s32.totalorder %s15, 1
      %s239 = scalar_select %p238, %s15, 1
      %s240 = smul.addr %s239, 8
      %s241 = smul.addr %s240, 4
      %s242 = scalar_lea.vmem %s1, %s241
      %p243 = scmp.lt.s32.totalorder %s15, 1
      %s244 = scalar_select %p243, %s15, 1
      %s245 = smul.addr %s244, 6
      %s246 = smul.addr %s245, 4
      %s247 = scalar_lea.vmem %s2, %s246
      %p248 = scmp.lt.s32.totalorder %s15, 1
      %s249 = scalar_select %p248, %s15, 1
      %s250 = smul.addr %s249, 6
      %s251 = smul.addr %s250, 4
      %s252 = scalar_lea.vmem %s3, %s251
      %p253 = scmp.lt.s32.totalorder %s15, 1
      %s254 = scalar_select %p253, %s15, 1
      %s255 = smul.addr %s254, 6
      %s256 = smul.addr %s255, 4
      %s257 = scalar_lea.vmem %s4, %s256
      %v258 = vld [vmem:[%s237] sm:$0x77]
      %v259 = vld [vmem:[%s237 + $0x8] sm:$0x77]
      %v260 = vld [vmem:[%s237 + $0x10] sm:$0x77]
      %v261 = vld [vmem:[%s237 + $0x18] sm:$0x77]
      %v262 = vld [vmem:[%s237] sm:$0xee]
      %v263 = vld [vmem:[%s237 + $0x8] sm:$0xee]
      %v264 = vld [vmem:[%s237 + $0x10] sm:$0xee]
      %v265 = vld [vmem:[%s237 + $0x18] sm:$0xee]
      %v270 = vrot.slane %v262, 5
      %v271 = vrot.slane %v270, 4
      %v272 = vrot.slane %v263, 5
      %v273 = vrot.slane %v272, 4
      %v274 = vrot.slane %v264, 5
      %v275 = vrot.slane %v274, 4
      %v276 = vrot.slane %v265, 5
      %v277 = vrot.slane %v276, 4
      %v282 = vmax.f32 %v258, %v271
      %v283 = vmax.f32 %v259, %v273
      %v284 = vmax.f32 %v260, %v275
      %v285 = vmax.f32 %v261, %v277
      %v286 = vld [vmem:[%s242] sm:$0x77]
      %v287 = vld [vmem:[%s242 + $0x8] sm:$0x77]
      %v288 = vld [vmem:[%s242 + $0x10] sm:$0x77]
      %v289 = vld [vmem:[%s242 + $0x18] sm:$0x77]
      %v290 = vmax.f32 %v282, %v286
      %v291 = vmax.f32 %v283, %v287
      %v292 = vmax.f32 %v284, %v288
      %v293 = vmax.f32 %v285, %v289
      %v294 = vld [vmem:[%s247] sm:$0x77]
      %v295 = vld [vmem:[%s247 + $0x8] sm:$0x77]
      %v296 = vld [vmem:[%s247 + $0x10] sm:$0x77]
      %v297 = vld [vmem:[%s247] sm:$0xee]
      %v298 = vld [vmem:[%s247 + $0x8] sm:$0xee]
      %v299 = vld [vmem:[%s247 + $0x10] sm:$0xee]
      %v303 = vrot.slane %v297, 5
      %v304 = vrot.slane %v303, 4
      %v305 = vrot.slane %v298, 5
      %v306 = vrot.slane %v305, 4
      %v307 = vrot.slane %v299, 5
      %v308 = vrot.slane %v307, 4
      %v312 = vmax.f32 %v294, %v304
      %v313 = vmax.f32 %v295, %v306
      %v314 = vmax.f32 %v296, %v308
      %v315 = vld [vmem:[%s252] sm:$0x77]
      %v316 = vld [vmem:[%s252 + $0x8] sm:$0x77]
      %v317 = vld [vmem:[%s252 + $0x10] sm:$0x77]
      %v318 = vmax.f32 %v312, %v315
      %v319 = vmax.f32 %v313, %v316
      %v320 = vmax.f32 %v314, %v317
      %v321 = vmax.f32 %v290, %v291
      %v322 = vmax.f32 %v291, %v292
      %v323 = vmax.f32 %v292, %v293
      %v324 = vmax.f32 %v321, %v318
      %v325 = vmax.f32 %v322, %v319
      %v326 = vmax.f32 %v323, %v320
      %vm327 = vcmask 1042432
      %vm328 = vcmask 522244
      %vm329 = vmor %vm328, %vm327
      %330 = vst.msk [vmem:[%s257] sm:$0x77] %vm329, %v324
      %331 = vst.msk [vmem:[%s257 + $0x8] sm:$0x77] %vm329, %v325
      %332 = vst.msk [vmem:[%s257 + $0x10] sm:$0x77] %vm329, %v326
      %p333 = scmp.lt.s32.totalorder %s15, 1
      %s334 = scalar_select %p333, %s15, 1
      %s335 = smul.addr %s334, 6
      %s336 = smul.addr %s335, 4
      %s337 = scalar_lea.vmem %s4, %s336
      // Predicated region
      $region37: #{alexnet_forward.12} parent=35 // pred_check
        %p338 = pneg %p137
      $region38: #{alexnet_forward.12} parent=35 // pred_check_branch
        %340 = sbr.rel (%p338) target = $region40
      $region39: #{alexnet_forward.12} parent=35 // pred_region
        _
      $region40: #{alexnet_forward.12} parent=35 // pred_fallthru
        _
    $region36: #{alexnet_forward.12} parent=5 // pred_fallthru
      _
    %p341 = scmp.le.s32.totalorder 2, %s10
    // Predicated region
    $region41: #{alexnet_forward.12} parent=5 // pred_check
      %p342 = pneg %p341
    $region42: #{alexnet_forward.12} parent=5 // pred_check_branch
      %344 = sbr.rel (%p342) target = $region44
    $region43: #{alexnet_forward.12} parent=5 // pred_region
      %s345 = ssub.s32 %s10, 2
      // Predicated region
      $region45: #{alexnet_forward.12} parent=43 // pred_check
        %p346 = pneg %p143
      $region46: #{alexnet_forward.12} parent=43 // pred_check_branch
        %348 = sbr.rel (%p346) target = $region48
      $region47: #{alexnet_forward.12} parent=43 // pred_region
        %p349 = scmp.lt.s32.totalorder %s16, 1
        %s350 = scalar_select %p349, %s16, 1
        %s351 = smul.addr %s350, 6
        %s352 = smul.addr %s351, 4
        %s353 = scalar_lea.vmem %s4, %s352
      $region48: #{alexnet_forward.12} parent=43 // pred_fallthru
        _
    $region44: #{alexnet_forward.12} parent=5 // pred_fallthru
      _
  $region6: #{alexnet_forward.12} parent=0 // loop_footer
    %s14 = sadd.s32 1, %s10
  $region7: #{alexnet_forward.12} parent=0 // loop_footer_branch
    %9 = sbr.rel target = $region3
  $region8: #{alexnet_forward.12} parent=0 // loop_exit
    _

// kernel: alexnet_forward.13
$region0: #{alexnet_forward.13}
  #allocation0 [shape = 'u32[]', space=smem, size = 0x4, offset = 0x4, fixed_abs, tag = 'smem constant byte address 0x4 - core index']
  #allocation1 [shape = 'u32[144,128]{1,0:T(1,128)}', space=vmem, size = 0x12000, scoped, tag = 'internal scratch']
  #allocation2 [shape = 'f32[24,384]{1,0:T(8,128)}', space=vmem, size = 0x9000, scoped, tag = 'scratch operand']
  %s0 = inlined_call_operand.vmem [shape: bf16[24,1792], index: 0, kind: input, shape index: {}]
  %s1 = inlined_call_operand.vmem [shape: bf16[1792,384], index: 1, kind: input, shape index: {}]
  %s2 = inlined_call_operand.vmem [shape: f32[1,384], index: 2, kind: input, shape index: {}]
  %s3 = inlined_call_operand.vmem [shape: f32[24,384], index: 3, kind: output, shape index: {}]
  %s4 = sld [smem:[#allocation0]]
  $region79: #{alexnet_forward.13} parent=0
    _
  %s6 = ssub.s32 1, %s4
  %s7 = scalar_select 0, %s6, %s4
  $region1: #{alexnet_forward.13} parent=0
    #allocation3 [shape = 'u8[86016]{0}', space=vmem, size = 0x15000, scoped, tag = 'input window, operand 0']
    loop: start=0, step=1, limit=4
    $region2: #{alexnet_forward.13} parent=1 // loop_pre_header
      _
    $region3: #{alexnet_forward.13} parent=1 // loop_header
      %s9 = sphi 0, %s13
      %p10 = scmp.ge.s32.totalorder %s9, 4
      %s16 = sphi 0, %s35
      %s17 = sphi 0, %s31
      %s18 = sphi 0, %s27
      %s19 = sphi 0, %s16
      %s20 = sphi 0, %s17
      %s21 = sphi 0, %s18
      %s22 = sphi 0, %s19
      %s23 = sphi 0, %s20
      %s24 = sphi 0, %s21
      %s40 = sphi 0, %s42
      %s43 = sphi 0, %s40
      %s44 = sphi 0, %s43
      %s60 = sphi 0, %s44
      %s68 = sphi 0, %s70
      %s71 = sphi 0, %s68
      %s72 = sphi 0, %s71
      %s88 = sphi 0, %s72
      %s94 = sphi 0, %s96
      %s97 = sphi 0, %s94
      %s98 = sphi 0, %s97
      %s114 = sphi 0, %s98
      %s122 = sphi 0, %s124
      %s125 = sphi 0, %s122
      %s126 = sphi 0, %s125
      %s142 = sphi 0, %s126
    $region4: #{alexnet_forward.13} parent=1 // loop_header_branch
      %12 = sbr.rel (%p10) target = $region8
    $region5: #{alexnet_forward.13} parent=1 // loop_body
      %s14 = ssub.s32 %s9, 1
      %s15 = ssub.s32 %s9, 2
      %s25 = sadd.s32 1, %s18
      %p26 = scmp.ge.s32.totalorder %s25, 2
      %s27 = scalar_select %p26, 0, %s25
      %s28 = sadd.s32 1, %s17
      %s29 = scalar_select %p26, %s28, %s17
      %p30 = scmp.ge.s32.totalorder %s29, 1
      %s31 = scalar_select %p30, 0, %s29
      %s32 = sadd.s32 1, %s16
      %s33 = scalar_select %p30, %s32, %s16
      %p34 = scmp.ge.s32.totalorder %s33, 1
      %s35 = scalar_select %p34, 0, %s33
      %s36 = ssub.s32 %s16, %s35
      %s37 = ssub.s32 %s18, %s27
      %s38 = sor.u32 %s36, %s37
      %p39 = scmp.eq.s32.totalorder %s38, 0
      %s41 = sadd.s32 %s40, 1
      %s42 = scalar_select %p39, %s40, %s41
      %p45 = pneg %p39
      %p46 = scmp.eq.s32.totalorder %s9, 1
      %p47 = por %p45, %p46
      %p48 = scmp.ne.s32.totalorder %s40, %s43
      %p49 = scmp.eq.s32.totalorder %s9, 0
      %p50 = por %p48, %p49
      %p51 = scmp.ne.s32.totalorder %s40, %s43
      %p52 = scmp.eq.s32.totalorder %s14, 1
      %p53 = por %p51, %p52
      %p54 = scmp.ne.s32.totalorder %s43, %s44
      %p55 = scmp.eq.s32.totalorder %s14, 0
      %p56 = por %p54, %p55
      %p57 = scmp.ne.s32.totalorder %s43, %s44
      %p58 = scmp.eq.s32.totalorder %s15, 1
      %p59 = por %p57, %p58
      %p61 = scmp.ne.s32.totalorder %s44, %s60
      %p62 = scmp.eq.s32.totalorder %s15, 0
      %p63 = por %p61, %p62
      %s64 = ssub.s32 %s18, %s27
      %s65 = ssub.s32 %s17, %s31
      %s66 = sor.u32 %s64, %s65
      %p67 = scmp.eq.s32.totalorder %s66, 0
      %s69 = sadd.s32 %s68, 1
      %s70 = scalar_select %p67, %s68, %s69
      %p73 = pneg %p67
      %p74 = scmp.eq.s32.totalorder %s9, 1
      %p75 = por %p73, %p74
      %p76 = scmp.ne.s32.totalorder %s68, %s71
      %p77 = scmp.eq.s32.totalorder %s9, 0
      %p78 = por %p76, %p77
      %p79 = scmp.ne.s32.totalorder %s68, %s71
      %p80 = scmp.eq.s32.totalorder %s14, 1
      %p81 = por %p79, %p80
      %p82 = scmp.ne.s32.totalorder %s71, %s72
      %p83 = scmp.eq.s32.totalorder %s14, 0
      %p84 = por %p82, %p83
      %p85 = scmp.ne.s32.totalorder %s71, %s72
      %p86 = scmp.eq.s32.totalorder %s15, 1
      %p87 = por %p85, %p86
      %p89 = scmp.ne.s32.totalorder %s72, %s88
      %p90 = scmp.eq.s32.totalorder %s15, 0
      %p91 = por %p89, %p90
      %s92 = ssub.s32 %s17, %s31
      %p93 = scmp.eq.s32.totalorder %s92, 0
      %s95 = sadd.s32 %s94, 1
      %s96 = scalar_select %p93, %s94, %s95
      %p99 = pneg %p93
      %p100 = scmp.eq.s32.totalorder %s9, 1
      %p101 = por %p99, %p100
      %p102 = scmp.ne.s32.totalorder %s94, %s97
      %p103 = scmp.eq.s32.totalorder %s9, 0
      %p104 = por %p102, %p103
      %p105 = scmp.ne.s32.totalorder %s94, %s97
      %p106 = scmp.eq.s32.totalorder %s14, 1
      %p107 = por %p105, %p106
      %p108 = scmp.ne.s32.totalorder %s97, %s98
      %p109 = scmp.eq.s32.totalorder %s14, 0
      %p110 = por %p108, %p109
      %p111 = scmp.ne.s32.totalorder %s97, %s98
      %p112 = scmp.eq.s32.totalorder %s15, 1
      %p113 = por %p111, %p112
      %p115 = scmp.ne.s32.totalorder %s98, %s114
      %p116 = scmp.eq.s32.totalorder %s15, 0
      %p117 = por %p115, %p116
      %s118 = ssub.s32 %s16, %s35
      %s119 = ssub.s32 %s17, %s31
      %s120 = sor.u32 %s118, %s119
      %p121 = scmp.eq.s32.totalorder %s120, 0
      %s123 = sadd.s32 %s122, 1
      %s124 = scalar_select %p121, %s122, %s123
      %p127 = pneg %p121
      %p128 = scmp.eq.s32.totalorder %s9, 1
      %p129 = por %p127, %p128
      %p130 = scmp.ne.s32.totalorder %s122, %s125
      %p131 = scmp.eq.s32.totalorder %s9, 0
      %p132 = por %p130, %p131
      %p133 = scmp.ne.s32.totalorder %s122, %s125
      %p134 = scmp.eq.s32.totalorder %s14, 1
      %p135 = por %p133, %p134
      %p136 = scmp.ne.s32.totalorder %s125, %s126
      %p137 = scmp.eq.s32.totalorder %s14, 0
      %p138 = por %p136, %p137
      %p139 = scmp.ne.s32.totalorder %s125, %s126
      %p140 = scmp.eq.s32.totalorder %s15, 1
      %p141 = por %p139, %p140
      %p143 = scmp.ne.s32.totalorder %s126, %s142
      %p144 = scmp.eq.s32.totalorder %s15, 0
      %p145 = por %p143, %p144
      %p146 = scmp.le.s32.totalorder 1, %s9
      %p147 = scmp.lt.s32.totalorder %s9, 3
      %p148 = pnand %p146, %p147
      %p149 = pneg %p148
      // Predicated region
      $region9: #{alexnet_forward.13} parent=5 // pred_check
        _
      $region10: #{alexnet_forward.13} parent=5 // pred_check_branch
        %151 = sbr.rel (%p148) target = $region12
      $region11: #{alexnet_forward.13} parent=5 // pred_region
        %s152 = ssub.s32 %s9, 1
        // Predicated region
        $region13: #{alexnet_forward.13} parent=11 // pred_check
          %p153 = pneg %p110
        $region14: #{alexnet_forward.13} parent=11 // pred_check_branch
          %155 = sbr.rel (%p153) target = $region16
        $region15: #{alexnet_forward.13} parent=11 // pred_region
          %s156 = smul.u32 3, %s20
          %p157 = scmp.lt.s32.totalorder %s156, 2
          %s158 = scalar_select %p157, %s156, 2
          %s159 = scalar_lea.vmem %s2, %s158
          %s160 = smul.u32 3, %s20
        $region16: #{alexnet_forward.13} parent=11 // pred_fallthru
          _
      $region12: #{alexnet_forward.13} parent=5 // pred_fallthru
        _
      %p161 = scmp.lt.s32.totalorder %s9, 2
      // Predicated region
      $region17: #{alexnet_forward.13} parent=5 // pred_check
        %p162 = pneg %p161
      $region18: #{alexnet_forward.13} parent=5 // pred_check_branch
        %164 = sbr.rel (%p162) target = $region20
      $region19: #{alexnet_forward.13} parent=5 // pred_region
        // Predicated region
        $region21: #{alexnet_forward.13} parent=19 // pred_check
          %p165 = pneg %p50
        $region22: #{alexnet_forward.13} parent=19 // pred_check_branch
          %167 = sbr.rel (%p165) target = $region24
        $region23: #{alexnet_forward.13} parent=19 // pred_region
          %s168 = sand.u32 %s40, 1
          %s169 = sand.u32 %s40, 1
          %s170 = smul.addr %s169, 84
          %s171 = scalar_lea.vmem [#allocation3], %s170
          %s172 = smul.u32 3, %s16
          %s173 = smul.u32 7, %s18
          %s174 = smul.addr %s172, 14
          %s175 = sadd.s32 %s173, %s174
          %s176 = smul.addr %s175, 4
          %s177 = scalar_lea.vmem %s0, %s176
          // Predicated region
          $region25: #{alexnet_forward.13} parent=23 // pred_check
            _
          $region26: #{alexnet_forward.13} parent=23 // pred_check_branch
            %179 = sbr.rel (0) target = $region28
          $region27: #{alexnet_forward.13} parent=23 // pred_region
            // Predicated region
            $region29: #{alexnet_forward.13} parent=27 // pred_check
              _
            $region30: #{alexnet_forward.13} parent=27 // pred_check_branch
              %181 = sbr.rel (0) target = $region32
            $region31: #{alexnet_forward.13} parent=27 // pred_region
              %s182 = scalar_lea.vmem %s177, 24
              %s183 = scalar_lea.vmem %s171, 24 [#allocation3]
              loop: start=0, step=1, limit=1
              $region33: #{alexnet_forward.13} parent=31 // loop_pre_header
                _
              $region34: #{alexnet_forward.13} parent=31 // loop_header
                %s185 = sphi 0, %s189
                %p186 = scmp.ge.s32.totalorder %s185, 1
                %s190 = sphi %s177, %s177
                %s191 = sphi %s171, %s171
              $region35: #{alexnet_forward.13} parent=31 // loop_header_branch
                %188 = sbr.rel (%p186) target = $region39
              $region36: #{alexnet_forward.13} parent=31 // loop_body
                %v192 = vld [vmem:[%s190] sm:$0xff]
                %193 = vst [vmem:[%s191] sm:$0xff] %v192
                %v194 = vld [vmem:[%s190 + $0x8] sm:$0xff]
                %195 = vst [vmem:[%s191 + $0x8] sm:$0xff] %v194
                %v196 = vld [vmem:[%s190 + $0x10] sm:$0xff]
                %197 = vst [vmem:[%s191 + $0x10] sm:$0xff] %v196
                %v198 = vld [vmem:[%s190 + $0x38] sm:$0xff]
                %199 = vst [vmem:[%s191 + $0x1c] sm:$0xff] %v198
                %v200 = vld [vmem:[%s190 + $0x40] sm:$0xff]
                %201 = vst [vmem:[%s191 + $0x24] sm:$0xff] %v200
                %v202 = vld [vmem:[%s190 + $0x48] sm:$0xff]
                %203 = vst [vmem:[%s191 + $0x2c] sm:$0xff] %v202
                %v204 = vld [vmem:[%s190 + $0x70] sm:$0xff]
                %205 = vst [vmem:[%s191 + $0x38] sm:$0xff] %v204
                %v206 = vld [vmem:[%s190 + $0x78] sm:$0xff]
                %207 = vst [vmem:[%s191 + $0x40] sm:$0xff] %v206
                %v208 = vld [vmem:[%s190 + $0x80] sm:$0xff]
                %209 = vst [vmem:[%s191 + $0x48] sm:$0xff] %v208
              $region37: #{alexnet_forward.13} parent=31 // loop_footer
                %s189 = sadd.s32 1, %s185
              $region38: #{alexnet_forward.13} parent=31 // loop_footer_branch
                %184 = sbr.rel target = $region34
              $region39: #{alexnet_forward.13} parent=31 // loop_exit
                _
              loop: start=0, step=1, limit=1
              $region40: #{alexnet_forward.13} parent=31 // loop_pre_header
                _
              $region41: #{alexnet_forward.13} parent=31 // loop_header
                %s212 = sphi 0, %s216
                %p213 = scmp.ge.s32.totalorder %s212, 1
                %s217 = sphi %s182, %s182
                %s218 = sphi %s183, %s183
              $region42: #{alexnet_forward.13} parent=31 // loop_header_branch
                %215 = sbr.rel (%p213) target = $region46
              $region43: #{alexnet_forward.13} parent=31 // loop_body
                %v219 = vld [vmem:[%s217] sm:$0xf]
                %220 = vst [vmem:[%s218] sm:$0xf] %v219
                %v221 = vld [vmem:[%s217 + $0x38] sm:$0xf]
                %222 = vst [vmem:[%s218 + $0x1c] sm:$0xf] %v221
                %v223 = vld [vmem:[%s217 + $0x70] sm:$0xf]
                %224 = vst [vmem:[%s218 + $0x38] sm:$0xf] %v223
              $region44: #{alexnet_forward.13} parent=31 // loop_footer
                %s216 = sadd.s32 1, %s212
              $region45: #{alexnet_forward.13} parent=31 // loop_footer_branch
                %211 = sbr.rel target = $region41
              $region46: #{alexnet_forward.13} parent=31 // loop_exit
                _
            $region32: #{alexnet_forward.13} parent=27 // pred_fallthru
              _
          $region28: #{alexnet_forward.13} parent=23 // pred_fallthru
            _
          %225 = vnop
        $region24: #{alexnet_forward.13} parent=19 // pred_fallthru
          _
        // Predicated region
        $region47: #{alexnet_forward.13} parent=19 // pred_check
          %p226 = pneg %p78
        $region48: #{alexnet_forward.13} parent=19 // pred_check_branch
          %228 = sbr.rel (%p226) target = $region50
        $region49: #{alexnet_forward.13} parent=19 // pred_region
          %s229 = smul.u32 112, %s18
          %s230 = smul.u32 3, %s17
          %p231 = scmp.lt.s32.totalorder %s229, 223
          %s232 = scalar_select %p231, %s229, 223
          %p233 = scmp.lt.s32.totalorder %s230, 2
          %s234 = scalar_select %p233, %s230, 2
          %s235 = smul.addr %s232, 3
          %s236 = sadd.s32 %s234, %s235
          %s237 = smul.addr %s236, 4
          %s238 = scalar_lea.vmem %s1, %s237
          %s239 = smul.u32 112, %s18
          %s240 = smul.u32 3, %s17
        $region50: #{alexnet_forward.13} parent=19 // pred_fallthru
          _
      $region20: #{alexnet_forward.13} parent=5 // pred_fallthru
        _
      %p241 = scmp.le.s32.totalorder 1, %s9
      %p242 = scmp.lt.s32.totalorder %s9, 3
      %p243 = pnand %p241, %p242
      %p244 = pneg %p243
      // Predicated region
      $region51: #{alexnet_forward.13} parent=5 // pred_check
        _
      $region52: #{alexnet_forward.13} parent=5 // pred_check_branch
        %246 = sbr.rel (%p243) target = $region54
      $region53: #{alexnet_forward.13} parent=5 // pred_region
        %s247 = ssub.s32 %s9, 1
        %s248 = sand.u32 %s43, 1
        %s249 = sand.u32 %s43, 1
        %s250 = smul.addr %s249, 84
        %s251 = scalar_lea.vmem [#allocation3], %s250
        // Predicated region
        $region55: #{alexnet_forward.13} parent=53 // pred_check
          %p252 = pneg %p56
        $region56: #{alexnet_forward.13} parent=53 // pred_check_branch
          %254 = sbr.rel (%p252) target = $region58
        $region57: #{alexnet_forward.13} parent=53 // pred_region
          _
        $region58: #{alexnet_forward.13} parent=53 // pred_fallthru
          _
        %s255 = sand.u32 %s43, 1
        %s256 = sand.u32 %s43, 1
        %s257 = smul.addr %s256, 84
        %s258 = scalar_lea.vmem [#allocation3], %s257
        %p259 = pneg %p56
        %p260 = pneg %p53
        %s261 = smul.u32 112, %s21
        %s262 = smul.u32 3, %s20
        %p263 = scmp.lt.s32.totalorder %s261, 223
        %s264 = scalar_select %p263, %s261, 223
        %p265 = scmp.lt.s32.totalorder %s262, 2
        %s266 = scalar_select %p265, %s262, 2
        %s267 = smul.addr %s264, 3
        %s268 = sadd.s32 %s266, %s267
        %s269 = smul.addr %s268, 4
        %s270 = scalar_lea.vmem %s1, %s269
        %p271 = pneg %p84
        %p272 = pneg %p81
        %s273 = smul.u32 3, %s20
        %p274 = scmp.lt.s32.totalorder %s273, 2
        %s275 = scalar_select %p274, %s273, 2
        %s276 = scalar_lea.vmem %s2, %s275
        %p277 = pneg %p110
        %p278 = pneg %p107
        %p279 = pneg %p138
        %p280 = pneg %p135
        %s281 = smul.u32 3, %s19
        %s282 = smul.u32 3, %s20
        %p283 = scmp.lt.s32.totalorder %s281, 2
        %s284 = scalar_select %p283, %s281, 2
        %p285 = scmp.lt.s32.totalorder %s282, 2
        %s286 = scalar_select %p285, %s282, 2
        %s287 = smul.addr %s284, 3
        %s288 = sadd.s32 %s286, %s287
        %s289 = smul.addr %s288, 8
        %s290 = scalar_lea.vmem %s3, %s289
        %s291 = smul.u32 3, %s19
        %s292 = smul.u32 7, %s21
        %s293 = smul.u32 112, %s21
        %s294 = smul.u32 3, %s20
        %p295 = scmp.lt.s32.totalorder %s293, 223
        %s296 = scalar_select %p295, %s293, 223
        %p297 = scmp.lt.s32.totalorder %s294, 2
        %s298 = scalar_select %p297, %s294, 2
        %s299 = smul.addr %s296, 3
        %s300 = sadd.s32 %s298, %s299
        %s301 = smul.addr %s300, 4
        %s302 = scalar_lea.vmem %s1, %s301
        %s303 = smul.u32 112, %s21
        %s304 = smul.u32 3, %s20
        %s305 = smul.u32 3, %s20
        %p306 = scmp.lt.s32.totalorder %s305, 2
        %s307 = scalar_select %p306, %s305, 2
        %s308 = scalar_lea.vmem %s2, %s307
        %s309 = smul.u32 3, %s20
        %s310 = smul.u32 3, %s19
        %s311 = smul.u32 3, %s20
        %p312 = scmp.lt.s32.totalorder %s310, 2
        %s313 = scalar_select %p312, %s310, 2
        %p314 = scmp.lt.s32.totalorder %s311, 2
        %s315 = scalar_select %p314, %s311, 2
        %s316 = smul.addr %s313, 3
        %s317 = sadd.s32 %s315, %s316
        %s318 = smul.addr %s317, 8
        %s319 = scalar_lea.vmem %s3, %s318
        %s320 = smul.u32 3, %s19
        %s321 = smul.u32 3, %s20
        %p323 = scmp.eq.s32.totalorder %s21, 0
        // Predicated region
        $region59: #{alexnet_forward.13} parent=53 // pred_check
          %p324 = pneg %p323
        $region60: #{alexnet_forward.13} parent=53 // pred_check_branch
          %326 = sbr.rel (%p324) target = $region62
        $region61: #{alexnet_forward.13} parent=53 // pred_region
          %327 = vst [vmem:[#allocation2] sm:$0xff] 0.0
          %328 = vst [vmem:[#allocation2 + $0x8] sm:$0xff] 0.0
          %329 = vst [vmem:[#allocation2 + $0x10] sm:$0xff] 0.0
          %330 = vst [vmem:[#allocation2 + $0x18] sm:$0xff] 0.0
          %331 = vst [vmem:[#allocation2 + $0x20] sm:$0xff] 0.0
          %332 = vst [vmem:[#allocation2 + $0x28] sm:$0xff] 0.0
          %333 = vst [vmem:[#allocation2 + $0x30] sm:$0xff] 0.0
          %334 = vst [vmem:[#allocation2 + $0x38] sm:$0xff] 0.0
          %335 = vst [vmem:[#allocation2 + $0x40] sm:$0xff] 0.0
        $region62: #{alexnet_forward.13} parent=53 // pred_fallthru
          _
        %v336 = vld [vmem:[#allocation2] sm:$0xff]
        %v337 = vld [vmem:[#allocation2 + $0x8] sm:$0xff]
        %v338 = vld [vmem:[#allocation2 + $0x10] sm:$0xff]
        %v339 = vld [vmem:[#allocation2 + $0x18] sm:$0xff]
        %v340 = vld [vmem:[#allocation2 + $0x20] sm:$0xff]
        %v341 = vld [vmem:[#allocation2 + $0x28] sm:$0xff]
        %v342 = vld [vmem:[#allocation2 + $0x30] sm:$0xff]
        %v343 = vld [vmem:[#allocation2 + $0x38] sm:$0xff]
        %v344 = vld [vmem:[#allocation2 + $0x40] sm:$0xff]
        %v345 = vld [vmem:[%s251] sm:$0xff]
        %v346 = vld [vmem:[%s251 + $0x8] sm:$0xff]
        %v347 = vld [vmem:[%s251 + $0x10] sm:$0xff]
        %v348 = vld [vmem:[%s251 + $0x18] sm:$0xf]
        %v349 = vld [vmem:[%s251 + $0x1c] sm:$0xff]
        %v350 = vld [vmem:[%s251 + $0x24] sm:$0xff]
        %v351 = vld [vmem:[%s251 + $0x2c] sm:$0xff]
        %v352 = vld [vmem:[%s251 + $0x34] sm:$0xf]
        %v353 = vld [vmem:[%s251 + $0x38] sm:$0xff]
        %v354 = vld [vmem:[%s251 + $0x40] sm:$0xff]
        %v355 = vld [vmem:[%s251 + $0x48] sm:$0xff]
        %v356 = vld [vmem:[%s251 + $0x50] sm:$0xf]
        %v357 = vld [vmem:[%s302] sm:$0xff]
        %v358 = vld [vmem:[%s302 + $0x8] sm:$0xf]
        %v359 = vld [vmem:[%s302 + $0xc] sm:$0xff]
        %v360 = vld [vmem:[%s302 + $0x14] sm:$0xf]
        %v361 = vld [vmem:[%s302 + $0x18] sm:$0xff]
        %v362 = vld [vmem:[%s302 + $0x20] sm:$0xf]
        %v363 = vld [vmem:[%s302 + $0x24] sm:$0xff]
        %v364 = vld [vmem:[%s302 + $0x2c] sm:$0xf]
        %v365 = vld [vmem:[%s302 + $0x30] sm:$0xff]
        %v366 = vld [vmem:[%s302 + $0x38] sm:$0xf]
        %v367 = vld [vmem:[%s302 + $0x3c] sm:$0xff]
        %v368 = vld [vmem:[%s302 + $0x44] sm:$0xf]
        %v369 = vld [vmem:[%s302 + $0x48] sm:$0xff]
        %v370 = vld [vmem:[%s302 + $0x50] sm:$0xf]
        %v371 = vld [vmem:[%s302 + $0x54] sm:$0xff]
        %v372 = vld [vmem:[%s302 + $0x5c] sm:$0xf]
        %v373 = vld [vmem:[%s302 + $0x60] sm:$0xff]
        %v374 = vld [vmem:[%s302 + $0x68] sm:$0xf]
        %v375 = vld [vmem:[%s302 + $0x6c] sm:$0xff]
        %v376 = vld [vmem:[%s302 + $0x74] sm:$0xf]
        %v377 = vld [vmem:[%s302 + $0x78] sm:$0xff]
        %v378 = vld [vmem:[%s302 + $0x80] sm:$0xf]
        %v379 = vld [vmem:[%s302 + $0x84] sm:$0xff]
        %v380 = vld [vmem:[%s302 + $0x8c] sm:$0xf]
        %v381 = vld [vmem:[%s302 + $0x90] sm:$0xff]
        %v382 = vld [vmem:[%s302 + $0x98] sm:$0xf]
        %v383 = vld [vmem:[%s302 + $0x9c] sm:$0xff]
        %v384 = vld [vmem:[%s302 + $0xa4] sm:$0xf]
        %v385 = vld [vmem:[%s302 + $0xa8] sm:$0xff]
        %v386 = vld [vmem:[%s302 + $0xb0] sm:$0xf]
        %v387 = vld [vmem:[%s302 + $0xb4] sm:$0xff]
        %v388 = vld [vmem:[%s302 + $0xbc] sm:$0xf]
        %v389 = vld [vmem:[%s302 + $0xc0] sm:$0xff]
        %v390 = vld [vmem:[%s302 + $0xc8] sm:$0xf]
        %v391 = vld [vmem:[%s302 + $0xcc] sm:$0xff]
        %v392 = vld [vmem:[%s302 + $0xd4] sm:$0xf]
        %v393 = vld [vmem:[%s302 + $0xd8] sm:$0xff]
        %v394 = vld [vmem:[%s302 + $0xe0] sm:$0xf]
        %v395 = vld [vmem:[%s302 + $0xe4] sm:$0xff]
        %v396 = vld [vmem:[%s302 + $0xec] sm:$0xf]
        %v397 = vld [vmem:[%s302 + $0xf0] sm:$0xff]
        %v398 = vld [vmem:[%s302 + $0xf8] sm:$0xf]
        %v399 = vld [vmem:[%s302 + $0xfc] sm:$0xff]
        %v400 = vld [vmem:[%s302 + $0x104] sm:$0xf]
        %v401 = vld [vmem:[%s302 + $0x108] sm:$0xff]
        %v402 = vld [vmem:[%s302 + $0x110] sm:$0xf]
        %v403 = vld [vmem:[%s302 + $0x114] sm:$0xff]
        %v404 = vld [vmem:[%s302 + $0x11c] sm:$0xf]
        %v405 = vld [vmem:[%s302 + $0x120] sm:$0xff]
        %v406 = vld [vmem:[%s302 + $0x128] sm:$0xf]
        %v407 = vld [vmem:[%s302 + $0x12c] sm:$0xff]
        %v408 = vld [vmem:[%s302 + $0x134] sm:$0xf]
        %v409 = vld [vmem:[%s302 + $0x138] sm:$0xff]
        %v410 = vld [vmem:[%s302 + $0x140] sm:$0xf]
        %v411 = vld [vmem:[%s302 + $0x144] sm:$0xff]
        %v412 = vld [vmem:[%s302 + $0x14c] sm:$0xf]
        %v413 = vld [vmem:[%s302 + $0x150] sm:$0xff]
        %v414 = vld [vmem:[%s302 + $0x158] sm:$0xf]
        %v415 = vld [vmem:[%s302 + $0x15c] sm:$0xff]
        %v416 = vld [vmem:[%s302 + $0x164] sm:$0xf]
        %v417 = vld [vmem:[%s302 + $0x168] sm:$0xff]
        %v418 = vld [vmem:[%s302 + $0x170] sm:$0xf]
        %v419 = vld [vmem:[%s302 + $0x174] sm:$0xff]
        %v420 = vld [vmem:[%s302 + $0x17c] sm:$0xf]
        %v421 = vld [vmem:[%s302 + $0x180] sm:$0xff]
        %v422 = vld [vmem:[%s302 + $0x188] sm:$0xf]
        %v423 = vld [vmem:[%s302 + $0x18c] sm:$0xff]
        %v424 = vld [vmem:[%s302 + $0x194] sm:$0xf]
        %v425 = vld [vmem:[%s302 + $0x198] sm:$0xff]
        %v426 = vld [vmem:[%s302 + $0x1a0] sm:$0xf]
        %v427 = vld [vmem:[%s302 + $0x1a4] sm:$0xff]
        %v428 = vld [vmem:[%s302 + $0x1ac] sm:$0xf]
        %v429 = vld [vmem:[%s302 + $0x1b0] sm:$0xff]
        %v430 = vld [vmem:[%s302 + $0x1b8] sm:$0xf]
        %v431 = vld [vmem:[%s302 + $0x1bc] sm:$0xff]
        %v432 = vld [vmem:[%s302 + $0x1c4] sm:$0xf]
        %v433 = vld [vmem:[%s302 + $0x1c8] sm:$0xff]
        %v434 = vld [vmem:[%s302 + $0x1d0] sm:$0xf]
        %v435 = vld [vmem:[%s302 + $0x1d4] sm:$0xff]
        %v436 = vld [vmem:[%s302 + $0x1dc] sm:$0xf]
        %v437 = vld [vmem:[%s302 + $0x1e0] sm:$0xff]
        %v438 = vld [vmem:[%s302 + $0x1e8] sm:$0xf]
        %v439 = vld [vmem:[%s302 + $0x1ec] sm:$0xff]
        %v440 = vld [vmem:[%s302 + $0x1f4] sm:$0xf]
        %v441 = vld [vmem:[%s302 + $0x1f8] sm:$0xff]
        %v442 = vld [vmem:[%s302 + $0x200] sm:$0xf]
        %v443 = vld [vmem:[%s302 + $0x204] sm:$0xff]
        %v444 = vld [vmem:[%s302 + $0x20c] sm:$0xf]
        %v445 = vld [vmem:[%s302 + $0x210] sm:$0xff]
        %v446 = vld [vmem:[%s302 + $0x218] sm:$0xf]
        %v447 = vld [vmem:[%s302 + $0x21c] sm:$0xff]
        %v448 = vld [vmem:[%s302 + $0x224] sm:$0xf]
        %v449 = vld [vmem:[%s302 + $0x228] sm:$0xff]
        %v450 = vld [vmem:[%s302 + $0x230] sm:$0xf]
        %v451 = vld [vmem:[%s302 + $0x234] sm:$0xff]
        %v452 = vld [vmem:[%s302 + $0x23c] sm:$0xf]
        %v453 = vld [vmem:[%s302 + $0x240] sm:$0xff]
        %v454 = vld [vmem:[%s302 + $0x248] sm:$0xf]
        %v455 = vld [vmem:[%s302 + $0x24c] sm:$0xff]
        %v456 = vld [vmem:[%s302 + $0x254] sm:$0xf]
        %v457 = vld [vmem:[%s302 + $0x258] sm:$0xff]
        %v458 = vld [vmem:[%s302 + $0x260] sm:$0xf]
        %v459 = vld [vmem:[%s302 + $0x264] sm:$0xff]
        %v460 = vld [vmem:[%s302 + $0x26c] sm:$0xf]
        %v461 = vld [vmem:[%s302 + $0x270] sm:$0xff]
        %v462 = vld [vmem:[%s302 + $0x278] sm:$0xf]
        %v463 = vld [vmem:[%s302 + $0x27c] sm:$0xff]
        %v464 = vld [vmem:[%s302 + $0x284] sm:$0xf]
        %v465 = vld [vmem:[%s302 + $0x288] sm:$0xff]
        %v466 = vld [vmem:[%s302 + $0x290] sm:$0xf]
        %v467 = vld [vmem:[%s302 + $0x294] sm:$0xff]
        %v468 = vld [vmem:[%s302 + $0x29c] sm:$0xf]
        %v469 = vld [vmem:[%s302 + $0x2a0] sm:$0xff]
        %v470 = vld [vmem:[%s302 + $0x2a8] sm:$0xf]
        %v471 = vld [vmem:[%s302 + $0x2ac] sm:$0xff]
        %v472 = vld [vmem:[%s302 + $0x2b4] sm:$0xf]
        %v473 = vld [vmem:[%s302 + $0x2b8] sm:$0xff]
        %v474 = vld [vmem:[%s302 + $0x2c0] sm:$0xf]
        %v475 = vld [vmem:[%s302 + $0x2c4] sm:$0xff]
        %v476 = vld [vmem:[%s302 + $0x2cc] sm:$0xf]
        %v477 = vld [vmem:[%s302 + $0x2d0] sm:$0xff]
        %v478 = vld [vmem:[%s302 + $0x2d8] sm:$0xf]
        %v479 = vld [vmem:[%s302 + $0x2dc] sm:$0xff]
        %v480 = vld [vmem:[%s302 + $0x2e4] sm:$0xf]
        %v481 = vld [vmem:[%s302 + $0x2e8] sm:$0xff]
        %v482 = vld [vmem:[%s302 + $0x2f0] sm:$0xf]
        %v483 = vld [vmem:[%s302 + $0x2f4] sm:$0xff]
        %v484 = vld [vmem:[%s302 + $0x2fc] sm:$0xf]
        %v485 = vld [vmem:[%s302 + $0x300] sm:$0xff]
        %v486 = vld [vmem:[%s302 + $0x308] sm:$0xf]
        %v487 = vld [vmem:[%s302 + $0x30c] sm:$0xff]
        %v488 = vld [vmem:[%s302 + $0x314] sm:$0xf]
        %v489 = vld [vmem:[%s302 + $0x318] sm:$0xff]
        %v490 = vld [vmem:[%s302 + $0x320] sm:$0xf]
        %v491 = vld [vmem:[%s302 + $0x324] sm:$0xff]
        %v492 = vld [vmem:[%s302 + $0x32c] sm:$0xf]
        %v493 = vld [vmem:[%s302 + $0x330] sm:$0xff]
        %v494 = vld [vmem:[%s302 + $0x338] sm:$0xf]
        %v495 = vld [vmem:[%s302 + $0x33c] sm:$0xff]
        %v496 = vld [vmem:[%s302 + $0x344] sm:$0xf]
        %v497 = vld [vmem:[%s302 + $0x348] sm:$0xff]
        %v498 = vld [vmem:[%s302 + $0x350] sm:$0xf]
        %v499 = vld [vmem:[%s302 + $0x354] sm:$0xff]
        %v500 = vld [vmem:[%s302 + $0x35c] sm:$0xf]
        %v501 = vld [vmem:[%s302 + $0x360] sm:$0xff]
        %v502 = vld [vmem:[%s302 + $0x368] sm:$0xf]
        %v503 = vld [vmem:[%s302 + $0x36c] sm:$0xff]
        %v504 = vld [vmem:[%s302 + $0x374] sm:$0xf]
        %v505 = vld [vmem:[%s302 + $0x378] sm:$0xff]
        %v506 = vld [vmem:[%s302 + $0x380] sm:$0xf]
        %v507 = vld [vmem:[%s302 + $0x384] sm:$0xff]
        %v508 = vld [vmem:[%s302 + $0x38c] sm:$0xf]
        %v509 = vld [vmem:[%s302 + $0x390] sm:$0xff]
        %v510 = vld [vmem:[%s302 + $0x398] sm:$0xf]
        %v511 = vld [vmem:[%s302 + $0x39c] sm:$0xff]
        %v512 = vld [vmem:[%s302 + $0x3a4] sm:$0xf]
        %v513 = vld [vmem:[%s302 + $0x3a8] sm:$0xff]
        %v514 = vld [vmem:[%s302 + $0x3b0] sm:$0xf]
        %v515 = vld [vmem:[%s302 + $0x3b4] sm:$0xff]
        %v516 = vld [vmem:[%s302 + $0x3bc] sm:$0xf]
        %v517 = vld [vmem:[%s302 + $0x3c0] sm:$0xff]
        %v518 = vld [vmem:[%s302 + $0x3c8] sm:$0xf]
        %v519 = vld [vmem:[%s302 + $0x3cc] sm:$0xff]
        %v520 = vld [vmem:[%s302 + $0x3d4] sm:$0xf]
        %v521 = vld [vmem:[%s302 + $0x3d8] sm:$0xff]
        %v522 = vld [vmem:[%s302 + $0x3e0] sm:$0xf]
        %v523 = vld [vmem:[%s302 + $0x3e4] sm:$0xff]
        %v524 = vld [vmem:[%s302 + $0x3ec] sm:$0xf]
        %v525 = vld [vmem:[%s302 + $0x3f0] sm:$0xff]
        %v526 = vld [vmem:[%s302 + $0x3f8] sm:$0xf]
        %v527 = vld [vmem:[%s302 + $0x3fc] sm:$0xff]
        %v528 = vld [vmem:[%s302 + $0x404] sm:$0xf]
        %v529 = vld [vmem:[%s302 + $0x408] sm:$0xff]
        %v530 = vld [vmem:[%s302 + $0x410] sm:$0xf]
        %v531 = vld [vmem:[%s302 + $0x414] sm:$0xff]
        %v532 = vld [vmem:[%s302 + $0x41c] sm:$0xf]
        %v533 = vld [vmem:[%s302 + $0x420] sm:$0xff]
        %v534 = vld [vmem:[%s302 + $0x428] sm:$0xf]
        %v535 = vld [vmem:[%s302 + $0x42c] sm:$0xff]
        %v536 = vld [vmem:[%s302 + $0x434] sm:$0xf]
        %v537 = vld [vmem:[%s302 + $0x438] sm:$0xff]
        %v538 = vld [vmem:[%s302 + $0x440] sm:$0xf]
        %v539 = vld [vmem:[%s302 + $0x444] sm:$0xff]
        %v540 = vld [vmem:[%s302 + $0x44c] sm:$0xf]
        %v541 = vld [vmem:[%s302 + $0x450] sm:$0xff]
        %v542 = vld [vmem:[%s302 + $0x458] sm:$0xf]
        %v543 = vld [vmem:[%s302 + $0x45c] sm:$0xff]
        %v544 = vld [vmem:[%s302 + $0x464] sm:$0xf]
        %v545 = vld [vmem:[%s302 + $0x468] sm:$0xff]
        %v546 = vld [vmem:[%s302 + $0x470] sm:$0xf]
        %v547 = vld [vmem:[%s302 + $0x474] sm:$0xff]
        %v548 = vld [vmem:[%s302 + $0x47c] sm:$0xf]
        %v549 = vld [vmem:[%s302 + $0x480] sm:$0xff]
        %v550 = vld [vmem:[%s302 + $0x488] sm:$0xf]
        %v551 = vld [vmem:[%s302 + $0x48c] sm:$0xff]
        %v552 = vld [vmem:[%s302 + $0x494] sm:$0xf]
        %v553 = vld [vmem:[%s302 + $0x498] sm:$0xff]
        %v554 = vld [vmem:[%s302 + $0x4a0] sm:$0xf]
        %v555 = vld [vmem:[%s302 + $0x4a4] sm:$0xff]
        %v556 = vld [vmem:[%s302 + $0x4ac] sm:$0xf]
        %v557 = vld [vmem:[%s302 + $0x4b0] sm:$0xff]
        %v558 = vld [vmem:[%s302 + $0x4b8] sm:$0xf]
        %v559 = vld [vmem:[%s302 + $0x4bc] sm:$0xff]
        %v560 = vld [vmem:[%s302 + $0x4c4] sm:$0xf]
        %v561 = vld [vmem:[%s302 + $0x4c8] sm:$0xff]
        %v562 = vld [vmem:[%s302 + $0x4d0] sm:$0xf]
        %v563 = vld [vmem:[%s302 + $0x4d4] sm:$0xff]
        %v564 = vld [vmem:[%s302 + $0x4dc] sm:$0xf]
        %v565 = vld [vmem:[%s302 + $0x4e0] sm:$0xff]
        %v566 = vld [vmem:[%s302 + $0x4e8] sm:$0xf]
        %v567 = vld [vmem:[%s302 + $0x4ec] sm:$0xff]
        %v568 = vld [vmem:[%s302 + $0x4f4] sm:$0xf]
        %v569 = vld [vmem:[%s302 + $0x4f8] sm:$0xff]
        %v570 = vld [vmem:[%s302 + $0x500] sm:$0xf]
        %v571 = vld [vmem:[%s302 + $0x504] sm:$0xff]
        %v572 = vld [vmem:[%s302 + $0x50c] sm:$0xf]
        %v573 = vld [vmem:[%s302 + $0x510] sm:$0xff]
        %v574 = vld [vmem:[%s302 + $0x518] sm:$0xf]
        %v575 = vld [vmem:[%s302 + $0x51c] sm:$0xff]
        %v576 = vld [vmem:[%s302 + $0x524] sm:$0xf]
        %v577 = vld [vmem:[%s302 + $0x528] sm:$0xff]
        %v578 = vld [vmem:[%s302 + $0x530] sm:$0xf]
        %v579 = vld [vmem:[%s302 + $0x534] sm:$0xff]
        %v580 = vld [vmem:[%s302 + $0x53c] sm:$0xf]
        %v593 = vunpack.c.l.b16 %v345
        %v594 = vunpack.c.h.b16 %v345
        %v595 = vunpack.c.l.b16 %v346
        %v596 = vunpack.c.h.b16 %v346
        %v597 = vunpack.c.l.b16 %v347
        %v598 = vunpack.c.h.b16 %v347
        %v599 = vunpack.c.l.b16 %v348
        %v600 = vunpack.c.l.b16 %v349
        %v601 = vunpack.c.h.b16 %v349
        %v602 = vunpack.c.l.b16 %v350
        %v603 = vunpack.c.h.b16 %v350
        %v604 = vunpack.c.l.b16 %v351
        %v605 = vunpack.c.h.b16 %v351
        %v606 = vunpack.c.l.b16 %v352
        %v607 = vunpack.c.l.b16 %v353
        %v608 = vunpack.c.h.b16 %v353
        %v609 = vunpack.c.l.b16 %v354
        %v610 = vunpack.c.h.b16 %v354
        %v611 = vunpack.c.l.b16 %v355
        %v612 = vunpack.c.h.b16 %v355
        %v613 = vunpack.c.l.b16 %v356
        %v614 = vpack.c.b16 %v600, %v593
        %v615 = vpack.c.b16 %v601, %v594
        %v616 = vpack.c.b16 %v602, %v595
        %v617 = vpack.c.b16 %v603, %v596
        %v618 = vpack.c.b16 %v604, %v597
        %v619 = vpack.c.b16 %v605, %v598
        %v620 = vpack.c.b16 %v606, %v599
        %v621 = vpack.c.b16 %v607, %v607
        %v622 = vpack.c.b16 %v608, %v608
        %v623 = vpack.c.b16 %v609, %v609
        %v624 = vpack.c.b16 %v610, %v610
        %v625 = vpack.c.b16 %v611, %v611
        %v626 = vpack.c.b16 %v612, %v612
        %v627 = vpack.c.b16 %v613, %v613
        %v866 = vunpack.c.l.b16 %v357
        %v867 = vunpack.c.h.b16 %v357
        %v868 = vunpack.c.l.b16 %v358
        %v869 = vunpack.c.l.b16 %v359
        %v870 = vunpack.c.h.b16 %v359
        %v871 = vunpack.c.l.b16 %v360
        %v872 = vunpack.c.l.b16 %v361
        %v873 = vunpack.c.h.b16 %v361
        %v874 = vunpack.c.l.b16 %v362
        %v875 = vunpack.c.l.b16 %v363
        %v876 = vunpack.c.h.b16 %v363
        %v877 = vunpack.c.l.b16 %v364
        %v878 = vunpack.c.l.b16 %v365
        %v879 = vunpack.c.h.b16 %v365
        %v880 = vunpack.c.l.b16 %v366
        %v881 = vunpack.c.l.b16 %v367
        %v882 = vunpack.c.h.b16 %v367
        %v883 = vunpack.c.l.b16 %v368
        %v884 = vunpack.c.l.b16 %v369
        %v885 = vunpack.c.h.b16 %v369
        %v886 = vunpack.c.l.b16 %v370
        %v887 = vunpack.c.l.b16 %v371
        %v888 = vunpack.c.h.b16 %v371
        %v889 = vunpack.c.l.b16 %v372
        %v890 = vunpack.c.l.b16 %v373
        %v891 = vunpack.c.h.b16 %v373
        %v892 = vunpack.c.l.b16 %v374
        %v893 = vunpack.c.l.b16 %v375
        %v894 = vunpack.c.h.b16 %v375
        %v895 = vunpack.c.l.b16 %v376
        %v896 = vunpack.c.l.b16 %v377
        %v897 = vunpack.c.h.b16 %v377
        %v898 = vunpack.c.l.b16 %v378
        %v899 = vunpack.c.l.b16 %v379
        %v900 = vunpack.c.h.b16 %v379
        %v901 = vunpack.c.l.b16 %v380
        %v902 = vunpack.c.l.b16 %v381
        %v903 = vunpack.c.h.b16 %v381
        %v904 = vunpack.c.l.b16 %v382
        %v905 = vunpack.c.l.b16 %v383
        %v906 = vunpack.c.h.b16 %v383
        %v907 = vunpack.c.l.b16 %v384
        %v908 = vunpack.c.l.b16 %v385
        %v909 = vunpack.c.h.b16 %v385
        %v910 = vunpack.c.l.b16 %v386
        %v911 = vunpack.c.l.b16 %v387
        %v912 = vunpack.c.h.b16 %v387
        %v913 = vunpack.c.l.b16 %v388
        %v914 = vunpack.c.l.b16 %v389
        %v915 = vunpack.c.h.b16 %v389
        %v916 = vunpack.c.l.b16 %v390
        %v917 = vunpack.c.l.b16 %v391
        %v918 = vunpack.c.h.b16 %v391
        %v919 = vunpack.c.l.b16 %v392
        %v920 = vunpack.c.l.b16 %v393
        %v921 = vunpack.c.h.b16 %v393
        %v922 = vunpack.c.l.b16 %v394
        %v923 = vunpack.c.l.b16 %v395
        %v924 = vunpack.c.h.b16 %v395
        %v925 = vunpack.c.l.b16 %v396
        %v926 = vunpack.c.l.b16 %v397
        %v927 = vunpack.c.h.b16 %v397
        %v928 = vunpack.c.l.b16 %v398
        %v929 = vunpack.c.l.b16 %v399
        %v930 = vunpack.c.h.b16 %v399
        %v931 = vunpack.c.l.b16 %v400
        %v932 = vunpack.c.l.b16 %v401
        %v933 = vunpack.c.h.b16 %v401
        %v934 = vunpack.c.l.b16 %v402
        %v935 = vunpack.c.l.b16 %v403
        %v936 = vunpack.c.h.b16 %v403
        %v937 = vunpack.c.l.b16 %v404
        %v938 = vunpack.c.l.b16 %v405
        %v939 = vunpack.c.h.b16 %v405
        %v940 = vunpack.c.l.b16 %v406
        %v941 = vunpack.c.l.b16 %v407
        %v942 = vunpack.c.h.b16 %v407
        %v943 = vunpack.c.l.b16 %v408
        %v944 = vunpack.c.l.b16 %v409
        %v945 = vunpack.c.h.b16 %v409
        %v946 = vunpack.c.l.b16 %v410
        %v947 = vunpack.c.l.b16 %v411
        %v948 = vunpack.c.h.b16 %v411
        %v949 = vunpack.c.l.b16 %v412
        %v950 = vunpack.c.l.b16 %v413
        %v951 = vunpack.c.h.b16 %v413
        %v952 = vunpack.c.l.b16 %v414
        %v953 = vunpack.c.l.b16 %v415
        %v954 = vunpack.c.h.b16 %v415
        %v955 = vunpack.c.l.b16 %v416
        %v956 = vunpack.c.l.b16 %v417
        %v957 = vunpack.c.h.b16 %v417
        %v958 = vunpack.c.l.b16 %v418
        %v959 = vunpack.c.l.b16 %v419
        %v960 = vunpack.c.h.b16 %v419
        %v961 = vunpack.c.l.b16 %v420
        %v962 = vunpack.c.l.b16 %v421
        %v963 = vunpack.c.h.b16 %v421
        %v964 = vunpack.c.l.b16 %v422
        %v965 = vunpack.c.l.b16 %v423
        %v966 = vunpack.c.h.b16 %v423
        %v967 = vunpack.c.l.b16 %v424
        %v968 = vunpack.c.l.b16 %v425
        %v969 = vunpack.c.h.b16 %v425
        %v970 = vunpack.c.l.b16 %v426
        %v971 = vunpack.c.l.b16 %v427
        %v972 = vunpack.c.h.b16 %v427
        %v973 = vunpack.c.l.b16 %v428
        %v974 = vunpack.c.l.b16 %v429
        %v975 = vunpack.c.h.b16 %v429
        %v976 = vunpack.c.l.b16 %v430
        %v977 = vunpack.c.l.b16 %v431
        %v978 = vunpack.c.h.b16 %v431
        %v979 = vunpack.c.l.b16 %v432
        %v980 = vunpack.c.l.b16 %v433
        %v981 = vunpack.c.h.b16 %v433
        %v982 = vunpack.c.l.b16 %v434
        %v983 = vunpack.c.l.b16 %v435
        %v984 = vunpack.c.h.b16 %v435
        %v985 = vunpack.c.l.b16 %v436
        %v986 = vunpack.c.l.b16 %v437
        %v987 = vunpack.c.h.b16 %v437
        %v988 = vunpack.c.l.b16 %v438
        %v989 = vunpack.c.l.b16 %v439
        %v990 = vunpack.c.h.b16 %v439
        %v991 = vunpack.c.l.b16 %v440
        %v992 = vunpack.c.l.b16 %v441
        %v993 = vunpack.c.h.b16 %v441
        %v994 = vunpack.c.l.b16 %v442
        %v995 = vunpack.c.l.b16 %v443
        %v996 = vunpack.c.h.b16 %v443
        %v997 = vunpack.c.l.b16 %v444
        %v998 = vunpack.c.l.b16 %v445
        %v999 = vunpack.c.h.b16 %v445
        %v1000 = vunpack.c.l.b16 %v446
        %v1001 = vunpack.c.l.b16 %v447
        %v1002 = vunpack.c.h.b16 %v447
        %v1003 = vunpack.c.l.b16 %v448
        %v1004 = vunpack.c.l.b16 %v449
        %v1005 = vunpack.c.h.b16 %v449
        %v1006 = vunpack.c.l.b16 %v450
        %v1007 = vunpack.c.l.b16 %v451
        %v1008 = vunpack.c.h.b16 %v451
        %v1009 = vunpack.c.l.b16 %v452
        %v1010 = vunpack.c.l.b16 %v453
        %v1011 = vunpack.c.h.b16 %v453
        %v1012 = vunpack.c.l.b16 %v454
        %v1013 = vunpack.c.l.b16 %v455
        %v1014 = vunpack.c.h.b16 %v455
        %v1015 = vunpack.c.l.b16 %v456
        %v1016 = vunpack.c.l.b16 %v457
        %v1017 = vunpack.c.h.b16 %v457
        %v1018 = vunpack.c.l.b16 %v458
        %v1019 = vunpack.c.l.b16 %v459
        %v1020 = vunpack.c.h.b16 %v459
        %v1021 = vunpack.c.l.b16 %v460
        %v1022 = vunpack.c.l.b16 %v461
        %v1023 = vunpack.c.h.b16 %v461
        %v1024 = vunpack.c.l.b16 %v462
        %v1025 = vunpack.c.l.b16 %v463
        %v1026 = vunpack.c.h.b16 %v463
        %v1027 = vunpack.c.l.b16 %v464
        %v1028 = vunpack.c.l.b16 %v465
        %v1029 = vunpack.c.h.b16 %v465
        %v1030 = vunpack.c.l.b16 %v466
        %v1031 = vunpack.c.l.b16 %v467
        %v1032 = vunpack.c.h.b16 %v467
        %v1033 = vunpack.c.l.b16 %v468
        %v1034 = vunpack.c.l.b16 %v469
        %v1035 = vunpack.c.h.b16 %v469
        %v1036 = vunpack.c.l.b16 %v470
        %v1037 = vunpack.c.l.b16 %v471
        %v1038 = vunpack.c.h.b16 %v471
        %v1039 = vunpack.c.l.b16 %v472
        %v1040 = vunpack.c.l.b16 %v473
        %v1041 = vunpack.c.h.b16 %v473
        %v1042 = vunpack.c.l.b16 %v474
        %v1043 = vunpack.c.l.b16 %v475
        %v1044 = vunpack.c.h.b16 %v475
        %v1045 = vunpack.c.l.b16 %v476
        %v1046 = vunpack.c.l.b16 %v477
        %v1047 = vunpack.c.h.b16 %v477
        %v1048 = vunpack.c.l.b16 %v478
        %v1049 = vunpack.c.l.b16 %v479
        %v1050 = vunpack.c.h.b16 %v479
        %v1051 = vunpack.c.l.b16 %v480
        %v1052 = vunpack.c.l.b16 %v481
        %v1053 = vunpack.c.h.b16 %v481
        %v1054 = vunpack.c.l.b16 %v482
        %v1055 = vunpack.c.l.b16 %v483
        %v1056 = vunpack.c.h.b16 %v483
        %v1057 = vunpack.c.l.b16 %v484
        %v1058 = vunpack.c.l.b16 %v485
        %v1059 = vunpack.c.h.b16 %v485
        %v1060 = vunpack.c.l.b16 %v486
        %v1061 = vunpack.c.l.b16 %v487
        %v1062 = vunpack.c.h.b16 %v487
        %v1063 = vunpack.c.l.b16 %v488
        %v1064 = vunpack.c.l.b16 %v489
        %v1065 = vunpack.c.h.b16 %v489
        %v1066 = vunpack.c.l.b16 %v490
        %v1067 = vunpack.c.l.b16 %v491
        %v1068 = vunpack.c.h.b16 %v491
        %v1069 = vunpack.c.l.b16 %v492
        %v1070 = vunpack.c.l.b16 %v493
        %v1071 = vunpack.c.h.b16 %v493
        %v1072 = vunpack.c.l.b16 %v494
        %v1073 = vunpack.c.l.b16 %v495
        %v1074 = vunpack.c.h.b16 %v495
        %v1075 = vunpack.c.l.b16 %v496
        %v1076 = vunpack.c.l.b16 %v497
        %v1077 = vunpack.c.h.b16 %v497
        %v1078 = vunpack.c.l.b16 %v498
        %v1079 = vunpack.c.l.b16 %v499
        %v1080 = vunpack.c.h.b16 %v499
        %v1081 = vunpack.c.l.b16 %v500
        %v1082 = vunpack.c.l.b16 %v501
        %v1083 = vunpack.c.h.b16 %v501
        %v1084 = vunpack.c.l.b16 %v502
        %v1085 = vunpack.c.l.b16 %v503
        %v1086 = vunpack.c.h.b16 %v503
        %v1087 = vunpack.c.l.b16 %v504
        %v1088 = vunpack.c.l.b16 %v505
        %v1089 = vunpack.c.h.b16 %v505
        %v1090 = vunpack.c.l.b16 %v506
        %v1091 = vunpack.c.l.b16 %v507
        %v1092 = vunpack.c.h.b16 %v507
        %v1093 = vunpack.c.l.b16 %v508
        %v1094 = vunpack.c.l.b16 %v509
        %v1095 = vunpack.c.h.b16 %v509
        %v1096 = vunpack.c.l.b16 %v510
        %v1097 = vunpack.c.l.b16 %v511
        %v1098 = vunpack.c.h.b16 %v511
        %v1099 = vunpack.c.l.b16 %v512
        %v1100 = vunpack.c.l.b16 %v513
        %v1101 = vunpack.c.h.b16 %v513
        %v1102 = vunpack.c.l.b16 %v514
        %v1103 = vunpack.c.l.b16 %v515
        %v1104 = vunpack.c.h.b16 %v515
        %v1105 = vunpack.c.l.b16 %v516
        %v1106 = vunpack.c.l.b16 %v517
        %v1107 = vunpack.c.h.b16 %v517
        %v1108 = vunpack.c.l.b16 %v518
        %v1109 = vunpack.c.l.b16 %v519
        %v1110 = vunpack.c.h.b16 %v519
        %v1111 = vunpack.c.l.b16 %v520
        %v1112 = vunpack.c.l.b16 %v521
        %v1113 = vunpack.c.h.b16 %v521
        %v1114 = vunpack.c.l.b16 %v522
        %v1115 = vunpack.c.l.b16 %v523
        %v1116 = vunpack.c.h.b16 %v523
        %v1117 = vunpack.c.l.b16 %v524
        %v1118 = vunpack.c.l.b16 %v525
        %v1119 = vunpack.c.h.b16 %v525
        %v1120 = vunpack.c.l.b16 %v526
        %v1121 = vunpack.c.l.b16 %v527
        %v1122 = vunpack.c.h.b16 %v527
        %v1123 = vunpack.c.l.b16 %v528
        %v1124 = vunpack.c.l.b16 %v529
        %v1125 = vunpack.c.h.b16 %v529
        %v1126 = vunpack.c.l.b16 %v530
        %v1127 = vunpack.c.l.b16 %v531
        %v1128 = vunpack.c.h.b16 %v531
        %v1129 = vunpack.c.l.b16 %v532
        %v1130 = vunpack.c.l.b16 %v533
        %v1131 = vunpack.c.h.b16 %v533
        %v1132 = vunpack.c.l.b16 %v534
        %v1133 = vunpack.c.l.b16 %v535
        %v1134 = vunpack.c.h.b16 %v535
        %v1135 = vunpack.c.l.b16 %v536
        %v1136 = vunpack.c.l.b16 %v537
        %v1137 = vunpack.c.h.b16 %v537
        %v1138 = vunpack.c.l.b16 %v538
        %v1139 = vunpack.c.l.b16 %v539
        %v1140 = vunpack.c.h.b16 %v539
        %v1141 = vunpack.c.l.b16 %v540
        %v1142 = vunpack.c.l.b16 %v541
        %v1143 = vunpack.c.h.b16 %v541
        %v1144 = vunpack.c.l.b16 %v542
        %v1145 = vunpack.c.l.b16 %v543
        %v1146 = vunpack.c.h.b16 %v543
        %v1147 = vunpack.c.l.b16 %v544
        %v1148 = vunpack.c.l.b16 %v545
        %v1149 = vunpack.c.h.b16 %v545
        %v1150 = vunpack.c.l.b16 %v546
        %v1151 = vunpack.c.l.b16 %v547
        %v1152 = vunpack.c.h.b16 %v547
        %v1153 = vunpack.c.l.b16 %v548
        %v1154 = vunpack.c.l.b16 %v549
        %v1155 = vunpack.c.h.b16 %v549
        %v1156 = vunpack.c.l.b16 %v550
        %v1157 = vunpack.c.l.b16 %v551
        %v1158 = vunpack.c.h.b16 %v551
        %v1159 = vunpack.c.l.b16 %v552
        %v1160 = vunpack.c.l.b16 %v553
        %v1161 = vunpack.c.h.b16 %v553
        %v1162 = vunpack.c.l.b16 %v554
        %v1163 = vunpack.c.l.b16 %v555
        %v1164 = vunpack.c.h.b16 %v555
        %v1165 = vunpack.c.l.b16 %v556
        %v1166 = vunpack.c.l.b16 %v557
        %v1167 = vunpack.c.h.b16 %v557
        %v1168 = vunpack.c.l.b16 %v558
        %v1169 = vunpack.c.l.b16 %v559
        %v1170 = vunpack.c.h.b16 %v559
        %v1171 = vunpack.c.l.b16 %v560
        %v1172 = vunpack.c.l.b16 %v561
        %v1173 = vunpack.c.h.b16 %v561
        %v1174 = vunpack.c.l.b16 %v562
        %v1175 = vunpack.c.l.b16 %v563
        %v1176 = vunpack.c.h.b16 %v563
        %v1177 = vunpack.c.l.b16 %v564
        %v1178 = vunpack.c.l.b16 %v565
        %v1179 = vunpack.c.h.b16 %v565
        %v1180 = vunpack.c.l.b16 %v566
        %v1181 = vunpack.c.l.b16 %v567
        %v1182 = vunpack.c.h.b16 %v567
        %v1183 = vunpack.c.l.b16 %v568
        %v1184 = vunpack.c.l.b16 %v569
        %v1185 = vunpack.c.h.b16 %v569
        %v1186 = vunpack.c.l.b16 %v570
        %v1187 = vunpack.c.l.b16 %v571
        %v1188 = vunpack.c.h.b16 %v571
        %v1189 = vunpack.c.l.b16 %v572
        %v1190 = vunpack.c.l.b16 %v573
        %v1191 = vunpack.c.h.b16 %v573
        %v1192 = vunpack.c.l.b16 %v574
        %v1193 = vunpack.c.l.b16 %v575
        %v1194 = vunpack.c.h.b16 %v575
        %v1195 = vunpack.c.l.b16 %v576
        %v1196 = vunpack.c.l.b16 %v577
        %v1197 = vunpack.c.h.b16 %v577
        %v1198 = vunpack.c.l.b16 %v578
        %v1199 = vunpack.c.l.b16 %v579
        %v1200 = vunpack.c.h.b16 %v579
        %v1201 = vunpack.c.l.b16 %v580
        %v1202 = vpack.c.b16 %v869, %v866
        %v1203 = vpack.c.b16 %v870, %v867
        %v1204 = vpack.c.b16 %v871, %v868
        %v1205 = vpack.c.b16 %v875, %v872
        %v1206 = vpack.c.b16 %v876, %v873
        %v1207 = vpack.c.b16 %v877, %v874
        %v1208 = vpack.c.b16 %v881, %v878
        %v1209 = vpack.c.b16 %v882, %v879
        %v1210 = vpack.c.b16 %v883, %v880
        %v1211 = vpack.c.b16 %v887, %v884
        %v1212 = vpack.c.b16 %v888, %v885
        %v1213 = vpack.c.b16 %v889, %v886
        %v1214 = vpack.c.b16 %v893, %v890
        %v1215 = vpack.c.b16 %v894, %v891
        %v1216 = vpack.c.b16 %v895, %v892
        %v1217 = vpack.c.b16 %v899, %v896
        %v1218 = vpack.c.b16 %v900, %v897
        %v1219 = vpack.c.b16 %v901, %v898
        %v1220 = vpack.c.b16 %v905, %v902
        %v1221 = vpack.c.b16 %v906, %v903
        %v1222 = vpack.c.b16 %v907, %v904
        %v1223 = vpack.c.b16 %v911, %v908
        %v1224 = vpack.c.b16 %v912, %v909
        %v1225 = vpack.c.b16 %v913, %v910
        %v1226 = vpack.c.b16 %v917, %v914
        %v1227 = vpack.c.b16 %v918, %v915
        %v1228 = vpack.c.b16 %v919, %v916
        %v1229 = vpack.c.b16 %v923, %v920
        %v1230 = vpack.c.b16 %v924, %v921
        %v1231 = vpack.c.b16 %v925, %v922
        %v1232 = vpack.c.b16 %v929, %v926
        %v1233 = vpack.c.b16 %v930, %v927
        %v1234 = vpack.c.b16 %v931, %v928
        %v1235 = vpack.c.b16 %v935, %v932
        %v1236 = vpack.c.b16 %v936, %v933
        %v1237 = vpack.c.b16 %v937, %v934
        %v1238 = vpack.c.b16 %v941, %v938
        %v1239 = vpack.c.b16 %v942, %v939
        %v1240 = vpack.c.b16 %v943, %v940
        %v1241 = vpack.c.b16 %v947, %v944
        %v1242 = vpack.c.b16 %v948, %v945
        %v1243 = vpack.c.b16 %v949, %v946
        %v1244 = vpack.c.b16 %v953, %v950
        %v1245 = vpack.c.b16 %v954, %v951
        %v1246 = vpack.c.b16 %v955, %v952
        %v1247 = vpack.c.b16 %v959, %v956
        %v1248 = vpack.c.b16 %v960, %v957
        %v1249 = vpack.c.b16 %v961, %v958
        %v1250 = vpack.c.b16 %v965, %v962
        %v1251 = vpack.c.b16 %v966, %v963
        %v1252 = vpack.c.b16 %v967, %v964
        %v1253 = vpack.c.b16 %v971, %v968
        %v1254 = vpack.c.b16 %v972, %v969
        %v1255 = vpack.c.b16 %v973, %v970
        %v1256 = vpack.c.b16 %v977, %v974
        %v1257 = vpack.c.b16 %v978, %v975
        %v1258 = vpack.c.b16 %v979, %v976
        %v1259 = vpack.c.b16 %v983, %v980
        %v1260 = vpack.c.b16 %v984, %v981
        %v1261 = vpack.c.b16 %v985, %v982
        %v1262 = vpack.c.b16 %v989, %v986
        %v1263 = vpack.c.b16 %v990, %v987
        %v1264 = vpack.c.b16 %v991, %v988
        %v1265 = vpack.c.b16 %v995, %v992
        %v1266 = vpack.c.b16 %v996, %v993
        %v1267 = vpack.c.b16 %v997, %v994
        %v1268 = vpack.c.b16 %v1001, %v998
        %v1269 = vpack.c.b16 %v1002, %v999
        %v1270 = vpack.c.b16 %v1003, %v1000
        %v1271 = vpack.c.b16 %v1007, %v1004
        %v1272 = vpack.c.b16 %v1008, %v1005
        %v1273 = vpack.c.b16 %v1009, %v1006
        %v1274 = vpack.c.b16 %v1013, %v1010
        %v1275 = vpack.c.b16 %v1014, %v1011
        %v1276 = vpack.c.b16 %v1015, %v1012
        %v1277 = vpack.c.b16 %v1019, %v1016
        %v1278 = vpack.c.b16 %v1020, %v1017
        %v1279 = vpack.c.b16 %v1021, %v1018
        %v1280 = vpack.c.b16 %v1025, %v1022
        %v1281 = vpack.c.b16 %v1026, %v1023
        %v1282 = vpack.c.b16 %v1027, %v1024
        %v1283 = vpack.c.b16 %v1031, %v1028
        %v1284 = vpack.c.b16 %v1032, %v1029
        %v1285 = vpack.c.b16 %v1033, %v1030
        %v1286 = vpack.c.b16 %v1037, %v1034
        %v1287 = vpack.c.b16 %v1038, %v1035
        %v1288 = vpack.c.b16 %v1039, %v1036
        %v1289 = vpack.c.b16 %v1043, %v1040
        %v1290 = vpack.c.b16 %v1044, %v1041
        %v1291 = vpack.c.b16 %v1045, %v1042
        %v1292 = vpack.c.b16 %v1049, %v1046
        %v1293 = vpack.c.b16 %v1050, %v1047
        %v1294 = vpack.c.b16 %v1051, %v1048
        %v1295 = vpack.c.b16 %v1055, %v1052
        %v1296 = vpack.c.b16 %v1056, %v1053
        %v1297 = vpack.c.b16 %v1057, %v1054
        %v1298 = vpack.c.b16 %v1061, %v1058
        %v1299 = vpack.c.b16 %v1062, %v1059
        %v1300 = vpack.c.b16 %v1063, %v1060
        %v1301 = vpack.c.b16 %v1067, %v1064
        %v1302 = vpack.c.b16 %v1068, %v1065
        %v1303 = vpack.c.b16 %v1069, %v1066
        %v1304 = vpack.c.b16 %v1073, %v1070
        %v1305 = vpack.c.b16 %v1074, %v1071
        %v1306 = vpack.c.b16 %v1075, %v1072
        %v1307 = vpack.c.b16 %v1079, %v1076
        %v1308 = vpack.c.b16 %v1080, %v1077
        %v1309 = vpack.c.b16 %v1081, %v1078
        %v1310 = vpack.c.b16 %v1085, %v1082
        %v1311 = vpack.c.b16 %v1086, %v1083
        %v1312 = vpack.c.b16 %v1087, %v1084
        %v1313 = vpack.c.b16 %v1091, %v1088
        %v1314 = vpack.c.b16 %v1092, %v1089
        %v1315 = vpack.c.b16 %v1093, %v1090
        %v1316 = vpack.c.b16 %v1097, %v1094
        %v1317 = vpack.c.b16 %v1098, %v1095
        %v1318 = vpack.c.b16 %v1099, %v1096
        %v1319 = vpack.c.b16 %v1103, %v1100
        %v1320 = vpack.c.b16 %v1104, %v1101
        %v1321 = vpack.c.b16 %v1105, %v1102
        %v1322 = vpack.c.b16 %v1109, %v1106
        %v1323 = vpack.c.b16 %v1110, %v1107
        %v1324 = vpack.c.b16 %v1111, %v1108
        %v1325 = vpack.c.b16 %v1115, %v1112
        %v1326 = vpack.c.b16 %v1116, %v1113
        %v1327 = vpack.c.b16 %v1117, %v1114
        %v1328 = vpack.c.b16 %v1121, %v1118
        %v1329 = vpack.c.b16 %v1122, %v1119
        %v1330 = vpack.c.b16 %v1123, %v1120
        %v1331 = vpack.c.b16 %v1127, %v1124
        %v1332 = vpack.c.b16 %v1128, %v1125
        %v1333 = vpack.c.b16 %v1129, %v1126
        %v1334 = vpack.c.b16 %v1133, %v1130
        %v1335 = vpack.c.b16 %v1134, %v1131
        %v1336 = vpack.c.b16 %v1135, %v1132
        %v1337 = vpack.c.b16 %v1139, %v1136
        %v1338 = vpack.c.b16 %v1140, %v1137
        %v1339 = vpack.c.b16 %v1141, %v1138
        %v1340 = vpack.c.b16 %v1145, %v1142
        %v1341 = vpack.c.b16 %v1146, %v1143
        %v1342 = vpack.c.b16 %v1147, %v1144
        %v1343 = vpack.c.b16 %v1151, %v1148
        %v1344 = vpack.c.b16 %v1152, %v1149
        %v1345 = vpack.c.b16 %v1153, %v1150
        %v1346 = vpack.c.b16 %v1157, %v1154
        %v1347 = vpack.c.b16 %v1158, %v1155
        %v1348 = vpack.c.b16 %v1159, %v1156
        %v1349 = vpack.c.b16 %v1163, %v1160
        %v1350 = vpack.c.b16 %v1164, %v1161
        %v1351 = vpack.c.b16 %v1165, %v1162
        %v1352 = vpack.c.b16 %v1169, %v1166
        %v1353 = vpack.c.b16 %v1170, %v1167
        %v1354 = vpack.c.b16 %v1171, %v1168
        %v1355 = vpack.c.b16 %v1175, %v1172
        %v1356 = vpack.c.b16 %v1176, %v1173
        %v1357 = vpack.c.b16 %v1177, %v1174
        %v1358 = vpack.c.b16 %v1181, %v1178
        %v1359 = vpack.c.b16 %v1182, %v1179
        %v1360 = vpack.c.b16 %v1183, %v1180
        %v1361 = vpack.c.b16 %v1187, %v1184
        %v1362 = vpack.c.b16 %v1188, %v1185
        %v1363 = vpack.c.b16 %v1189, %v1186
        %v1364 = vpack.c.b16 %v1193, %v1190
        %v1365 = vpack.c.b16 %v1194, %v1191
        %v1366 = vpack.c.b16 %v1195, %v1192
        %v1367 = vpack.c.b16 %v1199, %v1196
        %v1368 = vpack.c.b16 %v1200, %v1197
        %v1369 = vpack.c.b16 %v1201, %v1198
        %1538 = vmatprep.subr.bf16.mxu0 %v1203
        %1539 = vmatpush1.bf16.msra.mxu0 %v1202
        %1540 = vmatprep.subr.bf16.mxu0 %v1206
        %1541 = vmatpush1.bf16.msra.mxu0 %v1205
        %1542 = vmatprep.subr.bf16.mxu0 %v1209
        %1543 = vmatpush1.bf16.msra.mxu0 %v1208
        %1544 = vmatprep.subr.bf16.mxu0 %v1212
        %1545 = vmatpush1.bf16.msra.mxu0 %v1211
        %1546 = vmatprep.subr.bf16.mxu0 %v1215
        %1547 = vmatpush1.bf16.msra.mxu0 %v1214
        %1548 = vmatprep.subr.bf16.mxu0 %v1218
        %1549 = vmatpush1.bf16.msra.mxu0 %v1217
        %1550 = vmatprep.subr.bf16.mxu0 %v1221
        %1551 = vmatpush1.bf16.msra.mxu0 %v1220
        %1552 = vmatprep.subr.bf16.mxu0 %v1224
        %1553 = vmatpush1.bf16.msra.mxu0 %v1223
        %1554 = vmatprep.subr.bf16.mxu0 %v1227
        %1555 = vmatpush1.bf16.msra.mxu0 %v1226
        %1556 = vmatprep.subr.bf16.mxu0 %v1230
        %1557 = vmatpush1.bf16.msra.mxu0 %v1229
        %1558 = vmatprep.subr.bf16.mxu0 %v1233
        %1559 = vmatpush1.bf16.msra.mxu0 %v1232
        %1560 = vmatprep.subr.bf16.mxu0 %v1236
        %1561 = vmatpush1.bf16.msra.mxu0 %v1235
        %1562 = vmatprep.subr.bf16.mxu0 %v1239
        %1563 = vmatpush1.bf16.msra.mxu0 %v1238
        %1564 = vmatprep.subr.bf16.mxu0 %v1242
        %1565 = vmatpush1.bf16.msra.mxu0 %v1241
        %1566 = vmatprep.subr.bf16.mxu0 %v1245
        %1567 = vmatpush1.bf16.msra.mxu0 %v1244
        %1568 = vmatprep.subr.bf16.mxu0 %v1248
        %1569 = vmatpush1.bf16.msra.mxu0 %v1247
        %1570 = vmatprep.mubr.bf16.mxu0 %v615
        %1571 = vmatmul.mubr.bf16.gmra.mrb[0].mxu0 %v614
        %v1572 = vpop.f32.mrb[0].mxu0
        %v1573 = vadd.f32 0.0, %v1572
        %v1574 = vpop.f32.mrb[0].mxu0
        %v1575 = vadd.f32 0.0, %v1574
        %v1576 = vpop.f32.mrb[0].mxu0
        %v1577 = vadd.f32 0.0, %v1576
        %v1578 = vpop.f32.mrb[0].mxu0
        %v1579 = vadd.f32 0.0, %v1578
        %1580 = vmatprep.mubr.bf16.mxu0 %v622
        %1581 = vmatmul.mubr.bf16.gmra.mrb[0].mxu0 %v621
        %v1582 = vpop.f32.mrb[0].mxu0
        %v1583 = vadd.f32 0.0, %v1582
        %v1584 = vpop.f32.mrb[0].mxu0
        %v1585 = vadd.f32 0.0, %v1584
        %v1586 = vpop.f32.mrb[0].mxu0
        %v1587 = vpop.f32.mrb[0].mxu0
        %1588 = vdwg.mxu0
        %1589 = vmatprep.subr.bf16.mxu0 %v1251
        %1590 = vmatpush1.bf16.msra.mxu0 %v1250
        %1591 = vmatprep.subr.bf16.mxu0 %v1254
        %1592 = vmatpush1.bf16.msra.mxu0 %v1253
        %1593 = vmatprep.subr.bf16.mxu0 %v1257
        %1594 = vmatpush1.bf16.msra.mxu0 %v1256
        %1595 = vmatprep.subr.bf16.mxu0 %v1260
        %1596 = vmatpush1.bf16.msra.mxu0 %v1259
        %1597 = vmatprep.subr.bf16.mxu0 %v1263
        %1598 = vmatpush1.bf16.msra.mxu0 %v1262
        %1599 = vmatprep.subr.bf16.mxu0 %v1266
        %1600 = vmatpush1.bf16.msra.mxu0 %v1265
        %1601 = vmatprep.subr.bf16.mxu0 %v1269
        %1602 = vmatpush1.bf16.msra.mxu0 %v1268
        %1603 = vmatprep.subr.bf16.mxu0 %v1272
        %1604 = vmatpush1.bf16.msra.mxu0 %v1271
        %1605 = vmatprep.subr.bf16.mxu0 %v1275
        %1606 = vmatpush1.bf16.msra.mxu0 %v1274
        %1607 = vmatprep.subr.bf16.mxu0 %v1278
        %1608 = vmatpush1.bf16.msra.mxu0 %v1277
        %1609 = vmatprep.subr.bf16.mxu0 %v1281
        %1610 = vmatpush1.bf16.msra.mxu0 %v1280
        %1611 = vmatprep.subr.bf16.mxu0 %v1284
        %1612 = vmatpush1.bf16.msra.mxu0 %v1283
        %1613 = vmatprep.subr.bf16.mxu0 %v1287
        %1614 = vmatpush1.bf16.msra.mxu0 %v1286
        %1615 = vmatprep.subr.bf16.mxu0 %v1290
        %1616 = vmatpush1.bf16.msra.mxu0 %v1289
        %1617 = vmatprep.subr.bf16.mxu0 %v1293
        %1618 = vmatpush1.bf16.msra.mxu0 %v1292
        %1619 = vmatprep.subr.bf16.mxu0 %v1296
        %1620 = vmatpush1.bf16.msra.mxu0 %v1295
        %1621 = vmatprep.mubr.bf16.mxu0 %v617
        %1622 = vmatmul.mubr.bf16.gmra.mrb[0].mxu0 %v616
        %v1623 = vpop.f32.mrb[0].mxu0
        %v1624 = vadd.f32 %v1573, %v1623
        %v1625 = vpop.f32.mrb[0].mxu0
        %v1626 = vadd.f32 %v1575, %v1625
        %v1627 = vpop.f32.mrb[0].mxu0
        %v1628 = vadd.f32 %v1577, %v1627
        %v1629 = vpop.f32.mrb[0].mxu0
        %v1630 = vadd.f32 %v1579, %v1629
        %1631 = vmatprep.mubr.bf16.mxu0 %v624
        %1632 = vmatmul.mubr.bf16.gmra.mrb[0].mxu0 %v623
        %v1633 = vpop.f32.mrb[0].mxu0
        %v1634 = vadd.f32 %v1583, %v1633
        %v1635 = vpop.f32.mrb[0].mxu0
        %v1636 = vadd.f32 %v1585, %v1635
        %v1637 = vpop.f32.mrb[0].mxu0
        %v1638 = vpop.f32.mrb[0].mxu0
        %1639 = vdwg.mxu0
        %1640 = vmatprep.subr.bf16.mxu0 %v1299
        %1641 = vmatpush1.bf16.msra.mxu0 %v1298
        %1642 = vmatprep.subr.bf16.mxu0 %v1302
        %1643 = vmatpush1.bf16.msra.mxu0 %v1301
        %1644 = vmatprep.subr.bf16.mxu0 %v1305
        %1645 = vmatpush1.bf16.msra.mxu0 %v1304
        %1646 = vmatprep.subr.bf16.mxu0 %v1308
        %1647 = vmatpush1.bf16.msra.mxu0 %v1307
        %1648 = vmatprep.subr.bf16.mxu0 %v1311
        %1649 = vmatpush1.bf16.msra.mxu0 %v1310
        %1650 = vmatprep.subr.bf16.mxu0 %v1314
        %1651 = vmatpush1.bf16.msra.mxu0 %v1313
        %1652 = vmatprep.subr.bf16.mxu0 %v1317
        %1653 = vmatpush1.bf16.msra.mxu0 %v1316
        %1654 = vmatprep.subr.bf16.mxu0 %v1320
        %1655 = vmatpush1.bf16.msra.mxu0 %v1319
        %1656 = vmatprep.subr.bf16.mxu0 %v1323
        %1657 = vmatpush1.bf16.msra.mxu0 %v1322
        %1658 = vmatprep.subr.bf16.mxu0 %v1326
        %1659 = vmatpush1.bf16.msra.mxu0 %v1325
        %1660 = vmatprep.subr.bf16.mxu0 %v1329
        %1661 = vmatpush1.bf16.msra.mxu0 %v1328
        %1662 = vmatprep.subr.bf16.mxu0 %v1332
        %1663 = vmatpush1.bf16.msra.mxu0 %v1331
        %1664 = vmatprep.subr.bf16.mxu0 %v1335
        %1665 = vmatpush1.bf16.msra.mxu0 %v1334
        %1666 = vmatprep.subr.bf16.mxu0 %v1338
        %1667 = vmatpush1.bf16.msra.mxu0 %v1337
        %1668 = vmatprep.subr.bf16.mxu0 %v1341
        %1669 = vmatpush1.bf16.msra.mxu0 %v1340
        %1670 = vmatprep.subr.bf16.mxu0 %v1344
        %1671 = vmatpush1.bf16.msra.mxu0 %v1343
        %1672 = vmatprep.mubr.bf16.mxu0 %v619
        %1673 = vmatmul.mubr.bf16.gmra.mrb[0].mxu0 %v618
        %v1674 = vpop.f32.mrb[0].mxu0
        %v1675 = vadd.f32 %v1624, %v1674
        %v1676 = vpop.f32.mrb[0].mxu0
        %v1677 = vadd.f32 %v1626, %v1676
        %v1678 = vpop.f32.mrb[0].mxu0
        %v1679 = vadd.f32 %v1628, %v1678
        %v1680 = vpop.f32.mrb[0].mxu0
        %v1681 = vadd.f32 %v1630, %v1680
        %1682 = vmatprep.mubr.bf16.mxu0 %v626
        %1683 = vmatmul.mubr.bf16.gmra.mrb[0].mxu0 %v625
        %v1684 = vpop.f32.mrb[0].mxu0
        %v1685 = vadd.f32 %v1634, %v1684
        %v1686 = vpop.f32.mrb[0].mxu0
        %v1687 = vadd.f32 %v1636, %v1686
        %v1688 = vpop.f32.mrb[0].mxu0
        %v1689 = vpop.f32.mrb[0].mxu0
        %1690 = vdwg.mxu0
        %1691 = vmatprep.subr.bf16.mxu0 %v1347
        %1692 = vmatpush1.bf16.msra.mxu0 %v1346
        %1693 = vmatprep.subr.bf16.mxu0 %v1350
        %1694 = vmatpush1.bf16.msra.mxu0 %v1349
        %1695 = vmatprep.subr.bf16.mxu0 %v1353
        %1696 = vmatpush1.bf16.msra.mxu0 %v1352
        %1697 = vmatprep.subr.bf16.mxu0 %v1356
        %1698 = vmatpush1.bf16.msra.mxu0 %v1355
        %1699 = vmatprep.subr.bf16.mxu0 %v1359
        %1700 = vmatpush1.bf16.msra.mxu0 %v1358
        %1701 = vmatprep.subr.bf16.mxu0 %v1362
        %1702 = vmatpush1.bf16.msra.mxu0 %v1361
        %1703 = vmatprep.subr.bf16.mxu0 %v1365
        %1704 = vmatpush1.bf16.msra.mxu0 %v1364
        %1705 = vmatprep.subr.bf16.mxu0 %v1368
        %1706 = vmatpush1.bf16.msra.mxu0 %v1367
        %1707 = vmatprep.subr.bf16.mxu0 0
        %1708 = vmatpush1.bf16.msra.mxu0 0
        %1709 = vmatprep.subr.bf16.mxu0 0
        %1710 = vmatpush1.bf16.msra.mxu0 0
        %1711 = vmatprep.subr.bf16.mxu0 0
        %1712 = vmatpush1.bf16.msra.mxu0 0
        %1713 = vmatprep.subr.bf16.mxu0 0
        %1714 = vmatpush1.bf16.msra.mxu0 0
        %1715 = vmatprep.subr.bf16.mxu0 0
        %1716 = vmatpush1.bf16.msra.mxu0 0
        %1717 = vmatprep.subr.bf16.mxu0 0
        %1718 = vmatpush1.bf16.msra.mxu0 0
        %1719 = vmatprep.subr.bf16.mxu0 0
        %1720 = vmatpush1.bf16.msra.mxu0 0
        %1721 = vmatprep.subr.bf16.mxu0 0
        %1722 = vmatpush1.bf16.msra.mxu0 0
        %1723 = vmatprep.mubr.bf16.mxu0 0
        %1724 = vmatmul.mubr.bf16.gmra.mrb[0].mxu0 %v620
        %v1725 = vpop.f32.mrb[0].mxu0
        %v1726 = vadd.f32 %v1675, %v1725
        %v1727 = vpop.f32.mrb[0].mxu0
        %v1728 = vadd.f32 %v1677, %v1727
        %v1729 = vpop.f32.mrb[0].mxu0
        %v1730 = vadd.f32 %v1679, %v1729
        %v1731 = vpop.f32.mrb[0].mxu0
        %v1732 = vadd.f32 %v1681, %v1731
        %1733 = vmatprep.mubr.bf16.mxu0 0
        %1734 = vmatmul.mubr.bf16.gmra.mrb[0].mxu0 %v627
        %v1735 = vpop.f32.mrb[0].mxu0
        %v1736 = vadd.f32 %v1685, %v1735
        %v1737 = vpop.f32.mrb[0].mxu0
        %v1738 = vadd.f32 %v1687, %v1737
        %v1739 = vpop.f32.mrb[0].mxu0
        %v1740 = vpop.f32.mrb[0].mxu0
        %1741 = vdwg.mxu0
        %1742 = vmatprep.subr.bf16.mxu0 0
        %1743 = vmatpush1.bf16.msra.mxu0 %v1204
        %1744 = vmatprep.subr.bf16.mxu0 0
        %1745 = vmatpush1.bf16.msra.mxu0 %v1207
        %1746 = vmatprep.subr.bf16.mxu0 0
        %1747 = vmatpush1.bf16.msra.mxu0 %v1210
        %1748 = vmatprep.subr.bf16.mxu0 0
        %1749 = vmatpush1.bf16.msra.mxu0 %v1213
        %1750 = vmatprep.subr.bf16.mxu0 0
        %1751 = vmatpush1.bf16.msra.mxu0 %v1216
        %1752 = vmatprep.subr.bf16.mxu0 0
        %1753 = vmatpush1.bf16.msra.mxu0 %v1219
        %1754 = vmatprep.subr.bf16.mxu0 0
        %1755 = vmatpush1.bf16.msra.mxu0 %v1222
        %1756 = vmatprep.subr.bf16.mxu0 0
        %1757 = vmatpush1.bf16.msra.mxu0 %v1225
        %1758 = vmatprep.subr.bf16.mxu0 0
        %1759 = vmatpush1.bf16.msra.mxu0 %v1228
        %1760 = vmatprep.subr.bf16.mxu0 0
        %1761 = vmatpush1.bf16.msra.mxu0 %v1231
        %1762 = vmatprep.subr.bf16.mxu0 0
        %1763 = vmatpush1.bf16.msra.mxu0 %v1234
        %1764 = vmatprep.subr.bf16.mxu0 0
        %1765 = vmatpush1.bf16.msra.mxu0 %v1237
        %1766 = vmatprep.subr.bf16.mxu0 0
        %1767 = vmatpush1.bf16.msra.mxu0 %v1240
        %1768 = vmatprep.subr.bf16.mxu0 0
        %1769 = vmatpush1.bf16.msra.mxu0 %v1243
        %1770 = vmatprep.subr.bf16.mxu0 0
        %1771 = vmatpush1.bf16.msra.mxu0 %v1246
        %1772 = vmatprep.subr.bf16.mxu0 0
        %1773 = vmatpush1.bf16.msra.mxu0 %v1249
        %1774 = vmatprep.mubr.bf16.mxu0 %v615
        %1775 = vmatmul.mubr.bf16.gmra.mrb[0].mxu0 %v614
        %v1776 = vpop.f32.mrb[0].mxu0
        %v1777 = vadd.f32 0.0, %v1776
        %v1778 = vpop.f32.mrb[0].mxu0
        %v1779 = vpop.f32.mrb[0].mxu0
        %v1780 = vadd.f32 0.0, %v1779
        %v1781 = vpop.f32.mrb[0].mxu0
        %1782 = vmatprep.mubr.bf16.mxu0 %v622
        %1783 = vmatmul.mubr.bf16.gmra.mrb[0].mxu0 %v621
        %v1784 = vpop.f32.mrb[0].mxu0
        %v1785 = vadd.f32 0.0, %v1784
        %v1786 = vpop.f32.mrb[0].mxu0
        %v1787 = vpop.f32.mrb[0].mxu0
        %v1788 = vpop.f32.mrb[0].mxu0
        %1789 = vdwg.mxu0
        %1790 = vmatprep.subr.bf16.mxu0 0
        %1791 = vmatpush1.bf16.msra.mxu0 %v1252
        %1792 = vmatprep.subr.bf16.mxu0 0
        %1793 = vmatpush1.bf16.msra.mxu0 %v1255
        %1794 = vmatprep.subr.bf16.mxu0 0
        %1795 = vmatpush1.bf16.msra.mxu0 %v1258
        %1796 = vmatprep.subr.bf16.mxu0 0
        %1797 = vmatpush1.bf16.msra.mxu0 %v1261
        %1798 = vmatprep.subr.bf16.mxu0 0
        %1799 = vmatpush1.bf16.msra.mxu0 %v1264
        %1800 = vmatprep.subr.bf16.mxu0 0
        %1801 = vmatpush1.bf16.msra.mxu0 %v1267
        %1802 = vmatprep.subr.bf16.mxu0 0
        %1803 = vmatpush1.bf16.msra.mxu0 %v1270
        %1804 = vmatprep.subr.bf16.mxu0 0
        %1805 = vmatpush1.bf16.msra.mxu0 %v1273
        %1806 = vmatprep.subr.bf16.mxu0 0
        %1807 = vmatpush1.bf16.msra.mxu0 %v1276
        %1808 = vmatprep.subr.bf16.mxu0 0
        %1809 = vmatpush1.bf16.msra.mxu0 %v1279
        %1810 = vmatprep.subr.bf16.mxu0 0
        %1811 = vmatpush1.bf16.msra.mxu0 %v1282
        %1812 = vmatprep.subr.bf16.mxu0 0
        %1813 = vmatpush1.bf16.msra.mxu0 %v1285
        %1814 = vmatprep.subr.bf16.mxu0 0
        %1815 = vmatpush1.bf16.msra.mxu0 %v1288
        %1816 = vmatprep.subr.bf16.mxu0 0
        %1817 = vmatpush1.bf16.msra.mxu0 %v1291
        %1818 = vmatprep.subr.bf16.mxu0 0
        %1819 = vmatpush1.bf16.msra.mxu0 %v1294
        %1820 = vmatprep.subr.bf16.mxu0 0
        %1821 = vmatpush1.bf16.msra.mxu0 %v1297
        %1822 = vmatprep.mubr.bf16.mxu0 %v617
        %1823 = vmatmul.mubr.bf16.gmra.mrb[0].mxu0 %v616
        %v1824 = vpop.f32.mrb[0].mxu0
        %v1825 = vadd.f32 %v1777, %v1824
        %v1826 = vpop.f32.mrb[0].mxu0
        %v1827 = vpop.f32.mrb[0].mxu0
        %v1828 = vadd.f32 %v1780, %v1827
        %v1829 = vpop.f32.mrb[0].mxu0
        %1830 = vmatprep.mubr.bf16.mxu0 %v624
        %1831 = vmatmul.mubr.bf16.gmra.mrb[0].mxu0 %v623
        %v1832 = vpop.f32.mrb[0].mxu0
        %v1833 = vadd.f32 %v1785, %v1832
        %v1834 = vpop.f32.mrb[0].mxu0
        %v1835 = vpop.f32.mrb[0].mxu0
        %v1836 = vpop.f32.mrb[0].mxu0
        %1837 = vdwg.mxu0
        %1838 = vmatprep.subr.bf16.mxu0 0
        %1839 = vmatpush1.bf16.msra.mxu0 %v1300
        %1840 = vmatprep.subr.bf16.mxu0 0
        %1841 = vmatpush1.bf16.msra.mxu0 %v1303
        %1842 = vmatprep.subr.bf16.mxu0 0
        %1843 = vmatpush1.bf16.msra.mxu0 %v1306
        %1844 = vmatprep.subr.bf16.mxu0 0
        %1845 = vmatpush1.bf16.msra.mxu0 %v1309
        %1846 = vmatprep.subr.bf16.mxu0 0
        %1847 = vmatpush1.bf16.msra.mxu0 %v1312
        %1848 = vmatprep.subr.bf16.mxu0 0
        %1849 = vmatpush1.bf16.msra.mxu0 %v1315
        %1850 = vmatprep.subr.bf16.mxu0 0
        %1851 = vmatpush1.bf16.msra.mxu0 %v1318
        %1852 = vmatprep.subr.bf16.mxu0 0
        %1853 = vmatpush1.bf16.msra.mxu0 %v1321
        %1854 = vmatprep.subr.bf16.mxu0 0
        %1855 = vmatpush1.bf16.msra.mxu0 %v1324
        %1856 = vmatprep.subr.bf16.mxu0 0
        %1857 = vmatpush1.bf16.msra.mxu0 %v1327
        %1858 = vmatprep.subr.bf16.mxu0 0
        %1859 = vmatpush1.bf16.msra.mxu0 %v1330
        %1860 = vmatprep.subr.bf16.mxu0 0
        %1861 = vmatpush1.bf16.msra.mxu0 %v1333
        %1862 = vmatprep.subr.bf16.mxu0 0
        %1863 = vmatpush1.bf16.msra.mxu0 %v1336
        %1864 = vmatprep.subr.bf16.mxu0 0
        %1865 = vmatpush1.bf16.msra.mxu0 %v1339
        %1866 = vmatprep.subr.bf16.mxu0 0
        %1867 = vmatpush1.bf16.msra.mxu0 %v1342
        %1868 = vmatprep.subr.bf16.mxu0 0
        %1869 = vmatpush1.bf16.msra.mxu0 %v1345
        %1870 = vmatprep.mubr.bf16.mxu0 %v619
        %1871 = vmatmul.mubr.bf16.gmra.mrb[0].mxu0 %v618
        %v1872 = vpop.f32.mrb[0].mxu0
        %v1873 = vadd.f32 %v1825, %v1872
        %v1874 = vpop.f32.mrb[0].mxu0
        %v1875 = vpop.f32.mrb[0].mxu0
        %v1876 = vadd.f32 %v1828, %v1875
        %v1877 = vpop.f32.mrb[0].mxu0
        %1878 = vmatprep.mubr.bf16.mxu0 %v626
        %1879 = vmatmul.mubr.bf16.gmra.mrb[0].mxu0 %v625
        %v1880 = vpop.f32.mrb[0].mxu0
        %v1881 = vadd.f32 %v1833, %v1880
        %v1882 = vpop.f32.mrb[0].mxu0
        %v1883 = vpop.f32.mrb[0].mxu0
        %v1884 = vpop.f32.mrb[0].mxu0
        %1885 = vdwg.mxu0
        %1886 = vmatprep.subr.bf16.mxu0 0
        %1887 = vmatpush1.bf16.msra.mxu0 %v1348
        %1888 = vmatprep.subr.bf16.mxu0 0
        %1889 = vmatpush1.bf16.msra.mxu0 %v1351
        %1890 = vmatprep.subr.bf16.mxu0 0
        %1891 = vmatpush1.bf16.msra.mxu0 %v1354
        %1892 = vmatprep.subr.bf16.mxu0 0
        %1893 = vmatpush1.bf16.msra.mxu0 %v1357
        %1894 = vmatprep.subr.bf16.mxu0 0
        %1895 = vmatpush1.bf16.msra.mxu0 %v1360
        %1896 = vmatprep.subr.bf16.mxu0 0
        %1897 = vmatpush1.bf16.msra.mxu0 %v1363
        %1898 = vmatprep.subr.bf16.mxu0 0
        %1899 = vmatpush1.bf16.msra.mxu0 %v1366
        %1900 = vmatprep.subr.bf16.mxu0 0
        %1901 = vmatpush1.bf16.msra.mxu0 %v1369
        %1902 = vmatprep.subr.bf16.mxu0 0
        %1903 = vmatpush1.bf16.msra.mxu0 0
        %1904 = vmatprep.subr.bf16.mxu0 0
        %1905 = vmatpush1.bf16.msra.mxu0 0
        %1906 = vmatprep.subr.bf16.mxu0 0
        %1907 = vmatpush1.bf16.msra.mxu0 0
        %1908 = vmatprep.subr.bf16.mxu0 0
        %1909 = vmatpush1.bf16.msra.mxu0 0
        %1910 = vmatprep.subr.bf16.mxu0 0
        %1911 = vmatpush1.bf16.msra.mxu0 0
        %1912 = vmatprep.subr.bf16.mxu0 0
        %1913 = vmatpush1.bf16.msra.mxu0 0
        %1914 = vmatprep.subr.bf16.mxu0 0
        %1915 = vmatpush1.bf16.msra.mxu0 0
        %1916 = vmatprep.subr.bf16.mxu0 0
        %1917 = vmatpush1.bf16.msra.mxu0 0
        %1918 = vmatprep.mubr.bf16.mxu0 0
        %1919 = vmatmul.mubr.bf16.gmra.mrb[0].mxu0 %v620
        %v1920 = vpop.f32.mrb[0].mxu0
        %v1921 = vadd.f32 %v1873, %v1920
        %v1922 = vpop.f32.mrb[0].mxu0
        %v1923 = vpop.f32.mrb[0].mxu0
        %v1924 = vadd.f32 %v1876, %v1923
        %v1925 = vpop.f32.mrb[0].mxu0
        %1926 = vmatprep.mubr.bf16.mxu0 0
        %1927 = vmatmul.mubr.bf16.gmra.mrb[0].mxu0 %v627
        %v1928 = vpop.f32.mrb[0].mxu0
        %v1929 = vadd.f32 %v1881, %v1928
        %v1930 = vpop.f32.mrb[0].mxu0
        %v1931 = vpop.f32.mrb[0].mxu0
        %v1932 = vpop.f32.mrb[0].mxu0
        %1933 = vdwg.mxu0
        %v1934 = vadd.f32 %v336, %v1726
        %v1935 = vadd.f32 %v337, %v1728
        %v1936 = vadd.f32 %v338, %v1921
        %v1937 = vadd.f32 %v339, %v1730
        %v1938 = vadd.f32 %v340, %v1732
        %v1939 = vadd.f32 %v341, %v1924
        %v1940 = vadd.f32 %v342, %v1736
        %v1941 = vadd.f32 %v343, %v1738
        %v1942 = vadd.f32 %v344, %v1929
        %1943 = vst [vmem:[#allocation2] sm:$0xff] %v1934
        %1944 = vst [vmem:[#allocation2 + $0x8] sm:$0xff] %v1935
        %1945 = vst [vmem:[#allocation2 + $0x10] sm:$0xff] %v1936
        %1946 = vst [vmem:[#allocation2 + $0x18] sm:$0xff] %v1937
        %1947 = vst [vmem:[#allocation2 + $0x20] sm:$0xff] %v1938
        %1948 = vst [vmem:[#allocation2 + $0x28] sm:$0xff] %v1939
        %1949 = vst [vmem:[#allocation2 + $0x30] sm:$0xff] %v1940
        %1950 = vst [vmem:[#allocation2 + $0x38] sm:$0xff] %v1941
        %1951 = vst [vmem:[#allocation2 + $0x40] sm:$0xff] %v1942
        %p1952 = scmp.eq.s32.totalorder %s21, 1
        // Predicated region
        $region63: #{alexnet_forward.13} parent=53 // pred_check
          %p1953 = pneg %p1952
        $region64: #{alexnet_forward.13} parent=53 // pred_check_branch
          %1955 = sbr.rel (%p1953) target = $region66
        $region65: #{alexnet_forward.13} parent=53 // pred_region
          %v1956 = vld [vmem:[#allocation2] sm:$0xff]
          %v1957 = vld [vmem:[#allocation2 + $0x8] sm:$0xff]
          %v1958 = vld [vmem:[#allocation2 + $0x10] sm:$0xff]
          %v1959 = vld [vmem:[#allocation2 + $0x18] sm:$0xff]
          %v1960 = vld [vmem:[#allocation2 + $0x20] sm:$0xff]
          %v1961 = vld [vmem:[#allocation2 + $0x28] sm:$0xff]
          %v1962 = vld [vmem:[#allocation2 + $0x30] sm:$0xff]
          %v1963 = vld [vmem:[#allocation2 + $0x38] sm:$0xff]
          %v1964 = vld [vmem:[#allocation2 + $0x40] sm:$0xff]
          %v1965 = vld [vmem:[%s308] sm:$0x7]
          %v1967 = vlaneseq
          %v1968 = vshrl.u32 %v1967, 7
          %v1969 = vsub.s32 0, %v1968
          %v1970 = vrot.slane %v1965, %v1969
          %v1971 = vlaneseq
          %v1972 = vshrl.u32 %v1971, 7
          %v1973 = vsub.s32 1, %v1972
          %v1974 = vrot.slane %v1965, %v1973
          %v1975 = vlaneseq
          %v1976 = vshrl.u32 %v1975, 7
          %v1977 = vsub.s32 2, %v1976
          %v1978 = vrot.slane %v1965, %v1977
          %v1982 = vadd.f32 %v1956, %v1970
          %v1983 = vadd.f32 %v1957, %v1974
          %v1984 = vadd.f32 %v1958, %v1978
          %v1985 = vadd.f32 %v1959, %v1970
          %v1986 = vadd.f32 %v1960, %v1974
          %v1987 = vadd.f32 %v1961, %v1978
          %v1988 = vadd.f32 %v1962, %v1970
          %v1989 = vadd.f32 %v1963, %v1974
          %v1990 = vadd.f32 %v1964, %v1978
          %v1991 = vmax.f32 %v1982, 0.0
          %v1992 = vmax.f32 %v1983, 0.0
          %v1993 = vmax.f32 %v1984, 0.0
          %v1994 = vmax.f32 %v1985, 0.0
          %v1995 = vmax.f32 %v1986, 0.0
          %v1996 = vmax.f32 %v1987, 0.0
          %v1997 = vmax.f32 %v1988, 0.0
          %v1998 = vmax.f32 %v1989, 0.0
          %v1999 = vmax.f32 %v1990, 0.0
          %2000 = vst [vmem:[%s319] sm:$0xff] %v1991
          %2001 = vst [vmem:[%s319 + $0x8] sm:$0xff] %v1992
          %2002 = vst [vmem:[%s319 + $0x10] sm:$0xff] %v1993
          %2003 = vst [vmem:[%s319 + $0x18] sm:$0xff] %v1994
          %2004 = vst [vmem:[%s319 + $0x20] sm:$0xff] %v1995
          %2005 = vst [vmem:[%s319 + $0x28] sm:$0xff] %v1996
          %2006 = vst [vmem:[%s319 + $0x30] sm:$0xff] %v1997
          %2007 = vst [vmem:[%s319 + $0x38] sm:$0xff] %v1998
          %2008 = vst [vmem:[%s319 + $0x40] sm:$0xff] %v1999
        $region66: #{alexnet_forward.13} parent=53 // pred_fallthru
          _
        %s2009 = smul.u32 3, %s19
        %s2010 = smul.u32 3, %s20
        %p2011 = scmp.lt.s32.totalorder %s2009, 2
        %s2012 = scalar_select %p2011, %s2009, 2
        %p2013 = scmp.lt.s32.totalorder %s2010, 2
        %s2014 = scalar_select %p2013, %s2010, 2
        %s2015 = smul.addr %s2012, 3
        %s2016 = sadd.s32 %s2014, %s2015
        %s2017 = smul.addr %s2016, 8
        %s2018 = scalar_lea.vmem %s3, %s2017
        // Predicated region
        $region67: #{alexnet_forward.13} parent=53 // pred_check
          %p2019 = pneg %p135
        $region68: #{alexnet_forward.13} parent=53 // pred_check_branch
          %2021 = sbr.rel (%p2019) target = $region70
        $region69: #{alexnet_forward.13} parent=53 // pred_region
          %s2022 = smul.u32 3, %s19
          %s2023 = smul.u32 3, %s20
        $region70: #{alexnet_forward.13} parent=53 // pred_fallthru
          _
        // Predicated region
        $region71: #{alexnet_forward.13} parent=53 // pred_check
          %p2024 = pneg %p135
        $region72: #{alexnet_forward.13} parent=53 // pred_check_branch
          %2026 = sbr.rel (%p2024) target = $region74
        $region73: #{alexnet_forward.13} parent=53 // pred_region
          %s2027 = smul.u32 3, %s19
          %s2028 = smul.u32 3, %s20
          %p2029 = scmp.lt.s32.totalorder %s2027, 2
          %s2030 = scalar_select %p2029, %s2027, 2
          %p2031 = scmp.lt.s32.totalorder %s2028, 2
          %s2032 = scalar_select %p2031, %s2028, 2
          %s2033 = smul.addr %s2030, 3
          %s2034 = sadd.s32 %s2032, %s2033
          %s2035 = smul.addr %s2034, 8
          %s2036 = scalar_lea.vmem %s3, %s2035
        $region74: #{alexnet_forward.13} parent=53 // pred_fallthru
          _
      $region54: #{alexnet_forward.13} parent=5 // pred_fallthru
        _
      %p2037 = scmp.le.s32.totalorder 2, %s9
      // Predicated region
      $region75: #{alexnet_forward.13} parent=5 // pred_check
        %p2038 = pneg %p2037
      $region76: #{alexnet_forward.13} parent=5 // pred_check_branch
        %2040 = sbr.rel (%p2038) target = $region78
      $region77: #{alexnet_forward.13} parent=5 // pred_region
        %s2041 = ssub.s32 %s9, 2
      $region78: #{alexnet_forward.13} parent=5 // pred_fallthru
        _
    $region6: #{alexnet_forward.13} parent=1 // loop_footer
      %s13 = sadd.s32 1, %s9
    $region7: #{alexnet_forward.13} parent=1 // loop_footer_branch
      %8 = sbr.rel target = $region3
    $region8: #{alexnet_forward.13} parent=1 // loop_exit
      _

// kernel: alexnet_forward.14
$region0: #{alexnet_forward.14}
  #allocation0 [shape = 'u32[]', space=smem, size = 0x4, offset = 0x4, fixed_abs, tag = 'smem constant byte address 0x4 - core index']
  #allocation1 [shape = 'u32[144,128]{1,0:T(1,128)}', space=vmem, size = 0x12000, scoped, tag = 'internal scratch']
  #allocation2 [shape = 'f32[24,256]{1,0:T(8,128)}', space=vmem, size = 0x6000, scoped, tag = 'scratch operand']
  %s0 = inlined_call_operand.vmem [shape: bf16[24,3584], index: 0, kind: input, shape index: {}]
  %s1 = inlined_call_operand.vmem [shape: bf16[3584,256], index: 1, kind: input, shape index: {}]
  %s2 = inlined_call_operand.vmem [shape: f32[1,256], index: 2, kind: input, shape index: {}]
  %s3 = inlined_call_operand.vmem [shape: f32[24,256], index: 3, kind: output, shape index: {}]
  %s4 = sld [smem:[#allocation0]]
  $region79: #{alexnet_forward.14} parent=0
    _
  %s6 = ssub.s32 1, %s4
  %s7 = scalar_select 0, %s6, %s4
  $region1: #{alexnet_forward.14} parent=0
    #allocation3 [shape = 'u8[86016]{0}', space=vmem, size = 0x15000, scoped, tag = 'input window, operand 0']
    loop: start=0, step=1, limit=6
    $region2: #{alexnet_forward.14} parent=1 // loop_pre_header
      _
    $region3: #{alexnet_forward.14} parent=1 // loop_header
      %s9 = sphi 0, %s13
      %p10 = scmp.ge.s32.totalorder %s9, 6
      %s16 = sphi 0, %s35
      %s17 = sphi 0, %s31
      %s18 = sphi 0, %s27
      %s19 = sphi 0, %s16
      %s20 = sphi 0, %s17
      %s21 = sphi 0, %s18
      %s22 = sphi 0, %s19
      %s23 = sphi 0, %s20
      %s24 = sphi 0, %s21
      %s40 = sphi 0, %s42
      %s43 = sphi 0, %s40
      %s44 = sphi 0, %s43
      %s60 = sphi 0, %s44
      %s68 = sphi 0, %s70
      %s71 = sphi 0, %s68
      %s72 = sphi 0, %s71
      %s88 = sphi 0, %s72
      %s94 = sphi 0, %s96
      %s97 = sphi 0, %s94
      %s98 = sphi 0, %s97
      %s114 = sphi 0, %s98
      %s122 = sphi 0, %s124
      %s125 = sphi 0, %s122
      %s126 = sphi 0, %s125
      %s142 = sphi 0, %s126
    $region4: #{alexnet_forward.14} parent=1 // loop_header_branch
      %12 = sbr.rel (%p10) target = $region8
    $region5: #{alexnet_forward.14} parent=1 // loop_body
      %s14 = ssub.s32 %s9, 1
      %s15 = ssub.s32 %s9, 2
      %s25 = sadd.s32 1, %s18
      %p26 = scmp.ge.s32.totalorder %s25, 4
      %s27 = scalar_select %p26, 0, %s25
      %s28 = sadd.s32 1, %s17
      %s29 = scalar_select %p26, %s28, %s17
      %p30 = scmp.ge.s32.totalorder %s29, 1
      %s31 = scalar_select %p30, 0, %s29
      %s32 = sadd.s32 1, %s16
      %s33 = scalar_select %p30, %s32, %s16
      %p34 = scmp.ge.s32.totalorder %s33, 1
      %s35 = scalar_select %p34, 0, %s33
      %s36 = ssub.s32 %s16, %s35
      %s37 = ssub.s32 %s18, %s27
      %s38 = sor.u32 %s36, %s37
      %p39 = scmp.eq.s32.totalorder %s38, 0
      %s41 = sadd.s32 %s40, 1
      %s42 = scalar_select %p39, %s40, %s41
      %p45 = pneg %p39
      %p46 = scmp.eq.s32.totalorder %s9, 3
      %p47 = por %p45, %p46
      %p48 = scmp.ne.s32.totalorder %s40, %s43
      %p49 = scmp.eq.s32.totalorder %s9, 0
      %p50 = por %p48, %p49
      %p51 = scmp.ne.s32.totalorder %s40, %s43
      %p52 = scmp.eq.s32.totalorder %s14, 3
      %p53 = por %p51, %p52
      %p54 = scmp.ne.s32.totalorder %s43, %s44
      %p55 = scmp.eq.s32.totalorder %s14, 0
      %p56 = por %p54, %p55
      %p57 = scmp.ne.s32.totalorder %s43, %s44
      %p58 = scmp.eq.s32.totalorder %s15, 3
      %p59 = por %p57, %p58
      %p61 = scmp.ne.s32.totalorder %s44, %s60
      %p62 = scmp.eq.s32.totalorder %s15, 0
      %p63 = por %p61, %p62
      %s64 = ssub.s32 %s18, %s27
      %s65 = ssub.s32 %s17, %s31
      %s66 = sor.u32 %s64, %s65
      %p67 = scmp.eq.s32.totalorder %s66, 0
      %s69 = sadd.s32 %s68, 1
      %s70 = scalar_select %p67, %s68, %s69
      %p73 = pneg %p67
      %p74 = scmp.eq.s32.totalorder %s9, 3
      %p75 = por %p73, %p74
      %p76 = scmp.ne.s32.totalorder %s68, %s71
      %p77 = scmp.eq.s32.totalorder %s9, 0
      %p78 = por %p76, %p77
      %p79 = scmp.ne.s32.totalorder %s68, %s71
      %p80 = scmp.eq.s32.totalorder %s14, 3
      %p81 = por %p79, %p80
      %p82 = scmp.ne.s32.totalorder %s71, %s72
      %p83 = scmp.eq.s32.totalorder %s14, 0
      %p84 = por %p82, %p83
      %p85 = scmp.ne.s32.totalorder %s71, %s72
      %p86 = scmp.eq.s32.totalorder %s15, 3
      %p87 = por %p85, %p86
      %p89 = scmp.ne.s32.totalorder %s72, %s88
      %p90 = scmp.eq.s32.totalorder %s15, 0
      %p91 = por %p89, %p90
      %s92 = ssub.s32 %s17, %s31
      %p93 = scmp.eq.s32.totalorder %s92, 0
      %s95 = sadd.s32 %s94, 1
      %s96 = scalar_select %p93, %s94, %s95
      %p99 = pneg %p93
      %p100 = scmp.eq.s32.totalorder %s9, 3
      %p101 = por %p99, %p100
      %p102 = scmp.ne.s32.totalorder %s94, %s97
      %p103 = scmp.eq.s32.totalorder %s9, 0
      %p104 = por %p102, %p103
      %p105 = scmp.ne.s32.totalorder %s94, %s97
      %p106 = scmp.eq.s32.totalorder %s14, 3
      %p107 = por %p105, %p106
      %p108 = scmp.ne.s32.totalorder %s97, %s98
      %p109 = scmp.eq.s32.totalorder %s14, 0
      %p110 = por %p108, %p109
      %p111 = scmp.ne.s32.totalorder %s97, %s98
      %p112 = scmp.eq.s32.totalorder %s15, 3
      %p113 = por %p111, %p112
      %p115 = scmp.ne.s32.totalorder %s98, %s114
      %p116 = scmp.eq.s32.totalorder %s15, 0
      %p117 = por %p115, %p116
      %s118 = ssub.s32 %s16, %s35
      %s119 = ssub.s32 %s17, %s31
      %s120 = sor.u32 %s118, %s119
      %p121 = scmp.eq.s32.totalorder %s120, 0
      %s123 = sadd.s32 %s122, 1
      %s124 = scalar_select %p121, %s122, %s123
      %p127 = pneg %p121
      %p128 = scmp.eq.s32.totalorder %s9, 3
      %p129 = por %p127, %p128
      %p130 = scmp.ne.s32.totalorder %s122, %s125
      %p131 = scmp.eq.s32.totalorder %s9, 0
      %p132 = por %p130, %p131
      %p133 = scmp.ne.s32.totalorder %s122, %s125
      %p134 = scmp.eq.s32.totalorder %s14, 3
      %p135 = por %p133, %p134
      %p136 = scmp.ne.s32.totalorder %s125, %s126
      %p137 = scmp.eq.s32.totalorder %s14, 0
      %p138 = por %p136, %p137
      %p139 = scmp.ne.s32.totalorder %s125, %s126
      %p140 = scmp.eq.s32.totalorder %s15, 3
      %p141 = por %p139, %p140
      %p143 = scmp.ne.s32.totalorder %s126, %s142
      %p144 = scmp.eq.s32.totalorder %s15, 0
      %p145 = por %p143, %p144
      %p146 = scmp.le.s32.totalorder 1, %s9
      %p147 = scmp.lt.s32.totalorder %s9, 5
      %p148 = pnand %p146, %p147
      %p149 = pneg %p148
      // Predicated region
      $region9: #{alexnet_forward.14} parent=5 // pred_check
        _
      $region10: #{alexnet_forward.14} parent=5 // pred_check_branch
        %151 = sbr.rel (%p148) target = $region12
      $region11: #{alexnet_forward.14} parent=5 // pred_region
        %s152 = ssub.s32 %s9, 1
        // Predicated region
        $region13: #{alexnet_forward.14} parent=11 // pred_check
          %p153 = pneg %p110
        $region14: #{alexnet_forward.14} parent=11 // pred_check_branch
          %155 = sbr.rel (%p153) target = $region16
        $region15: #{alexnet_forward.14} parent=11 // pred_region
          %s156 = smul.u32 2, %s20
          %p157 = scmp.lt.s32.totalorder %s156, 1
          %s158 = scalar_select %p157, %s156, 1
          %s159 = scalar_lea.vmem %s2, %s158
          %s160 = smul.u32 2, %s20
        $region16: #{alexnet_forward.14} parent=11 // pred_fallthru
          _
      $region12: #{alexnet_forward.14} parent=5 // pred_fallthru
        _
      %p161 = scmp.lt.s32.totalorder %s9, 4
      // Predicated region
      $region17: #{alexnet_forward.14} parent=5 // pred_check
        %p162 = pneg %p161
      $region18: #{alexnet_forward.14} parent=5 // pred_check_branch
        %164 = sbr.rel (%p162) target = $region20
      $region19: #{alexnet_forward.14} parent=5 // pred_region
        // Predicated region
        $region21: #{alexnet_forward.14} parent=19 // pred_check
          %p165 = pneg %p50
        $region22: #{alexnet_forward.14} parent=19 // pred_check_branch
          %167 = sbr.rel (%p165) target = $region24
        $region23: #{alexnet_forward.14} parent=19 // pred_region
          %s168 = sand.u32 %s40, 1
          %s169 = sand.u32 %s40, 1
          %s170 = smul.addr %s169, 84
          %s171 = scalar_lea.vmem [#allocation3], %s170
          %s172 = smul.u32 3, %s16
          %s173 = smul.u32 7, %s18
          %s174 = smul.addr %s172, 28
          %s175 = sadd.s32 %s173, %s174
          %s176 = smul.addr %s175, 4
          %s177 = scalar_lea.vmem %s0, %s176
          // Predicated region
          $region25: #{alexnet_forward.14} parent=23 // pred_check
            _
          $region26: #{alexnet_forward.14} parent=23 // pred_check_branch
            %179 = sbr.rel (0) target = $region28
          $region27: #{alexnet_forward.14} parent=23 // pred_region
            // Predicated region
            $region29: #{alexnet_forward.14} parent=27 // pred_check
              _
            $region30: #{alexnet_forward.14} parent=27 // pred_check_branch
              %181 = sbr.rel (0) target = $region32
            $region31: #{alexnet_forward.14} parent=27 // pred_region
              %s182 = scalar_lea.vmem %s177, 24
              %s183 = scalar_lea.vmem %s171, 24 [#allocation3]
              loop: start=0, step=1, limit=1
              $region33: #{alexnet_forward.14} parent=31 // loop_pre_header
                _
              $region34: #{alexnet_forward.14} parent=31 // loop_header
                %s185 = sphi 0, %s189
                %p186 = scmp.ge.s32.totalorder %s185, 1
                %s190 = sphi %s177, %s177
                %s191 = sphi %s171, %s171
              $region35: #{alexnet_forward.14} parent=31 // loop_header_branch
                %188 = sbr.rel (%p186) target = $region39
              $region36: #{alexnet_forward.14} parent=31 // loop_body
                %v192 = vld [vmem:[%s190] sm:$0xff]
                %193 = vst [vmem:[%s191] sm:$0xff] %v192
                %v194 = vld [vmem:[%s190 + $0x8] sm:$0xff]
                %195 = vst [vmem:[%s191 + $0x8] sm:$0xff] %v194
                %v196 = vld [vmem:[%s190 + $0x10] sm:$0xff]
                %197 = vst [vmem:[%s191 + $0x10] sm:$0xff] %v196
                %v198 = vld [vmem:[%s190 + $0x70] sm:$0xff]
                %199 = vst [vmem:[%s191 + $0x1c] sm:$0xff] %v198
                %v200 = vld [vmem:[%s190 + $0x78] sm:$0xff]
                %201 = vst [vmem:[%s191 + $0x24] sm:$0xff] %v200
                %v202 = vld [vmem:[%s190 + $0x80] sm:$0xff]
                %203 = vst [vmem:[%s191 + $0x2c] sm:$0xff] %v202
                %v204 = vld [vmem:[%s190 + $0xe0] sm:$0xff]
                %205 = vst [vmem:[%s191 + $0x38] sm:$0xff] %v204
                %v206 = vld [vmem:[%s190 + $0xe8] sm:$0xff]
                %207 = vst [vmem:[%s191 + $0x40] sm:$0xff] %v206
                %v208 = vld [vmem:[%s190 + $0xf0] sm:$0xff]
                %209 = vst [vmem:[%s191 + $0x48] sm:$0xff] %v208
              $region37: #{alexnet_forward.14} parent=31 // loop_footer
                %s189 = sadd.s32 1, %s185
              $region38: #{alexnet_forward.14} parent=31 // loop_footer_branch
                %184 = sbr.rel target = $region34
              $region39: #{alexnet_forward.14} parent=31 // loop_exit
                _
              loop: start=0, step=1, limit=1
              $region40: #{alexnet_forward.14} parent=31 // loop_pre_header
                _
              $region41: #{alexnet_forward.14} parent=31 // loop_header
                %s212 = sphi 0, %s216
                %p213 = scmp.ge.s32.totalorder %s212, 1
                %s217 = sphi %s182, %s182
                %s218 = sphi %s183, %s183
              $region42: #{alexnet_forward.14} parent=31 // loop_header_branch
                %215 = sbr.rel (%p213) target = $region46
              $region43: #{alexnet_forward.14} parent=31 // loop_body
                %v219 = vld [vmem:[%s217] sm:$0xf]
                %220 = vst [vmem:[%s218] sm:$0xf] %v219
                %v221 = vld [vmem:[%s217 + $0x70] sm:$0xf]
                %222 = vst [vmem:[%s218 + $0x1c] sm:$0xf] %v221
                %v223 = vld [vmem:[%s217 + $0xe0] sm:$0xf]
                %224 = vst [vmem:[%s218 + $0x38] sm:$0xf] %v223
              $region44: #{alexnet_forward.14} parent=31 // loop_footer
                %s216 = sadd.s32 1, %s212
              $region45: #{alexnet_forward.14} parent=31 // loop_footer_branch
                %211 = sbr.rel target = $region41
              $region46: #{alexnet_forward.14} parent=31 // loop_exit
                _
            $region32: #{alexnet_forward.14} parent=27 // pred_fallthru
              _
          $region28: #{alexnet_forward.14} parent=23 // pred_fallthru
            _
          %225 = vnop
        $region24: #{alexnet_forward.14} parent=19 // pred_fallthru
          _
        // Predicated region
        $region47: #{alexnet_forward.14} parent=19 // pred_check
          %p226 = pneg %p78
        $region48: #{alexnet_forward.14} parent=19 // pred_check_branch
          %228 = sbr.rel (%p226) target = $region50
        $region49: #{alexnet_forward.14} parent=19 // pred_region
          %s229 = smul.u32 112, %s18
          %s230 = smul.u32 2, %s17
          %p231 = scmp.lt.s32.totalorder %s229, 447
          %s232 = scalar_select %p231, %s229, 447
          %p233 = scmp.lt.s32.totalorder %s230, 1
          %s234 = scalar_select %p233, %s230, 1
          %s235 = smul.addr %s232, 2
          %s236 = sadd.s32 %s234, %s235
          %s237 = smul.addr %s236, 4
          %s238 = scalar_lea.vmem %s1, %s237
          %s239 = smul.u32 112, %s18
          %s240 = smul.u32 2, %s17
        $region50: #{alexnet_forward.14} parent=19 // pred_fallthru
          _
      $region20: #{alexnet_forward.14} parent=5 // pred_fallthru
        _
      %p241 = scmp.le.s32.totalorder 1, %s9
      %p242 = scmp.lt.s32.totalorder %s9, 5
      %p243 = pnand %p241, %p242
      %p244 = pneg %p243
      // Predicated region
      $region51: #{alexnet_forward.14} parent=5 // pred_check
        _
      $region52: #{alexnet_forward.14} parent=5 // pred_check_branch
        %246 = sbr.rel (%p243) target = $region54
      $region53: #{alexnet_forward.14} parent=5 // pred_region
        %s247 = ssub.s32 %s9, 1
        %s248 = sand.u32 %s43, 1
        %s249 = sand.u32 %s43, 1
        %s250 = smul.addr %s249, 84
        %s251 = scalar_lea.vmem [#allocation3], %s250
        // Predicated region
        $region55: #{alexnet_forward.14} parent=53 // pred_check
          %p252 = pneg %p56
        $region56: #{alexnet_forward.14} parent=53 // pred_check_branch
          %254 = sbr.rel (%p252) target = $region58
        $region57: #{alexnet_forward.14} parent=53 // pred_region
          _
        $region58: #{alexnet_forward.14} parent=53 // pred_fallthru
          _
        %s255 = sand.u32 %s43, 1
        %s256 = sand.u32 %s43, 1
        %s257 = smul.addr %s256, 84
        %s258 = scalar_lea.vmem [#allocation3], %s257
        %p259 = pneg %p56
        %p260 = pneg %p53
        %s261 = smul.u32 112, %s21
        %s262 = smul.u32 2, %s20
        %p263 = scmp.lt.s32.totalorder %s261, 447
        %s264 = scalar_select %p263, %s261, 447
        %p265 = scmp.lt.s32.totalorder %s262, 1
        %s266 = scalar_select %p265, %s262, 1
        %s267 = smul.addr %s264, 2
        %s268 = sadd.s32 %s266, %s267
        %s269 = smul.addr %s268, 4
        %s270 = scalar_lea.vmem %s1, %s269
        %p271 = pneg %p84
        %p272 = pneg %p81
        %s273 = smul.u32 2, %s20
        %p274 = scmp.lt.s32.totalorder %s273, 1
        %s275 = scalar_select %p274, %s273, 1
        %s276 = scalar_lea.vmem %s2, %s275
        %p277 = pneg %p110
        %p278 = pneg %p107
        %p279 = pneg %p138
        %p280 = pneg %p135
        %s281 = smul.u32 3, %s19
        %s282 = smul.u32 2, %s20
        %p283 = scmp.lt.s32.totalorder %s281, 2
        %s284 = scalar_select %p283, %s281, 2
        %p285 = scmp.lt.s32.totalorder %s282, 1
        %s286 = scalar_select %p285, %s282, 1
        %s287 = smul.addr %s284, 2
        %s288 = sadd.s32 %s286, %s287
        %s289 = smul.addr %s288, 8
        %s290 = scalar_lea.vmem %s3, %s289
        %s291 = smul.u32 3, %s19
        %s292 = smul.u32 7, %s21
        %s293 = smul.u32 112, %s21
        %s294 = smul.u32 2, %s20
        %p295 = scmp.lt.s32.totalorder %s293, 447
        %s296 = scalar_select %p295, %s293, 447
        %p297 = scmp.lt.s32.totalorder %s294, 1
        %s298 = scalar_select %p297, %s294, 1
        %s299 = smul.addr %s296, 2
        %s300 = sadd.s32 %s298, %s299
        %s301 = smul.addr %s300, 4
        %s302 = scalar_lea.vmem %s1, %s301
        %s303 = smul.u32 112, %s21
        %s304 = smul.u32 2, %s20
        %s305 = smul.u32 2, %s20
        %p306 = scmp.lt.s32.totalorder %s305, 1
        %s307 = scalar_select %p306, %s305, 1
        %s308 = scalar_lea.vmem %s2, %s307
        %s309 = smul.u32 2, %s20
        %s310 = smul.u32 3, %s19
        %s311 = smul.u32 2, %s20
        %p312 = scmp.lt.s32.totalorder %s310, 2
        %s313 = scalar_select %p312, %s310, 2
        %p314 = scmp.lt.s32.totalorder %s311, 1
        %s315 = scalar_select %p314, %s311, 1
        %s316 = smul.addr %s313, 2
        %s317 = sadd.s32 %s315, %s316
        %s318 = smul.addr %s317, 8
        %s319 = scalar_lea.vmem %s3, %s318
        %s320 = smul.u32 3, %s19
        %s321 = smul.u32 2, %s20
        %p323 = scmp.eq.s32.totalorder %s21, 0
        // Predicated region
        $region59: #{alexnet_forward.14} parent=53 // pred_check
          %p324 = pneg %p323
        $region60: #{alexnet_forward.14} parent=53 // pred_check_branch
          %326 = sbr.rel (%p324) target = $region62
        $region61: #{alexnet_forward.14} parent=53 // pred_region
          %327 = vst [vmem:[#allocation2] sm:$0xff] 0.0
          %328 = vst [vmem:[#allocation2 + $0x8] sm:$0xff] 0.0
          %329 = vst [vmem:[#allocation2 + $0x10] sm:$0xff] 0.0
          %330 = vst [vmem:[#allocation2 + $0x18] sm:$0xff] 0.0
          %331 = vst [vmem:[#allocation2 + $0x20] sm:$0xff] 0.0
          %332 = vst [vmem:[#allocation2 + $0x28] sm:$0xff] 0.0
        $region62: #{alexnet_forward.14} parent=53 // pred_fallthru
          _
        %v333 = vld [vmem:[#allocation2] sm:$0xff]
        %v334 = vld [vmem:[#allocation2 + $0x8] sm:$0xff]
        %v335 = vld [vmem:[#allocation2 + $0x10] sm:$0xff]
        %v336 = vld [vmem:[#allocation2 + $0x18] sm:$0xff]
        %v337 = vld [vmem:[#allocation2 + $0x20] sm:$0xff]
        %v338 = vld [vmem:[#allocation2 + $0x28] sm:$0xff]
        %v339 = vld [vmem:[%s251] sm:$0xff]
        %v340 = vld [vmem:[%s251 + $0x8] sm:$0xff]
        %v341 = vld [vmem:[%s251 + $0x10] sm:$0xff]
        %v342 = vld [vmem:[%s251 + $0x18] sm:$0xf]
        %v343 = vld [vmem:[%s251 + $0x1c] sm:$0xff]
        %v344 = vld [vmem:[%s251 + $0x24] sm:$0xff]
        %v345 = vld [vmem:[%s251 + $0x2c] sm:$0xff]
        %v346 = vld [vmem:[%s251 + $0x34] sm:$0xf]
        %v347 = vld [vmem:[%s251 + $0x38] sm:$0xff]
        %v348 = vld [vmem:[%s251 + $0x40] sm:$0xff]
        %v349 = vld [vmem:[%s251 + $0x48] sm:$0xff]
        %v350 = vld [vmem:[%s251 + $0x50] sm:$0xf]
        %v351 = vld [vmem:[%s302] sm:$0xff]
        %v352 = vld [vmem:[%s302 + $0x8] sm:$0xff]
        %v353 = vld [vmem:[%s302 + $0x10] sm:$0xff]
        %v354 = vld [vmem:[%s302 + $0x18] sm:$0xff]
        %v355 = vld [vmem:[%s302 + $0x20] sm:$0xff]
        %v356 = vld [vmem:[%s302 + $0x28] sm:$0xff]
        %v357 = vld [vmem:[%s302 + $0x30] sm:$0xff]
        %v358 = vld [vmem:[%s302 + $0x38] sm:$0xff]
        %v359 = vld [vmem:[%s302 + $0x40] sm:$0xff]
        %v360 = vld [vmem:[%s302 + $0x48] sm:$0xff]
        %v361 = vld [vmem:[%s302 + $0x50] sm:$0xff]
        %v362 = vld [vmem:[%s302 + $0x58] sm:$0xff]
        %v363 = vld [vmem:[%s302 + $0x60] sm:$0xff]
        %v364 = vld [vmem:[%s302 + $0x68] sm:$0xff]
        %v365 = vld [vmem:[%s302 + $0x70] sm:$0xff]
        %v366 = vld [vmem:[%s302 + $0x78] sm:$0xff]
        %v367 = vld [vmem:[%s302 + $0x80] sm:$0xff]
        %v368 = vld [vmem:[%s302 + $0x88] sm:$0xff]
        %v369 = vld [vmem:[%s302 + $0x90] sm:$0xff]
        %v370 = vld [vmem:[%s302 + $0x98] sm:$0xff]
        %v371 = vld [vmem:[%s302 + $0xa0] sm:$0xff]
        %v372 = vld [vmem:[%s302 + $0xa8] sm:$0xff]
        %v373 = vld [vmem:[%s302 + $0xb0] sm:$0xff]
        %v374 = vld [vmem:[%s302 + $0xb8] sm:$0xff]
        %v375 = vld [vmem:[%s302 + $0xc0] sm:$0xff]
        %v376 = vld [vmem:[%s302 + $0xc8] sm:$0xff]
        %v377 = vld [vmem:[%s302 + $0xd0] sm:$0xff]
        %v378 = vld [vmem:[%s302 + $0xd8] sm:$0xff]
        %v379 = vld [vmem:[%s302 + $0xe0] sm:$0xff]
        %v380 = vld [vmem:[%s302 + $0xe8] sm:$0xff]
        %v381 = vld [vmem:[%s302 + $0xf0] sm:$0xff]
        %v382 = vld [vmem:[%s302 + $0xf8] sm:$0xff]
        %v383 = vld [vmem:[%s302 + $0x100] sm:$0xff]
        %v384 = vld [vmem:[%s302 + $0x108] sm:$0xff]
        %v385 = vld [vmem:[%s302 + $0x110] sm:$0xff]
        %v386 = vld [vmem:[%s302 + $0x118] sm:$0xff]
        %v387 = vld [vmem:[%s302 + $0x120] sm:$0xff]
        %v388 = vld [vmem:[%s302 + $0x128] sm:$0xff]
        %v389 = vld [vmem:[%s302 + $0x130] sm:$0xff]
        %v390 = vld [vmem:[%s302 + $0x138] sm:$0xff]
        %v391 = vld [vmem:[%s302 + $0x140] sm:$0xff]
        %v392 = vld [vmem:[%s302 + $0x148] sm:$0xff]
        %v393 = vld [vmem:[%s302 + $0x150] sm:$0xff]
        %v394 = vld [vmem:[%s302 + $0x158] sm:$0xff]
        %v395 = vld [vmem:[%s302 + $0x160] sm:$0xff]
        %v396 = vld [vmem:[%s302 + $0x168] sm:$0xff]
        %v397 = vld [vmem:[%s302 + $0x170] sm:$0xff]
        %v398 = vld [vmem:[%s302 + $0x178] sm:$0xff]
        %v399 = vld [vmem:[%s302 + $0x180] sm:$0xff]
        %v400 = vld [vmem:[%s302 + $0x188] sm:$0xff]
        %v401 = vld [vmem:[%s302 + $0x190] sm:$0xff]
        %v402 = vld [vmem:[%s302 + $0x198] sm:$0xff]
        %v403 = vld [vmem:[%s302 + $0x1a0] sm:$0xff]
        %v404 = vld [vmem:[%s302 + $0x1a8] sm:$0xff]
        %v405 = vld [vmem:[%s302 + $0x1b0] sm:$0xff]
        %v406 = vld [vmem:[%s302 + $0x1b8] sm:$0xff]
        %v407 = vld [vmem:[%s302 + $0x1c0] sm:$0xff]
        %v408 = vld [vmem:[%s302 + $0x1c8] sm:$0xff]
        %v409 = vld [vmem:[%s302 + $0x1d0] sm:$0xff]
        %v410 = vld [vmem:[%s302 + $0x1d8] sm:$0xff]
        %v411 = vld [vmem:[%s302 + $0x1e0] sm:$0xff]
        %v412 = vld [vmem:[%s302 + $0x1e8] sm:$0xff]
        %v413 = vld [vmem:[%s302 + $0x1f0] sm:$0xff]
        %v414 = vld [vmem:[%s302 + $0x1f8] sm:$0xff]
        %v415 = vld [vmem:[%s302 + $0x200] sm:$0xff]
        %v416 = vld [vmem:[%s302 + $0x208] sm:$0xff]
        %v417 = vld [vmem:[%s302 + $0x210] sm:$0xff]
        %v418 = vld [vmem:[%s302 + $0x218] sm:$0xff]
        %v419 = vld [vmem:[%s302 + $0x220] sm:$0xff]
        %v420 = vld [vmem:[%s302 + $0x228] sm:$0xff]
        %v421 = vld [vmem:[%s302 + $0x230] sm:$0xff]
        %v422 = vld [vmem:[%s302 + $0x238] sm:$0xff]
        %v423 = vld [vmem:[%s302 + $0x240] sm:$0xff]
        %v424 = vld [vmem:[%s302 + $0x248] sm:$0xff]
        %v425 = vld [vmem:[%s302 + $0x250] sm:$0xff]
        %v426 = vld [vmem:[%s302 + $0x258] sm:$0xff]
        %v427 = vld [vmem:[%s302 + $0x260] sm:$0xff]
        %v428 = vld [vmem:[%s302 + $0x268] sm:$0xff]
        %v429 = vld [vmem:[%s302 + $0x270] sm:$0xff]
        %v430 = vld [vmem:[%s302 + $0x278] sm:$0xff]
        %v431 = vld [vmem:[%s302 + $0x280] sm:$0xff]
        %v432 = vld [vmem:[%s302 + $0x288] sm:$0xff]
        %v433 = vld [vmem:[%s302 + $0x290] sm:$0xff]
        %v434 = vld [vmem:[%s302 + $0x298] sm:$0xff]
        %v435 = vld [vmem:[%s302 + $0x2a0] sm:$0xff]
        %v436 = vld [vmem:[%s302 + $0x2a8] sm:$0xff]
        %v437 = vld [vmem:[%s302 + $0x2b0] sm:$0xff]
        %v438 = vld [vmem:[%s302 + $0x2b8] sm:$0xff]
        %v439 = vld [vmem:[%s302 + $0x2c0] sm:$0xff]
        %v440 = vld [vmem:[%s302 + $0x2c8] sm:$0xff]
        %v441 = vld [vmem:[%s302 + $0x2d0] sm:$0xff]
        %v442 = vld [vmem:[%s302 + $0x2d8] sm:$0xff]
        %v443 = vld [vmem:[%s302 + $0x2e0] sm:$0xff]
        %v444 = vld [vmem:[%s302 + $0x2e8] sm:$0xff]
        %v445 = vld [vmem:[%s302 + $0x2f0] sm:$0xff]
        %v446 = vld [vmem:[%s302 + $0x2f8] sm:$0xff]
        %v447 = vld [vmem:[%s302 + $0x300] sm:$0xff]
        %v448 = vld [vmem:[%s302 + $0x308] sm:$0xff]
        %v449 = vld [vmem:[%s302 + $0x310] sm:$0xff]
        %v450 = vld [vmem:[%s302 + $0x318] sm:$0xff]
        %v451 = vld [vmem:[%s302 + $0x320] sm:$0xff]
        %v452 = vld [vmem:[%s302 + $0x328] sm:$0xff]
        %v453 = vld [vmem:[%s302 + $0x330] sm:$0xff]
        %v454 = vld [vmem:[%s302 + $0x338] sm:$0xff]
        %v455 = vld [vmem:[%s302 + $0x340] sm:$0xff]
        %v456 = vld [vmem:[%s302 + $0x348] sm:$0xff]
        %v457 = vld [vmem:[%s302 + $0x350] sm:$0xff]
        %v458 = vld [vmem:[%s302 + $0x358] sm:$0xff]
        %v459 = vld [vmem:[%s302 + $0x360] sm:$0xff]
        %v460 = vld [vmem:[%s302 + $0x368] sm:$0xff]
        %v461 = vld [vmem:[%s302 + $0x370] sm:$0xff]
        %v462 = vld [vmem:[%s302 + $0x378] sm:$0xff]
        %v475 = vunpack.c.l.b16 %v339
        %v476 = vunpack.c.h.b16 %v339
        %v477 = vunpack.c.l.b16 %v340
        %v478 = vunpack.c.h.b16 %v340
        %v479 = vunpack.c.l.b16 %v341
        %v480 = vunpack.c.h.b16 %v341
        %v481 = vunpack.c.l.b16 %v342
        %v482 = vunpack.c.l.b16 %v343
        %v483 = vunpack.c.h.b16 %v343
        %v484 = vunpack.c.l.b16 %v344
        %v485 = vunpack.c.h.b16 %v344
        %v486 = vunpack.c.l.b16 %v345
        %v487 = vunpack.c.h.b16 %v345
        %v488 = vunpack.c.l.b16 %v346
        %v489 = vunpack.c.l.b16 %v347
        %v490 = vunpack.c.h.b16 %v347
        %v491 = vunpack.c.l.b16 %v348
        %v492 = vunpack.c.h.b16 %v348
        %v493 = vunpack.c.l.b16 %v349
        %v494 = vunpack.c.h.b16 %v349
        %v495 = vunpack.c.l.b16 %v350
        %v496 = vpack.c.b16 %v482, %v475
        %v497 = vpack.c.b16 %v483, %v476
        %v498 = vpack.c.b16 %v484, %v477
        %v499 = vpack.c.b16 %v485, %v478
        %v500 = vpack.c.b16 %v486, %v479
        %v501 = vpack.c.b16 %v487, %v480
        %v502 = vpack.c.b16 %v488, %v481
        %v503 = vpack.c.b16 %v489, %v489
        %v504 = vpack.c.b16 %v490, %v490
        %v505 = vpack.c.b16 %v491, %v491
        %v506 = vpack.c.b16 %v492, %v492
        %v507 = vpack.c.b16 %v493, %v493
        %v508 = vpack.c.b16 %v494, %v494
        %v509 = vpack.c.b16 %v495, %v495
        %v636 = vunpack.c.l.b16 %v351
        %v637 = vunpack.c.h.b16 %v351
        %v638 = vunpack.c.l.b16 %v352
        %v639 = vunpack.c.h.b16 %v352
        %v640 = vunpack.c.l.b16 %v353
        %v641 = vunpack.c.h.b16 %v353
        %v642 = vunpack.c.l.b16 %v354
        %v643 = vunpack.c.h.b16 %v354
        %v644 = vunpack.c.l.b16 %v355
        %v645 = vunpack.c.h.b16 %v355
        %v646 = vunpack.c.l.b16 %v356
        %v647 = vunpack.c.h.b16 %v356
        %v648 = vunpack.c.l.b16 %v357
        %v649 = vunpack.c.h.b16 %v357
        %v650 = vunpack.c.l.b16 %v358
        %v651 = vunpack.c.h.b16 %v358
        %v652 = vunpack.c.l.b16 %v359
        %v653 = vunpack.c.h.b16 %v359
        %v654 = vunpack.c.l.b16 %v360
        %v655 = vunpack.c.h.b16 %v360
        %v656 = vunpack.c.l.b16 %v361
        %v657 = vunpack.c.h.b16 %v361
        %v658 = vunpack.c.l.b16 %v362
        %v659 = vunpack.c.h.b16 %v362
        %v660 = vunpack.c.l.b16 %v363
        %v661 = vunpack.c.h.b16 %v363
        %v662 = vunpack.c.l.b16 %v364
        %v663 = vunpack.c.h.b16 %v364
        %v664 = vunpack.c.l.b16 %v365
        %v665 = vunpack.c.h.b16 %v365
        %v666 = vunpack.c.l.b16 %v366
        %v667 = vunpack.c.h.b16 %v366
        %v668 = vunpack.c.l.b16 %v367
        %v669 = vunpack.c.h.b16 %v367
        %v670 = vunpack.c.l.b16 %v368
        %v671 = vunpack.c.h.b16 %v368
        %v672 = vunpack.c.l.b16 %v369
        %v673 = vunpack.c.h.b16 %v369
        %v674 = vunpack.c.l.b16 %v370
        %v675 = vunpack.c.h.b16 %v370
        %v676 = vunpack.c.l.b16 %v371
        %v677 = vunpack.c.h.b16 %v371
        %v678 = vunpack.c.l.b16 %v372
        %v679 = vunpack.c.h.b16 %v372
        %v680 = vunpack.c.l.b16 %v373
        %v681 = vunpack.c.h.b16 %v373
        %v682 = vunpack.c.l.b16 %v374
        %v683 = vunpack.c.h.b16 %v374
        %v684 = vunpack.c.l.b16 %v375
        %v685 = vunpack.c.h.b16 %v375
        %v686 = vunpack.c.l.b16 %v376
        %v687 = vunpack.c.h.b16 %v376
        %v688 = vunpack.c.l.b16 %v377
        %v689 = vunpack.c.h.b16 %v377
        %v690 = vunpack.c.l.b16 %v378
        %v691 = vunpack.c.h.b16 %v378
        %v692 = vunpack.c.l.b16 %v379
        %v693 = vunpack.c.h.b16 %v379
        %v694 = vunpack.c.l.b16 %v380
        %v695 = vunpack.c.h.b16 %v380
        %v696 = vunpack.c.l.b16 %v381
        %v697 = vunpack.c.h.b16 %v381
        %v698 = vunpack.c.l.b16 %v382
        %v699 = vunpack.c.h.b16 %v382
        %v700 = vunpack.c.l.b16 %v383
        %v701 = vunpack.c.h.b16 %v383
        %v702 = vunpack.c.l.b16 %v384
        %v703 = vunpack.c.h.b16 %v384
        %v704 = vunpack.c.l.b16 %v385
        %v705 = vunpack.c.h.b16 %v385
        %v706 = vunpack.c.l.b16 %v386
        %v707 = vunpack.c.h.b16 %v386
        %v708 = vunpack.c.l.b16 %v387
        %v709 = vunpack.c.h.b16 %v387
        %v710 = vunpack.c.l.b16 %v388
        %v711 = vunpack.c.h.b16 %v388
        %v712 = vunpack.c.l.b16 %v389
        %v713 = vunpack.c.h.b16 %v389
        %v714 = vunpack.c.l.b16 %v390
        %v715 = vunpack.c.h.b16 %v390
        %v716 = vunpack.c.l.b16 %v391
        %v717 = vunpack.c.h.b16 %v391
        %v718 = vunpack.c.l.b16 %v392
        %v719 = vunpack.c.h.b16 %v392
        %v720 = vunpack.c.l.b16 %v393
        %v721 = vunpack.c.h.b16 %v393
        %v722 = vunpack.c.l.b16 %v394
        %v723 = vunpack.c.h.b16 %v394
        %v724 = vunpack.c.l.b16 %v395
        %v725 = vunpack.c.h.b16 %v395
        %v726 = vunpack.c.l.b16 %v396
        %v727 = vunpack.c.h.b16 %v396
        %v728 = vunpack.c.l.b16 %v397
        %v729 = vunpack.c.h.b16 %v397
        %v730 = vunpack.c.l.b16 %v398
        %v731 = vunpack.c.h.b16 %v398
        %v732 = vunpack.c.l.b16 %v399
        %v733 = vunpack.c.h.b16 %v399
        %v734 = vunpack.c.l.b16 %v400
        %v735 = vunpack.c.h.b16 %v400
        %v736 = vunpack.c.l.b16 %v401
        %v737 = vunpack.c.h.b16 %v401
        %v738 = vunpack.c.l.b16 %v402
        %v739 = vunpack.c.h.b16 %v402
        %v740 = vunpack.c.l.b16 %v403
        %v741 = vunpack.c.h.b16 %v403
        %v742 = vunpack.c.l.b16 %v404
        %v743 = vunpack.c.h.b16 %v404
        %v744 = vunpack.c.l.b16 %v405
        %v745 = vunpack.c.h.b16 %v405
        %v746 = vunpack.c.l.b16 %v406
        %v747 = vunpack.c.h.b16 %v406
        %v748 = vunpack.c.l.b16 %v407
        %v749 = vunpack.c.h.b16 %v407
        %v750 = vunpack.c.l.b16 %v408
        %v751 = vunpack.c.h.b16 %v408
        %v752 = vunpack.c.l.b16 %v409
        %v753 = vunpack.c.h.b16 %v409
        %v754 = vunpack.c.l.b16 %v410
        %v755 = vunpack.c.h.b16 %v410
        %v756 = vunpack.c.l.b16 %v411
        %v757 = vunpack.c.h.b16 %v411
        %v758 = vunpack.c.l.b16 %v412
        %v759 = vunpack.c.h.b16 %v412
        %v760 = vunpack.c.l.b16 %v413
        %v761 = vunpack.c.h.b16 %v413
        %v762 = vunpack.c.l.b16 %v414
        %v763 = vunpack.c.h.b16 %v414
        %v764 = vunpack.c.l.b16 %v415
        %v765 = vunpack.c.h.b16 %v415
        %v766 = vunpack.c.l.b16 %v416
        %v767 = vunpack.c.h.b16 %v416
        %v768 = vunpack.c.l.b16 %v417
        %v769 = vunpack.c.h.b16 %v417
        %v770 = vunpack.c.l.b16 %v418
        %v771 = vunpack.c.h.b16 %v418
        %v772 = vunpack.c.l.b16 %v419
        %v773 = vunpack.c.h.b16 %v419
        %v774 = vunpack.c.l.b16 %v420
        %v775 = vunpack.c.h.b16 %v420
        %v776 = vunpack.c.l.b16 %v421
        %v777 = vunpack.c.h.b16 %v421
        %v778 = vunpack.c.l.b16 %v422
        %v779 = vunpack.c.h.b16 %v422
        %v780 = vunpack.c.l.b16 %v423
        %v781 = vunpack.c.h.b16 %v423
        %v782 = vunpack.c.l.b16 %v424
        %v783 = vunpack.c.h.b16 %v424
        %v784 = vunpack.c.l.b16 %v425
        %v785 = vunpack.c.h.b16 %v425
        %v786 = vunpack.c.l.b16 %v426
        %v787 = vunpack.c.h.b16 %v426
        %v788 = vunpack.c.l.b16 %v427
        %v789 = vunpack.c.h.b16 %v427
        %v790 = vunpack.c.l.b16 %v428
        %v791 = vunpack.c.h.b16 %v428
        %v792 = vunpack.c.l.b16 %v429
        %v793 = vunpack.c.h.b16 %v429
        %v794 = vunpack.c.l.b16 %v430
        %v795 = vunpack.c.h.b16 %v430
        %v796 = vunpack.c.l.b16 %v431
        %v797 = vunpack.c.h.b16 %v431
        %v798 = vunpack.c.l.b16 %v432
        %v799 = vunpack.c.h.b16 %v432
        %v800 = vunpack.c.l.b16 %v433
        %v801 = vunpack.c.h.b16 %v433
        %v802 = vunpack.c.l.b16 %v434
        %v803 = vunpack.c.h.b16 %v434
        %v804 = vunpack.c.l.b16 %v435
        %v805 = vunpack.c.h.b16 %v435
        %v806 = vunpack.c.l.b16 %v436
        %v807 = vunpack.c.h.b16 %v436
        %v808 = vunpack.c.l.b16 %v437
        %v809 = vunpack.c.h.b16 %v437
        %v810 = vunpack.c.l.b16 %v438
        %v811 = vunpack.c.h.b16 %v438
        %v812 = vunpack.c.l.b16 %v439
        %v813 = vunpack.c.h.b16 %v439
        %v814 = vunpack.c.l.b16 %v440
        %v815 = vunpack.c.h.b16 %v440
        %v816 = vunpack.c.l.b16 %v441
        %v817 = vunpack.c.h.b16 %v441
        %v818 = vunpack.c.l.b16 %v442
        %v819 = vunpack.c.h.b16 %v442
        %v820 = vunpack.c.l.b16 %v443
        %v821 = vunpack.c.h.b16 %v443
        %v822 = vunpack.c.l.b16 %v444
        %v823 = vunpack.c.h.b16 %v444
        %v824 = vunpack.c.l.b16 %v445
        %v825 = vunpack.c.h.b16 %v445
        %v826 = vunpack.c.l.b16 %v446
        %v827 = vunpack.c.h.b16 %v446
        %v828 = vunpack.c.l.b16 %v447
        %v829 = vunpack.c.h.b16 %v447
        %v830 = vunpack.c.l.b16 %v448
        %v831 = vunpack.c.h.b16 %v448
        %v832 = vunpack.c.l.b16 %v449
        %v833 = vunpack.c.h.b16 %v449
        %v834 = vunpack.c.l.b16 %v450
        %v835 = vunpack.c.h.b16 %v450
        %v836 = vunpack.c.l.b16 %v451
        %v837 = vunpack.c.h.b16 %v451
        %v838 = vunpack.c.l.b16 %v452
        %v839 = vunpack.c.h.b16 %v452
        %v840 = vunpack.c.l.b16 %v453
        %v841 = vunpack.c.h.b16 %v453
        %v842 = vunpack.c.l.b16 %v454
        %v843 = vunpack.c.h.b16 %v454
        %v844 = vunpack.c.l.b16 %v455
        %v845 = vunpack.c.h.b16 %v455
        %v846 = vunpack.c.l.b16 %v456
        %v847 = vunpack.c.h.b16 %v456
        %v848 = vunpack.c.l.b16 %v457
        %v849 = vunpack.c.h.b16 %v457
        %v850 = vunpack.c.l.b16 %v458
        %v851 = vunpack.c.h.b16 %v458
        %v852 = vunpack.c.l.b16 %v459
        %v853 = vunpack.c.h.b16 %v459
        %v854 = vunpack.c.l.b16 %v460
        %v855 = vunpack.c.h.b16 %v460
        %v856 = vunpack.c.l.b16 %v461
        %v857 = vunpack.c.h.b16 %v461
        %v858 = vunpack.c.l.b16 %v462
        %v859 = vunpack.c.h.b16 %v462
        %v860 = vpack.c.b16 %v638, %v636
        %v861 = vpack.c.b16 %v639, %v637
        %v862 = vpack.c.b16 %v642, %v640
        %v863 = vpack.c.b16 %v643, %v641
        %v864 = vpack.c.b16 %v646, %v644
        %v865 = vpack.c.b16 %v647, %v645
        %v866 = vpack.c.b16 %v650, %v648
        %v867 = vpack.c.b16 %v651, %v649
        %v868 = vpack.c.b16 %v654, %v652
        %v869 = vpack.c.b16 %v655, %v653
        %v870 = vpack.c.b16 %v658, %v656
        %v871 = vpack.c.b16 %v659, %v657
        %v872 = vpack.c.b16 %v662, %v660
        %v873 = vpack.c.b16 %v663, %v661
        %v874 = vpack.c.b16 %v666, %v664
        %v875 = vpack.c.b16 %v667, %v665
        %v876 = vpack.c.b16 %v670, %v668
        %v877 = vpack.c.b16 %v671, %v669
        %v878 = vpack.c.b16 %v674, %v672
        %v879 = vpack.c.b16 %v675, %v673
        %v880 = vpack.c.b16 %v678, %v676
        %v881 = vpack.c.b16 %v679, %v677
        %v882 = vpack.c.b16 %v682, %v680
        %v883 = vpack.c.b16 %v683, %v681
        %v884 = vpack.c.b16 %v686, %v684
        %v885 = vpack.c.b16 %v687, %v685
        %v886 = vpack.c.b16 %v690, %v688
        %v887 = vpack.c.b16 %v691, %v689
        %v888 = vpack.c.b16 %v694, %v692
        %v889 = vpack.c.b16 %v695, %v693
        %v890 = vpack.c.b16 %v698, %v696
        %v891 = vpack.c.b16 %v699, %v697
        %v892 = vpack.c.b16 %v702, %v700
        %v893 = vpack.c.b16 %v703, %v701
        %v894 = vpack.c.b16 %v706, %v704
        %v895 = vpack.c.b16 %v707, %v705
        %v896 = vpack.c.b16 %v710, %v708
        %v897 = vpack.c.b16 %v711, %v709
        %v898 = vpack.c.b16 %v714, %v712
        %v899 = vpack.c.b16 %v715, %v713
        %v900 = vpack.c.b16 %v718, %v716
        %v901 = vpack.c.b16 %v719, %v717
        %v902 = vpack.c.b16 %v722, %v720
        %v903 = vpack.c.b16 %v723, %v721
        %v904 = vpack.c.b16 %v726, %v724
        %v905 = vpack.c.b16 %v727, %v725
        %v906 = vpack.c.b16 %v730, %v728
        %v907 = vpack.c.b16 %v731, %v729
        %v908 = vpack.c.b16 %v734, %v732
        %v909 = vpack.c.b16 %v735, %v733
        %v910 = vpack.c.b16 %v738, %v736
        %v911 = vpack.c.b16 %v739, %v737
        %v912 = vpack.c.b16 %v742, %v740
        %v913 = vpack.c.b16 %v743, %v741
        %v914 = vpack.c.b16 %v746, %v744
        %v915 = vpack.c.b16 %v747, %v745
        %v916 = vpack.c.b16 %v750, %v748
        %v917 = vpack.c.b16 %v751, %v749
        %v918 = vpack.c.b16 %v754, %v752
        %v919 = vpack.c.b16 %v755, %v753
        %v920 = vpack.c.b16 %v758, %v756
        %v921 = vpack.c.b16 %v759, %v757
        %v922 = vpack.c.b16 %v762, %v760
        %v923 = vpack.c.b16 %v763, %v761
        %v924 = vpack.c.b16 %v766, %v764
        %v925 = vpack.c.b16 %v767, %v765
        %v926 = vpack.c.b16 %v770, %v768
        %v927 = vpack.c.b16 %v771, %v769
        %v928 = vpack.c.b16 %v774, %v772
        %v929 = vpack.c.b16 %v775, %v773
        %v930 = vpack.c.b16 %v778, %v776
        %v931 = vpack.c.b16 %v779, %v777
        %v932 = vpack.c.b16 %v782, %v780
        %v933 = vpack.c.b16 %v783, %v781
        %v934 = vpack.c.b16 %v786, %v784
        %v935 = vpack.c.b16 %v787, %v785
        %v936 = vpack.c.b16 %v790, %v788
        %v937 = vpack.c.b16 %v791, %v789
        %v938 = vpack.c.b16 %v794, %v792
        %v939 = vpack.c.b16 %v795, %v793
        %v940 = vpack.c.b16 %v798, %v796
        %v941 = vpack.c.b16 %v799, %v797
        %v942 = vpack.c.b16 %v802, %v800
        %v943 = vpack.c.b16 %v803, %v801
        %v944 = vpack.c.b16 %v806, %v804
        %v945 = vpack.c.b16 %v807, %v805
        %v946 = vpack.c.b16 %v810, %v808
        %v947 = vpack.c.b16 %v811, %v809
        %v948 = vpack.c.b16 %v814, %v812
        %v949 = vpack.c.b16 %v815, %v813
        %v950 = vpack.c.b16 %v818, %v816
        %v951 = vpack.c.b16 %v819, %v817
        %v952 = vpack.c.b16 %v822, %v820
        %v953 = vpack.c.b16 %v823, %v821
        %v954 = vpack.c.b16 %v826, %v824
        %v955 = vpack.c.b16 %v827, %v825
        %v956 = vpack.c.b16 %v830, %v828
        %v957 = vpack.c.b16 %v831, %v829
        %v958 = vpack.c.b16 %v834, %v832
        %v959 = vpack.c.b16 %v835, %v833
        %v960 = vpack.c.b16 %v838, %v836
        %v961 = vpack.c.b16 %v839, %v837
        %v962 = vpack.c.b16 %v842, %v840
        %v963 = vpack.c.b16 %v843, %v841
        %v964 = vpack.c.b16 %v846, %v844
        %v965 = vpack.c.b16 %v847, %v845
        %v966 = vpack.c.b16 %v850, %v848
        %v967 = vpack.c.b16 %v851, %v849
        %v968 = vpack.c.b16 %v854, %v852
        %v969 = vpack.c.b16 %v855, %v853
        %v970 = vpack.c.b16 %v858, %v856
        %v971 = vpack.c.b16 %v859, %v857
        %1084 = vmatprep.subr.bf16.mxu0 %v861
        %1085 = vmatpush1.bf16.msra.mxu0 %v860
        %1086 = vmatprep.subr.bf16.mxu0 %v863
        %1087 = vmatpush1.bf16.msra.mxu0 %v862
        %1088 = vmatprep.subr.bf16.mxu0 %v865
        %1089 = vmatpush1.bf16.msra.mxu0 %v864
        %1090 = vmatprep.subr.bf16.mxu0 %v867
        %1091 = vmatpush1.bf16.msra.mxu0 %v866
        %1092 = vmatprep.subr.bf16.mxu0 %v869
        %1093 = vmatpush1.bf16.msra.mxu0 %v868
        %1094 = vmatprep.subr.bf16.mxu0 %v871
        %1095 = vmatpush1.bf16.msra.mxu0 %v870
        %1096 = vmatprep.subr.bf16.mxu0 %v873
        %1097 = vmatpush1.bf16.msra.mxu0 %v872
        %1098 = vmatprep.subr.bf16.mxu0 %v875
        %1099 = vmatpush1.bf16.msra.mxu0 %v874
        %1100 = vmatprep.subr.bf16.mxu0 %v877
        %1101 = vmatpush1.bf16.msra.mxu0 %v876
        %1102 = vmatprep.subr.bf16.mxu0 %v879
        %1103 = vmatpush1.bf16.msra.mxu0 %v878
        %1104 = vmatprep.subr.bf16.mxu0 %v881
        %1105 = vmatpush1.bf16.msra.mxu0 %v880
        %1106 = vmatprep.subr.bf16.mxu0 %v883
        %1107 = vmatpush1.bf16.msra.mxu0 %v882
        %1108 = vmatprep.subr.bf16.mxu0 %v885
        %1109 = vmatpush1.bf16.msra.mxu0 %v884
        %1110 = vmatprep.subr.bf16.mxu0 %v887
        %1111 = vmatpush1.bf16.msra.mxu0 %v886
        %1112 = vmatprep.subr.bf16.mxu0 %v889
        %1113 = vmatpush1.bf16.msra.mxu0 %v888
        %1114 = vmatprep.subr.bf16.mxu0 %v891
        %1115 = vmatpush1.bf16.msra.mxu0 %v890
        %1116 = vmatprep.mubr.bf16.mxu0 %v497
        %1117 = vmatmul.mubr.bf16.gmra.mrb[0].mxu0 %v496
        %v1118 = vpop.f32.mrb[0].mxu0
        %v1119 = vadd.f32 0.0, %v1118
        %v1120 = vpop.f32.mrb[0].mxu0
        %v1121 = vadd.f32 0.0, %v1120
        %v1122 = vpop.f32.mrb[0].mxu0
        %v1123 = vadd.f32 0.0, %v1122
        %v1124 = vpop.f32.mrb[0].mxu0
        %v1125 = vadd.f32 0.0, %v1124
        %1126 = vmatprep.mubr.bf16.mxu0 %v504
        %1127 = vmatmul.mubr.bf16.gmra.mrb[0].mxu0 %v503
        %v1128 = vpop.f32.mrb[0].mxu0
        %v1129 = vadd.f32 0.0, %v1128
        %v1130 = vpop.f32.mrb[0].mxu0
        %v1131 = vadd.f32 0.0, %v1130
        %v1132 = vpop.f32.mrb[0].mxu0
        %v1133 = vpop.f32.mrb[0].mxu0
        %1134 = vdwg.mxu0
        %1135 = vmatprep.subr.bf16.mxu0 %v893
        %1136 = vmatpush1.bf16.msra.mxu0 %v892
        %1137 = vmatprep.subr.bf16.mxu0 %v895
        %1138 = vmatpush1.bf16.msra.mxu0 %v894
        %1139 = vmatprep.subr.bf16.mxu0 %v897
        %1140 = vmatpush1.bf16.msra.mxu0 %v896
        %1141 = vmatprep.subr.bf16.mxu0 %v899
        %1142 = vmatpush1.bf16.msra.mxu0 %v898
        %1143 = vmatprep.subr.bf16.mxu0 %v901
        %1144 = vmatpush1.bf16.msra.mxu0 %v900
        %1145 = vmatprep.subr.bf16.mxu0 %v903
        %1146 = vmatpush1.bf16.msra.mxu0 %v902
        %1147 = vmatprep.subr.bf16.mxu0 %v905
        %1148 = vmatpush1.bf16.msra.mxu0 %v904
        %1149 = vmatprep.subr.bf16.mxu0 %v907
        %1150 = vmatpush1.bf16.msra.mxu0 %v906
        %1151 = vmatprep.subr.bf16.mxu0 %v909
        %1152 = vmatpush1.bf16.msra.mxu0 %v908
        %1153 = vmatprep.subr.bf16.mxu0 %v911
        %1154 = vmatpush1.bf16.msra.mxu0 %v910
        %1155 = vmatprep.subr.bf16.mxu0 %v913
        %1156 = vmatpush1.bf16.msra.mxu0 %v912
        %1157 = vmatprep.subr.bf16.mxu0 %v915
        %1158 = vmatpush1.bf16.msra.mxu0 %v914
        %1159 = vmatprep.subr.bf16.mxu0 %v917
        %1160 = vmatpush1.bf16.msra.mxu0 %v916
        %1161 = vmatprep.subr.bf16.mxu0 %v919
        %1162 = vmatpush1.bf16.msra.mxu0 %v918
        %1163 = vmatprep.subr.bf16.mxu0 %v921
        %1164 = vmatpush1.bf16.msra.mxu0 %v920
        %1165 = vmatprep.subr.bf16.mxu0 %v923
        %1166 = vmatpush1.bf16.msra.mxu0 %v922
        %1167 = vmatprep.mubr.bf16.mxu0 %v499
        %1168 = vmatmul.mubr.bf16.gmra.mrb[0].mxu0 %v498
        %v1169 = vpop.f32.mrb[0].mxu0
        %v1170 = vadd.f32 %v1119, %v1169
        %v1171 = vpop.f32.mrb[0].mxu0
        %v1172 = vadd.f32 %v1121, %v1171
        %v1173 = vpop.f32.mrb[0].mxu0
        %v1174 = vadd.f32 %v1123, %v1173
        %v1175 = vpop.f32.mrb[0].mxu0
        %v1176 = vadd.f32 %v1125, %v1175
        %1177 = vmatprep.mubr.bf16.mxu0 %v506
        %1178 = vmatmul.mubr.bf16.gmra.mrb[0].mxu0 %v505
        %v1179 = vpop.f32.mrb[0].mxu0
        %v1180 = vadd.f32 %v1129, %v1179
        %v1181 = vpop.f32.mrb[0].mxu0
        %v1182 = vadd.f32 %v1131, %v1181
        %v1183 = vpop.f32.mrb[0].mxu0
        %v1184 = vpop.f32.mrb[0].mxu0
        %1185 = vdwg.mxu0
        %1186 = vmatprep.subr.bf16.mxu0 %v925
        %1187 = vmatpush1.bf16.msra.mxu0 %v924
        %1188 = vmatprep.subr.bf16.mxu0 %v927
        %1189 = vmatpush1.bf16.msra.mxu0 %v926
        %1190 = vmatprep.subr.bf16.mxu0 %v929
        %1191 = vmatpush1.bf16.msra.mxu0 %v928
        %1192 = vmatprep.subr.bf16.mxu0 %v931
        %1193 = vmatpush1.bf16.msra.mxu0 %v930
        %1194 = vmatprep.subr.bf16.mxu0 %v933
        %1195 = vmatpush1.bf16.msra.mxu0 %v932
        %1196 = vmatprep.subr.bf16.mxu0 %v935
        %1197 = vmatpush1.bf16.msra.mxu0 %v934
        %1198 = vmatprep.subr.bf16.mxu0 %v937
        %1199 = vmatpush1.bf16.msra.mxu0 %v936
        %1200 = vmatprep.subr.bf16.mxu0 %v939
        %1201 = vmatpush1.bf16.msra.mxu0 %v938
        %1202 = vmatprep.subr.bf16.mxu0 %v941
        %1203 = vmatpush1.bf16.msra.mxu0 %v940
        %1204 = vmatprep.subr.bf16.mxu0 %v943
        %1205 = vmatpush1.bf16.msra.mxu0 %v942
        %1206 = vmatprep.subr.bf16.mxu0 %v945
        %1207 = vmatpush1.bf16.msra.mxu0 %v944
        %1208 = vmatprep.subr.bf16.mxu0 %v947
        %1209 = vmatpush1.bf16.msra.mxu0 %v946
        %1210 = vmatprep.subr.bf16.mxu0 %v949
        %1211 = vmatpush1.bf16.msra.mxu0 %v948
        %1212 = vmatprep.subr.bf16.mxu0 %v951
        %1213 = vmatpush1.bf16.msra.mxu0 %v950
        %1214 = vmatprep.subr.bf16.mxu0 %v953
        %1215 = vmatpush1.bf16.msra.mxu0 %v952
        %1216 = vmatprep.subr.bf16.mxu0 %v955
        %1217 = vmatpush1.bf16.msra.mxu0 %v954
        %1218 = vmatprep.mubr.bf16.mxu0 %v501
        %1219 = vmatmul.mubr.bf16.gmra.mrb[0].mxu0 %v500
        %v1220 = vpop.f32.mrb[0].mxu0
        %v1221 = vadd.f32 %v1170, %v1220
        %v1222 = vpop.f32.mrb[0].mxu0
        %v1223 = vadd.f32 %v1172, %v1222
        %v1224 = vpop.f32.mrb[0].mxu0
        %v1225 = vadd.f32 %v1174, %v1224
        %v1226 = vpop.f32.mrb[0].mxu0
        %v1227 = vadd.f32 %v1176, %v1226
        %1228 = vmatprep.mubr.bf16.mxu0 %v508
        %1229 = vmatmul.mubr.bf16.gmra.mrb[0].mxu0 %v507
        %v1230 = vpop.f32.mrb[0].mxu0
        %v1231 = vadd.f32 %v1180, %v1230
        %v1232 = vpop.f32.mrb[0].mxu0
        %v1233 = vadd.f32 %v1182, %v1232
        %v1234 = vpop.f32.mrb[0].mxu0
        %v1235 = vpop.f32.mrb[0].mxu0
        %1236 = vdwg.mxu0
        %1237 = vmatprep.subr.bf16.mxu0 %v957
        %1238 = vmatpush1.bf16.msra.mxu0 %v956
        %1239 = vmatprep.subr.bf16.mxu0 %v959
        %1240 = vmatpush1.bf16.msra.mxu0 %v958
        %1241 = vmatprep.subr.bf16.mxu0 %v961
        %1242 = vmatpush1.bf16.msra.mxu0 %v960
        %1243 = vmatprep.subr.bf16.mxu0 %v963
        %1244 = vmatpush1.bf16.msra.mxu0 %v962
        %1245 = vmatprep.subr.bf16.mxu0 %v965
        %1246 = vmatpush1.bf16.msra.mxu0 %v964
        %1247 = vmatprep.subr.bf16.mxu0 %v967
        %1248 = vmatpush1.bf16.msra.mxu0 %v966
        %1249 = vmatprep.subr.bf16.mxu0 %v969
        %1250 = vmatpush1.bf16.msra.mxu0 %v968
        %1251 = vmatprep.subr.bf16.mxu0 %v971
        %1252 = vmatpush1.bf16.msra.mxu0 %v970
        %1253 = vmatprep.subr.bf16.mxu0 0
        %1254 = vmatpush1.bf16.msra.mxu0 0
        %1255 = vmatprep.subr.bf16.mxu0 0
        %1256 = vmatpush1.bf16.msra.mxu0 0
        %1257 = vmatprep.subr.bf16.mxu0 0
        %1258 = vmatpush1.bf16.msra.mxu0 0
        %1259 = vmatprep.subr.bf16.mxu0 0
        %1260 = vmatpush1.bf16.msra.mxu0 0
        %1261 = vmatprep.subr.bf16.mxu0 0
        %1262 = vmatpush1.bf16.msra.mxu0 0
        %1263 = vmatprep.subr.bf16.mxu0 0
        %1264 = vmatpush1.bf16.msra.mxu0 0
        %1265 = vmatprep.subr.bf16.mxu0 0
        %1266 = vmatpush1.bf16.msra.mxu0 0
        %1267 = vmatprep.subr.bf16.mxu0 0
        %1268 = vmatpush1.bf16.msra.mxu0 0
        %1269 = vmatprep.mubr.bf16.mxu0 0
        %1270 = vmatmul.mubr.bf16.gmra.mrb[0].mxu0 %v502
        %v1271 = vpop.f32.mrb[0].mxu0
        %v1272 = vadd.f32 %v1221, %v1271
        %v1273 = vpop.f32.mrb[0].mxu0
        %v1274 = vadd.f32 %v1223, %v1273
        %v1275 = vpop.f32.mrb[0].mxu0
        %v1276 = vadd.f32 %v1225, %v1275
        %v1277 = vpop.f32.mrb[0].mxu0
        %v1278 = vadd.f32 %v1227, %v1277
        %1279 = vmatprep.mubr.bf16.mxu0 0
        %1280 = vmatmul.mubr.bf16.gmra.mrb[0].mxu0 %v509
        %v1281 = vpop.f32.mrb[0].mxu0
        %v1282 = vadd.f32 %v1231, %v1281
        %v1283 = vpop.f32.mrb[0].mxu0
        %v1284 = vadd.f32 %v1233, %v1283
        %v1285 = vpop.f32.mrb[0].mxu0
        %v1286 = vpop.f32.mrb[0].mxu0
        %1287 = vdwg.mxu0
        %v1288 = vadd.f32 %v333, %v1272
        %v1289 = vadd.f32 %v334, %v1274
        %v1290 = vadd.f32 %v335, %v1276
        %v1291 = vadd.f32 %v336, %v1278
        %v1292 = vadd.f32 %v337, %v1282
        %v1293 = vadd.f32 %v338, %v1284
        %1294 = vst [vmem:[#allocation2] sm:$0xff] %v1288
        %1295 = vst [vmem:[#allocation2 + $0x8] sm:$0xff] %v1289
        %1296 = vst [vmem:[#allocation2 + $0x10] sm:$0xff] %v1290
        %1297 = vst [vmem:[#allocation2 + $0x18] sm:$0xff] %v1291
        %1298 = vst [vmem:[#allocation2 + $0x20] sm:$0xff] %v1292
        %1299 = vst [vmem:[#allocation2 + $0x28] sm:$0xff] %v1293
        %p1300 = scmp.eq.s32.totalorder %s21, 3
        // Predicated region
        $region63: #{alexnet_forward.14} parent=53 // pred_check
          %p1301 = pneg %p1300
        $region64: #{alexnet_forward.14} parent=53 // pred_check_branch
          %1303 = sbr.rel (%p1301) target = $region66
        $region65: #{alexnet_forward.14} parent=53 // pred_region
          %v1304 = vld [vmem:[#allocation2] sm:$0xff]
          %v1305 = vld [vmem:[#allocation2 + $0x8] sm:$0xff]
          %v1306 = vld [vmem:[#allocation2 + $0x10] sm:$0xff]
          %v1307 = vld [vmem:[#allocation2 + $0x18] sm:$0xff]
          %v1308 = vld [vmem:[#allocation2 + $0x20] sm:$0xff]
          %v1309 = vld [vmem:[#allocation2 + $0x28] sm:$0xff]
          %v1310 = vld [vmem:[%s308] sm:$0x3]
          %v1312 = vlaneseq
          %v1313 = vshrl.u32 %v1312, 7
          %v1314 = vsub.s32 0, %v1313
          %v1315 = vrot.slane %v1310, %v1314
          %v1316 = vlaneseq
          %v1317 = vshrl.u32 %v1316, 7
          %v1318 = vsub.s32 1, %v1317
          %v1319 = vrot.slane %v1310, %v1318
          %v1322 = vadd.f32 %v1304, %v1315
          %v1323 = vadd.f32 %v1305, %v1319
          %v1324 = vadd.f32 %v1306, %v1315
          %v1325 = vadd.f32 %v1307, %v1319
          %v1326 = vadd.f32 %v1308, %v1315
          %v1327 = vadd.f32 %v1309, %v1319
          %v1328 = vmax.f32 %v1322, 0.0
          %v1329 = vmax.f32 %v1323, 0.0
          %v1330 = vmax.f32 %v1324, 0.0
          %v1331 = vmax.f32 %v1325, 0.0
          %v1332 = vmax.f32 %v1326, 0.0
          %v1333 = vmax.f32 %v1327, 0.0
          %1334 = vst [vmem:[%s319] sm:$0xff] %v1328
          %1335 = vst [vmem:[%s319 + $0x8] sm:$0xff] %v1329
          %1336 = vst [vmem:[%s319 + $0x10] sm:$0xff] %v1330
          %1337 = vst [vmem:[%s319 + $0x18] sm:$0xff] %v1331
          %1338 = vst [vmem:[%s319 + $0x20] sm:$0xff] %v1332
          %1339 = vst [vmem:[%s319 + $0x28] sm:$0xff] %v1333
        $region66: #{alexnet_forward.14} parent=53 // pred_fallthru
          _
        %s1340 = smul.u32 3, %s19
        %s1341 = smul.u32 2, %s20
        %p1342 = scmp.lt.s32.totalorder %s1340, 2
        %s1343 = scalar_select %p1342, %s1340, 2
        %p1344 = scmp.lt.s32.totalorder %s1341, 1
        %s1345 = scalar_select %p1344, %s1341, 1
        %s1346 = smul.addr %s1343, 2
        %s1347 = sadd.s32 %s1345, %s1346
        %s1348 = smul.addr %s1347, 8
        %s1349 = scalar_lea.vmem %s3, %s1348
        // Predicated region
        $region67: #{alexnet_forward.14} parent=53 // pred_check
          %p1350 = pneg %p135
        $region68: #{alexnet_forward.14} parent=53 // pred_check_branch
          %1352 = sbr.rel (%p1350) target = $region70
        $region69: #{alexnet_forward.14} parent=53 // pred_region
          %s1353 = smul.u32 3, %s19
          %s1354 = smul.u32 2, %s20
        $region70: #{alexnet_forward.14} parent=53 // pred_fallthru
          _
        // Predicated region
        $region71: #{alexnet_forward.14} parent=53 // pred_check
          %p1355 = pneg %p135
        $region72: #{alexnet_forward.14} parent=53 // pred_check_branch
          %1357 = sbr.rel (%p1355) target = $region74
        $region73: #{alexnet_forward.14} parent=53 // pred_region
          %s1358 = smul.u32 3, %s19
          %s1359 = smul.u32 2, %s20
          %p1360 = scmp.lt.s32.totalorder %s1358, 2
          %s1361 = scalar_select %p1360, %s1358, 2
          %p1362 = scmp.lt.s32.totalorder %s1359, 1
          %s1363 = scalar_select %p1362, %s1359, 1
          %s1364 = smul.addr %s1361, 2
          %s1365 = sadd.s32 %s1363, %s1364
          %s1366 = smul.addr %s1365, 8
          %s1367 = scalar_lea.vmem %s3, %s1366
        $region74: #{alexnet_forward.14} parent=53 // pred_fallthru
          _
      $region54: #{alexnet_forward.14} parent=5 // pred_fallthru
        _
      %p1368 = scmp.le.s32.totalorder 2, %s9
      // Predicated region
      $region75: #{alexnet_forward.14} parent=5 // pred_check
        %p1369 = pneg %p1368
      $region76: #{alexnet_forward.14} parent=5 // pred_check_branch
        %1371 = sbr.rel (%p1369) target = $region78
      $region77: #{alexnet_forward.14} parent=5 // pred_region
        %s1372 = ssub.s32 %s9, 2
      $region78: #{alexnet_forward.14} parent=5 // pred_fallthru
        _
    $region6: #{alexnet_forward.14} parent=1 // loop_footer
      %s13 = sadd.s32 1, %s9
    $region7: #{alexnet_forward.14} parent=1 // loop_footer_branch
      %8 = sbr.rel target = $region3
    $region8: #{alexnet_forward.14} parent=1 // loop_exit
      _

// kernel: alexnet_forward.15
$region0: #{alexnet_forward.15}
  #allocation0 [shape = 'u32[]', space=smem, size = 0x4, offset = 0x4, fixed_abs, tag = 'smem constant byte address 0x4 - core index']
  #allocation1 [shape = 'u32[144,128]{1,0:T(1,128)}', space=vmem, size = 0x12000, scoped, tag = 'internal scratch']
  #allocation2 [shape = 'f32[24,256]{1,0:T(8,128)}', space=vmem, size = 0x6000, scoped, tag = 'scratch operand']
  %s0 = inlined_call_operand.vmem [shape: bf16[24,2304], index: 0, kind: input, shape index: {}]
  %s1 = inlined_call_operand.vmem [shape: bf16[2304,256], index: 1, kind: input, shape index: {}]
  %s2 = inlined_call_operand.vmem [shape: f32[1,256], index: 2, kind: input, shape index: {}]
  %s3 = inlined_call_operand.vmem [shape: f32[24,256], index: 3, kind: output, shape index: {}]
  %s4 = sld [smem:[#allocation0]]
  $region76: #{alexnet_forward.15} parent=0
    _
  %s6 = ssub.s32 1, %s4
  %s7 = scalar_select 0, %s6, %s4
  $region1: #{alexnet_forward.15} parent=0
    #allocation3 [shape = 'u8[73728]{0}', space=vmem, size = 0x12000, scoped, tag = 'input window, operand 0']
    loop: start=0, step=1, limit=5
    $region2: #{alexnet_forward.15} parent=1 // loop_pre_header
      _
    $region3: #{alexnet_forward.15} parent=1 // loop_header
      %s9 = sphi 0, %s13
      %p10 = scmp.ge.s32.totalorder %s9, 5
      %s16 = sphi 0, %s35
      %s17 = sphi 0, %s31
      %s18 = sphi 0, %s27
      %s19 = sphi 0, %s16
      %s20 = sphi 0, %s17
      %s21 = sphi 0, %s18
      %s22 = sphi 0, %s19
      %s23 = sphi 0, %s20
      %s24 = sphi 0, %s21
      %s40 = sphi 0, %s42
      %s43 = sphi 0, %s40
      %s44 = sphi 0, %s43
      %s60 = sphi 0, %s44
      %s68 = sphi 0, %s70
      %s71 = sphi 0, %s68
      %s72 = sphi 0, %s71
      %s88 = sphi 0, %s72
      %s94 = sphi 0, %s96
      %s97 = sphi 0, %s94
      %s98 = sphi 0, %s97
      %s114 = sphi 0, %s98
      %s122 = sphi 0, %s124
      %s125 = sphi 0, %s122
      %s126 = sphi 0, %s125
      %s142 = sphi 0, %s126
    $region4: #{alexnet_forward.15} parent=1 // loop_header_branch
      %12 = sbr.rel (%p10) target = $region8
    $region5: #{alexnet_forward.15} parent=1 // loop_body
      %s14 = ssub.s32 %s9, 1
      %s15 = ssub.s32 %s9, 2
      %s25 = sadd.s32 1, %s18
      %p26 = scmp.ge.s32.totalorder %s25, 3
      %s27 = scalar_select %p26, 0, %s25
      %s28 = sadd.s32 1, %s17
      %s29 = scalar_select %p26, %s28, %s17
      %p30 = scmp.ge.s32.totalorder %s29, 1
      %s31 = scalar_select %p30, 0, %s29
      %s32 = sadd.s32 1, %s16
      %s33 = scalar_select %p30, %s32, %s16
      %p34 = scmp.ge.s32.totalorder %s33, 1
      %s35 = scalar_select %p34, 0, %s33
      %s36 = ssub.s32 %s16, %s35
      %s37 = ssub.s32 %s18, %s27
      %s38 = sor.u32 %s36, %s37
      %p39 = scmp.eq.s32.totalorder %s38, 0
      %s41 = sadd.s32 %s40, 1
      %s42 = scalar_select %p39, %s40, %s41
      %p45 = pneg %p39
      %p46 = scmp.eq.s32.totalorder %s9, 2
      %p47 = por %p45, %p46
      %p48 = scmp.ne.s32.totalorder %s40, %s43
      %p49 = scmp.eq.s32.totalorder %s9, 0
      %p50 = por %p48, %p49
      %p51 = scmp.ne.s32.totalorder %s40, %s43
      %p52 = scmp.eq.s32.totalorder %s14, 2
      %p53 = por %p51, %p52
      %p54 = scmp.ne.s32.totalorder %s43, %s44
      %p55 = scmp.eq.s32.totalorder %s14, 0
      %p56 = por %p54, %p55
      %p57 = scmp.ne.s32.totalorder %s43, %s44
      %p58 = scmp.eq.s32.totalorder %s15, 2
      %p59 = por %p57, %p58
      %p61 = scmp.ne.s32.totalorder %s44, %s60
      %p62 = scmp.eq.s32.totalorder %s15, 0
      %p63 = por %p61, %p62
      %s64 = ssub.s32 %s18, %s27
      %s65 = ssub.s32 %s17, %s31
      %s66 = sor.u32 %s64, %s65
      %p67 = scmp.eq.s32.totalorder %s66, 0
      %s69 = sadd.s32 %s68, 1
      %s70 = scalar_select %p67, %s68, %s69
      %p73 = pneg %p67
      %p74 = scmp.eq.s32.totalorder %s9, 2
      %p75 = por %p73, %p74
      %p76 = scmp.ne.s32.totalorder %s68, %s71
      %p77 = scmp.eq.s32.totalorder %s9, 0
      %p78 = por %p76, %p77
      %p79 = scmp.ne.s32.totalorder %s68, %s71
      %p80 = scmp.eq.s32.totalorder %s14, 2
      %p81 = por %p79, %p80
      %p82 = scmp.ne.s32.totalorder %s71, %s72
      %p83 = scmp.eq.s32.totalorder %s14, 0
      %p84 = por %p82, %p83
      %p85 = scmp.ne.s32.totalorder %s71, %s72
      %p86 = scmp.eq.s32.totalorder %s15, 2
      %p87 = por %p85, %p86
      %p89 = scmp.ne.s32.totalorder %s72, %s88
      %p90 = scmp.eq.s32.totalorder %s15, 0
      %p91 = por %p89, %p90
      %s92 = ssub.s32 %s17, %s31
      %p93 = scmp.eq.s32.totalorder %s92, 0
      %s95 = sadd.s32 %s94, 1
      %s96 = scalar_select %p93, %s94, %s95
      %p99 = pneg %p93
      %p100 = scmp.eq.s32.totalorder %s9, 2
      %p101 = por %p99, %p100
      %p102 = scmp.ne.s32.totalorder %s94, %s97
      %p103 = scmp.eq.s32.totalorder %s9, 0
      %p104 = por %p102, %p103
      %p105 = scmp.ne.s32.totalorder %s94, %s97
      %p106 = scmp.eq.s32.totalorder %s14, 2
      %p107 = por %p105, %p106
      %p108 = scmp.ne.s32.totalorder %s97, %s98
      %p109 = scmp.eq.s32.totalorder %s14, 0
      %p110 = por %p108, %p109
      %p111 = scmp.ne.s32.totalorder %s97, %s98
      %p112 = scmp.eq.s32.totalorder %s15, 2
      %p113 = por %p111, %p112
      %p115 = scmp.ne.s32.totalorder %s98, %s114
      %p116 = scmp.eq.s32.totalorder %s15, 0
      %p117 = por %p115, %p116
      %s118 = ssub.s32 %s16, %s35
      %s119 = ssub.s32 %s17, %s31
      %s120 = sor.u32 %s118, %s119
      %p121 = scmp.eq.s32.totalorder %s120, 0
      %s123 = sadd.s32 %s122, 1
      %s124 = scalar_select %p121, %s122, %s123
      %p127 = pneg %p121
      %p128 = scmp.eq.s32.totalorder %s9, 2
      %p129 = por %p127, %p128
      %p130 = scmp.ne.s32.totalorder %s122, %s125
      %p131 = scmp.eq.s32.totalorder %s9, 0
      %p132 = por %p130, %p131
      %p133 = scmp.ne.s32.totalorder %s122, %s125
      %p134 = scmp.eq.s32.totalorder %s14, 2
      %p135 = por %p133, %p134
      %p136 = scmp.ne.s32.totalorder %s125, %s126
      %p137 = scmp.eq.s32.totalorder %s14, 0
      %p138 = por %p136, %p137
      %p139 = scmp.ne.s32.totalorder %s125, %s126
      %p140 = scmp.eq.s32.totalorder %s15, 2
      %p141 = por %p139, %p140
      %p143 = scmp.ne.s32.totalorder %s126, %s142
      %p144 = scmp.eq.s32.totalorder %s15, 0
      %p145 = por %p143, %p144
      %p146 = scmp.le.s32.totalorder 1, %s9
      %p147 = scmp.lt.s32.totalorder %s9, 4
      %p148 = pnand %p146, %p147
      %p149 = pneg %p148
      // Predicated region
      $region9: #{alexnet_forward.15} parent=5 // pred_check
        _
      $region10: #{alexnet_forward.15} parent=5 // pred_check_branch
        %151 = sbr.rel (%p148) target = $region12
      $region11: #{alexnet_forward.15} parent=5 // pred_region
        %s152 = ssub.s32 %s9, 1
        // Predicated region
        $region13: #{alexnet_forward.15} parent=11 // pred_check
          %p153 = pneg %p110
        $region14: #{alexnet_forward.15} parent=11 // pred_check_branch
          %155 = sbr.rel (%p153) target = $region16
        $region15: #{alexnet_forward.15} parent=11 // pred_region
          %s156 = smul.u32 2, %s20
          %p157 = scmp.lt.s32.totalorder %s156, 1
          %s158 = scalar_select %p157, %s156, 1
          %s159 = scalar_lea.vmem %s2, %s158
          %s160 = smul.u32 2, %s20
        $region16: #{alexnet_forward.15} parent=11 // pred_fallthru
          _
      $region12: #{alexnet_forward.15} parent=5 // pred_fallthru
        _
      %p161 = scmp.lt.s32.totalorder %s9, 3
      // Predicated region
      $region17: #{alexnet_forward.15} parent=5 // pred_check
        %p162 = pneg %p161
      $region18: #{alexnet_forward.15} parent=5 // pred_check_branch
        %164 = sbr.rel (%p162) target = $region20
      $region19: #{alexnet_forward.15} parent=5 // pred_region
        // Predicated region
        $region21: #{alexnet_forward.15} parent=19 // pred_check
          %p165 = pneg %p50
        $region22: #{alexnet_forward.15} parent=19 // pred_check_branch
          %167 = sbr.rel (%p165) target = $region24
        $region23: #{alexnet_forward.15} parent=19 // pred_region
          %s168 = sand.u32 %s40, 1
          %s169 = sand.u32 %s40, 1
          %s170 = smul.addr %s169, 72
          %s171 = scalar_lea.vmem [#allocation3], %s170
          %s172 = smul.u32 3, %s16
          %s173 = smul.u32 6, %s18
          %s174 = smul.addr %s172, 18
          %s175 = sadd.s32 %s173, %s174
          %s176 = smul.addr %s175, 4
          %s177 = scalar_lea.vmem %s0, %s176
          // Predicated region
          $region25: #{alexnet_forward.15} parent=23 // pred_check
            _
          $region26: #{alexnet_forward.15} parent=23 // pred_check_branch
            %179 = sbr.rel (0) target = $region28
          $region27: #{alexnet_forward.15} parent=23 // pred_region
            // Predicated region
            $region29: #{alexnet_forward.15} parent=27 // pred_check
              _
            $region30: #{alexnet_forward.15} parent=27 // pred_check_branch
              %181 = sbr.rel (0) target = $region32
            $region31: #{alexnet_forward.15} parent=27 // pred_region
              loop: start=0, step=1, limit=1
              $region33: #{alexnet_forward.15} parent=31 // loop_pre_header
                _
              $region34: #{alexnet_forward.15} parent=31 // loop_header
                %s183 = sphi 0, %s187
                %p184 = scmp.ge.s32.totalorder %s183, 1
                %s188 = sphi %s177, %s177
                %s189 = sphi %s171, %s171
              $region35: #{alexnet_forward.15} parent=31 // loop_header_branch
                %186 = sbr.rel (%p184) target = $region39
              $region36: #{alexnet_forward.15} parent=31 // loop_body
                %v190 = vld [vmem:[%s188] sm:$0xff]
                %191 = vst [vmem:[%s189] sm:$0xff] %v190
                %v192 = vld [vmem:[%s188 + $0x8] sm:$0xff]
                %193 = vst [vmem:[%s189 + $0x8] sm:$0xff] %v192
                %v194 = vld [vmem:[%s188 + $0x10] sm:$0xff]
                %195 = vst [vmem:[%s189 + $0x10] sm:$0xff] %v194
                %v196 = vld [vmem:[%s188 + $0x48] sm:$0xff]
                %197 = vst [vmem:[%s189 + $0x18] sm:$0xff] %v196
                %v198 = vld [vmem:[%s188 + $0x50] sm:$0xff]
                %199 = vst [vmem:[%s189 + $0x20] sm:$0xff] %v198
                %v200 = vld [vmem:[%s188 + $0x58] sm:$0xff]
                %201 = vst [vmem:[%s189 + $0x28] sm:$0xff] %v200
                %v202 = vld [vmem:[%s188 + $0x90] sm:$0xff]
                %203 = vst [vmem:[%s189 + $0x30] sm:$0xff] %v202
                %v204 = vld [vmem:[%s188 + $0x98] sm:$0xff]
                %205 = vst [vmem:[%s189 + $0x38] sm:$0xff] %v204
                %v206 = vld [vmem:[%s188 + $0xa0] sm:$0xff]
                %207 = vst [vmem:[%s189 + $0x40] sm:$0xff] %v206
              $region37: #{alexnet_forward.15} parent=31 // loop_footer
                %s187 = sadd.s32 1, %s183
              $region38: #{alexnet_forward.15} parent=31 // loop_footer_branch
                %182 = sbr.rel target = $region34
              $region39: #{alexnet_forward.15} parent=31 // loop_exit
                _
            $region32: #{alexnet_forward.15} parent=27 // pred_fallthru
              _
            // Predicated region
            $region40: #{alexnet_forward.15} parent=27 // pred_check
              _
            $region41: #{alexnet_forward.15} parent=27 // pred_check_branch
              %209 = sbr.rel target = $region43
            $region42: #{alexnet_forward.15} parent=27 // pred_region
              _
            $region43: #{alexnet_forward.15} parent=27 // pred_fallthru
              _
          $region28: #{alexnet_forward.15} parent=23 // pred_fallthru
            _
          %210 = vnop
        $region24: #{alexnet_forward.15} parent=19 // pred_fallthru
          _
        // Predicated region
        $region44: #{alexnet_forward.15} parent=19 // pred_check
          %p211 = pneg %p78
        $region45: #{alexnet_forward.15} parent=19 // pred_check_branch
          %213 = sbr.rel (%p211) target = $region47
        $region46: #{alexnet_forward.15} parent=19 // pred_region
          %s214 = smul.u32 96, %s18
          %s215 = smul.u32 2, %s17
          %p216 = scmp.lt.s32.totalorder %s214, 287
          %s217 = scalar_select %p216, %s214, 287
          %p218 = scmp.lt.s32.totalorder %s215, 1
          %s219 = scalar_select %p218, %s215, 1
          %s220 = smul.addr %s217, 2
          %s221 = sadd.s32 %s219, %s220
          %s222 = smul.addr %s221, 4
          %s223 = scalar_lea.vmem %s1, %s222
          %s224 = smul.u32 96, %s18
          %s225 = smul.u32 2, %s17
        $region47: #{alexnet_forward.15} parent=19 // pred_fallthru
          _
      $region20: #{alexnet_forward.15} parent=5 // pred_fallthru
        _
      %p226 = scmp.le.s32.totalorder 1, %s9
      %p227 = scmp.lt.s32.totalorder %s9, 4
      %p228 = pnand %p226, %p227
      %p229 = pneg %p228
      // Predicated region
      $region48: #{alexnet_forward.15} parent=5 // pred_check
        _
      $region49: #{alexnet_forward.15} parent=5 // pred_check_branch
        %231 = sbr.rel (%p228) target = $region51
      $region50: #{alexnet_forward.15} parent=5 // pred_region
        %s232 = ssub.s32 %s9, 1
        %s233 = sand.u32 %s43, 1
        %s234 = sand.u32 %s43, 1
        %s235 = smul.addr %s234, 72
        %s236 = scalar_lea.vmem [#allocation3], %s235
        // Predicated region
        $region52: #{alexnet_forward.15} parent=50 // pred_check
          %p237 = pneg %p56
        $region53: #{alexnet_forward.15} parent=50 // pred_check_branch
          %239 = sbr.rel (%p237) target = $region55
        $region54: #{alexnet_forward.15} parent=50 // pred_region
          _
        $region55: #{alexnet_forward.15} parent=50 // pred_fallthru
          _
        %s240 = sand.u32 %s43, 1
        %s241 = sand.u32 %s43, 1
        %s242 = smul.addr %s241, 72
        %s243 = scalar_lea.vmem [#allocation3], %s242
        %p244 = pneg %p56
        %p245 = pneg %p53
        %s246 = smul.u32 96, %s21
        %s247 = smul.u32 2, %s20
        %p248 = scmp.lt.s32.totalorder %s246, 287
        %s249 = scalar_select %p248, %s246, 287
        %p250 = scmp.lt.s32.totalorder %s247, 1
        %s251 = scalar_select %p250, %s247, 1
        %s252 = smul.addr %s249, 2
        %s253 = sadd.s32 %s251, %s252
        %s254 = smul.addr %s253, 4
        %s255 = scalar_lea.vmem %s1, %s254
        %p256 = pneg %p84
        %p257 = pneg %p81
        %s258 = smul.u32 2, %s20
        %p259 = scmp.lt.s32.totalorder %s258, 1
        %s260 = scalar_select %p259, %s258, 1
        %s261 = scalar_lea.vmem %s2, %s260
        %p262 = pneg %p110
        %p263 = pneg %p107
        %p264 = pneg %p138
        %p265 = pneg %p135
        %s266 = smul.u32 3, %s19
        %s267 = smul.u32 2, %s20
        %p268 = scmp.lt.s32.totalorder %s266, 2
        %s269 = scalar_select %p268, %s266, 2
        %p270 = scmp.lt.s32.totalorder %s267, 1
        %s271 = scalar_select %p270, %s267, 1
        %s272 = smul.addr %s269, 2
        %s273 = sadd.s32 %s271, %s272
        %s274 = smul.addr %s273, 8
        %s275 = scalar_lea.vmem %s3, %s274
        %s276 = smul.u32 3, %s19
        %s277 = smul.u32 6, %s21
        %s278 = smul.u32 96, %s21
        %s279 = smul.u32 2, %s20
        %p280 = scmp.lt.s32.totalorder %s278, 287
        %s281 = scalar_select %p280, %s278, 287
        %p282 = scmp.lt.s32.totalorder %s279, 1
        %s283 = scalar_select %p282, %s279, 1
        %s284 = smul.addr %s281, 2
        %s285 = sadd.s32 %s283, %s284
        %s286 = smul.addr %s285, 4
        %s287 = scalar_lea.vmem %s1, %s286
        %s288 = smul.u32 96, %s21
        %s289 = smul.u32 2, %s20
        %s290 = smul.u32 2, %s20
        %p291 = scmp.lt.s32.totalorder %s290, 1
        %s292 = scalar_select %p291, %s290, 1
        %s293 = scalar_lea.vmem %s2, %s292
        %s294 = smul.u32 2, %s20
        %s295 = smul.u32 3, %s19
        %s296 = smul.u32 2, %s20
        %p297 = scmp.lt.s32.totalorder %s295, 2
        %s298 = scalar_select %p297, %s295, 2
        %p299 = scmp.lt.s32.totalorder %s296, 1
        %s300 = scalar_select %p299, %s296, 1
        %s301 = smul.addr %s298, 2
        %s302 = sadd.s32 %s300, %s301
        %s303 = smul.addr %s302, 8
        %s304 = scalar_lea.vmem %s3, %s303
        %s305 = smul.u32 3, %s19
        %s306 = smul.u32 2, %s20
        %p307 = scmp.eq.s32.totalorder %s21, 0
        // Predicated region
        $region56: #{alexnet_forward.15} parent=50 // pred_check
          %p308 = pneg %p307
        $region57: #{alexnet_forward.15} parent=50 // pred_check_branch
          %310 = sbr.rel (%p308) target = $region59
        $region58: #{alexnet_forward.15} parent=50 // pred_region
          %311 = vst [vmem:[#allocation2] sm:$0xff] 0.0
          %312 = vst [vmem:[#allocation2 + $0x8] sm:$0xff] 0.0
          %313 = vst [vmem:[#allocation2 + $0x10] sm:$0xff] 0.0
          %314 = vst [vmem:[#allocation2 + $0x18] sm:$0xff] 0.0
          %315 = vst [vmem:[#allocation2 + $0x20] sm:$0xff] 0.0
          %316 = vst [vmem:[#allocation2 + $0x28] sm:$0xff] 0.0
        $region59: #{alexnet_forward.15} parent=50 // pred_fallthru
          _
        %v317 = vld [vmem:[#allocation2] sm:$0xff]
        %v318 = vld [vmem:[#allocation2 + $0x8] sm:$0xff]
        %v319 = vld [vmem:[#allocation2 + $0x10] sm:$0xff]
        %v320 = vld [vmem:[#allocation2 + $0x18] sm:$0xff]
        %v321 = vld [vmem:[#allocation2 + $0x20] sm:$0xff]
        %v322 = vld [vmem:[#allocation2 + $0x28] sm:$0xff]
        %v323 = vld [vmem:[%s236] sm:$0xff]
        %v324 = vld [vmem:[%s236 + $0x8] sm:$0xff]
        %v325 = vld [vmem:[%s236 + $0x10] sm:$0xff]
        %v326 = vld [vmem:[%s236 + $0x18] sm:$0xff]
        %v327 = vld [vmem:[%s236 + $0x20] sm:$0xff]
        %v328 = vld [vmem:[%s236 + $0x28] sm:$0xff]
        %v329 = vld [vmem:[%s236 + $0x30] sm:$0xff]
        %v330 = vld [vmem:[%s236 + $0x38] sm:$0xff]
        %v331 = vld [vmem:[%s236 + $0x40] sm:$0xff]
        %v332 = vld [vmem:[%s287] sm:$0xff]
        %v333 = vld [vmem:[%s287 + $0x8] sm:$0xff]
        %v334 = vld [vmem:[%s287 + $0x10] sm:$0xff]
        %v335 = vld [vmem:[%s287 + $0x18] sm:$0xff]
        %v336 = vld [vmem:[%s287 + $0x20] sm:$0xff]
        %v337 = vld [vmem:[%s287 + $0x28] sm:$0xff]
        %v338 = vld [vmem:[%s287 + $0x30] sm:$0xff]
        %v339 = vld [vmem:[%s287 + $0x38] sm:$0xff]
        %v340 = vld [vmem:[%s287 + $0x40] sm:$0xff]
        %v341 = vld [vmem:[%s287 + $0x48] sm:$0xff]
        %v342 = vld [vmem:[%s287 + $0x50] sm:$0xff]
        %v343 = vld [vmem:[%s287 + $0x58] sm:$0xff]
        %v344 = vld [vmem:[%s287 + $0x60] sm:$0xff]
        %v345 = vld [vmem:[%s287 + $0x68] sm:$0xff]
        %v346 = vld [vmem:[%s287 + $0x70] sm:$0xff]
        %v347 = vld [vmem:[%s287 + $0x78] sm:$0xff]
        %v348 = vld [vmem:[%s287 + $0x80] sm:$0xff]
        %v349 = vld [vmem:[%s287 + $0x88] sm:$0xff]
        %v350 = vld [vmem:[%s287 + $0x90] sm:$0xff]
        %v351 = vld [vmem:[%s287 + $0x98] sm:$0xff]
        %v352 = vld [vmem:[%s287 + $0xa0] sm:$0xff]
        %v353 = vld [vmem:[%s287 + $0xa8] sm:$0xff]
        %v354 = vld [vmem:[%s287 + $0xb0] sm:$0xff]
        %v355 = vld [vmem:[%s287 + $0xb8] sm:$0xff]
        %v356 = vld [vmem:[%s287 + $0xc0] sm:$0xff]
        %v357 = vld [vmem:[%s287 + $0xc8] sm:$0xff]
        %v358 = vld [vmem:[%s287 + $0xd0] sm:$0xff]
        %v359 = vld [vmem:[%s287 + $0xd8] sm:$0xff]
        %v360 = vld [vmem:[%s287 + $0xe0] sm:$0xff]
        %v361 = vld [vmem:[%s287 + $0xe8] sm:$0xff]
        %v362 = vld [vmem:[%s287 + $0xf0] sm:$0xff]
        %v363 = vld [vmem:[%s287 + $0xf8] sm:$0xff]
        %v364 = vld [vmem:[%s287 + $0x100] sm:$0xff]
        %v365 = vld [vmem:[%s287 + $0x108] sm:$0xff]
        %v366 = vld [vmem:[%s287 + $0x110] sm:$0xff]
        %v367 = vld [vmem:[%s287 + $0x118] sm:$0xff]
        %v368 = vld [vmem:[%s287 + $0x120] sm:$0xff]
        %v369 = vld [vmem:[%s287 + $0x128] sm:$0xff]
        %v370 = vld [vmem:[%s287 + $0x130] sm:$0xff]
        %v371 = vld [vmem:[%s287 + $0x138] sm:$0xff]
        %v372 = vld [vmem:[%s287 + $0x140] sm:$0xff]
        %v373 = vld [vmem:[%s287 + $0x148] sm:$0xff]
        %v374 = vld [vmem:[%s287 + $0x150] sm:$0xff]
        %v375 = vld [vmem:[%s287 + $0x158] sm:$0xff]
        %v376 = vld [vmem:[%s287 + $0x160] sm:$0xff]
        %v377 = vld [vmem:[%s287 + $0x168] sm:$0xff]
        %v378 = vld [vmem:[%s287 + $0x170] sm:$0xff]
        %v379 = vld [vmem:[%s287 + $0x178] sm:$0xff]
        %v380 = vld [vmem:[%s287 + $0x180] sm:$0xff]
        %v381 = vld [vmem:[%s287 + $0x188] sm:$0xff]
        %v382 = vld [vmem:[%s287 + $0x190] sm:$0xff]
        %v383 = vld [vmem:[%s287 + $0x198] sm:$0xff]
        %v384 = vld [vmem:[%s287 + $0x1a0] sm:$0xff]
        %v385 = vld [vmem:[%s287 + $0x1a8] sm:$0xff]
        %v386 = vld [vmem:[%s287 + $0x1b0] sm:$0xff]
        %v387 = vld [vmem:[%s287 + $0x1b8] sm:$0xff]
        %v388 = vld [vmem:[%s287 + $0x1c0] sm:$0xff]
        %v389 = vld [vmem:[%s287 + $0x1c8] sm:$0xff]
        %v390 = vld [vmem:[%s287 + $0x1d0] sm:$0xff]
        %v391 = vld [vmem:[%s287 + $0x1d8] sm:$0xff]
        %v392 = vld [vmem:[%s287 + $0x1e0] sm:$0xff]
        %v393 = vld [vmem:[%s287 + $0x1e8] sm:$0xff]
        %v394 = vld [vmem:[%s287 + $0x1f0] sm:$0xff]
        %v395 = vld [vmem:[%s287 + $0x1f8] sm:$0xff]
        %v396 = vld [vmem:[%s287 + $0x200] sm:$0xff]
        %v397 = vld [vmem:[%s287 + $0x208] sm:$0xff]
        %v398 = vld [vmem:[%s287 + $0x210] sm:$0xff]
        %v399 = vld [vmem:[%s287 + $0x218] sm:$0xff]
        %v400 = vld [vmem:[%s287 + $0x220] sm:$0xff]
        %v401 = vld [vmem:[%s287 + $0x228] sm:$0xff]
        %v402 = vld [vmem:[%s287 + $0x230] sm:$0xff]
        %v403 = vld [vmem:[%s287 + $0x238] sm:$0xff]
        %v404 = vld [vmem:[%s287 + $0x240] sm:$0xff]
        %v405 = vld [vmem:[%s287 + $0x248] sm:$0xff]
        %v406 = vld [vmem:[%s287 + $0x250] sm:$0xff]
        %v407 = vld [vmem:[%s287 + $0x258] sm:$0xff]
        %v408 = vld [vmem:[%s287 + $0x260] sm:$0xff]
        %v409 = vld [vmem:[%s287 + $0x268] sm:$0xff]
        %v410 = vld [vmem:[%s287 + $0x270] sm:$0xff]
        %v411 = vld [vmem:[%s287 + $0x278] sm:$0xff]
        %v412 = vld [vmem:[%s287 + $0x280] sm:$0xff]
        %v413 = vld [vmem:[%s287 + $0x288] sm:$0xff]
        %v414 = vld [vmem:[%s287 + $0x290] sm:$0xff]
        %v415 = vld [vmem:[%s287 + $0x298] sm:$0xff]
        %v416 = vld [vmem:[%s287 + $0x2a0] sm:$0xff]
        %v417 = vld [vmem:[%s287 + $0x2a8] sm:$0xff]
        %v418 = vld [vmem:[%s287 + $0x2b0] sm:$0xff]
        %v419 = vld [vmem:[%s287 + $0x2b8] sm:$0xff]
        %v420 = vld [vmem:[%s287 + $0x2c0] sm:$0xff]
        %v421 = vld [vmem:[%s287 + $0x2c8] sm:$0xff]
        %v422 = vld [vmem:[%s287 + $0x2d0] sm:$0xff]
        %v423 = vld [vmem:[%s287 + $0x2d8] sm:$0xff]
        %v424 = vld [vmem:[%s287 + $0x2e0] sm:$0xff]
        %v425 = vld [vmem:[%s287 + $0x2e8] sm:$0xff]
        %v426 = vld [vmem:[%s287 + $0x2f0] sm:$0xff]
        %v427 = vld [vmem:[%s287 + $0x2f8] sm:$0xff]
        %v437 = vunpack.c.l.b16 %v323
        %v438 = vunpack.c.h.b16 %v323
        %v439 = vunpack.c.l.b16 %v324
        %v440 = vunpack.c.h.b16 %v324
        %v441 = vunpack.c.l.b16 %v325
        %v442 = vunpack.c.h.b16 %v325
        %v443 = vunpack.c.l.b16 %v326
        %v444 = vunpack.c.h.b16 %v326
        %v445 = vunpack.c.l.b16 %v327
        %v446 = vunpack.c.h.b16 %v327
        %v447 = vunpack.c.l.b16 %v328
        %v448 = vunpack.c.h.b16 %v328
        %v449 = vunpack.c.l.b16 %v329
        %v450 = vunpack.c.h.b16 %v329
        %v451 = vunpack.c.l.b16 %v330
        %v452 = vunpack.c.h.b16 %v330
        %v453 = vunpack.c.l.b16 %v331
        %v454 = vunpack.c.h.b16 %v331
        %v455 = vpack.c.b16 %v443, %v437
        %v456 = vpack.c.b16 %v444, %v438
        %v457 = vpack.c.b16 %v445, %v439
        %v458 = vpack.c.b16 %v446, %v440
        %v459 = vpack.c.b16 %v447, %v441
        %v460 = vpack.c.b16 %v448, %v442
        %v461 = vpack.c.b16 %v449, %v449
        %v462 = vpack.c.b16 %v450, %v450
        %v463 = vpack.c.b16 %v451, %v451
        %v464 = vpack.c.b16 %v452, %v452
        %v465 = vpack.c.b16 %v453, %v453
        %v466 = vpack.c.b16 %v454, %v454
        %v575 = vunpack.c.l.b16 %v332
        %v576 = vunpack.c.h.b16 %v332
        %v577 = vunpack.c.l.b16 %v333
        %v578 = vunpack.c.h.b16 %v333
        %v579 = vunpack.c.l.b16 %v334
        %v580 = vunpack.c.h.b16 %v334
        %v581 = vunpack.c.l.b16 %v335
        %v582 = vunpack.c.h.b16 %v335
        %v583 = vunpack.c.l.b16 %v336
        %v584 = vunpack.c.h.b16 %v336
        %v585 = vunpack.c.l.b16 %v337
        %v586 = vunpack.c.h.b16 %v337
        %v587 = vunpack.c.l.b16 %v338
        %v588 = vunpack.c.h.b16 %v338
        %v589 = vunpack.c.l.b16 %v339
        %v590 = vunpack.c.h.b16 %v339
        %v591 = vunpack.c.l.b16 %v340
        %v592 = vunpack.c.h.b16 %v340
        %v593 = vunpack.c.l.b16 %v341
        %v594 = vunpack.c.h.b16 %v341
        %v595 = vunpack.c.l.b16 %v342
        %v596 = vunpack.c.h.b16 %v342
        %v597 = vunpack.c.l.b16 %v343
        %v598 = vunpack.c.h.b16 %v343
        %v599 = vunpack.c.l.b16 %v344
        %v600 = vunpack.c.h.b16 %v344
        %v601 = vunpack.c.l.b16 %v345
        %v602 = vunpack.c.h.b16 %v345
        %v603 = vunpack.c.l.b16 %v346
        %v604 = vunpack.c.h.b16 %v346
        %v605 = vunpack.c.l.b16 %v347
        %v606 = vunpack.c.h.b16 %v347
        %v607 = vunpack.c.l.b16 %v348
        %v608 = vunpack.c.h.b16 %v348
        %v609 = vunpack.c.l.b16 %v349
        %v610 = vunpack.c.h.b16 %v349
        %v611 = vunpack.c.l.b16 %v350
        %v612 = vunpack.c.h.b16 %v350
        %v613 = vunpack.c.l.b16 %v351
        %v614 = vunpack.c.h.b16 %v351
        %v615 = vunpack.c.l.b16 %v352
        %v616 = vunpack.c.h.b16 %v352
        %v617 = vunpack.c.l.b16 %v353
        %v618 = vunpack.c.h.b16 %v353
        %v619 = vunpack.c.l.b16 %v354
        %v620 = vunpack.c.h.b16 %v354
        %v621 = vunpack.c.l.b16 %v355
        %v622 = vunpack.c.h.b16 %v355
        %v623 = vunpack.c.l.b16 %v356
        %v624 = vunpack.c.h.b16 %v356
        %v625 = vunpack.c.l.b16 %v357
        %v626 = vunpack.c.h.b16 %v357
        %v627 = vunpack.c.l.b16 %v358
        %v628 = vunpack.c.h.b16 %v358
        %v629 = vunpack.c.l.b16 %v359
        %v630 = vunpack.c.h.b16 %v359
        %v631 = vunpack.c.l.b16 %v360
        %v632 = vunpack.c.h.b16 %v360
        %v633 = vunpack.c.l.b16 %v361
        %v634 = vunpack.c.h.b16 %v361
        %v635 = vunpack.c.l.b16 %v362
        %v636 = vunpack.c.h.b16 %v362
        %v637 = vunpack.c.l.b16 %v363
        %v638 = vunpack.c.h.b16 %v363
        %v639 = vunpack.c.l.b16 %v364
        %v640 = vunpack.c.h.b16 %v364
        %v641 = vunpack.c.l.b16 %v365
        %v642 = vunpack.c.h.b16 %v365
        %v643 = vunpack.c.l.b16 %v366
        %v644 = vunpack.c.h.b16 %v366
        %v645 = vunpack.c.l.b16 %v367
        %v646 = vunpack.c.h.b16 %v367
        %v647 = vunpack.c.l.b16 %v368
        %v648 = vunpack.c.h.b16 %v368
        %v649 = vunpack.c.l.b16 %v369
        %v650 = vunpack.c.h.b16 %v369
        %v651 = vunpack.c.l.b16 %v370
        %v652 = vunpack.c.h.b16 %v370
        %v653 = vunpack.c.l.b16 %v371
        %v654 = vunpack.c.h.b16 %v371
        %v655 = vunpack.c.l.b16 %v372
        %v656 = vunpack.c.h.b16 %v372
        %v657 = vunpack.c.l.b16 %v373
        %v658 = vunpack.c.h.b16 %v373
        %v659 = vunpack.c.l.b16 %v374
        %v660 = vunpack.c.h.b16 %v374
        %v661 = vunpack.c.l.b16 %v375
        %v662 = vunpack.c.h.b16 %v375
        %v663 = vunpack.c.l.b16 %v376
        %v664 = vunpack.c.h.b16 %v376
        %v665 = vunpack.c.l.b16 %v377
        %v666 = vunpack.c.h.b16 %v377
        %v667 = vunpack.c.l.b16 %v378
        %v668 = vunpack.c.h.b16 %v378
        %v669 = vunpack.c.l.b16 %v379
        %v670 = vunpack.c.h.b16 %v379
        %v671 = vunpack.c.l.b16 %v380
        %v672 = vunpack.c.h.b16 %v380
        %v673 = vunpack.c.l.b16 %v381
        %v674 = vunpack.c.h.b16 %v381
        %v675 = vunpack.c.l.b16 %v382
        %v676 = vunpack.c.h.b16 %v382
        %v677 = vunpack.c.l.b16 %v383
        %v678 = vunpack.c.h.b16 %v383
        %v679 = vunpack.c.l.b16 %v384
        %v680 = vunpack.c.h.b16 %v384
        %v681 = vunpack.c.l.b16 %v385
        %v682 = vunpack.c.h.b16 %v385
        %v683 = vunpack.c.l.b16 %v386
        %v684 = vunpack.c.h.b16 %v386
        %v685 = vunpack.c.l.b16 %v387
        %v686 = vunpack.c.h.b16 %v387
        %v687 = vunpack.c.l.b16 %v388
        %v688 = vunpack.c.h.b16 %v388
        %v689 = vunpack.c.l.b16 %v389
        %v690 = vunpack.c.h.b16 %v389
        %v691 = vunpack.c.l.b16 %v390
        %v692 = vunpack.c.h.b16 %v390
        %v693 = vunpack.c.l.b16 %v391
        %v694 = vunpack.c.h.b16 %v391
        %v695 = vunpack.c.l.b16 %v392
        %v696 = vunpack.c.h.b16 %v392
        %v697 = vunpack.c.l.b16 %v393
        %v698 = vunpack.c.h.b16 %v393
        %v699 = vunpack.c.l.b16 %v394
        %v700 = vunpack.c.h.b16 %v394
        %v701 = vunpack.c.l.b16 %v395
        %v702 = vunpack.c.h.b16 %v395
        %v703 = vunpack.c.l.b16 %v396
        %v704 = vunpack.c.h.b16 %v396
        %v705 = vunpack.c.l.b16 %v397
        %v706 = vunpack.c.h.b16 %v397
        %v707 = vunpack.c.l.b16 %v398
        %v708 = vunpack.c.h.b16 %v398
        %v709 = vunpack.c.l.b16 %v399
        %v710 = vunpack.c.h.b16 %v399
        %v711 = vunpack.c.l.b16 %v400
        %v712 = vunpack.c.h.b16 %v400
        %v713 = vunpack.c.l.b16 %v401
        %v714 = vunpack.c.h.b16 %v401
        %v715 = vunpack.c.l.b16 %v402
        %v716 = vunpack.c.h.b16 %v402
        %v717 = vunpack.c.l.b16 %v403
        %v718 = vunpack.c.h.b16 %v403
        %v719 = vunpack.c.l.b16 %v404
        %v720 = vunpack.c.h.b16 %v404
        %v721 = vunpack.c.l.b16 %v405
        %v722 = vunpack.c.h.b16 %v405
        %v723 = vunpack.c.l.b16 %v406
        %v724 = vunpack.c.h.b16 %v406
        %v725 = vunpack.c.l.b16 %v407
        %v726 = vunpack.c.h.b16 %v407
        %v727 = vunpack.c.l.b16 %v408
        %v728 = vunpack.c.h.b16 %v408
        %v729 = vunpack.c.l.b16 %v409
        %v730 = vunpack.c.h.b16 %v409
        %v731 = vunpack.c.l.b16 %v410
        %v732 = vunpack.c.h.b16 %v410
        %v733 = vunpack.c.l.b16 %v411
        %v734 = vunpack.c.h.b16 %v411
        %v735 = vunpack.c.l.b16 %v412
        %v736 = vunpack.c.h.b16 %v412
        %v737 = vunpack.c.l.b16 %v413
        %v738 = vunpack.c.h.b16 %v413
        %v739 = vunpack.c.l.b16 %v414
        %v740 = vunpack.c.h.b16 %v414
        %v741 = vunpack.c.l.b16 %v415
        %v742 = vunpack.c.h.b16 %v415
        %v743 = vunpack.c.l.b16 %v416
        %v744 = vunpack.c.h.b16 %v416
        %v745 = vunpack.c.l.b16 %v417
        %v746 = vunpack.c.h.b16 %v417
        %v747 = vunpack.c.l.b16 %v418
        %v748 = vunpack.c.h.b16 %v418
        %v749 = vunpack.c.l.b16 %v419
        %v750 = vunpack.c.h.b16 %v419
        %v751 = vunpack.c.l.b16 %v420
        %v752 = vunpack.c.h.b16 %v420
        %v753 = vunpack.c.l.b16 %v421
        %v754 = vunpack.c.h.b16 %v421
        %v755 = vunpack.c.l.b16 %v422
        %v756 = vunpack.c.h.b16 %v422
        %v757 = vunpack.c.l.b16 %v423
        %v758 = vunpack.c.h.b16 %v423
        %v759 = vunpack.c.l.b16 %v424
        %v760 = vunpack.c.h.b16 %v424
        %v761 = vunpack.c.l.b16 %v425
        %v762 = vunpack.c.h.b16 %v425
        %v763 = vunpack.c.l.b16 %v426
        %v764 = vunpack.c.h.b16 %v426
        %v765 = vunpack.c.l.b16 %v427
        %v766 = vunpack.c.h.b16 %v427
        %v767 = vpack.c.b16 %v577, %v575
        %v768 = vpack.c.b16 %v578, %v576
        %v769 = vpack.c.b16 %v581, %v579
        %v770 = vpack.c.b16 %v582, %v580
        %v771 = vpack.c.b16 %v585, %v583
        %v772 = vpack.c.b16 %v586, %v584
        %v773 = vpack.c.b16 %v589, %v587
        %v774 = vpack.c.b16 %v590, %v588
        %v775 = vpack.c.b16 %v593, %v591
        %v776 = vpack.c.b16 %v594, %v592
        %v777 = vpack.c.b16 %v597, %v595
        %v778 = vpack.c.b16 %v598, %v596
        %v779 = vpack.c.b16 %v601, %v599
        %v780 = vpack.c.b16 %v602, %v600
        %v781 = vpack.c.b16 %v605, %v603
        %v782 = vpack.c.b16 %v606, %v604
        %v783 = vpack.c.b16 %v609, %v607
        %v784 = vpack.c.b16 %v610, %v608
        %v785 = vpack.c.b16 %v613, %v611
        %v786 = vpack.c.b16 %v614, %v612
        %v787 = vpack.c.b16 %v617, %v615
        %v788 = vpack.c.b16 %v618, %v616
        %v789 = vpack.c.b16 %v621, %v619
        %v790 = vpack.c.b16 %v622, %v620
        %v791 = vpack.c.b16 %v625, %v623
        %v792 = vpack.c.b16 %v626, %v624
        %v793 = vpack.c.b16 %v629, %v627
        %v794 = vpack.c.b16 %v630, %v628
        %v795 = vpack.c.b16 %v633, %v631
        %v796 = vpack.c.b16 %v634, %v632
        %v797 = vpack.c.b16 %v637, %v635
        %v798 = vpack.c.b16 %v638, %v636
        %v799 = vpack.c.b16 %v641, %v639
        %v800 = vpack.c.b16 %v642, %v640
        %v801 = vpack.c.b16 %v645, %v643
        %v802 = vpack.c.b16 %v646, %v644
        %v803 = vpack.c.b16 %v649, %v647
        %v804 = vpack.c.b16 %v650, %v648
        %v805 = vpack.c.b16 %v653, %v651
        %v806 = vpack.c.b16 %v654, %v652
        %v807 = vpack.c.b16 %v657, %v655
        %v808 = vpack.c.b16 %v658, %v656
        %v809 = vpack.c.b16 %v661, %v659
        %v810 = vpack.c.b16 %v662, %v660
        %v811 = vpack.c.b16 %v665, %v663
        %v812 = vpack.c.b16 %v666, %v664
        %v813 = vpack.c.b16 %v669, %v667
        %v814 = vpack.c.b16 %v670, %v668
        %v815 = vpack.c.b16 %v673, %v671
        %v816 = vpack.c.b16 %v674, %v672
        %v817 = vpack.c.b16 %v677, %v675
        %v818 = vpack.c.b16 %v678, %v676
        %v819 = vpack.c.b16 %v681, %v679
        %v820 = vpack.c.b16 %v682, %v680
        %v821 = vpack.c.b16 %v685, %v683
        %v822 = vpack.c.b16 %v686, %v684
        %v823 = vpack.c.b16 %v689, %v687
        %v824 = vpack.c.b16 %v690, %v688
        %v825 = vpack.c.b16 %v693, %v691
        %v826 = vpack.c.b16 %v694, %v692
        %v827 = vpack.c.b16 %v697, %v695
        %v828 = vpack.c.b16 %v698, %v696
        %v829 = vpack.c.b16 %v701, %v699
        %v830 = vpack.c.b16 %v702, %v700
        %v831 = vpack.c.b16 %v705, %v703
        %v832 = vpack.c.b16 %v706, %v704
        %v833 = vpack.c.b16 %v709, %v707
        %v834 = vpack.c.b16 %v710, %v708
        %v835 = vpack.c.b16 %v713, %v711
        %v836 = vpack.c.b16 %v714, %v712
        %v837 = vpack.c.b16 %v717, %v715
        %v838 = vpack.c.b16 %v718, %v716
        %v839 = vpack.c.b16 %v721, %v719
        %v840 = vpack.c.b16 %v722, %v720
        %v841 = vpack.c.b16 %v725, %v723
        %v842 = vpack.c.b16 %v726, %v724
        %v843 = vpack.c.b16 %v729, %v727
        %v844 = vpack.c.b16 %v730, %v728
        %v845 = vpack.c.b16 %v733, %v731
        %v846 = vpack.c.b16 %v734, %v732
        %v847 = vpack.c.b16 %v737, %v735
        %v848 = vpack.c.b16 %v738, %v736
        %v849 = vpack.c.b16 %v741, %v739
        %v850 = vpack.c.b16 %v742, %v740
        %v851 = vpack.c.b16 %v745, %v743
        %v852 = vpack.c.b16 %v746, %v744
        %v853 = vpack.c.b16 %v749, %v747
        %v854 = vpack.c.b16 %v750, %v748
        %v855 = vpack.c.b16 %v753, %v751
        %v856 = vpack.c.b16 %v754, %v752
        %v857 = vpack.c.b16 %v757, %v755
        %v858 = vpack.c.b16 %v758, %v756
        %v859 = vpack.c.b16 %v761, %v759
        %v860 = vpack.c.b16 %v762, %v760
        %v861 = vpack.c.b16 %v765, %v763
        %v862 = vpack.c.b16 %v766, %v764
        %959 = vmatprep.subr.bf16.mxu0 %v768
        %960 = vmatpush1.bf16.msra.mxu0 %v767
        %961 = vmatprep.subr.bf16.mxu0 %v770
        %962 = vmatpush1.bf16.msra.mxu0 %v769
        %963 = vmatprep.subr.bf16.mxu0 %v772
        %964 = vmatpush1.bf16.msra.mxu0 %v771
        %965 = vmatprep.subr.bf16.mxu0 %v774
        %966 = vmatpush1.bf16.msra.mxu0 %v773
        %967 = vmatprep.subr.bf16.mxu0 %v776
        %968 = vmatpush1.bf16.msra.mxu0 %v775
        %969 = vmatprep.subr.bf16.mxu0 %v778
        %970 = vmatpush1.bf16.msra.mxu0 %v777
        %971 = vmatprep.subr.bf16.mxu0 %v780
        %972 = vmatpush1.bf16.msra.mxu0 %v779
        %973 = vmatprep.subr.bf16.mxu0 %v782
        %974 = vmatpush1.bf16.msra.mxu0 %v781
        %975 = vmatprep.subr.bf16.mxu0 %v784
        %976 = vmatpush1.bf16.msra.mxu0 %v783
        %977 = vmatprep.subr.bf16.mxu0 %v786
        %978 = vmatpush1.bf16.msra.mxu0 %v785
        %979 = vmatprep.subr.bf16.mxu0 %v788
        %980 = vmatpush1.bf16.msra.mxu0 %v787
        %981 = vmatprep.subr.bf16.mxu0 %v790
        %982 = vmatpush1.bf16.msra.mxu0 %v789
        %983 = vmatprep.subr.bf16.mxu0 %v792
        %984 = vmatpush1.bf16.msra.mxu0 %v791
        %985 = vmatprep.subr.bf16.mxu0 %v794
        %986 = vmatpush1.bf16.msra.mxu0 %v793
        %987 = vmatprep.subr.bf16.mxu0 %v796
        %988 = vmatpush1.bf16.msra.mxu0 %v795
        %989 = vmatprep.subr.bf16.mxu0 %v798
        %990 = vmatpush1.bf16.msra.mxu0 %v797
        %991 = vmatprep.mubr.bf16.mxu0 %v456
        %992 = vmatmul.mubr.bf16.gmra.mrb[0].mxu0 %v455
        %v993 = vpop.f32.mrb[0].mxu0
        %v994 = vadd.f32 0.0, %v993
        %v995 = vpop.f32.mrb[0].mxu0
        %v996 = vadd.f32 0.0, %v995
        %v997 = vpop.f32.mrb[0].mxu0
        %v998 = vadd.f32 0.0, %v997
        %v999 = vpop.f32.mrb[0].mxu0
        %v1000 = vadd.f32 0.0, %v999
        %1001 = vmatprep.mubr.bf16.mxu0 %v462
        %1002 = vmatmul.mubr.bf16.gmra.mrb[0].mxu0 %v461
        %v1003 = vpop.f32.mrb[0].mxu0
        %v1004 = vadd.f32 0.0, %v1003
        %v1005 = vpop.f32.mrb[0].mxu0
        %v1006 = vadd.f32 0.0, %v1005
        %v1007 = vpop.f32.mrb[0].mxu0
        %v1008 = vpop.f32.mrb[0].mxu0
        %1009 = vdwg.mxu0
        %1010 = vmatprep.subr.bf16.mxu0 %v800
        %1011 = vmatpush1.bf16.msra.mxu0 %v799
        %1012 = vmatprep.subr.bf16.mxu0 %v802
        %1013 = vmatpush1.bf16.msra.mxu0 %v801
        %1014 = vmatprep.subr.bf16.mxu0 %v804
        %1015 = vmatpush1.bf16.msra.mxu0 %v803
        %1016 = vmatprep.subr.bf16.mxu0 %v806
        %1017 = vmatpush1.bf16.msra.mxu0 %v805
        %1018 = vmatprep.subr.bf16.mxu0 %v808
        %1019 = vmatpush1.bf16.msra.mxu0 %v807
        %1020 = vmatprep.subr.bf16.mxu0 %v810
        %1021 = vmatpush1.bf16.msra.mxu0 %v809
        %1022 = vmatprep.subr.bf16.mxu0 %v812
        %1023 = vmatpush1.bf16.msra.mxu0 %v811
        %1024 = vmatprep.subr.bf16.mxu0 %v814
        %1025 = vmatpush1.bf16.msra.mxu0 %v813
        %1026 = vmatprep.subr.bf16.mxu0 %v816
        %1027 = vmatpush1.bf16.msra.mxu0 %v815
        %1028 = vmatprep.subr.bf16.mxu0 %v818
        %1029 = vmatpush1.bf16.msra.mxu0 %v817
        %1030 = vmatprep.subr.bf16.mxu0 %v820
        %1031 = vmatpush1.bf16.msra.mxu0 %v819
        %1032 = vmatprep.subr.bf16.mxu0 %v822
        %1033 = vmatpush1.bf16.msra.mxu0 %v821
        %1034 = vmatprep.subr.bf16.mxu0 %v824
        %1035 = vmatpush1.bf16.msra.mxu0 %v823
        %1036 = vmatprep.subr.bf16.mxu0 %v826
        %1037 = vmatpush1.bf16.msra.mxu0 %v825
        %1038 = vmatprep.subr.bf16.mxu0 %v828
        %1039 = vmatpush1.bf16.msra.mxu0 %v827
        %1040 = vmatprep.subr.bf16.mxu0 %v830
        %1041 = vmatpush1.bf16.msra.mxu0 %v829
        %1042 = vmatprep.mubr.bf16.mxu0 %v458
        %1043 = vmatmul.mubr.bf16.gmra.mrb[0].mxu0 %v457
        %v1044 = vpop.f32.mrb[0].mxu0
        %v1045 = vadd.f32 %v994, %v1044
        %v1046 = vpop.f32.mrb[0].mxu0
        %v1047 = vadd.f32 %v996, %v1046
        %v1048 = vpop.f32.mrb[0].mxu0
        %v1049 = vadd.f32 %v998, %v1048
        %v1050 = vpop.f32.mrb[0].mxu0
        %v1051 = vadd.f32 %v1000, %v1050
        %1052 = vmatprep.mubr.bf16.mxu0 %v464
        %1053 = vmatmul.mubr.bf16.gmra.mrb[0].mxu0 %v463
        %v1054 = vpop.f32.mrb[0].mxu0
        %v1055 = vadd.f32 %v1004, %v1054
        %v1056 = vpop.f32.mrb[0].mxu0
        %v1057 = vadd.f32 %v1006, %v1056
        %v1058 = vpop.f32.mrb[0].mxu0
        %v1059 = vpop.f32.mrb[0].mxu0
        %1060 = vdwg.mxu0
        %1061 = vmatprep.subr.bf16.mxu0 %v832
        %1062 = vmatpush1.bf16.msra.mxu0 %v831
        %1063 = vmatprep.subr.bf16.mxu0 %v834
        %1064 = vmatpush1.bf16.msra.mxu0 %v833
        %1065 = vmatprep.subr.bf16.mxu0 %v836
        %1066 = vmatpush1.bf16.msra.mxu0 %v835
        %1067 = vmatprep.subr.bf16.mxu0 %v838
        %1068 = vmatpush1.bf16.msra.mxu0 %v837
        %1069 = vmatprep.subr.bf16.mxu0 %v840
        %1070 = vmatpush1.bf16.msra.mxu0 %v839
        %1071 = vmatprep.subr.bf16.mxu0 %v842
        %1072 = vmatpush1.bf16.msra.mxu0 %v841
        %1073 = vmatprep.subr.bf16.mxu0 %v844
        %1074 = vmatpush1.bf16.msra.mxu0 %v843
        %1075 = vmatprep.subr.bf16.mxu0 %v846
        %1076 = vmatpush1.bf16.msra.mxu0 %v845
        %1077 = vmatprep.subr.bf16.mxu0 %v848
        %1078 = vmatpush1.bf16.msra.mxu0 %v847
        %1079 = vmatprep.subr.bf16.mxu0 %v850
        %1080 = vmatpush1.bf16.msra.mxu0 %v849
        %1081 = vmatprep.subr.bf16.mxu0 %v852
        %1082 = vmatpush1.bf16.msra.mxu0 %v851
        %1083 = vmatprep.subr.bf16.mxu0 %v854
        %1084 = vmatpush1.bf16.msra.mxu0 %v853
        %1085 = vmatprep.subr.bf16.mxu0 %v856
        %1086 = vmatpush1.bf16.msra.mxu0 %v855
        %1087 = vmatprep.subr.bf16.mxu0 %v858
        %1088 = vmatpush1.bf16.msra.mxu0 %v857
        %1089 = vmatprep.subr.bf16.mxu0 %v860
        %1090 = vmatpush1.bf16.msra.mxu0 %v859
        %1091 = vmatprep.subr.bf16.mxu0 %v862
        %1092 = vmatpush1.bf16.msra.mxu0 %v861
        %1093 = vmatprep.mubr.bf16.mxu0 %v460
        %1094 = vmatmul.mubr.bf16.gmra.mrb[0].mxu0 %v459
        %v1095 = vpop.f32.mrb[0].mxu0
        %v1096 = vadd.f32 %v1045, %v1095
        %v1097 = vpop.f32.mrb[0].mxu0
        %v1098 = vadd.f32 %v1047, %v1097
        %v1099 = vpop.f32.mrb[0].mxu0
        %v1100 = vadd.f32 %v1049, %v1099
        %v1101 = vpop.f32.mrb[0].mxu0
        %v1102 = vadd.f32 %v1051, %v1101
        %1103 = vmatprep.mubr.bf16.mxu0 %v466
        %1104 = vmatmul.mubr.bf16.gmra.mrb[0].mxu0 %v465
        %v1105 = vpop.f32.mrb[0].mxu0
        %v1106 = vadd.f32 %v1055, %v1105
        %v1107 = vpop.f32.mrb[0].mxu0
        %v1108 = vadd.f32 %v1057, %v1107
        %v1109 = vpop.f32.mrb[0].mxu0
        %v1110 = vpop.f32.mrb[0].mxu0
        %1111 = vdwg.mxu0
        %v1112 = vadd.f32 %v317, %v1096
        %v1113 = vadd.f32 %v318, %v1098
        %v1114 = vadd.f32 %v319, %v1100
        %v1115 = vadd.f32 %v320, %v1102
        %v1116 = vadd.f32 %v321, %v1106
        %v1117 = vadd.f32 %v322, %v1108
        %1118 = vst [vmem:[#allocation2] sm:$0xff] %v1112
        %1119 = vst [vmem:[#allocation2 + $0x8] sm:$0xff] %v1113
        %1120 = vst [vmem:[#allocation2 + $0x10] sm:$0xff] %v1114
        %1121 = vst [vmem:[#allocation2 + $0x18] sm:$0xff] %v1115
        %1122 = vst [vmem:[#allocation2 + $0x20] sm:$0xff] %v1116
        %1123 = vst [vmem:[#allocation2 + $0x28] sm:$0xff] %v1117
        %p1124 = scmp.eq.s32.totalorder %s21, 2
        // Predicated region
        $region60: #{alexnet_forward.15} parent=50 // pred_check
          %p1125 = pneg %p1124
        $region61: #{alexnet_forward.15} parent=50 // pred_check_branch
          %1127 = sbr.rel (%p1125) target = $region63
        $region62: #{alexnet_forward.15} parent=50 // pred_region
          %v1128 = vld [vmem:[#allocation2] sm:$0xff]
          %v1129 = vld [vmem:[#allocation2 + $0x8] sm:$0xff]
          %v1130 = vld [vmem:[#allocation2 + $0x10] sm:$0xff]
          %v1131 = vld [vmem:[#allocation2 + $0x18] sm:$0xff]
          %v1132 = vld [vmem:[#allocation2 + $0x20] sm:$0xff]
          %v1133 = vld [vmem:[#allocation2 + $0x28] sm:$0xff]
          %v1134 = vld [vmem:[%s293] sm:$0x3]
          %v1136 = vlaneseq
          %v1137 = vshrl.u32 %v1136, 7
          %v1138 = vsub.s32 0, %v1137
          %v1139 = vrot.slane %v1134, %v1138
          %v1140 = vlaneseq
          %v1141 = vshrl.u32 %v1140, 7
          %v1142 = vsub.s32 1, %v1141
          %v1143 = vrot.slane %v1134, %v1142
          %v1146 = vadd.f32 %v1128, %v1139
          %v1147 = vadd.f32 %v1129, %v1143
          %v1148 = vadd.f32 %v1130, %v1139
          %v1149 = vadd.f32 %v1131, %v1143
          %v1150 = vadd.f32 %v1132, %v1139
          %v1151 = vadd.f32 %v1133, %v1143
          %v1152 = vmax.f32 %v1146, 0.0
          %v1153 = vmax.f32 %v1147, 0.0
          %v1154 = vmax.f32 %v1148, 0.0
          %v1155 = vmax.f32 %v1149, 0.0
          %v1156 = vmax.f32 %v1150, 0.0
          %v1157 = vmax.f32 %v1151, 0.0
          %1158 = vst [vmem:[%s304] sm:$0xff] %v1152
          %1159 = vst [vmem:[%s304 + $0x8] sm:$0xff] %v1153
          %1160 = vst [vmem:[%s304 + $0x10] sm:$0xff] %v1154
          %1161 = vst [vmem:[%s304 + $0x18] sm:$0xff] %v1155
          %1162 = vst [vmem:[%s304 + $0x20] sm:$0xff] %v1156
          %1163 = vst [vmem:[%s304 + $0x28] sm:$0xff] %v1157
        $region63: #{alexnet_forward.15} parent=50 // pred_fallthru
          _
        %s1164 = smul.u32 3, %s19
        %s1165 = smul.u32 2, %s20
        %p1166 = scmp.lt.s32.totalorder %s1164, 2
        %s1167 = scalar_select %p1166, %s1164, 2
        %p1168 = scmp.lt.s32.totalorder %s1165, 1
        %s1169 = scalar_select %p1168, %s1165, 1
        %s1170 = smul.addr %s1167, 2
        %s1171 = sadd.s32 %s1169, %s1170
        %s1172 = smul.addr %s1171, 8
        %s1173 = scalar_lea.vmem %s3, %s1172
        // Predicated region
        $region64: #{alexnet_forward.15} parent=50 // pred_check
          %p1174 = pneg %p135
        $region65: #{alexnet_forward.15} parent=50 // pred_check_branch
          %1176 = sbr.rel (%p1174) target = $region67
        $region66: #{alexnet_forward.15} parent=50 // pred_region
          %s1177 = smul.u32 3, %s19
          %s1178 = smul.u32 2, %s20
        $region67: #{alexnet_forward.15} parent=50 // pred_fallthru
          _
        // Predicated region
        $region68: #{alexnet_forward.15} parent=50 // pred_check
          %p1179 = pneg %p135
        $region69: #{alexnet_forward.15} parent=50 // pred_check_branch
          %1181 = sbr.rel (%p1179) target = $region71
        $region70: #{alexnet_forward.15} parent=50 // pred_region
          %s1182 = smul.u32 3, %s19
          %s1183 = smul.u32 2, %s20
          %p1184 = scmp.lt.s32.totalorder %s1182, 2
          %s1185 = scalar_select %p1184, %s1182, 2
          %p1186 = scmp.lt.s32.totalorder %s1183, 1
          %s1187 = scalar_select %p1186, %s1183, 1
          %s1188 = smul.addr %s1185, 2
          %s1189 = sadd.s32 %s1187, %s1188
          %s1190 = smul.addr %s1189, 8
          %s1191 = scalar_lea.vmem %s3, %s1190
        $region71: #{alexnet_forward.15} parent=50 // pred_fallthru
          _
      $region51: #{alexnet_forward.15} parent=5 // pred_fallthru
        _
      %p1192 = scmp.le.s32.totalorder 2, %s9
      // Predicated region
      $region72: #{alexnet_forward.15} parent=5 // pred_check
        %p1193 = pneg %p1192
      $region73: #{alexnet_forward.15} parent=5 // pred_check_branch
        %1195 = sbr.rel (%p1193) target = $region75
      $region74: #{alexnet_forward.15} parent=5 // pred_region
        %s1196 = ssub.s32 %s9, 2
      $region75: #{alexnet_forward.15} parent=5 // pred_fallthru
        _
    $region6: #{alexnet_forward.15} parent=1 // loop_footer
      %s13 = sadd.s32 1, %s9
    $region7: #{alexnet_forward.15} parent=1 // loop_footer_branch
      %8 = sbr.rel target = $region3
    $region8: #{alexnet_forward.15} parent=1 // loop_exit
      _

// kernel: alexnet_forward.16
$region0: #{alexnet_forward.16}
  #allocation0 [shape = 'u32[]', space=smem, size = 0x4, offset = 0x4, fixed_abs, tag = 'smem constant byte address 0x4 - core index']
  #allocation1 [shape = 'u32[144,128]{1,0:T(1,128)}', space=vmem, size = 0x12000, scoped, tag = 'internal scratch']
  %s0 = inlined_call_operand.vmem [shape: f32[2,2,2,256], index: 0, kind: input, shape index: {}]
  %s1 = inlined_call_operand.vmem [shape: f32[2,2,1,256], index: 1, kind: input, shape index: {}]
  %s2 = inlined_call_operand.vmem [shape: f32[2,1,2,256], index: 2, kind: input, shape index: {}]
  %s3 = inlined_call_operand.vmem [shape: f32[2,1,1,256], index: 3, kind: input, shape index: {}]
  %s4 = inlined_call_operand.vmem [shape: f32[2,1,1,256], index: 4, kind: output, shape index: {}]
  %s5 = sld [smem:[#allocation0]]
  $region49: #{alexnet_forward.16} parent=0
    _
  %s7 = ssub.s32 1, %s5
  %s8 = scalar_select 0, %s7, %s5
  loop: start=0, step=1, limit=4
  $region2: #{alexnet_forward.16} parent=0 // loop_pre_header
    _
  $region3: #{alexnet_forward.16} parent=0 // loop_header
    %s10 = sphi 0, %s14
    %p11 = scmp.ge.s32.totalorder %s10, 4
    %s20 = sphi 0, %s22
    %s23 = sphi 0, %s20
    %s24 = sphi 0, %s23
    %s40 = sphi 0, %s24
    %s46 = sphi 0, %s48
    %s49 = sphi 0, %s46
    %s50 = sphi 0, %s49
    %s66 = sphi 0, %s50
    %s72 = sphi 0, %s74
    %s75 = sphi 0, %s72
    %s76 = sphi 0, %s75
    %s92 = sphi 0, %s76
    %s98 = sphi 0, %s100
    %s101 = sphi 0, %s98
    %s102 = sphi 0, %s101
    %s118 = sphi 0, %s102
    %s124 = sphi 0, %s126
    %s127 = sphi 0, %s124
    %s128 = sphi 0, %s127
    %s144 = sphi 0, %s128
  $region4: #{alexnet_forward.16} parent=0 // loop_header_branch
    %13 = sbr.rel (%p11) target = $region8
  $region5: #{alexnet_forward.16} parent=0 // loop_body
    %s15 = ssub.s32 %s10, 1
    %s16 = ssub.s32 %s10, 2
    %s17 = sadd.s32 %s10, 1
    %s18 = ssub.s32 %s10, %s17
    %p19 = scmp.eq.s32.totalorder %s18, 0
    %s21 = sadd.s32 %s20, 1
    %s22 = scalar_select %p19, %s20, %s21
    %p25 = pneg %p19
    %p26 = scmp.eq.s32.totalorder %s10, 1
    %p27 = por %p25, %p26
    %p28 = scmp.ne.s32.totalorder %s20, %s23
    %p29 = scmp.eq.s32.totalorder %s10, 0
    %p30 = por %p28, %p29
    %p31 = scmp.ne.s32.totalorder %s20, %s23
    %p32 = scmp.eq.s32.totalorder %s15, 1
    %p33 = por %p31, %p32
    %p34 = scmp.ne.s32.totalorder %s23, %s24
    %p35 = scmp.eq.s32.totalorder %s15, 0
    %p36 = por %p34, %p35
    %p37 = scmp.ne.s32.totalorder %s23, %s24
    %p38 = scmp.eq.s32.totalorder %s16, 1
    %p39 = por %p37, %p38
    %p41 = scmp.ne.s32.totalorder %s24, %s40
    %p42 = scmp.eq.s32.totalorder %s16, 0
    %p43 = por %p41, %p42
    %s44 = ssub.s32 %s10, %s17
    %p45 = scmp.eq.s32.totalorder %s44, 0
    %s47 = sadd.s32 %s46, 1
    %s48 = scalar_select %p45, %s46, %s47
    %p51 = pneg %p45
    %p52 = scmp.eq.s32.totalorder %s10, 1
    %p53 = por %p51, %p52
    %p54 = scmp.ne.s32.totalorder %s46, %s49
    %p55 = scmp.eq.s32.totalorder %s10, 0
    %p56 = por %p54, %p55
    %p57 = scmp.ne.s32.totalorder %s46, %s49
    %p58 = scmp.eq.s32.totalorder %s15, 1
    %p59 = por %p57, %p58
    %p60 = scmp.ne.s32.totalorder %s49, %s50
    %p61 = scmp.eq.s32.totalorder %s15, 0
    %p62 = por %p60, %p61
    %p63 = scmp.ne.s32.totalorder %s49, %s50
    %p64 = scmp.eq.s32.totalorder %s16, 1
    %p65 = por %p63, %p64
    %p67 = scmp.ne.s32.totalorder %s50, %s66
    %p68 = scmp.eq.s32.totalorder %s16, 0
    %p69 = por %p67, %p68
    %s70 = ssub.s32 %s10, %s17
    %p71 = scmp.eq.s32.totalorder %s70, 0
    %s73 = sadd.s32 %s72, 1
    %s74 = scalar_select %p71, %s72, %s73
    %p77 = pneg %p71
    %p78 = scmp.eq.s32.totalorder %s10, 1
    %p79 = por %p77, %p78
    %p80 = scmp.ne.s32.totalorder %s72, %s75
    %p81 = scmp.eq.s32.totalorder %s10, 0
    %p82 = por %p80, %p81
    %p83 = scmp.ne.s32.totalorder %s72, %s75
    %p84 = scmp.eq.s32.totalorder %s15, 1
    %p85 = por %p83, %p84
    %p86 = scmp.ne.s32.totalorder %s75, %s76
    %p87 = scmp.eq.s32.totalorder %s15, 0
    %p88 = por %p86, %p87
    %p89 = scmp.ne.s32.totalorder %s75, %s76
    %p90 = scmp.eq.s32.totalorder %s16, 1
    %p91 = por %p89, %p90
    %p93 = scmp.ne.s32.totalorder %s76, %s92
    %p94 = scmp.eq.s32.totalorder %s16, 0
    %p95 = por %p93, %p94
    %s96 = ssub.s32 %s10, %s17
    %p97 = scmp.eq.s32.totalorder %s96, 0
    %s99 = sadd.s32 %s98, 1
    %s100 = scalar_select %p97, %s98, %s99
    %p103 = pneg %p97
    %p104 = scmp.eq.s32.totalorder %s10, 1
    %p105 = por %p103, %p104
    %p106 = scmp.ne.s32.totalorder %s98, %s101
    %p107 = scmp.eq.s32.totalorder %s10, 0
    %p108 = por %p106, %p107
    %p109 = scmp.ne.s32.totalorder %s98, %s101
    %p110 = scmp.eq.s32.totalorder %s15, 1
    %p111 = por %p109, %p110
    %p112 = scmp.ne.s32.totalorder %s101, %s102
    %p113 = scmp.eq.s32.totalorder %s15, 0
    %p114 = por %p112, %p113
    %p115 = scmp.ne.s32.totalorder %s101, %s102
    %p116 = scmp.eq.s32.totalorder %s16, 1
    %p117 = por %p115, %p116
    %p119 = scmp.ne.s32.totalorder %s102, %s118
    %p120 = scmp.eq.s32.totalorder %s16, 0
    %p121 = por %p119, %p120
    %s122 = ssub.s32 %s10, %s17
    %p123 = scmp.eq.s32.totalorder %s122, 0
    %s125 = sadd.s32 %s124, 1
    %s126 = scalar_select %p123, %s124, %s125
    %p129 = pneg %p123
    %p130 = scmp.eq.s32.totalorder %s10, 1
    %p131 = por %p129, %p130
    %p132 = scmp.ne.s32.totalorder %s124, %s127
    %p133 = scmp.eq.s32.totalorder %s10, 0
    %p134 = por %p132, %p133
    %p135 = scmp.ne.s32.totalorder %s124, %s127
    %p136 = scmp.eq.s32.totalorder %s15, 1
    %p137 = por %p135, %p136
    %p138 = scmp.ne.s32.totalorder %s127, %s128
    %p139 = scmp.eq.s32.totalorder %s15, 0
    %p140 = por %p138, %p139
    %p141 = scmp.ne.s32.totalorder %s127, %s128
    %p142 = scmp.eq.s32.totalorder %s16, 1
    %p143 = por %p141, %p142
    %p145 = scmp.ne.s32.totalorder %s128, %s144
    %p146 = scmp.eq.s32.totalorder %s16, 0
    %p147 = por %p145, %p146
    %p148 = scmp.le.s32.totalorder 1, %s10
    %p149 = scmp.lt.s32.totalorder %s10, 3
    %p150 = pnand %p148, %p149
    %p151 = pneg %p150
    // Predicated region
    $region9: #{alexnet_forward.16} parent=5 // pred_check
      _
    $region10: #{alexnet_forward.16} parent=5 // pred_check_branch
      %153 = sbr.rel (%p150) target = $region12
    $region11: #{alexnet_forward.16} parent=5 // pred_region
      %s154 = ssub.s32 %s10, 1
    $region12: #{alexnet_forward.16} parent=5 // pred_fallthru
      _
    %p155 = scmp.lt.s32.totalorder %s10, 2
    // Predicated region
    $region13: #{alexnet_forward.16} parent=5 // pred_check
      %p156 = pneg %p155
    $region14: #{alexnet_forward.16} parent=5 // pred_check_branch
      %158 = sbr.rel (%p156) target = $region16
    $region15: #{alexnet_forward.16} parent=5 // pred_region
      // Predicated region
      $region17: #{alexnet_forward.16} parent=15 // pred_check
        %p159 = pneg %p30
      $region18: #{alexnet_forward.16} parent=15 // pred_check_branch
        %161 = sbr.rel (%p159) target = $region20
      $region19: #{alexnet_forward.16} parent=15 // pred_region
        %p162 = scmp.lt.s32.totalorder %s10, 1
        %s163 = scalar_select %p162, %s10, 1
        %s164 = smul.addr %s163, 4
        %s165 = smul.addr %s164, 2
        %s166 = scalar_lea.vmem %s0, %s165
      $region20: #{alexnet_forward.16} parent=15 // pred_fallthru
        _
      // Predicated region
      $region21: #{alexnet_forward.16} parent=15 // pred_check
        %p167 = pneg %p56
      $region22: #{alexnet_forward.16} parent=15 // pred_check_branch
        %169 = sbr.rel (%p167) target = $region24
      $region23: #{alexnet_forward.16} parent=15 // pred_region
        %p170 = scmp.lt.s32.totalorder %s10, 1
        %s171 = scalar_select %p170, %s10, 1
        %s172 = smul.addr %s171, 4
        %s173 = scalar_lea.vmem %s1, %s172
      $region24: #{alexnet_forward.16} parent=15 // pred_fallthru
        _
      // Predicated region
      $region25: #{alexnet_forward.16} parent=15 // pred_check
        %p174 = pneg %p82
      $region26: #{alexnet_forward.16} parent=15 // pred_check_branch
        %176 = sbr.rel (%p174) target = $region28
      $region27: #{alexnet_forward.16} parent=15 // pred_region
        %p177 = scmp.lt.s32.totalorder %s10, 1
        %s178 = scalar_select %p177, %s10, 1
        %s179 = smul.addr %s178, 2
        %s180 = smul.addr %s179, 2
        %s181 = scalar_lea.vmem %s2, %s180
      $region28: #{alexnet_forward.16} parent=15 // pred_fallthru
        _
      // Predicated region
      $region29: #{alexnet_forward.16} parent=15 // pred_check
        %p182 = pneg %p108
      $region30: #{alexnet_forward.16} parent=15 // pred_check_branch
        %184 = sbr.rel (%p182) target = $region32
      $region31: #{alexnet_forward.16} parent=15 // pred_region
        %p185 = scmp.lt.s32.totalorder %s10, 1
        %s186 = scalar_select %p185, %s10, 1
        %s187 = smul.addr %s186, 2
        %s188 = scalar_lea.vmem %s3, %s187
      $region32: #{alexnet_forward.16} parent=15 // pred_fallthru
        _
    $region16: #{alexnet_forward.16} parent=5 // pred_fallthru
      _
    %p189 = scmp.le.s32.totalorder 1, %s10
    %p190 = scmp.lt.s32.totalorder %s10, 3
    %p191 = pnand %p189, %p190
    %p192 = pneg %p191
    // Predicated region
    $region33: #{alexnet_forward.16} parent=5 // pred_check
      _
    $region34: #{alexnet_forward.16} parent=5 // pred_check_branch
      %194 = sbr.rel (%p191) target = $region36
    $region35: #{alexnet_forward.16} parent=5 // pred_region
      %s195 = ssub.s32 %s10, 1
      %p196 = scmp.lt.s32.totalorder %s15, 1
      %s197 = scalar_select %p196, %s15, 1
      %s198 = smul.addr %s197, 4
      %s199 = smul.addr %s198, 2
      %s200 = scalar_lea.vmem %s0, %s199
      %p201 = pneg %p36
      %p202 = pneg %p33
      %p203 = scmp.lt.s32.totalorder %s15, 1
      %s204 = scalar_select %p203, %s15, 1
      %s205 = smul.addr %s204, 4
      %s206 = scalar_lea.vmem %s1, %s205
      %p207 = pneg %p62
      %p208 = pneg %p59
      %p209 = scmp.lt.s32.totalorder %s15, 1
      %s210 = scalar_select %p209, %s15, 1
      %s211 = smul.addr %s210, 2
      %s212 = smul.addr %s211, 2
      %s213 = scalar_lea.vmem %s2, %s212
      %p214 = pneg %p88
      %p215 = pneg %p85
      %p216 = scmp.lt.s32.totalorder %s15, 1
      %s217 = scalar_select %p216, %s15, 1
      %s218 = smul.addr %s217, 2
      %s219 = scalar_lea.vmem %s3, %s218
      %p220 = pneg %p114
      %p221 = pneg %p111
      %p222 = pneg %p140
      %p223 = pneg %p137
      %p224 = scmp.lt.s32.totalorder %s15, 1
      %s225 = scalar_select %p224, %s15, 1
      %s226 = smul.addr %s225, 2
      %s227 = scalar_lea.vmem %s4, %s226
      %p228 = scmp.lt.s32.totalorder %s15, 1
      %s229 = scalar_select %p228, %s15, 1
      %s230 = smul.addr %s229, 4
      %s231 = smul.addr %s230, 2
      %s232 = scalar_lea.vmem %s0, %s231
      %p233 = scmp.lt.s32.totalorder %s15, 1
      %s234 = scalar_select %p233, %s15, 1
      %s235 = smul.addr %s234, 4
      %s236 = scalar_lea.vmem %s1, %s235
      %p237 = scmp.lt.s32.totalorder %s15, 1
      %s238 = scalar_select %p237, %s15, 1
      %s239 = smul.addr %s238, 2
      %s240 = smul.addr %s239, 2
      %s241 = scalar_lea.vmem %s2, %s240
      %p242 = scmp.lt.s32.totalorder %s15, 1
      %s243 = scalar_select %p242, %s15, 1
      %s244 = smul.addr %s243, 2
      %s245 = scalar_lea.vmem %s3, %s244
      %p246 = scmp.lt.s32.totalorder %s15, 1
      %s247 = scalar_select %p246, %s15, 1
      %s248 = smul.addr %s247, 2
      %s249 = scalar_lea.vmem %s4, %s248
      %v250 = vld [vmem:[%s232] ss:$2 sm:$0x3]
      %s251 = scalar_lea.vmem %s232, 4
      %v252 = vld [vmem:[%s251] ss:$2 sm:$0x3]
      %s253 = scalar_lea.vmem %s232, 1
      %v254 = vld [vmem:[%s253] ss:$2 sm:$0x3]
      %s255 = scalar_lea.vmem %s232, 5
      %v256 = vld [vmem:[%s255] ss:$2 sm:$0x3]
      %v257 = vmax.f32 %v250, %v254
      %v258 = vmax.f32 %v252, %v256
      %v259 = vld [vmem:[%s236] sm:$0x3]
      %v260 = vld [vmem:[%s236 + $0x2] sm:$0x3]
      %v261 = vmax.f32 %v257, %v259
      %v262 = vmax.f32 %v258, %v260
      %v263 = vld [vmem:[%s241] ss:$2 sm:$0x3]
      %s264 = scalar_lea.vmem %s241, 1
      %v265 = vld [vmem:[%s264] ss:$2 sm:$0x3]
      %v266 = vmax.f32 %v263, %v265
      %v267 = vld [vmem:[%s245] sm:$0x3]
      %v268 = vmax.f32 %v266, %v267
      %v269 = vmax.f32 %v261, %v262
      %v270 = vmax.f32 %v269, %v268
      %v271 = vlaneseq
      %vm272 = vcmp.ge.s32.totalorder %v271, 0
      %vm273 = vcmp.lt.s32.totalorder %v271, 256
      %vm274 = vmand %vm272, %vm273
      %275 = vst.msk [vmem:[%s249] sm:$0x3] %vm274, %v270
      %p276 = scmp.lt.s32.totalorder %s15, 1
      %s277 = scalar_select %p276, %s15, 1
      %s278 = smul.addr %s277, 2
      %s279 = scalar_lea.vmem %s4, %s278
      // Predicated region
      $region37: #{alexnet_forward.16} parent=35 // pred_check
        %p280 = pneg %p137
      $region38: #{alexnet_forward.16} parent=35 // pred_check_branch
        %282 = sbr.rel (%p280) target = $region40
      $region39: #{alexnet_forward.16} parent=35 // pred_region
        _
      $region40: #{alexnet_forward.16} parent=35 // pred_fallthru
        _
    $region36: #{alexnet_forward.16} parent=5 // pred_fallthru
      _
    %p283 = scmp.le.s32.totalorder 2, %s10
    // Predicated region
    $region41: #{alexnet_forward.16} parent=5 // pred_check
      %p284 = pneg %p283
    $region42: #{alexnet_forward.16} parent=5 // pred_check_branch
      %286 = sbr.rel (%p284) target = $region44
    $region43: #{alexnet_forward.16} parent=5 // pred_region
      %s287 = ssub.s32 %s10, 2
      // Predicated region
      $region45: #{alexnet_forward.16} parent=43 // pred_check
        %p288 = pneg %p143
      $region46: #{alexnet_forward.16} parent=43 // pred_check_branch
        %290 = sbr.rel (%p288) target = $region48
      $region47: #{alexnet_forward.16} parent=43 // pred_region
        %p291 = scmp.lt.s32.totalorder %s16, 1
        %s292 = scalar_select %p291, %s16, 1
        %s293 = smul.addr %s292, 2
        %s294 = scalar_lea.vmem %s4, %s293
      $region48: #{alexnet_forward.16} parent=43 // pred_fallthru
        _
    $region44: #{alexnet_forward.16} parent=5 // pred_fallthru
      _
  $region6: #{alexnet_forward.16} parent=0 // loop_footer
    %s14 = sadd.s32 1, %s10
  $region7: #{alexnet_forward.16} parent=0 // loop_footer_branch
    %9 = sbr.rel target = $region3
  $region8: #{alexnet_forward.16} parent=0 // loop_exit
    _

// kernel: alexnet_forward.17
$region0: #{alexnet_forward.17}
  #allocation0 [shape = 'u32[]', space=smem, size = 0x4, offset = 0x4, fixed_abs, tag = 'smem constant byte address 0x4 - core index']
  #allocation1 [shape = 'u32[144,128]{1,0:T(1,128)}', space=vmem, size = 0x12000, scoped, tag = 'internal scratch']
  %s0 = inlined_call_operand.vmem [shape: f32[2,1,1,256], index: 0, kind: input, shape index: {}]
  %s1 = inlined_call_operand.vmem [shape: f32[2,6,6,256], index: 1, kind: output, shape index: {}]
  %s2 = sld [smem:[#allocation0]]
  $region37: #{alexnet_forward.17} parent=0
    _
  %s4 = ssub.s32 1, %s2
  %s5 = scalar_select 0, %s4, %s2
  loop: start=0, step=1, limit=4
  $region2: #{alexnet_forward.17} parent=0 // loop_pre_header
    _
  $region3: #{alexnet_forward.17} parent=0 // loop_header
    %s7 = sphi 0, %s11
    %p8 = scmp.ge.s32.totalorder %s7, 4
    %s17 = sphi 0, %s19
    %s20 = sphi 0, %s17
    %s21 = sphi 0, %s20
    %s37 = sphi 0, %s21
    %s43 = sphi 0, %s45
    %s46 = sphi 0, %s43
    %s47 = sphi 0, %s46
    %s63 = sphi 0, %s47
  $region4: #{alexnet_forward.17} parent=0 // loop_header_branch
    %10 = sbr.rel (%p8) target = $region8
  $region5: #{alexnet_forward.17} parent=0 // loop_body
    %s12 = ssub.s32 %s7, 1
    %s13 = ssub.s32 %s7, 2
    %s14 = sadd.s32 %s7, 1
    %s15 = ssub.s32 %s7, %s14
    %p16 = scmp.eq.s32.totalorder %s15, 0
    %s18 = sadd.s32 %s17, 1
    %s19 = scalar_select %p16, %s17, %s18
    %p22 = pneg %p16
    %p23 = scmp.eq.s32.totalorder %s7, 1
    %p24 = por %p22, %p23
    %p25 = scmp.ne.s32.totalorder %s17, %s20
    %p26 = scmp.eq.s32.totalorder %s7, 0
    %p27 = por %p25, %p26
    %p28 = scmp.ne.s32.totalorder %s17, %s20
    %p29 = scmp.eq.s32.totalorder %s12, 1
    %p30 = por %p28, %p29
    %p31 = scmp.ne.s32.totalorder %s20, %s21
    %p32 = scmp.eq.s32.totalorder %s12, 0
    %p33 = por %p31, %p32
    %p34 = scmp.ne.s32.totalorder %s20, %s21
    %p35 = scmp.eq.s32.totalorder %s13, 1
    %p36 = por %p34, %p35
    %p38 = scmp.ne.s32.totalorder %s21, %s37
    %p39 = scmp.eq.s32.totalorder %s13, 0
    %p40 = por %p38, %p39
    %s41 = ssub.s32 %s7, %s14
    %p42 = scmp.eq.s32.totalorder %s41, 0
    %s44 = sadd.s32 %s43, 1
    %s45 = scalar_select %p42, %s43, %s44
    %p48 = pneg %p42
    %p49 = scmp.eq.s32.totalorder %s7, 1
    %p50 = por %p48, %p49
    %p51 = scmp.ne.s32.totalorder %s43, %s46
    %p52 = scmp.eq.s32.totalorder %s7, 0
    %p53 = por %p51, %p52
    %p54 = scmp.ne.s32.totalorder %s43, %s46
    %p55 = scmp.eq.s32.totalorder %s12, 1
    %p56 = por %p54, %p55
    %p57 = scmp.ne.s32.totalorder %s46, %s47
    %p58 = scmp.eq.s32.totalorder %s12, 0
    %p59 = por %p57, %p58
    %p60 = scmp.ne.s32.totalorder %s46, %s47
    %p61 = scmp.eq.s32.totalorder %s13, 1
    %p62 = por %p60, %p61
    %p64 = scmp.ne.s32.totalorder %s47, %s63
    %p65 = scmp.eq.s32.totalorder %s13, 0
    %p66 = por %p64, %p65
    %p67 = scmp.le.s32.totalorder 1, %s7
    %p68 = scmp.lt.s32.totalorder %s7, 3
    %p69 = pnand %p67, %p68
    %p70 = pneg %p69
    // Predicated region
    $region9: #{alexnet_forward.17} parent=5 // pred_check
      _
    $region10: #{alexnet_forward.17} parent=5 // pred_check_branch
      %72 = sbr.rel (%p69) target = $region12
    $region11: #{alexnet_forward.17} parent=5 // pred_region
      %s73 = ssub.s32 %s7, 1
    $region12: #{alexnet_forward.17} parent=5 // pred_fallthru
      _
    %p74 = scmp.lt.s32.totalorder %s7, 2
    // Predicated region
    $region13: #{alexnet_forward.17} parent=5 // pred_check
      %p75 = pneg %p74
    $region14: #{alexnet_forward.17} parent=5 // pred_check_branch
      %77 = sbr.rel (%p75) target = $region16
    $region15: #{alexnet_forward.17} parent=5 // pred_region
      // Predicated region
      $region17: #{alexnet_forward.17} parent=15 // pred_check
        %p78 = pneg %p27
      $region18: #{alexnet_forward.17} parent=15 // pred_check_branch
        %80 = sbr.rel (%p78) target = $region20
      $region19: #{alexnet_forward.17} parent=15 // pred_region
        %p81 = scmp.lt.s32.totalorder %s7, 1
        %s82 = scalar_select %p81, %s7, 1
        %s83 = smul.addr %s82, 2
        %s84 = scalar_lea.vmem %s0, %s83
      $region20: #{alexnet_forward.17} parent=15 // pred_fallthru
        _
    $region16: #{alexnet_forward.17} parent=5 // pred_fallthru
      _
    %p85 = scmp.le.s32.totalorder 1, %s7
    %p86 = scmp.lt.s32.totalorder %s7, 3
    %p87 = pnand %p85, %p86
    %p88 = pneg %p87
    // Predicated region
    $region21: #{alexnet_forward.17} parent=5 // pred_check
      _
    $region22: #{alexnet_forward.17} parent=5 // pred_check_branch
      %90 = sbr.rel (%p87) target = $region24
    $region23: #{alexnet_forward.17} parent=5 // pred_region
      %s91 = ssub.s32 %s7, 1
      %p92 = scmp.lt.s32.totalorder %s12, 1
      %s93 = scalar_select %p92, %s12, 1
      %s94 = smul.addr %s93, 2
      %s95 = scalar_lea.vmem %s0, %s94
      %p96 = pneg %p33
      %p97 = pneg %p30
      %p98 = pneg %p59
      %p99 = pneg %p56
      %p100 = scmp.lt.s32.totalorder %s12, 1
      %s101 = scalar_select %p100, %s12, 1
      %s102 = smul.addr %s101, 12
      %s103 = smul.addr %s102, 8
      %s104 = scalar_lea.vmem %s1, %s103
      %p105 = scmp.lt.s32.totalorder %s12, 1
      %s106 = scalar_select %p105, %s12, 1
      %s107 = smul.addr %s106, 2
      %s108 = scalar_lea.vmem %s0, %s107
      %p109 = scmp.lt.s32.totalorder %s12, 1
      %s110 = scalar_select %p109, %s12, 1
      %s111 = smul.addr %s110, 12
      %s112 = smul.addr %s111, 8
      %s113 = scalar_lea.vmem %s1, %s112
      %v114 = vld [vmem:[%s108] sm:$0x3]
      %v115 = vadd.f32 %v114, 0.0
      %v116 = vlaneseq
      %vm117 = vcmp.ge.s32.totalorder %v116, 0
      %vm118 = vcmp.lt.s32.totalorder %v116, 256
      %vm119 = vmand %vm117, %vm118
      %120 = vst.msk [vmem:[%s113] ss:$8 sm:$0x3] %vm119, %v115
      %121 = vst.msk [vmem:[%s113] ss:$8 sm:$0x0] %vm119, %v115
      %v122 = vld [vmem:[%s108] sm:$0x3]
      %v123 = vadd.f32 %v122, 0.0
      %s124 = scalar_lea.vmem %s113, 1
      %125 = vst.msk [vmem:[%s124] ss:$8 sm:$0x3] %vm119, %v123
      %126 = vst.msk [vmem:[%s124] ss:$8 sm:$0x0] %vm119, %v123
      %v127 = vld [vmem:[%s108] sm:$0x3]
      %v128 = vadd.f32 %v127, 0.0
      %s129 = scalar_lea.vmem %s113, 2
      %130 = vst.msk [vmem:[%s129] ss:$8 sm:$0x3] %vm119, %v128
      %131 = vst.msk [vmem:[%s129] ss:$8 sm:$0x0] %vm119, %v128
      %v132 = vld [vmem:[%s108] sm:$0x3]
      %v133 = vadd.f32 %v132, 0.0
      %s134 = scalar_lea.vmem %s113, 3
      %135 = vst.msk [vmem:[%s134] ss:$8 sm:$0x3] %vm119, %v133
      %136 = vst.msk [vmem:[%s134] ss:$8 sm:$0x0] %vm119, %v133
      %v137 = vld [vmem:[%s108] sm:$0x3]
      %v138 = vadd.f32 %v137, 0.0
      %s139 = scalar_lea.vmem %s113, 4
      %140 = vst.msk [vmem:[%s139] ss:$8 sm:$0x3] %vm119, %v138
      %141 = vst.msk [vmem:[%s139] ss:$8 sm:$0x0] %vm119, %v138
      %v142 = vld [vmem:[%s108] sm:$0x3]
      %v143 = vadd.f32 %v142, 0.0
      %s144 = scalar_lea.vmem %s113, 5
      %145 = vst.msk [vmem:[%s144] ss:$8 sm:$0x3] %vm119, %v143
      %146 = vst.msk [vmem:[%s144] ss:$8 sm:$0x0] %vm119, %v143
      %v147 = vld [vmem:[%s108] sm:$0x3]
      %v148 = vadd.f32 %v147, 0.0
      %s149 = scalar_lea.vmem %s113, 16
      %150 = vst.msk [vmem:[%s149] ss:$8 sm:$0x3] %vm119, %v148
      %151 = vst.msk [vmem:[%s149] ss:$8 sm:$0x0] %vm119, %v148
      %v152 = vld [vmem:[%s108] sm:$0x3]
      %v153 = vadd.f32 %v152, 0.0
      %s154 = scalar_lea.vmem %s149, 1
      %155 = vst.msk [vmem:[%s154] ss:$8 sm:$0x3] %vm119, %v153
      %156 = vst.msk [vmem:[%s154] ss:$8 sm:$0x0] %vm119, %v153
      %v157 = vld [vmem:[%s108] sm:$0x3]
      %v158 = vadd.f32 %v157, 0.0
      %s159 = scalar_lea.vmem %s149, 2
      %160 = vst.msk [vmem:[%s159] ss:$8 sm:$0x3] %vm119, %v158
      %161 = vst.msk [vmem:[%s159] ss:$8 sm:$0x0] %vm119, %v158
      %v162 = vld [vmem:[%s108] sm:$0x3]
      %v163 = vadd.f32 %v162, 0.0
      %s164 = scalar_lea.vmem %s149, 3
      %165 = vst.msk [vmem:[%s164] ss:$8 sm:$0x3] %vm119, %v163
      %166 = vst.msk [vmem:[%s164] ss:$8 sm:$0x0] %vm119, %v163
      %v167 = vld [vmem:[%s108] sm:$0x3]
      %v168 = vadd.f32 %v167, 0.0
      %s169 = scalar_lea.vmem %s149, 4
      %170 = vst.msk [vmem:[%s169] ss:$8 sm:$0x3] %vm119, %v168
      %171 = vst.msk [vmem:[%s169] ss:$8 sm:$0x0] %vm119, %v168
      %v172 = vld [vmem:[%s108] sm:$0x3]
      %v173 = vadd.f32 %v172, 0.0
      %s174 = scalar_lea.vmem %s149, 5
      %175 = vst.msk [vmem:[%s174] ss:$8 sm:$0x3] %vm119, %v173
      %176 = vst.msk [vmem:[%s174] ss:$8 sm:$0x0] %vm119, %v173
      %v177 = vld [vmem:[%s108] sm:$0x3]
      %v178 = vadd.f32 %v177, 0.0
      %s179 = scalar_lea.vmem %s113, 32
      %180 = vst.msk [vmem:[%s179] ss:$8 sm:$0x3] %vm119, %v178
      %181 = vst.msk [vmem:[%s179] ss:$8 sm:$0x0] %vm119, %v178
      %v182 = vld [vmem:[%s108] sm:$0x3]
      %v183 = vadd.f32 %v182, 0.0
      %s184 = scalar_lea.vmem %s179, 1
      %185 = vst.msk [vmem:[%s184] ss:$8 sm:$0x3] %vm119, %v183
      %186 = vst.msk [vmem:[%s184] ss:$8 sm:$0x0] %vm119, %v183
      %v187 = vld [vmem:[%s108] sm:$0x3]
      %v188 = vadd.f32 %v187, 0.0
      %s189 = scalar_lea.vmem %s179, 2
      %190 = vst.msk [vmem:[%s189] ss:$8 sm:$0x3] %vm119, %v188
      %191 = vst.msk [vmem:[%s189] ss:$8 sm:$0x0] %vm119, %v188
      %v192 = vld [vmem:[%s108] sm:$0x3]
      %v193 = vadd.f32 %v192, 0.0
      %s194 = scalar_lea.vmem %s179, 3
      %195 = vst.msk [vmem:[%s194] ss:$8 sm:$0x3] %vm119, %v193
      %196 = vst.msk [vmem:[%s194] ss:$8 sm:$0x0] %vm119, %v193
      %v197 = vld [vmem:[%s108] sm:$0x3]
      %v198 = vadd.f32 %v197, 0.0
      %s199 = scalar_lea.vmem %s179, 4
      %200 = vst.msk [vmem:[%s199] ss:$8 sm:$0x3] %vm119, %v198
      %201 = vst.msk [vmem:[%s199] ss:$8 sm:$0x0] %vm119, %v198
      %v202 = vld [vmem:[%s108] sm:$0x3]
      %v203 = vadd.f32 %v202, 0.0
      %s204 = scalar_lea.vmem %s179, 5
      %205 = vst.msk [vmem:[%s204] ss:$8 sm:$0x3] %vm119, %v203
      %206 = vst.msk [vmem:[%s204] ss:$8 sm:$0x0] %vm119, %v203
      %v207 = vld [vmem:[%s108] sm:$0x3]
      %v208 = vadd.f32 %v207, 0.0
      %s209 = scalar_lea.vmem %s113, 48
      %210 = vst.msk [vmem:[%s209] ss:$8 sm:$0x3] %vm119, %v208
      %211 = vst.msk [vmem:[%s209] ss:$8 sm:$0x0] %vm119, %v208
      %v212 = vld [vmem:[%s108] sm:$0x3]
      %v213 = vadd.f32 %v212, 0.0
      %s214 = scalar_lea.vmem %s209, 1
      %215 = vst.msk [vmem:[%s214] ss:$8 sm:$0x3] %vm119, %v213
      %216 = vst.msk [vmem:[%s214] ss:$8 sm:$0x0] %vm119, %v213
      %v217 = vld [vmem:[%s108] sm:$0x3]
      %v218 = vadd.f32 %v217, 0.0
      %s219 = scalar_lea.vmem %s209, 2
      %220 = vst.msk [vmem:[%s219] ss:$8 sm:$0x3] %vm119, %v218
      %221 = vst.msk [vmem:[%s219] ss:$8 sm:$0x0] %vm119, %v218
      %v222 = vld [vmem:[%s108] sm:$0x3]
      %v223 = vadd.f32 %v222, 0.0
      %s224 = scalar_lea.vmem %s209, 3
      %225 = vst.msk [vmem:[%s224] ss:$8 sm:$0x3] %vm119, %v223
      %226 = vst.msk [vmem:[%s224] ss:$8 sm:$0x0] %vm119, %v223
      %v227 = vld [vmem:[%s108] sm:$0x3]
      %v228 = vadd.f32 %v227, 0.0
      %s229 = scalar_lea.vmem %s209, 4
      %230 = vst.msk [vmem:[%s229] ss:$8 sm:$0x3] %vm119, %v228
      %231 = vst.msk [vmem:[%s229] ss:$8 sm:$0x0] %vm119, %v228
      %v232 = vld [vmem:[%s108] sm:$0x3]
      %v233 = vadd.f32 %v232, 0.0
      %s234 = scalar_lea.vmem %s209, 5
      %235 = vst.msk [vmem:[%s234] ss:$8 sm:$0x3] %vm119, %v233
      %236 = vst.msk [vmem:[%s234] ss:$8 sm:$0x0] %vm119, %v233
      %v237 = vld [vmem:[%s108] sm:$0x3]
      %v238 = vadd.f32 %v237, 0.0
      %s239 = scalar_lea.vmem %s113, 64
      %240 = vst.msk [vmem:[%s239] ss:$8 sm:$0x3] %vm119, %v238
      %241 = vst.msk [vmem:[%s239] ss:$8 sm:$0x0] %vm119, %v238
      %v242 = vld [vmem:[%s108] sm:$0x3]
      %v243 = vadd.f32 %v242, 0.0
      %s244 = scalar_lea.vmem %s239, 1
      %245 = vst.msk [vmem:[%s244] ss:$8 sm:$0x3] %vm119, %v243
      %246 = vst.msk [vmem:[%s244] ss:$8 sm:$0x0] %vm119, %v243
      %v247 = vld [vmem:[%s108] sm:$0x3]
      %v248 = vadd.f32 %v247, 0.0
      %s249 = scalar_lea.vmem %s239, 2
      %250 = vst.msk [vmem:[%s249] ss:$8 sm:$0x3] %vm119, %v248
      %251 = vst.msk [vmem:[%s249] ss:$8 sm:$0x0] %vm119, %v248
      %v252 = vld [vmem:[%s108] sm:$0x3]
      %v253 = vadd.f32 %v252, 0.0
      %s254 = scalar_lea.vmem %s239, 3
      %255 = vst.msk [vmem:[%s254] ss:$8 sm:$0x3] %vm119, %v253
      %256 = vst.msk [vmem:[%s254] ss:$8 sm:$0x0] %vm119, %v253
      %v257 = vld [vmem:[%s108] sm:$0x3]
      %v258 = vadd.f32 %v257, 0.0
      %s259 = scalar_lea.vmem %s239, 4
      %260 = vst.msk [vmem:[%s259] ss:$8 sm:$0x3] %vm119, %v258
      %261 = vst.msk [vmem:[%s259] ss:$8 sm:$0x0] %vm119, %v258
      %v262 = vld [vmem:[%s108] sm:$0x3]
      %v263 = vadd.f32 %v262, 0.0
      %s264 = scalar_lea.vmem %s239, 5
      %265 = vst.msk [vmem:[%s264] ss:$8 sm:$0x3] %vm119, %v263
      %266 = vst.msk [vmem:[%s264] ss:$8 sm:$0x0] %vm119, %v263
      %v267 = vld [vmem:[%s108] sm:$0x3]
      %v268 = vadd.f32 %v267, 0.0
      %s269 = scalar_lea.vmem %s113, 80
      %270 = vst.msk [vmem:[%s269] ss:$8 sm:$0x3] %vm119, %v268
      %271 = vst.msk [vmem:[%s269] ss:$8 sm:$0x0] %vm119, %v268
      %v272 = vld [vmem:[%s108] sm:$0x3]
      %v273 = vadd.f32 %v272, 0.0
      %s274 = scalar_lea.vmem %s269, 1
      %275 = vst.msk [vmem:[%s274] ss:$8 sm:$0x3] %vm119, %v273
      %276 = vst.msk [vmem:[%s274] ss:$8 sm:$0x0] %vm119, %v273
      %v277 = vld [vmem:[%s108] sm:$0x3]
      %v278 = vadd.f32 %v277, 0.0
      %s279 = scalar_lea.vmem %s269, 2
      %280 = vst.msk [vmem:[%s279] ss:$8 sm:$0x3] %vm119, %v278
      %281 = vst.msk [vmem:[%s279] ss:$8 sm:$0x0] %vm119, %v278
      %v282 = vld [vmem:[%s108] sm:$0x3]
      %v283 = vadd.f32 %v282, 0.0
      %s284 = scalar_lea.vmem %s269, 3
      %285 = vst.msk [vmem:[%s284] ss:$8 sm:$0x3] %vm119, %v283
      %286 = vst.msk [vmem:[%s284] ss:$8 sm:$0x0] %vm119, %v283
      %v287 = vld [vmem:[%s108] sm:$0x3]
      %v288 = vadd.f32 %v287, 0.0
      %s289 = scalar_lea.vmem %s269, 4
      %290 = vst.msk [vmem:[%s289] ss:$8 sm:$0x3] %vm119, %v288
      %291 = vst.msk [vmem:[%s289] ss:$8 sm:$0x0] %vm119, %v288
      %v292 = vld [vmem:[%s108] sm:$0x3]
      %v293 = vadd.f32 %v292, 0.0
      %s294 = scalar_lea.vmem %s269, 5
      %295 = vst.msk [vmem:[%s294] ss:$8 sm:$0x3] %vm119, %v293
      %296 = vst.msk [vmem:[%s294] ss:$8 sm:$0x0] %vm119, %v293
      %p297 = scmp.lt.s32.totalorder %s12, 1
      %s298 = scalar_select %p297, %s12, 1
      %s299 = smul.addr %s298, 12
      %s300 = smul.addr %s299, 8
      %s301 = scalar_lea.vmem %s1, %s300
      // Predicated region
      $region25: #{alexnet_forward.17} parent=23 // pred_check
        %p302 = pneg %p56
      $region26: #{alexnet_forward.17} parent=23 // pred_check_branch
        %304 = sbr.rel (%p302) target = $region28
      $region27: #{alexnet_forward.17} parent=23 // pred_region
        _
      $region28: #{alexnet_forward.17} parent=23 // pred_fallthru
        _
    $region24: #{alexnet_forward.17} parent=5 // pred_fallthru
      _
    %p305 = scmp.le.s32.totalorder 2, %s7
    // Predicated region
    $region29: #{alexnet_forward.17} parent=5 // pred_check
      %p306 = pneg %p305
    $region30: #{alexnet_forward.17} parent=5 // pred_check_branch
      %308 = sbr.rel (%p306) target = $region32
    $region31: #{alexnet_forward.17} parent=5 // pred_region
      %s309 = ssub.s32 %s7, 2
      // Predicated region
      $region33: #{alexnet_forward.17} parent=31 // pred_check
        %p310 = pneg %p62
      $region34: #{alexnet_forward.17} parent=31 // pred_check_branch
        %312 = sbr.rel (%p310) target = $region36
      $region35: #{alexnet_forward.17} parent=31 // pred_region
        %p313 = scmp.lt.s32.totalorder %s13, 1
        %s314 = scalar_select %p313, %s13, 1
        %s315 = smul.addr %s314, 12
        %s316 = smul.addr %s315, 8
        %s317 = scalar_lea.vmem %s1, %s316
      $region36: #{alexnet_forward.17} parent=31 // pred_fallthru
        _
    $region32: #{alexnet_forward.17} parent=5 // pred_fallthru
      _
  $region6: #{alexnet_forward.17} parent=0 // loop_footer
    %s11 = sadd.s32 1, %s7
  $region7: #{alexnet_forward.17} parent=0 // loop_footer_branch
    %6 = sbr.rel target = $region3
  $region8: #{alexnet_forward.17} parent=0 // loop_exit
    _

</llo_original>
